<compile_context>
chip_gen: v7x
topology: tpu7x:2x2x1
jax: 0.10.0
libtpu: 0.0.40
codegen_flags: <defaults>
</compile_context>

<pallas_src>
import functools
import math

import jax
import jax.numpy as jnp
import numpy as np
from jax.experimental import pallas as pl
from jax.experimental.pallas import tpu as pltpu


# ----------------------------------------------------------------------------
# Deterministic "parameter" setup (mirrors gaussian() / create_window()).
# ----------------------------------------------------------------------------
def gaussian_1d(window_size: int, sigma: float) -> np.ndarray:
    g = np.array(
        [math.exp(-((x - window_size // 2) ** 2) / float(2 * sigma ** 2))
         for x in range(window_size)],
        dtype=np.float32,
    )
    return g / g.sum()


def banded_conv_matrices(hp: int, h: int, w: int, window_size: int):
    """At:(Hp,Ho) and B:(W,Wo) such that (At.T @ img @ B) == valid conv g⊗g.

    Rows of At beyond the real image height `h` stay zero, so zero-padding the
    image rows up to Hp (sublane alignment) is exact.
    """
    g = gaussian_1d(window_size, 1.5)
    ho = h - window_size + 1
    wo = w - window_size + 1
    At = np.zeros((hp, ho), dtype=np.float32)
    for o in range(ho):
        At[o:o + window_size, o] = g
    B = np.zeros((w, wo), dtype=np.float32)
    for o in range(wo):
        B[o:o + window_size, o] = g
    return At, B


# ----------------------------------------------------------------------------
# Pallas kernel.
# ----------------------------------------------------------------------------
def _ssim_kernel(x1_ref, x2_ref, at_ref, b_ref, c_ref, o_ref, *,
                 blk, hp, wo, nc_real, mask_pad):
    # x1_ref, x2_ref : (blk*Hp, W) f32 — rows are (channel, image-row) pairs
    # at_ref         : (Hp, Ho)    f32 banded Gaussian (row contraction, RHS)
    # b_ref          : (W, Wo)     f32 banded Gaussian (col contraction, RHS)
    # c_ref          : (1, 128)    f32 — [0,0]=C1, [0,1]=C2 (wrapper-computed)
    # o_ref          : (1, 8, 128) f32 — per-block partial sum (lane-padded)
    x1 = x1_ref[...]
    x2 = x2_ref[...]
    b = b_ref[...]
    at = at_ref[...]

    def gconv(img):
        # Valid depthwise Gaussian conv of every channel slab: A @ img @ B.
        # W-contraction: one lane-dense 2-D matmul, M = blk*Hp.
        t = jnp.dot(img, b, preferred_element_type=jnp.float32)   # (blk*Hp, Wo)
        # Free view: Hp is a multiple of 8 so this splits only whole tiles.
        t = t.reshape(blk, hp, wo)
        # H-contraction with the shared band matrix as the weight-stationary
        # RHS operand (output in the transposed (Wo, Ho) orientation; fine,
        # everything downstream is elementwise + a global sum).
        return jnp.einsum("nyw,yo->nwo", t, at,
                          preferred_element_type=jnp.float32)     # (blk, Wo, Ho)

    # Products are built one at a time (no concat slab, no casts).
    mu1 = gconv(x1)
    mu2 = gconv(x2)
    e11 = gconv(x1 * x1)
    e22 = gconv(x2 * x2)
    e12 = gconv(x1 * x2)

    c1 = c_ref[0, 0]
    c2 = c_ref[0, 1]

    mu1_sq = mu1 * mu1
    mu2_sq = mu2 * mu2
    mu1_mu2 = mu1 * mu2
    sigma1_sq = e11 - mu1_sq
    sigma2_sq = e22 - mu2_sq
    sigma12 = e12 - mu1_mu2

    v1 = 2.0 * sigma12 + c2
    v2 = sigma1_sq + sigma2_sq + c2
    num = (2.0 * mu1_mu2 + c1) * v1
    den = (mu1_sq + mu2_sq + c1) * v2
    ssim_map = num * pl.reciprocal(den, approx=True)               # EUP divide

    if mask_pad:
        # Padding channels only exist in the LAST block, so gate the mask.
        last = pl.num_programs(0) - 1

        @pl.when(pl.program_id(0) == last)
        def _():
            # Padded channels would otherwise evaluate to SSIM ~ 1.0.
            ch = (pl.program_id(0) * blk
                  + jax.lax.broadcasted_iota(jnp.int32, (blk, 1, 1), 0))
            masked = jnp.where(ch < nc_real, ssim_map, 0.0)
            o_ref[...] = jnp.full(o_ref.shape, jnp.sum(masked), jnp.float32)

        @pl.when(pl.program_id(0) != last)
        def _():
            o_ref[...] = jnp.full(o_ref.shape, jnp.sum(ssim_map), jnp.float32)
    else:
        o_ref[...] = jnp.full(o_ref.shape, jnp.sum(ssim_map), jnp.float32)


# ----------------------------------------------------------------------------
# Block sizing / VMEM budgeting helpers (generation-aware).
# ----------------------------------------------------------------------------
def _vmem_capacity_bytes() -> int:
    try:
        cap = getattr(pltpu.get_tpu_info(), "vmem_capacity_bytes", None)
        if cap:
            return int(cap)
    except Exception:
        pass
    return 128 * 2 ** 20   # v5e/v6e default


def _vmem_bytes(blk, hp, w, ho, wo):
    f32 = 4
    b = 2 * 2 * blk * hp * w * f32          # x1/x2 blocks, double-buffered
    b += (hp * ho + w * wo + 128) * f32     # A^T, B, constants (single buffer)
    b += blk * hp * w * f32                 # one transient product (x*x)
    b += blk * hp * wo * f32                # W-contraction intermediate
    b += 5 * blk * wo * ho * f32            # mu1, mu2, e11, e22, e12
    b += 6 * blk * wo * ho * f32            # elementwise temporaries
    b += 2 * 8 * 128 * f32                  # partial-sum output block
    return b


def _pick_block_channels(nc, hp, w, ho, wo, vmem_cap):
    # v7x: 64 MiB VMEM per TensorCore -> small block budget, <=48 MiB limit.
    # v5e/v6e: 128 MiB VMEM -> larger blocks, <=96 MiB limit.
    if vmem_cap <= 64 * 2 ** 20:
        budget, limit_cap = 14 * 2 ** 20, 48 * 2 ** 20
    else:
        budget, limit_cap = 48 * 2 ** 20, 96 * 2 ** 20
    per_ch = max(1, _vmem_bytes(1, hp, w, ho, wo))
    blk = max(8, (budget // per_ch) // 8 * 8)   # multiple of 8 (sublanes)
    nc8 = -(-nc // 8) * 8
    if nc8 >= 16:
        # Keep num_blocks >= 2: both v7x TensorCores busy + DMA/compute overlap.
        blk = min(blk, max(8, (nc8 // 2) // 8 * 8))
    blk = int(min(blk, nc8, 128))
    return blk, limit_cap


# ----------------------------------------------------------------------------
# Wrapper.
# ----------------------------------------------------------------------------
def ssim_pallas(img1: jax.Array, img2: jax.Array, window_size: int = 11) -> jax.Array:
    """img1/img2: (N, C, H, W).  Returns scalar SSIM (size_average=True)."""
    n, c, h, w = img1.shape
    real_size = min(window_size, h, w)
    ho = h - real_size + 1
    wo = w - real_size + 1
    nc = n * c
    hp = -(-h // 8) * 8                       # pad H to a sublane multiple

    At_np, B_np = banded_conv_matrices(hp, h, w, real_size)
    At = jnp.asarray(At_np)                   # (Hp, Ho) f32
    B = jnp.asarray(B_np)                     # (W, Wo)  f32

    img1 = img1.astype(jnp.float32)
    img2 = img2.astype(jnp.float32)

    # val_range=None branch: global data-dependent L computed OUTSIDE the
    # kernel (per-tile max/min would be wrong once we grid over channels).
    max_val = jnp.where(jnp.max(img1) > 128.0, 255.0, 1.0)
    min_val = jnp.where(jnp.min(img1) < -0.5, -1.0, 0.0)
    L = max_val - min_val
    c1 = (0.01 * L) ** 2
    c2 = (0.03 * L) ** 2
    cvals = jnp.zeros((1, 128), jnp.float32).at[0, 0].set(c1).at[0, 1].set(c2)

    vmem_cap = _vmem_capacity_bytes()
    blk, limit_cap = _pick_block_channels(nc, hp, w, ho, wo, vmem_cap)
    nc_pad = -(-nc // blk) * blk
    num_blocks = nc_pad // blk

    x1 = img1.reshape(nc, h, w)
    x2 = img2.reshape(nc, h, w)
    if nc_pad != nc or hp != h:
        pad = ((0, nc_pad - nc), (0, hp - h), (0, 0))
        x1 = jnp.pad(x1, pad)
        x2 = jnp.pad(x2, pad)
    # Fold channels into the row axis: (NC_pad*Hp, W) keeps W on lanes and the
    # rows a multiple of 8 per block, so every reshape in-kernel is a view.
    x1 = x1.reshape(nc_pad * hp, w)
    x2 = x2.reshape(nc_pad * hp, w)

    est = _vmem_bytes(blk, hp, w, ho, wo)
    vmem_limit = int(min(limit_cap, max(32 * 2 ** 20, (5 * est) // 4)))

    kernel = functools.partial(
        _ssim_kernel, blk=blk, hp=hp, wo=wo, nc_real=nc,
        mask_pad=(nc_pad != nc))

    def run(single_buffer_consts: bool):
        # Grid-invariant operands (index_map always (0,0)) only need a single
        # VMEM buffer; saves A/B double-buffer space (valuable on v7x).
        const_kw = ({"pipeline_mode": pl.Buffered(1)}
                    if single_buffer_consts else {})
        return pl.pallas_call(
            kernel,
            out_shape=jax.ShapeDtypeStruct((num_blocks, 8, 128), jnp.float32),
            grid=(num_blocks,),
            in_specs=[
                pl.BlockSpec((blk * hp, w), lambda i: (i, 0)),          # x1 block
                pl.BlockSpec((blk * hp, w), lambda i: (i, 0)),          # x2 block
                pl.BlockSpec((hp, ho), lambda i: (0, 0), **const_kw),   # A^T
                pl.BlockSpec((w, wo), lambda i: (0, 0), **const_kw),    # B
                pl.BlockSpec((1, 128), lambda i: (0, 0), **const_kw),   # C1/C2
            ],
            out_specs=pl.BlockSpec((1, 8, 128), lambda i: (i, 0, 0)),
            compiler_params=pltpu.CompilerParams(
                dimension_semantics=("parallel",),
                vmem_limit_bytes=vmem_limit),
        )(x1, x2, At, B, cvals)

    try:
        partial_sums = run(True)
    except Exception:
        # Older JAX without BlockSpec.pipeline_mode support -> default
        # double-buffering for the constants (slightly more VMEM, same result).
        partial_sums = run(False)

    total = jnp.sum(partial_sums[:, 0, 0])
    return total / float(nc * ho * wo)        # size_average=True -> global mean


# ----------------------------------------------------------------------------
# Pure-JAX reference (mirrors torch F.conv2d with groups=channel) for checking.
# ----------------------------------------------------------------------------
def ssim_reference(img1, img2, window_size=11):
    n, c, h, w = img1.shape
    real_size = min(window_size, h, w)
    g = gaussian_1d(real_size, 1.5)
    w2d = jnp.asarray(np.outer(g, g), dtype=jnp.float32)
    kernel = jnp.broadcast_to(w2d, (c, 1, real_size, real_size))

    def conv(x):
        return jax.lax.conv_general_dilated(
            x, kernel, window_strides=(1, 1), padding="VALID",
            dimension_numbers=("NCHW", "OIHW", "NCHW"), feature_group_count=c)

    mu1, mu2 = conv(img1), conv(img2)
    s11 = conv(img1 * img1) - mu1 ** 2
    s22 = conv(img2 * img2) - mu2 ** 2
    s12 = conv(img1 * img2) - mu1 * mu2
    max_val = jnp.where(jnp.max(img1) > 128.0, 255.0, 1.0)
    min_val = jnp.where(jnp.min(img1) < -0.5, -1.0, 0.0)
    L = max_val - min_val
    C1, C2 = (0.01 * L) ** 2, (0.03 * L) ** 2
    v1, v2 = 2.0 * s12 + C2, s11 + s22 + C2
    ssim_map = (2 * mu1 * mu2 + C1) * v1 / ((mu1 ** 2 + mu2 ** 2 + C1) * v2)
    return jnp.mean(ssim_map)


if __name__ == "__main__":
    key = jax.random.PRNGKey(0)
    k1, k2 = jax.random.split(key)
    img1 = jax.random.normal(k1, (2, 4, 16, 16), dtype=jnp.float32)
    img2 = img1 + 0.1 * jax.random.normal(k2, (2, 4, 16, 16), dtype=jnp.float32)

    out = ssim_pallas(img1, img2, window_size=11)
    out = jax.block_until_ready(out)

    ref = jax.block_until_ready(ssim_reference(img1, img2, window_size=11))
    # f32 MXU matmuls; only the approximate EUP reciprocal (~1e-3 rel/pixel)
    # separates us from the exact reference.
    np.testing.assert_allclose(np.asarray(out), np.asarray(ref),
                               rtol=1e-2, atol=1e-2)

    print("KERNEL_OK")
</pallas_src>

<mosaic_0001>
module attributes {stable_mosaic.version = 11 : i64} {
  func.func @_ssim_kernel(%arg0: i32, %arg1: memref<128x16xf32, #tpu.memory_space<vmem>>, %arg2: memref<128x16xf32, #tpu.memory_space<vmem>>, %arg3: memref<16x6xf32, #tpu.memory_space<vmem>>, %arg4: memref<16x6xf32, #tpu.memory_space<vmem>>, %arg5: memref<1x128xf32, #tpu.memory_space<vmem>>, %arg6: memref<1x8x128xf32, #tpu.memory_space<vmem>>) attributes {dimension_semantics = [#tpu.dimension_semantics<parallel>], iteration_bounds = array<i64: 1>, scalar_prefetch = 0 : i64, scratch_operands = 0 : i64, tpu.core_type = #tpu.core_type<tc>, window_params = [{transform_indices = @transform_0, window_bounds = array<i64: 128, 16>}, {transform_indices = @transform_1, window_bounds = array<i64: 128, 16>}, {pipeline_mode = #tpu.pipeline_mode<synchronous>, transform_indices = @transform_2, window_bounds = array<i64: 16, 6>}, {pipeline_mode = #tpu.pipeline_mode<synchronous>, transform_indices = @transform_3, window_bounds = array<i64: 16, 6>}, {pipeline_mode = #tpu.pipeline_mode<synchronous>, transform_indices = @transform_4, window_bounds = array<i64: 1, 128>}, {transform_indices = @transform_5, window_bounds = array<i64: 1, 8, 128>}]} {
    %c0 = arith.constant 0 : index
    %c0_0 = arith.constant 0 : index
    %0 = vector.load %arg1[%c0, %c0_0] : memref<128x16xf32, #tpu.memory_space<vmem>>, vector<128x16xf32>
    %c0_1 = arith.constant 0 : index
    %c0_2 = arith.constant 0 : index
    %1 = vector.load %arg2[%c0_1, %c0_2] : memref<128x16xf32, #tpu.memory_space<vmem>>, vector<128x16xf32>
    %c0_3 = arith.constant 0 : index
    %c0_4 = arith.constant 0 : index
    %2 = vector.load %arg4[%c0_3, %c0_4] : memref<16x6xf32, #tpu.memory_space<vmem>>, vector<16x6xf32>
    %c0_5 = arith.constant 0 : index
    %c0_6 = arith.constant 0 : index
    %3 = vector.load %arg3[%c0_5, %c0_6] : memref<16x6xf32, #tpu.memory_space<vmem>>, vector<16x6xf32>
    %cst = arith.constant dense<0.000000e+00> : vector<128x6xf32>
    %4 = tpu.matmul %0, %2, %cst {dimension_numbers = #tpu.dot_dimension_numbers<[1], [0], [0], [1], [0, 0, 1, 1], [], []>} : vector<128x16xf32>, vector<16x6xf32>, vector<128x6xf32> -> vector<128x6xf32>
    %5 = vector.shape_cast %4 : vector<128x6xf32> to vector<8x16x6xf32>
    "tpu.trace_start"() <{level = 10 : i32, message = "nyw,yo->nwo"}> : () -> ()
    %cst_7 = arith.constant dense<0.000000e+00> : vector<8x6x6xf32>
    %6 = tpu.matmul %5, %3, %cst_7 {dimension_numbers = #tpu.dot_dimension_numbers<[1], [0], [0, 2], [1], [0, 0, 0, 2, 1, 1], [], []>} : vector<8x16x6xf32>, vector<16x6xf32>, vector<8x6x6xf32> -> vector<8x6x6xf32>
    "tpu.trace_stop"() : () -> ()
    %cst_8 = arith.constant dense<0.000000e+00> : vector<128x6xf32>
    %7 = tpu.matmul %1, %2, %cst_8 {dimension_numbers = #tpu.dot_dimension_numbers<[1], [0], [0], [1], [0, 0, 1, 1], [], []>} : vector<128x16xf32>, vector<16x6xf32>, vector<128x6xf32> -> vector<128x6xf32>
    %8 = vector.shape_cast %7 : vector<128x6xf32> to vector<8x16x6xf32>
    "tpu.trace_start"() <{level = 10 : i32, message = "nyw,yo->nwo"}> : () -> ()
    %cst_9 = arith.constant dense<0.000000e+00> : vector<8x6x6xf32>
    %9 = tpu.matmul %8, %3, %cst_9 {dimension_numbers = #tpu.dot_dimension_numbers<[1], [0], [0, 2], [1], [0, 0, 0, 2, 1, 1], [], []>} : vector<8x16x6xf32>, vector<16x6xf32>, vector<8x6x6xf32> -> vector<8x6x6xf32>
    "tpu.trace_stop"() : () -> ()
    %10 = arith.mulf %0, %0 : vector<128x16xf32>
    %cst_10 = arith.constant dense<0.000000e+00> : vector<128x6xf32>
    %11 = tpu.matmul %10, %2, %cst_10 {dimension_numbers = #tpu.dot_dimension_numbers<[1], [0], [0], [1], [0, 0, 1, 1], [], []>} : vector<128x16xf32>, vector<16x6xf32>, vector<128x6xf32> -> vector<128x6xf32>
    %12 = vector.shape_cast %11 : vector<128x6xf32> to vector<8x16x6xf32>
    "tpu.trace_start"() <{level = 10 : i32, message = "nyw,yo->nwo"}> : () -> ()
    %cst_11 = arith.constant dense<0.000000e+00> : vector<8x6x6xf32>
    %13 = tpu.matmul %12, %3, %cst_11 {dimension_numbers = #tpu.dot_dimension_numbers<[1], [0], [0, 2], [1], [0, 0, 0, 2, 1, 1], [], []>} : vector<8x16x6xf32>, vector<16x6xf32>, vector<8x6x6xf32> -> vector<8x6x6xf32>
    "tpu.trace_stop"() : () -> ()
    %14 = arith.mulf %1, %1 : vector<128x16xf32>
    %cst_12 = arith.constant dense<0.000000e+00> : vector<128x6xf32>
    %15 = tpu.matmul %14, %2, %cst_12 {dimension_numbers = #tpu.dot_dimension_numbers<[1], [0], [0], [1], [0, 0, 1, 1], [], []>} : vector<128x16xf32>, vector<16x6xf32>, vector<128x6xf32> -> vector<128x6xf32>
    %16 = vector.shape_cast %15 : vector<128x6xf32> to vector<8x16x6xf32>
    "tpu.trace_start"() <{level = 10 : i32, message = "nyw,yo->nwo"}> : () -> ()
    %cst_13 = arith.constant dense<0.000000e+00> : vector<8x6x6xf32>
    %17 = tpu.matmul %16, %3, %cst_13 {dimension_numbers = #tpu.dot_dimension_numbers<[1], [0], [0, 2], [1], [0, 0, 0, 2, 1, 1], [], []>} : vector<8x16x6xf32>, vector<16x6xf32>, vector<8x6x6xf32> -> vector<8x6x6xf32>
    "tpu.trace_stop"() : () -> ()
    %18 = arith.mulf %0, %1 : vector<128x16xf32>
    %cst_14 = arith.constant dense<0.000000e+00> : vector<128x6xf32>
    %19 = tpu.matmul %18, %2, %cst_14 {dimension_numbers = #tpu.dot_dimension_numbers<[1], [0], [0], [1], [0, 0, 1, 1], [], []>} : vector<128x16xf32>, vector<16x6xf32>, vector<128x6xf32> -> vector<128x6xf32>
    %20 = vector.shape_cast %19 : vector<128x6xf32> to vector<8x16x6xf32>
    "tpu.trace_start"() <{level = 10 : i32, message = "nyw,yo->nwo"}> : () -> ()
    %cst_15 = arith.constant dense<0.000000e+00> : vector<8x6x6xf32>
    %21 = tpu.matmul %20, %3, %cst_15 {dimension_numbers = #tpu.dot_dimension_numbers<[1], [0], [0, 2], [1], [0, 0, 0, 2, 1, 1], [], []>} : vector<8x16x6xf32>, vector<16x6xf32>, vector<8x6x6xf32> -> vector<8x6x6xf32>
    "tpu.trace_stop"() : () -> ()
    %c0_16 = arith.constant 0 : index
    %c0_17 = arith.constant 0 : index
    %22 = vector.load %arg5[%c0_16, %c0_17] : memref<1x128xf32, #tpu.memory_space<vmem>>, vector<1x1xf32>
    %23 = vector.extract %22[0, 0] : f32 from vector<1x1xf32>
    %c0_18 = arith.constant 0 : index
    %c1 = arith.constant 1 : index
    %24 = vector.load %arg5[%c0_18, %c1] : memref<1x128xf32, #tpu.memory_space<vmem>>, vector<1x1xf32>
    %25 = vector.extract %24[0, 0] : f32 from vector<1x1xf32>
    %26 = arith.mulf %6, %6 : vector<8x6x6xf32>
    %27 = arith.mulf %9, %9 : vector<8x6x6xf32>
    %28 = arith.mulf %6, %9 : vector<8x6x6xf32>
    %29 = arith.subf %13, %26 : vector<8x6x6xf32>
    %30 = arith.subf %17, %27 : vector<8x6x6xf32>
    %31 = arith.subf %21, %28 : vector<8x6x6xf32>
    %cst_19 = arith.constant 2.000000e+00 : f32
    %32 = vector.broadcast %cst_19 : f32 to vector<8x6x6xf32>
    %33 = arith.mulf %32, %31 : vector<8x6x6xf32>
    %34 = vector.broadcast %25 : f32 to vector<8x6x6xf32>
    %35 = arith.addf %33, %34 : vector<8x6x6xf32>
    %36 = arith.addf %29, %30 : vector<8x6x6xf32>
    %37 = vector.broadcast %25 : f32 to vector<8x6x6xf32>
    %38 = arith.addf %36, %37 : vector<8x6x6xf32>
    %cst_20 = arith.constant 2.000000e+00 : f32
    %39 = vector.broadcast %cst_20 : f32 to vector<8x6x6xf32>
    %40 = arith.mulf %39, %28 : vector<8x6x6xf32>
    %41 = vector.broadcast %23 : f32 to vector<8x6x6xf32>
    %42 = arith.addf %40, %41 : vector<8x6x6xf32>
    %43 = arith.mulf %42, %35 : vector<8x6x6xf32>
    %44 = arith.addf %26, %27 : vector<8x6x6xf32>
    %45 = vector.broadcast %23 : f32 to vector<8x6x6xf32>
    %46 = arith.addf %44, %45 : vector<8x6x6xf32>
    %47 = arith.mulf %46, %38 : vector<8x6x6xf32>
    %48 = tpu.reciprocal %47 {approx = true} : vector<8x6x6xf32> -> vector<8x6x6xf32>
    %49 = arith.mulf %43, %48 : vector<8x6x6xf32>
    %50 = vector.shape_cast %49 : vector<8x6x6xf32> to vector<1x8x6x6xf32>
    %cst_21 = arith.constant dense<0.000000e+00> : vector<1xf32>
    %51 = vector.multi_reduction <add>, %50, %cst_21 [1, 2, 3] : vector<1x8x6x6xf32> to vector<1xf32>
    %52 = vector.shape_cast %51 : vector<1xf32> to vector<1x1x1x1xf32>
    %53 = vector.extract %52[0, 0, 0, 0] : f32 from vector<1x1x1x1xf32>
    %54 = vector.broadcast %53 : f32 to vector<1x8x128xf32>
    %c0_22 = arith.constant 0 : index
    %c0_23 = arith.constant 0 : index
    %c0_24 = arith.constant 0 : index
    %55 = vector.load %arg6[%c0_22, %c0_23, %c0_24] : memref<1x8x128xf32, #tpu.memory_space<vmem>>, vector<1x8x128xf32>
    tpu.vector_store %arg6[%c0_22, %c0_23, %c0_24], %54 {strides = array<i32>} : memref<1x8x128xf32, #tpu.memory_space<vmem>>, vector<1x8x128xf32>,
    return
  }
  func.func @transform_0(%arg0: i32) -> (i32, i32) {
    %c0_i32 = arith.constant 0 : i32
    %c0_i32_0 = arith.constant 0 : i32
    return %arg0, %c0_i32 : i32, i32
  }
  func.func @transform_1(%arg0: i32) -> (i32, i32) {
    %c0_i32 = arith.constant 0 : i32
    %c0_i32_0 = arith.constant 0 : i32
    return %arg0, %c0_i32 : i32, i32
  }
  func.func @transform_2(%arg0: i32) -> (i32, i32) {
    %c0_i32 = arith.constant 0 : i32
    %c0_i32_0 = arith.constant 0 : i32
    %c0_i32_1 = arith.constant 0 : i32
    return %c0_i32, %c0_i32_0 : i32, i32
  }
  func.func @transform_3(%arg0: i32) -> (i32, i32) {
    %c0_i32 = arith.constant 0 : i32
    %c0_i32_0 = arith.constant 0 : i32
    %c0_i32_1 = arith.constant 0 : i32
    return %c0_i32, %c0_i32_0 : i32, i32
  }
  func.func @transform_4(%arg0: i32) -> (i32, i32) {
    %c0_i32 = arith.constant 0 : i32
    %c0_i32_0 = arith.constant 0 : i32
    %c0_i32_1 = arith.constant 0 : i32
    return %c0_i32, %c0_i32_0 : i32, i32
  }
  func.func @transform_5(%arg0: i32) -> (i32, i32, i32) {
    %c0_i32 = arith.constant 0 : i32
    %c0_i32_0 = arith.constant 0 : i32
    %c0_i32_1 = arith.constant 0 : i32
    return %arg0, %c0_i32, %c0_i32_0 : i32, i32, i32
  }
}

module attributes {stable_mosaic.version = 11 : i64} {
  func.func @_ssim_kernel(%arg0: i32, %arg1: memref<128x16xf32, #tpu.memory_space<vmem>>, %arg2: memref<128x16xf32, #tpu.memory_space<vmem>>, %arg3: memref<16x6xf32, #tpu.memory_space<vmem>>, %arg4: memref<16x6xf32, #tpu.memory_space<vmem>>, %arg5: memref<1x128xf32, #tpu.memory_space<vmem>>, %arg6: memref<1x8x128xf32, #tpu.memory_space<vmem>>) attributes {dimension_semantics = [#tpu.dimension_semantics<parallel>], iteration_bounds = array<i64: 1>, scalar_prefetch = 0 : i64, scratch_operands = 0 : i64, tpu.core_type = #tpu.core_type<tc>, window_params = [{transform_indices = @transform_0, window_bounds = array<i64: 128, 16>}, {transform_indices = @transform_1, window_bounds = array<i64: 128, 16>}, {pipeline_mode = #tpu.pipeline_mode<synchronous>, transform_indices = @transform_2, window_bounds = array<i64: 16, 6>}, {pipeline_mode = #tpu.pipeline_mode<synchronous>, transform_indices = @transform_3, window_bounds = array<i64: 16, 6>}, {pipeline_mode = #tpu.pipeline_mode<synchronous>, transform_indices = @transform_4, window_bounds = array<i64: 1, 128>}, {transform_indices = @transform_5, window_bounds = array<i64: 1, 8, 128>}]} {
    %c0 = arith.constant 0 : index
    %c0_0 = arith.constant 0 : index
    %0 = vector.load %arg1[%c0, %c0_0] : memref<128x16xf32, #tpu.memory_space<vmem>>, vector<128x16xf32>
    %c0_1 = arith.constant 0 : index
    %c0_2 = arith.constant 0 : index
    %1 = vector.load %arg2[%c0_1, %c0_2] : memref<128x16xf32, #tpu.memory_space<vmem>>, vector<128x16xf32>
    %c0_3 = arith.constant 0 : index
    %c0_4 = arith.constant 0 : index
    %2 = vector.load %arg4[%c0_3, %c0_4] : memref<16x6xf32, #tpu.memory_space<vmem>>, vector<16x6xf32>
    %c0_5 = arith.constant 0 : index
    %c0_6 = arith.constant 0 : index
    %3 = vector.load %arg3[%c0_5, %c0_6] : memref<16x6xf32, #tpu.memory_space<vmem>>, vector<16x6xf32>
    %cst = arith.constant dense<0.000000e+00> : vector<128x6xf32>
    %4 = tpu.matmul %0, %2, %cst {dimension_numbers = #tpu.dot_dimension_numbers<[1], [0], [0], [1], [0, 0, 1, 1], [], []>} : vector<128x16xf32>, vector<16x6xf32>, vector<128x6xf32> -> vector<128x6xf32>
    %5 = vector.shape_cast %4 : vector<128x6xf32> to vector<8x16x6xf32>
    "tpu.trace_start"() <{level = 10 : i32, message = "nyw,yo->nwo"}> : () -> ()
    %cst_7 = arith.constant dense<0.000000e+00> : vector<8x6x6xf32>
    %6 = tpu.matmul %5, %3, %cst_7 {dimension_numbers = #tpu.dot_dimension_numbers<[1], [0], [0, 2], [1], [0, 0, 0, 2, 1, 1], [], []>} : vector<8x16x6xf32>, vector<16x6xf32>, vector<8x6x6xf32> -> vector<8x6x6xf32>
    "tpu.trace_stop"() : () -> ()
    %cst_8 = arith.constant dense<0.000000e+00> : vector<128x6xf32>
    %7 = tpu.matmul %1, %2, %cst_8 {dimension_numbers = #tpu.dot_dimension_numbers<[1], [0], [0], [1], [0, 0, 1, 1], [], []>} : vector<128x16xf32>, vector<16x6xf32>, vector<128x6xf32> -> vector<128x6xf32>
    %8 = vector.shape_cast %7 : vector<128x6xf32> to vector<8x16x6xf32>
    "tpu.trace_start"() <{level = 10 : i32, message = "nyw,yo->nwo"}> : () -> ()
    %cst_9 = arith.constant dense<0.000000e+00> : vector<8x6x6xf32>
    %9 = tpu.matmul %8, %3, %cst_9 {dimension_numbers = #tpu.dot_dimension_numbers<[1], [0], [0, 2], [1], [0, 0, 0, 2, 1, 1], [], []>} : vector<8x16x6xf32>, vector<16x6xf32>, vector<8x6x6xf32> -> vector<8x6x6xf32>
    "tpu.trace_stop"() : () -> ()
    %10 = arith.mulf %0, %0 : vector<128x16xf32>
    %cst_10 = arith.constant dense<0.000000e+00> : vector<128x6xf32>
    %11 = tpu.matmul %10, %2, %cst_10 {dimension_numbers = #tpu.dot_dimension_numbers<[1], [0], [0], [1], [0, 0, 1, 1], [], []>} : vector<128x16xf32>, vector<16x6xf32>, vector<128x6xf32> -> vector<128x6xf32>
    %12 = vector.shape_cast %11 : vector<128x6xf32> to vector<8x16x6xf32>
    "tpu.trace_start"() <{level = 10 : i32, message = "nyw,yo->nwo"}> : () -> ()
    %cst_11 = arith.constant dense<0.000000e+00> : vector<8x6x6xf32>
    %13 = tpu.matmul %12, %3, %cst_11 {dimension_numbers = #tpu.dot_dimension_numbers<[1], [0], [0, 2], [1], [0, 0, 0, 2, 1, 1], [], []>} : vector<8x16x6xf32>, vector<16x6xf32>, vector<8x6x6xf32> -> vector<8x6x6xf32>
    "tpu.trace_stop"() : () -> ()
    %14 = arith.mulf %1, %1 : vector<128x16xf32>
    %cst_12 = arith.constant dense<0.000000e+00> : vector<128x6xf32>
    %15 = tpu.matmul %14, %2, %cst_12 {dimension_numbers = #tpu.dot_dimension_numbers<[1], [0], [0], [1], [0, 0, 1, 1], [], []>} : vector<128x16xf32>, vector<16x6xf32>, vector<128x6xf32> -> vector<128x6xf32>
    %16 = vector.shape_cast %15 : vector<128x6xf32> to vector<8x16x6xf32>
    "tpu.trace_start"() <{level = 10 : i32, message = "nyw,yo->nwo"}> : () -> ()
    %cst_13 = arith.constant dense<0.000000e+00> : vector<8x6x6xf32>
    %17 = tpu.matmul %16, %3, %cst_13 {dimension_numbers = #tpu.dot_dimension_numbers<[1], [0], [0, 2], [1], [0, 0, 0, 2, 1, 1], [], []>} : vector<8x16x6xf32>, vector<16x6xf32>, vector<8x6x6xf32> -> vector<8x6x6xf32>
    "tpu.trace_stop"() : () -> ()
    %18 = arith.mulf %0, %1 : vector<128x16xf32>
    %cst_14 = arith.constant dense<0.000000e+00> : vector<128x6xf32>
    %19 = tpu.matmul %18, %2, %cst_14 {dimension_numbers = #tpu.dot_dimension_numbers<[1], [0], [0], [1], [0, 0, 1, 1], [], []>} : vector<128x16xf32>, vector<16x6xf32>, vector<128x6xf32> -> vector<128x6xf32>
    %20 = vector.shape_cast %19 : vector<128x6xf32> to vector<8x16x6xf32>
    "tpu.trace_start"() <{level = 10 : i32, message = "nyw,yo->nwo"}> : () -> ()
    %cst_15 = arith.constant dense<0.000000e+00> : vector<8x6x6xf32>
    %21 = tpu.matmul %20, %3, %cst_15 {dimension_numbers = #tpu.dot_dimension_numbers<[1], [0], [0, 2], [1], [0, 0, 0, 2, 1, 1], [], []>} : vector<8x16x6xf32>, vector<16x6xf32>, vector<8x6x6xf32> -> vector<8x6x6xf32>
    "tpu.trace_stop"() : () -> ()
    %c0_16 = arith.constant 0 : index
    %c0_17 = arith.constant 0 : index
    %22 = vector.load %arg5[%c0_16, %c0_17] : memref<1x128xf32, #tpu.memory_space<vmem>>, vector<1x1xf32>
    %23 = vector.extract %22[0, 0] : f32 from vector<1x1xf32>
    %c0_18 = arith.constant 0 : index
    %c1 = arith.constant 1 : index
    %24 = vector.load %arg5[%c0_18, %c1] : memref<1x128xf32, #tpu.memory_space<vmem>>, vector<1x1xf32>
    %25 = vector.extract %24[0, 0] : f32 from vector<1x1xf32>
    %26 = arith.mulf %6, %6 : vector<8x6x6xf32>
    %27 = arith.mulf %9, %9 : vector<8x6x6xf32>
    %28 = arith.mulf %6, %9 : vector<8x6x6xf32>
    %29 = arith.subf %13, %26 : vector<8x6x6xf32>
    %30 = arith.subf %17, %27 : vector<8x6x6xf32>
    %31 = arith.subf %21, %28 : vector<8x6x6xf32>
    %cst_19 = arith.constant 2.000000e+00 : f32
    %32 = vector.broadcast %cst_19 : f32 to vector<8x6x6xf32>
    %33 = arith.mulf %32, %31 : vector<8x6x6xf32>
    %34 = vector.broadcast %25 : f32 to vector<8x6x6xf32>
    %35 = arith.addf %33, %34 : vector<8x6x6xf32>
    %36 = arith.addf %29, %30 : vector<8x6x6xf32>
    %37 = vector.broadcast %25 : f32 to vector<8x6x6xf32>
    %38 = arith.addf %36, %37 : vector<8x6x6xf32>
    %cst_20 = arith.constant 2.000000e+00 : f32
    %39 = vector.broadcast %cst_20 : f32 to vector<8x6x6xf32>
    %40 = arith.mulf %39, %28 : vector<8x6x6xf32>
    %41 = vector.broadcast %23 : f32 to vector<8x6x6xf32>
    %42 = arith.addf %40, %41 : vector<8x6x6xf32>
    %43 = arith.mulf %42, %35 : vector<8x6x6xf32>
    %44 = arith.addf %26, %27 : vector<8x6x6xf32>
    %45 = vector.broadcast %23 : f32 to vector<8x6x6xf32>
    %46 = arith.addf %44, %45 : vector<8x6x6xf32>
    %47 = arith.mulf %46, %38 : vector<8x6x6xf32>
    %48 = tpu.reciprocal %47 {approx = true} : vector<8x6x6xf32> -> vector<8x6x6xf32>
    %49 = arith.mulf %43, %48 : vector<8x6x6xf32>
    %50 = vector.shape_cast %49 : vector<8x6x6xf32> to vector<1x8x6x6xf32>
    %cst_21 = arith.constant dense<0.000000e+00> : vector<1xf32>
    %51 = vector.multi_reduction <add>, %50, %cst_21 [1, 2, 3] : vector<1x8x6x6xf32> to vector<1xf32>
    %52 = vector.shape_cast %51 : vector<1xf32> to vector<1x1x1x1xf32>
    %53 = vector.extract %52[0, 0, 0, 0] : f32 from vector<1x1x1x1xf32>
    %54 = vector.broadcast %53 : f32 to vector<1x8x128xf32>
    %c0_22 = arith.constant 0 : index
    %c0_23 = arith.constant 0 : index
    %c0_24 = arith.constant 0 : index
    %55 = vector.load %arg6[%c0_22, %c0_23, %c0_24] : memref<1x8x128xf32, #tpu.memory_space<vmem>>, vector<1x8x128xf32>
    tpu.vector_store %arg6[%c0_22, %c0_23, %c0_24], %54 {strides = array<i32>} : memref<1x8x128xf32, #tpu.memory_space<vmem>>, vector<1x8x128xf32>,
    return
  }
  func.func @transform_0(%arg0: i32) -> (i32, i32) {
    %c0_i32 = arith.constant 0 : i32
    %c0_i32_0 = arith.constant 0 : i32
    return %arg0, %c0_i32 : i32, i32
  }
  func.func @transform_1(%arg0: i32) -> (i32, i32) {
    %c0_i32 = arith.constant 0 : i32
    %c0_i32_0 = arith.constant 0 : i32
    return %arg0, %c0_i32 : i32, i32
  }
  func.func @transform_2(%arg0: i32) -> (i32, i32) {
    %c0_i32 = arith.constant 0 : i32
    %c0_i32_0 = arith.constant 0 : i32
    %c0_i32_1 = arith.constant 0 : i32
    return %c0_i32, %c0_i32_0 : i32, i32
  }
  func.func @transform_3(%arg0: i32) -> (i32, i32) {
    %c0_i32 = arith.constant 0 : i32
    %c0_i32_0 = arith.constant 0 : i32
    %c0_i32_1 = arith.constant 0 : i32
    return %c0_i32, %c0_i32_0 : i32, i32
  }
  func.func @transform_4(%arg0: i32) -> (i32, i32) {
    %c0_i32 = arith.constant 0 : i32
    %c0_i32_0 = arith.constant 0 : i32
    %c0_i32_1 = arith.constant 0 : i32
    return %c0_i32, %c0_i32_0 : i32, i32
  }
  func.func @transform_5(%arg0: i32) -> (i32, i32, i32) {
    %c0_i32 = arith.constant 0 : i32
    %c0_i32_0 = arith.constant 0 : i32
    %c0_i32_1 = arith.constant 0 : i32
    return %arg0, %c0_i32, %c0_i32_0 : i32, i32, i32
  }
}

</mosaic_0001>

<llo_original>
// kernel: tpu_custom_call.1
$region0: #{tpu_custom_call.1}
  #allocation0 [shape = 'u32[]', space=smem, size = 0x4, offset = 0x4, fixed_abs, tag = 'smem constant byte address 0x4 - core index']
  #allocation1 [shape = 'u32[144,128]{1,0:T(1,128)}', space=vmem, size = 0x12000, scoped, tag = 'internal scratch']
  %s0 = inlined_call_operand.vmem [shape: f32[128,16], index: 0, kind: input, shape index: {}]
  %s1 = inlined_call_operand.vmem [shape: f32[128,16], index: 1, kind: input, shape index: {}]
  %s2 = inlined_call_operand.vmem [shape: f32[16,6], index: 2, kind: input, shape index: {}]
  %s3 = inlined_call_operand.vmem [shape: f32[16,6], index: 3, kind: input, shape index: {}]
  %s4 = inlined_call_operand.vmem [shape: f32[1,128], index: 4, kind: input, shape index: {}]
  %s5 = inlined_call_operand.hbm [shape: f32[1,8,128], index: 5, kind: output, shape index: {}]
  %s6 = sld [smem:[#allocation0]]
  $region30: #{tpu_custom_call.1} parent=0
    _
  %s8 = ssub.s32 1, %s6
  %s9 = scalar_select 0, %s8, %s6
  $region1: #{tpu_custom_call.1} parent=0
    #allocation2 [shape = 'u8[4096]{0}', space=vmem, size = 0x1000, scoped, tag = 'output window, operand 0, single buffered']
    #allocation3 [shape = 's32[1]{0}', space=sflag, size = 0x4, scoped, tag = 'scoped memory for tpu_custom_call.1']
    %10 = vsyncpa [#allocation3], 0
    // Predicated region
    $region2: #{tpu_custom_call.1} parent=1 // pred_check
      _
    $region3: #{tpu_custom_call.1} parent=1 // pred_check_branch
      %12 = sbr.rel (0) target = $region5
    $region4: #{tpu_custom_call.1} parent=1 // pred_region
      _
    $region5: #{tpu_custom_call.1} parent=1 // pred_fallthru
      _
    // Predicated region
    $region6: #{tpu_custom_call.1} parent=1 // pred_check
      _
    $region7: #{tpu_custom_call.1} parent=1 // pred_check_branch
      %14 = sbr.rel (0) target = $region9
    $region8: #{tpu_custom_call.1} parent=1 // pred_region
      _
    $region9: #{tpu_custom_call.1} parent=1 // pred_fallthru
      _
    // Predicated region
    $region10: #{tpu_custom_call.1} parent=1 // pred_check
      _
    $region11: #{tpu_custom_call.1} parent=1 // pred_check_branch
      %16 = sbr.rel (0) target = $region13
    $region12: #{tpu_custom_call.1} parent=1 // pred_region
      _
    $region13: #{tpu_custom_call.1} parent=1 // pred_fallthru
      _
    // Predicated region
    $region14: #{tpu_custom_call.1} parent=1 // pred_check
      _
    $region15: #{tpu_custom_call.1} parent=1 // pred_check_branch
      %18 = sbr.rel (0) target = $region17
    $region16: #{tpu_custom_call.1} parent=1 // pred_region
      _
    $region17: #{tpu_custom_call.1} parent=1 // pred_fallthru
      _
    // Predicated region
    $region18: #{tpu_custom_call.1} parent=1 // pred_check
      _
    $region19: #{tpu_custom_call.1} parent=1 // pred_check_branch
      %20 = sbr.rel (0) target = $region21
    $region20: #{tpu_custom_call.1} parent=1 // pred_region
      _
    $region21: #{tpu_custom_call.1} parent=1 // pred_fallthru
      _
    %v21 = vld [vmem:[%s0] sm:$0xff]
    %v22 = vld [vmem:[%s0 + $0x8] sm:$0xff]
    %v23 = vld [vmem:[%s0 + $0x10] sm:$0xff]
    %v24 = vld [vmem:[%s0 + $0x18] sm:$0xff]
    %v25 = vld [vmem:[%s0 + $0x20] sm:$0xff]
    %v26 = vld [vmem:[%s0 + $0x28] sm:$0xff]
    %v27 = vld [vmem:[%s0 + $0x30] sm:$0xff]
    %v28 = vld [vmem:[%s0 + $0x38] sm:$0xff]
    %v29 = vld [vmem:[%s0 + $0x40] sm:$0xff]
    %v30 = vld [vmem:[%s0 + $0x48] sm:$0xff]
    %v31 = vld [vmem:[%s0 + $0x50] sm:$0xff]
    %v32 = vld [vmem:[%s0 + $0x58] sm:$0xff]
    %v33 = vld [vmem:[%s0 + $0x60] sm:$0xff]
    %v34 = vld [vmem:[%s0 + $0x68] sm:$0xff]
    %v35 = vld [vmem:[%s0 + $0x70] sm:$0xff]
    %v36 = vld [vmem:[%s0 + $0x78] sm:$0xff]
    %v37 = vld [vmem:[%s1] sm:$0xff]
    %v38 = vld [vmem:[%s1 + $0x8] sm:$0xff]
    %v39 = vld [vmem:[%s1 + $0x10] sm:$0xff]
    %v40 = vld [vmem:[%s1 + $0x18] sm:$0xff]
    %v41 = vld [vmem:[%s1 + $0x20] sm:$0xff]
    %v42 = vld [vmem:[%s1 + $0x28] sm:$0xff]
    %v43 = vld [vmem:[%s1 + $0x30] sm:$0xff]
    %v44 = vld [vmem:[%s1 + $0x38] sm:$0xff]
    %v45 = vld [vmem:[%s1 + $0x40] sm:$0xff]
    %v46 = vld [vmem:[%s1 + $0x48] sm:$0xff]
    %v47 = vld [vmem:[%s1 + $0x50] sm:$0xff]
    %v48 = vld [vmem:[%s1 + $0x58] sm:$0xff]
    %v49 = vld [vmem:[%s1 + $0x60] sm:$0xff]
    %v50 = vld [vmem:[%s1 + $0x68] sm:$0xff]
    %v51 = vld [vmem:[%s1 + $0x70] sm:$0xff]
    %v52 = vld [vmem:[%s1 + $0x78] sm:$0xff]
    %v53 = vld [vmem:[%s3] sm:$0xff]
    %v54 = vld [vmem:[%s3 + $0x8] sm:$0xff]
    %v55 = vld [vmem:[%s2] sm:$0xff]
    %v56 = vld [vmem:[%s2 + $0x8] sm:$0xff]
    %vm57 = vcmask 130048
    %v59 = vsel %vm57, %v21, 0
    %v62 = vsel %vm57, %v22, 0
    %v65 = vsel %vm57, %v23, 0
    %v68 = vsel %vm57, %v24, 0
    %v71 = vsel %vm57, %v25, 0
    %v74 = vsel %vm57, %v26, 0
    %v77 = vsel %vm57, %v27, 0
    %v80 = vsel %vm57, %v28, 0
    %v83 = vsel %vm57, %v29, 0
    %v86 = vsel %vm57, %v30, 0
    %v89 = vsel %vm57, %v31, 0
    %v92 = vsel %vm57, %v32, 0
    %v95 = vsel %vm57, %v33, 0
    %v98 = vsel %vm57, %v34, 0
    %v101 = vsel %vm57, %v35, 0
    %v104 = vsel %vm57, %v36, 0
    %106 = vmatprep.subr.mxu0 0.0
    %107 = vmatpush1.msra.mxu0 %v53
    %108 = vmatprep.subr.mxu0 0.0
    %109 = vmatpush1.msra.mxu0 %v54
    %110 = vmatprep.subr.mxu0 0.0
    %111 = vmatpush1.msra.mxu0 0.0
    %112 = vmatprep.subr.mxu0 0.0
    %113 = vmatpush1.msra.mxu0 0.0
    %114 = vmatprep.subr.mxu0 0.0
    %115 = vmatpush1.msra.mxu0 0.0
    %116 = vmatprep.subr.mxu0 0.0
    %117 = vmatpush1.msra.mxu0 0.0
    %118 = vmatprep.subr.mxu0 0.0
    %119 = vmatpush1.msra.mxu0 0.0
    %120 = vmatprep.subr.mxu0 0.0
    %121 = vmatpush1.msra.mxu0 0.0
    %122 = vmatprep.subr.mxu0 0.0
    %123 = vmatpush1.msra.mxu0 0.0
    %124 = vmatprep.subr.mxu0 0.0
    %125 = vmatpush1.msra.mxu0 0.0
    %126 = vmatprep.subr.mxu0 0.0
    %127 = vmatpush1.msra.mxu0 0.0
    %128 = vmatprep.subr.mxu0 0.0
    %129 = vmatpush1.msra.mxu0 0.0
    %130 = vmatprep.subr.mxu0 0.0
    %131 = vmatpush1.msra.mxu0 0.0
    %132 = vmatprep.subr.mxu0 0.0
    %133 = vmatpush1.msra.mxu0 0.0
    %134 = vmatprep.subr.mxu0 0.0
    %135 = vmatpush1.msra.mxu0 0.0
    %136 = vmatprep.subr.mxu0 0.0
    %137 = vmatpush1.msra.mxu0 0.0
    %138 = vmatprep.subr.mxu0 0.0
    %139 = vmatpush1.msra.mxu0 0.0
    %140 = vmatprep.subr.mxu0 0.0
    %141 = vmatpush1.msra.mxu0 0.0
    %142 = vmatprep.subr.mxu0 0.0
    %143 = vmatpush1.msra.mxu0 0.0
    %144 = vmatprep.subr.mxu0 0.0
    %145 = vmatpush1.msra.mxu0 0.0
    %146 = vmatprep.subr.mxu0 0.0
    %147 = vmatpush1.msra.mxu0 0.0
    %148 = vmatprep.subr.mxu0 0.0
    %149 = vmatpush1.msra.mxu0 0.0
    %150 = vmatprep.subr.mxu0 0.0
    %151 = vmatpush1.msra.mxu0 0.0
    %152 = vmatprep.subr.mxu0 0.0
    %153 = vmatpush1.msra.mxu0 0.0
    %154 = vmatprep.subr.mxu0 0.0
    %155 = vmatpush1.msra.mxu0 0.0
    %156 = vmatprep.subr.mxu0 0.0
    %157 = vmatpush1.msra.mxu0 0.0
    %158 = vmatprep.subr.mxu0 0.0
    %159 = vmatpush1.msra.mxu0 0.0
    %160 = vmatprep.subr.mxu0 0.0
    %161 = vmatpush1.msra.mxu0 0.0
    %162 = vmatprep.subr.mxu0 0.0
    %163 = vmatpush1.msra.mxu0 0.0
    %164 = vmatprep.subr.mxu0 0.0
    %165 = vmatpush1.msra.mxu0 0.0
    %166 = vmatprep.subr.mxu0 0.0
    %167 = vmatpush1.msra.mxu0 0.0
    %168 = vmatprep.subr.mxu0 0.0
    %169 = vmatpush1.msra.mxu0 0.0
    %170 = vmatprep.mubr.f32.mxu0 0.0
    %171 = vmatmul.mubr.f32.gmra.mrb[0].mxu0 %v59
    %v172 = vpop.f32.mrb[0].mxu0
    %v173 = vadd.f32 0.0, %v172
    %v174 = vpop.f32.mrb[0].mxu0
    %175 = vmatprep.mubr.f32.mxu0 0.0
    %176 = vmatmul.mubr.f32.gmra.mrb[0].mxu0 %v62
    %v177 = vpop.f32.mrb[0].mxu0
    %v178 = vadd.f32 0.0, %v177
    %v179 = vpop.f32.mrb[0].mxu0
    %180 = vmatprep.mubr.f32.mxu0 0.0
    %181 = vmatmul.mubr.f32.gmra.mrb[0].mxu0 %v65
    %v182 = vpop.f32.mrb[0].mxu0
    %v183 = vadd.f32 0.0, %v182
    %v184 = vpop.f32.mrb[0].mxu0
    %185 = vmatprep.mubr.f32.mxu0 0.0
    %186 = vmatmul.mubr.f32.gmra.mrb[0].mxu0 %v68
    %v187 = vpop.f32.mrb[0].mxu0
    %v188 = vadd.f32 0.0, %v187
    %v189 = vpop.f32.mrb[0].mxu0
    %190 = vmatprep.mubr.f32.mxu0 0.0
    %191 = vmatmul.mubr.f32.gmra.mrb[0].mxu0 %v71
    %v192 = vpop.f32.mrb[0].mxu0
    %v193 = vadd.f32 0.0, %v192
    %v194 = vpop.f32.mrb[0].mxu0
    %195 = vmatprep.mubr.f32.mxu0 0.0
    %196 = vmatmul.mubr.f32.gmra.mrb[0].mxu0 %v74
    %v197 = vpop.f32.mrb[0].mxu0
    %v198 = vadd.f32 0.0, %v197
    %v199 = vpop.f32.mrb[0].mxu0
    %200 = vmatprep.mubr.f32.mxu0 0.0
    %201 = vmatmul.mubr.f32.gmra.mrb[0].mxu0 %v77
    %v202 = vpop.f32.mrb[0].mxu0
    %v203 = vadd.f32 0.0, %v202
    %v204 = vpop.f32.mrb[0].mxu0
    %205 = vmatprep.mubr.f32.mxu0 0.0
    %206 = vmatmul.mubr.f32.gmra.mrb[0].mxu0 %v80
    %v207 = vpop.f32.mrb[0].mxu0
    %v208 = vadd.f32 0.0, %v207
    %v209 = vpop.f32.mrb[0].mxu0
    %210 = vmatprep.mubr.f32.mxu0 0.0
    %211 = vmatmul.mubr.f32.gmra.mrb[0].mxu0 %v83
    %v212 = vpop.f32.mrb[0].mxu0
    %v213 = vadd.f32 0.0, %v212
    %v214 = vpop.f32.mrb[0].mxu0
    %215 = vmatprep.mubr.f32.mxu0 0.0
    %216 = vmatmul.mubr.f32.gmra.mrb[0].mxu0 %v86
    %v217 = vpop.f32.mrb[0].mxu0
    %v218 = vadd.f32 0.0, %v217
    %v219 = vpop.f32.mrb[0].mxu0
    %220 = vmatprep.mubr.f32.mxu0 0.0
    %221 = vmatmul.mubr.f32.gmra.mrb[0].mxu0 %v89
    %v222 = vpop.f32.mrb[0].mxu0
    %v223 = vadd.f32 0.0, %v222
    %v224 = vpop.f32.mrb[0].mxu0
    %225 = vmatprep.mubr.f32.mxu0 0.0
    %226 = vmatmul.mubr.f32.gmra.mrb[0].mxu0 %v92
    %v227 = vpop.f32.mrb[0].mxu0
    %v228 = vadd.f32 0.0, %v227
    %v229 = vpop.f32.mrb[0].mxu0
    %230 = vmatprep.mubr.f32.mxu0 0.0
    %231 = vmatmul.mubr.f32.gmra.mrb[0].mxu0 %v95
    %v232 = vpop.f32.mrb[0].mxu0
    %v233 = vadd.f32 0.0, %v232
    %v234 = vpop.f32.mrb[0].mxu0
    %235 = vmatprep.mubr.f32.mxu0 0.0
    %236 = vmatmul.mubr.f32.gmra.mrb[0].mxu0 %v98
    %v237 = vpop.f32.mrb[0].mxu0
    %v238 = vadd.f32 0.0, %v237
    %v239 = vpop.f32.mrb[0].mxu0
    %240 = vmatprep.mubr.f32.mxu0 0.0
    %241 = vmatmul.mubr.f32.gmra.mrb[0].mxu0 %v101
    %v242 = vpop.f32.mrb[0].mxu0
    %v243 = vadd.f32 0.0, %v242
    %v244 = vpop.f32.mrb[0].mxu0
    %245 = vmatprep.mubr.f32.mxu0 0.0
    %246 = vmatmul.mubr.f32.gmra.mrb[0].mxu0 %v104
    %v247 = vpop.f32.mrb[0].mxu0
    %v248 = vadd.f32 0.0, %v247
    %v249 = vpop.f32.mrb[0].mxu0
    %250 = vdwg.mxu0
    %251 = vxpose.xlu0.b32.start [1/16] %v173, 128
    %252 = vxpose.xlu0.b32.cont [2/16] %v178, 128
    %253 = vxpose.xlu0.b32.cont [3/16] 0.0, 128
    %254 = vxpose.xlu0.b32.cont [4/16] 0.0, 128
    %255 = vxpose.xlu0.b32.cont [5/16] 0.0, 128
    %256 = vxpose.xlu0.b32.cont [6/16] 0.0, 128
    %257 = vxpose.xlu0.b32.cont [7/16] 0.0, 128
    %258 = vxpose.xlu0.b32.cont [8/16] 0.0, 128
    %259 = vxpose.xlu0.b32.cont [9/16] 0.0, 128
    %260 = vxpose.xlu0.b32.cont [10/16] 0.0, 128
    %261 = vxpose.xlu0.b32.cont [11/16] 0.0, 128
    %262 = vxpose.xlu0.b32.cont [12/16] 0.0, 128
    %263 = vxpose.xlu0.b32.cont [13/16] 0.0, 128
    %264 = vxpose.xlu0.b32.cont [14/16] 0.0, 128
    %265 = vxpose.xlu0.b32.cont [15/16] 0.0, 128
    %266 = vxpose.xlu0.b32.end [16/16] 0.0, 128
    %v267 = vpop.trf.xlu0
    %v268 = vpop.trf.xlu0
    %v269 = vpop.trf.xlu0
    %v270 = vpop.trf.xlu0
    %v271 = vpop.trf.xlu0
    %v272 = vpop.trf.xlu0
    %v273 = vpop.trf.xlu0
    %v274 = vpop.trf.xlu0
    %v275 = vpop.trf.xlu0
    %v276 = vpop.trf.xlu0
    %v277 = vpop.trf.xlu0
    %v278 = vpop.trf.xlu0
    %v279 = vpop.trf.xlu0
    %v280 = vpop.trf.xlu0
    %v281 = vpop.trf.xlu0
    %v282 = vpop.trf.xlu0
    %283 = vxpose.xlu0.b32.start [1/16] %v183, 128
    %284 = vxpose.xlu0.b32.cont [2/16] %v188, 128
    %285 = vxpose.xlu0.b32.cont [3/16] 0.0, 128
    %286 = vxpose.xlu0.b32.cont [4/16] 0.0, 128
    %287 = vxpose.xlu0.b32.cont [5/16] 0.0, 128
    %288 = vxpose.xlu0.b32.cont [6/16] 0.0, 128
    %289 = vxpose.xlu0.b32.cont [7/16] 0.0, 128
    %290 = vxpose.xlu0.b32.cont [8/16] 0.0, 128
    %291 = vxpose.xlu0.b32.cont [9/16] 0.0, 128
    %292 = vxpose.xlu0.b32.cont [10/16] 0.0, 128
    %293 = vxpose.xlu0.b32.cont [11/16] 0.0, 128
    %294 = vxpose.xlu0.b32.cont [12/16] 0.0, 128
    %295 = vxpose.xlu0.b32.cont [13/16] 0.0, 128
    %296 = vxpose.xlu0.b32.cont [14/16] 0.0, 128
    %297 = vxpose.xlu0.b32.cont [15/16] 0.0, 128
    %298 = vxpose.xlu0.b32.end [16/16] 0.0, 128
    %v299 = vpop.trf.xlu0
    %v300 = vpop.trf.xlu0
    %v301 = vpop.trf.xlu0
    %v302 = vpop.trf.xlu0
    %v303 = vpop.trf.xlu0
    %v304 = vpop.trf.xlu0
    %v305 = vpop.trf.xlu0
    %v306 = vpop.trf.xlu0
    %v307 = vpop.trf.xlu0
    %v308 = vpop.trf.xlu0
    %v309 = vpop.trf.xlu0
    %v310 = vpop.trf.xlu0
    %v311 = vpop.trf.xlu0
    %v312 = vpop.trf.xlu0
    %v313 = vpop.trf.xlu0
    %v314 = vpop.trf.xlu0
    %315 = vxpose.xlu0.b32.start [1/16] %v193, 128
    %316 = vxpose.xlu0.b32.cont [2/16] %v198, 128
    %317 = vxpose.xlu0.b32.cont [3/16] 0.0, 128
    %318 = vxpose.xlu0.b32.cont [4/16] 0.0, 128
    %319 = vxpose.xlu0.b32.cont [5/16] 0.0, 128
    %320 = vxpose.xlu0.b32.cont [6/16] 0.0, 128
    %321 = vxpose.xlu0.b32.cont [7/16] 0.0, 128
    %322 = vxpose.xlu0.b32.cont [8/16] 0.0, 128
    %323 = vxpose.xlu0.b32.cont [9/16] 0.0, 128
    %324 = vxpose.xlu0.b32.cont [10/16] 0.0, 128
    %325 = vxpose.xlu0.b32.cont [11/16] 0.0, 128
    %326 = vxpose.xlu0.b32.cont [12/16] 0.0, 128
    %327 = vxpose.xlu0.b32.cont [13/16] 0.0, 128
    %328 = vxpose.xlu0.b32.cont [14/16] 0.0, 128
    %329 = vxpose.xlu0.b32.cont [15/16] 0.0, 128
    %330 = vxpose.xlu0.b32.end [16/16] 0.0, 128
    %v331 = vpop.trf.xlu0
    %v332 = vpop.trf.xlu0
    %v333 = vpop.trf.xlu0
    %v334 = vpop.trf.xlu0
    %v335 = vpop.trf.xlu0
    %v336 = vpop.trf.xlu0
    %v337 = vpop.trf.xlu0
    %v338 = vpop.trf.xlu0
    %v339 = vpop.trf.xlu0
    %v340 = vpop.trf.xlu0
    %v341 = vpop.trf.xlu0
    %v342 = vpop.trf.xlu0
    %v343 = vpop.trf.xlu0
    %v344 = vpop.trf.xlu0
    %v345 = vpop.trf.xlu0
    %v346 = vpop.trf.xlu0
    %347 = vxpose.xlu0.b32.start [1/16] %v203, 128
    %348 = vxpose.xlu0.b32.cont [2/16] %v208, 128
    %349 = vxpose.xlu0.b32.cont [3/16] 0.0, 128
    %350 = vxpose.xlu0.b32.cont [4/16] 0.0, 128
    %351 = vxpose.xlu0.b32.cont [5/16] 0.0, 128
    %352 = vxpose.xlu0.b32.cont [6/16] 0.0, 128
    %353 = vxpose.xlu0.b32.cont [7/16] 0.0, 128
    %354 = vxpose.xlu0.b32.cont [8/16] 0.0, 128
    %355 = vxpose.xlu0.b32.cont [9/16] 0.0, 128
    %356 = vxpose.xlu0.b32.cont [10/16] 0.0, 128
    %357 = vxpose.xlu0.b32.cont [11/16] 0.0, 128
    %358 = vxpose.xlu0.b32.cont [12/16] 0.0, 128
    %359 = vxpose.xlu0.b32.cont [13/16] 0.0, 128
    %360 = vxpose.xlu0.b32.cont [14/16] 0.0, 128
    %361 = vxpose.xlu0.b32.cont [15/16] 0.0, 128
    %362 = vxpose.xlu0.b32.end [16/16] 0.0, 128
    %v363 = vpop.trf.xlu0
    %v364 = vpop.trf.xlu0
    %v365 = vpop.trf.xlu0
    %v366 = vpop.trf.xlu0
    %v367 = vpop.trf.xlu0
    %v368 = vpop.trf.xlu0
    %v369 = vpop.trf.xlu0
    %v370 = vpop.trf.xlu0
    %v371 = vpop.trf.xlu0
    %v372 = vpop.trf.xlu0
    %v373 = vpop.trf.xlu0
    %v374 = vpop.trf.xlu0
    %v375 = vpop.trf.xlu0
    %v376 = vpop.trf.xlu0
    %v377 = vpop.trf.xlu0
    %v378 = vpop.trf.xlu0
    %379 = vxpose.xlu0.b32.start [1/16] %v213, 128
    %380 = vxpose.xlu0.b32.cont [2/16] %v218, 128
    %381 = vxpose.xlu0.b32.cont [3/16] 0.0, 128
    %382 = vxpose.xlu0.b32.cont [4/16] 0.0, 128
    %383 = vxpose.xlu0.b32.cont [5/16] 0.0, 128
    %384 = vxpose.xlu0.b32.cont [6/16] 0.0, 128
    %385 = vxpose.xlu0.b32.cont [7/16] 0.0, 128
    %386 = vxpose.xlu0.b32.cont [8/16] 0.0, 128
    %387 = vxpose.xlu0.b32.cont [9/16] 0.0, 128
    %388 = vxpose.xlu0.b32.cont [10/16] 0.0, 128
    %389 = vxpose.xlu0.b32.cont [11/16] 0.0, 128
    %390 = vxpose.xlu0.b32.cont [12/16] 0.0, 128
    %391 = vxpose.xlu0.b32.cont [13/16] 0.0, 128
    %392 = vxpose.xlu0.b32.cont [14/16] 0.0, 128
    %393 = vxpose.xlu0.b32.cont [15/16] 0.0, 128
    %394 = vxpose.xlu0.b32.end [16/16] 0.0, 128
    %v395 = vpop.trf.xlu0
    %v396 = vpop.trf.xlu0
    %v397 = vpop.trf.xlu0
    %v398 = vpop.trf.xlu0
    %v399 = vpop.trf.xlu0
    %v400 = vpop.trf.xlu0
    %v401 = vpop.trf.xlu0
    %v402 = vpop.trf.xlu0
    %v403 = vpop.trf.xlu0
    %v404 = vpop.trf.xlu0
    %v405 = vpop.trf.xlu0
    %v406 = vpop.trf.xlu0
    %v407 = vpop.trf.xlu0
    %v408 = vpop.trf.xlu0
    %v409 = vpop.trf.xlu0
    %v410 = vpop.trf.xlu0
    %411 = vxpose.xlu0.b32.start [1/16] %v223, 128
    %412 = vxpose.xlu0.b32.cont [2/16] %v228, 128
    %413 = vxpose.xlu0.b32.cont [3/16] 0.0, 128
    %414 = vxpose.xlu0.b32.cont [4/16] 0.0, 128
    %415 = vxpose.xlu0.b32.cont [5/16] 0.0, 128
    %416 = vxpose.xlu0.b32.cont [6/16] 0.0, 128
    %417 = vxpose.xlu0.b32.cont [7/16] 0.0, 128
    %418 = vxpose.xlu0.b32.cont [8/16] 0.0, 128
    %419 = vxpose.xlu0.b32.cont [9/16] 0.0, 128
    %420 = vxpose.xlu0.b32.cont [10/16] 0.0, 128
    %421 = vxpose.xlu0.b32.cont [11/16] 0.0, 128
    %422 = vxpose.xlu0.b32.cont [12/16] 0.0, 128
    %423 = vxpose.xlu0.b32.cont [13/16] 0.0, 128
    %424 = vxpose.xlu0.b32.cont [14/16] 0.0, 128
    %425 = vxpose.xlu0.b32.cont [15/16] 0.0, 128
    %426 = vxpose.xlu0.b32.end [16/16] 0.0, 128
    %v427 = vpop.trf.xlu0
    %v428 = vpop.trf.xlu0
    %v429 = vpop.trf.xlu0
    %v430 = vpop.trf.xlu0
    %v431 = vpop.trf.xlu0
    %v432 = vpop.trf.xlu0
    %v433 = vpop.trf.xlu0
    %v434 = vpop.trf.xlu0
    %v435 = vpop.trf.xlu0
    %v436 = vpop.trf.xlu0
    %v437 = vpop.trf.xlu0
    %v438 = vpop.trf.xlu0
    %v439 = vpop.trf.xlu0
    %v440 = vpop.trf.xlu0
    %v441 = vpop.trf.xlu0
    %v442 = vpop.trf.xlu0
    %443 = vxpose.xlu0.b32.start [1/16] %v233, 128
    %444 = vxpose.xlu0.b32.cont [2/16] %v238, 128
    %445 = vxpose.xlu0.b32.cont [3/16] 0.0, 128
    %446 = vxpose.xlu0.b32.cont [4/16] 0.0, 128
    %447 = vxpose.xlu0.b32.cont [5/16] 0.0, 128
    %448 = vxpose.xlu0.b32.cont [6/16] 0.0, 128
    %449 = vxpose.xlu0.b32.cont [7/16] 0.0, 128
    %450 = vxpose.xlu0.b32.cont [8/16] 0.0, 128
    %451 = vxpose.xlu0.b32.cont [9/16] 0.0, 128
    %452 = vxpose.xlu0.b32.cont [10/16] 0.0, 128
    %453 = vxpose.xlu0.b32.cont [11/16] 0.0, 128
    %454 = vxpose.xlu0.b32.cont [12/16] 0.0, 128
    %455 = vxpose.xlu0.b32.cont [13/16] 0.0, 128
    %456 = vxpose.xlu0.b32.cont [14/16] 0.0, 128
    %457 = vxpose.xlu0.b32.cont [15/16] 0.0, 128
    %458 = vxpose.xlu0.b32.end [16/16] 0.0, 128
    %v459 = vpop.trf.xlu0
    %v460 = vpop.trf.xlu0
    %v461 = vpop.trf.xlu0
    %v462 = vpop.trf.xlu0
    %v463 = vpop.trf.xlu0
    %v464 = vpop.trf.xlu0
    %v465 = vpop.trf.xlu0
    %v466 = vpop.trf.xlu0
    %v467 = vpop.trf.xlu0
    %v468 = vpop.trf.xlu0
    %v469 = vpop.trf.xlu0
    %v470 = vpop.trf.xlu0
    %v471 = vpop.trf.xlu0
    %v472 = vpop.trf.xlu0
    %v473 = vpop.trf.xlu0
    %v474 = vpop.trf.xlu0
    %475 = vxpose.xlu0.b32.start [1/16] %v243, 128
    %476 = vxpose.xlu0.b32.cont [2/16] %v248, 128
    %477 = vxpose.xlu0.b32.cont [3/16] 0.0, 128
    %478 = vxpose.xlu0.b32.cont [4/16] 0.0, 128
    %479 = vxpose.xlu0.b32.cont [5/16] 0.0, 128
    %480 = vxpose.xlu0.b32.cont [6/16] 0.0, 128
    %481 = vxpose.xlu0.b32.cont [7/16] 0.0, 128
    %482 = vxpose.xlu0.b32.cont [8/16] 0.0, 128
    %483 = vxpose.xlu0.b32.cont [9/16] 0.0, 128
    %484 = vxpose.xlu0.b32.cont [10/16] 0.0, 128
    %485 = vxpose.xlu0.b32.cont [11/16] 0.0, 128
    %486 = vxpose.xlu0.b32.cont [12/16] 0.0, 128
    %487 = vxpose.xlu0.b32.cont [13/16] 0.0, 128
    %488 = vxpose.xlu0.b32.cont [14/16] 0.0, 128
    %489 = vxpose.xlu0.b32.cont [15/16] 0.0, 128
    %490 = vxpose.xlu0.b32.end [16/16] 0.0, 128
    %v491 = vpop.trf.xlu0
    %v492 = vpop.trf.xlu0
    %v493 = vpop.trf.xlu0
    %v494 = vpop.trf.xlu0
    %v495 = vpop.trf.xlu0
    %v496 = vpop.trf.xlu0
    %v497 = vpop.trf.xlu0
    %v498 = vpop.trf.xlu0
    %v499 = vpop.trf.xlu0
    %v500 = vpop.trf.xlu0
    %v501 = vpop.trf.xlu0
    %v502 = vpop.trf.xlu0
    %v503 = vpop.trf.xlu0
    %v504 = vpop.trf.xlu0
    %v505 = vpop.trf.xlu0
    %v506 = vpop.trf.xlu0
    %v515 = vcombine.high %v267, %v267
    %v517 = vunpack.c.l.s4 1983009808
    %v518 = vunpack.c.0.s8 %v517
    %v519 = vlaneseq
    %v520 = vshrl.u32 %v519, 7
    %v521 = vsub.s32 %v518, %v520
    %v522 = vrot.slane %v267, %v521
    %v524 = vunpack.c.l.s4 1983009808
    %v525 = vunpack.c.0.s8 %v524
    %v526 = vlaneseq
    %v527 = vshrl.u32 %v526, 7
    %v528 = vsub.s32 %v525, %v527
    %v529 = vrot.slane %v515, %v528
    %v530 = vcombine.high %v522, %v522
    %v531 = vcombine.high %v299, %v299
    %v533 = vunpack.c.l.s4 1983009808
    %v534 = vunpack.c.0.s8 %v533
    %v535 = vlaneseq
    %v536 = vshrl.u32 %v535, 7
    %v537 = vsub.s32 %v534, %v536
    %v538 = vrot.slane %v299, %v537
    %v540 = vunpack.c.l.s4 1983009808
    %v541 = vunpack.c.0.s8 %v540
    %v542 = vlaneseq
    %v543 = vshrl.u32 %v542, 7
    %v544 = vsub.s32 %v541, %v543
    %v545 = vrot.slane %v531, %v544
    %v546 = vcombine.high %v538, %v538
    %v547 = vcombine.high %v331, %v331
    %v549 = vunpack.c.l.s4 1983009808
    %v550 = vunpack.c.0.s8 %v549
    %v551 = vlaneseq
    %v552 = vshrl.u32 %v551, 7
    %v553 = vsub.s32 %v550, %v552
    %v554 = vrot.slane %v331, %v553
    %v556 = vunpack.c.l.s4 1983009808
    %v557 = vunpack.c.0.s8 %v556
    %v558 = vlaneseq
    %v559 = vshrl.u32 %v558, 7
    %v560 = vsub.s32 %v557, %v559
    %v561 = vrot.slane %v547, %v560
    %v562 = vcombine.high %v554, %v554
    %v563 = vcombine.high %v363, %v363
    %v565 = vunpack.c.l.s4 1983009808
    %v566 = vunpack.c.0.s8 %v565
    %v567 = vlaneseq
    %v568 = vshrl.u32 %v567, 7
    %v569 = vsub.s32 %v566, %v568
    %v570 = vrot.slane %v363, %v569
    %v572 = vunpack.c.l.s4 1983009808
    %v573 = vunpack.c.0.s8 %v572
    %v574 = vlaneseq
    %v575 = vshrl.u32 %v574, 7
    %v576 = vsub.s32 %v573, %v575
    %v577 = vrot.slane %v563, %v576
    %v578 = vcombine.high %v570, %v570
    %v579 = vcombine.high %v395, %v395
    %v581 = vunpack.c.l.s4 1983009808
    %v582 = vunpack.c.0.s8 %v581
    %v583 = vlaneseq
    %v584 = vshrl.u32 %v583, 7
    %v585 = vsub.s32 %v582, %v584
    %v586 = vrot.slane %v395, %v585
    %v588 = vunpack.c.l.s4 1983009808
    %v589 = vunpack.c.0.s8 %v588
    %v590 = vlaneseq
    %v591 = vshrl.u32 %v590, 7
    %v592 = vsub.s32 %v589, %v591
    %v593 = vrot.slane %v579, %v592
    %v594 = vcombine.high %v586, %v586
    %v595 = vcombine.high %v427, %v427
    %v597 = vunpack.c.l.s4 1983009808
    %v598 = vunpack.c.0.s8 %v597
    %v599 = vlaneseq
    %v600 = vshrl.u32 %v599, 7
    %v601 = vsub.s32 %v598, %v600
    %v602 = vrot.slane %v427, %v601
    %v604 = vunpack.c.l.s4 1983009808
    %v605 = vunpack.c.0.s8 %v604
    %v606 = vlaneseq
    %v607 = vshrl.u32 %v606, 7
    %v608 = vsub.s32 %v605, %v607
    %v609 = vrot.slane %v595, %v608
    %v610 = vcombine.high %v602, %v602
    %v611 = vcombine.high %v459, %v459
    %v613 = vunpack.c.l.s4 1983009808
    %v614 = vunpack.c.0.s8 %v613
    %v615 = vlaneseq
    %v616 = vshrl.u32 %v615, 7
    %v617 = vsub.s32 %v614, %v616
    %v618 = vrot.slane %v459, %v617
    %v620 = vunpack.c.l.s4 1983009808
    %v621 = vunpack.c.0.s8 %v620
    %v622 = vlaneseq
    %v623 = vshrl.u32 %v622, 7
    %v624 = vsub.s32 %v621, %v623
    %v625 = vrot.slane %v611, %v624
    %v626 = vcombine.high %v618, %v618
    %v627 = vcombine.high %v491, %v491
    %v629 = vunpack.c.l.s4 1983009808
    %v630 = vunpack.c.0.s8 %v629
    %v631 = vlaneseq
    %v632 = vshrl.u32 %v631, 7
    %v633 = vsub.s32 %v630, %v632
    %v634 = vrot.slane %v491, %v633
    %v636 = vunpack.c.l.s4 1983009808
    %v637 = vunpack.c.0.s8 %v636
    %v638 = vlaneseq
    %v639 = vshrl.u32 %v638, 7
    %v640 = vsub.s32 %v637, %v639
    %v641 = vrot.slane %v627, %v640
    %v642 = vcombine.high %v634, %v634
    %v643 = vcombine.low %v522, %v530
    %v644 = vcombine.low %v529, %v538
    %v646 = vunpack.c.l.s4 1983009808
    %v647 = vunpack.c.0.s8 %v646
    %v648 = vlaneseq
    %v649 = vshrl.u32 %v648, 7
    %v650 = vsub.s32 %v647, %v649
    %v651 = vrot.slane %v643, %v650
    %v653 = vunpack.c.l.s4 1983009808
    %v654 = vunpack.c.0.s8 %v653
    %v655 = vlaneseq
    %v656 = vshrl.u32 %v655, 7
    %v657 = vsub.s32 %v654, %v656
    %v658 = vrot.slane %v644, %v657
    %v659 = vcombine.low %v651, %v658
    %v660 = vcombine.low %v546, %v545
    %v661 = vcombine.low %v554, %v562
    %v663 = vunpack.c.l.s4 1983009808
    %v664 = vunpack.c.0.s8 %v663
    %v665 = vlaneseq
    %v666 = vshrl.u32 %v665, 7
    %v667 = vsub.s32 %v664, %v666
    %v668 = vrot.slane %v660, %v667
    %v670 = vunpack.c.l.s4 1983009808
    %v671 = vunpack.c.0.s8 %v670
    %v672 = vlaneseq
    %v673 = vshrl.u32 %v672, 7
    %v674 = vsub.s32 %v671, %v673
    %v675 = vrot.slane %v661, %v674
    %v676 = vcombine.low %v668, %v675
    %v677 = vcombine.low %v561, %v570
    %v678 = vcombine.low %v578, %v577
    %v680 = vunpack.c.l.s4 1983009808
    %v681 = vunpack.c.0.s8 %v680
    %v682 = vlaneseq
    %v683 = vshrl.u32 %v682, 7
    %v684 = vsub.s32 %v681, %v683
    %v685 = vrot.slane %v677, %v684
    %v687 = vunpack.c.l.s4 1983009808
    %v688 = vunpack.c.0.s8 %v687
    %v689 = vlaneseq
    %v690 = vshrl.u32 %v689, 7
    %v691 = vsub.s32 %v688, %v690
    %v692 = vrot.slane %v678, %v691
    %v693 = vcombine.low %v685, %v692
    %v694 = vcombine.low %v586, %v594
    %v695 = vcombine.low %v593, %v602
    %v697 = vunpack.c.l.s4 1983009808
    %v698 = vunpack.c.0.s8 %v697
    %v699 = vlaneseq
    %v700 = vshrl.u32 %v699, 7
    %v701 = vsub.s32 %v698, %v700
    %v702 = vrot.slane %v694, %v701
    %v704 = vunpack.c.l.s4 1983009808
    %v705 = vunpack.c.0.s8 %v704
    %v706 = vlaneseq
    %v707 = vshrl.u32 %v706, 7
    %v708 = vsub.s32 %v705, %v707
    %v709 = vrot.slane %v695, %v708
    %v710 = vcombine.low %v702, %v709
    %v711 = vcombine.low %v610, %v609
    %v712 = vcombine.low %v618, %v626
    %v714 = vunpack.c.l.s4 1983009808
    %v715 = vunpack.c.0.s8 %v714
    %v716 = vlaneseq
    %v717 = vshrl.u32 %v716, 7
    %v718 = vsub.s32 %v715, %v717
    %v719 = vrot.slane %v711, %v718
    %v721 = vunpack.c.l.s4 1983009808
    %v722 = vunpack.c.0.s8 %v721
    %v723 = vlaneseq
    %v724 = vshrl.u32 %v723, 7
    %v725 = vsub.s32 %v722, %v724
    %v726 = vrot.slane %v712, %v725
    %v727 = vcombine.low %v719, %v726
    %v728 = vcombine.low %v625, %v634
    %v729 = vcombine.low %v642, %v641
    %v731 = vunpack.c.l.s4 1983009808
    %v732 = vunpack.c.0.s8 %v731
    %v733 = vlaneseq
    %v734 = vshrl.u32 %v733, 7
    %v735 = vsub.s32 %v732, %v734
    %v736 = vrot.slane %v728, %v735
    %v738 = vunpack.c.l.s4 1983009808
    %v739 = vunpack.c.0.s8 %v738
    %v740 = vlaneseq
    %v741 = vshrl.u32 %v740, 7
    %v742 = vsub.s32 %v739, %v741
    %v743 = vrot.slane %v729, %v742
    %v744 = vcombine.low %v736, %v743
    %v745 = vsel %vm57, %v659, 0
    %v747 = vsel %vm57, %v676, 0
    %v749 = vsel %vm57, %v693, 0
    %v751 = vsel %vm57, %v710, 0
    %v753 = vsel %vm57, %v727, 0
    %v755 = vsel %vm57, %v744, 0
    %757 = vmatprep.subr.mxu0 0.0
    %758 = vmatpush1.msra.mxu0 %v55
    %759 = vmatprep.subr.mxu0 0.0
    %760 = vmatpush1.msra.mxu0 %v56
    %761 = vmatprep.subr.mxu0 0.0
    %762 = vmatpush1.msra.mxu0 0.0
    %763 = vmatprep.subr.mxu0 0.0
    %764 = vmatpush1.msra.mxu0 0.0
    %765 = vmatprep.subr.mxu0 0.0
    %766 = vmatpush1.msra.mxu0 0.0
    %767 = vmatprep.subr.mxu0 0.0
    %768 = vmatpush1.msra.mxu0 0.0
    %769 = vmatprep.subr.mxu0 0.0
    %770 = vmatpush1.msra.mxu0 0.0
    %771 = vmatprep.subr.mxu0 0.0
    %772 = vmatpush1.msra.mxu0 0.0
    %773 = vmatprep.subr.mxu0 0.0
    %774 = vmatpush1.msra.mxu0 0.0
    %775 = vmatprep.subr.mxu0 0.0
    %776 = vmatpush1.msra.mxu0 0.0
    %777 = vmatprep.subr.mxu0 0.0
    %778 = vmatpush1.msra.mxu0 0.0
    %779 = vmatprep.subr.mxu0 0.0
    %780 = vmatpush1.msra.mxu0 0.0
    %781 = vmatprep.subr.mxu0 0.0
    %782 = vmatpush1.msra.mxu0 0.0
    %783 = vmatprep.subr.mxu0 0.0
    %784 = vmatpush1.msra.mxu0 0.0
    %785 = vmatprep.subr.mxu0 0.0
    %786 = vmatpush1.msra.mxu0 0.0
    %787 = vmatprep.subr.mxu0 0.0
    %788 = vmatpush1.msra.mxu0 0.0
    %789 = vmatprep.subr.mxu0 0.0
    %790 = vmatpush1.msra.mxu0 0.0
    %791 = vmatprep.subr.mxu0 0.0
    %792 = vmatpush1.msra.mxu0 0.0
    %793 = vmatprep.subr.mxu0 0.0
    %794 = vmatpush1.msra.mxu0 0.0
    %795 = vmatprep.subr.mxu0 0.0
    %796 = vmatpush1.msra.mxu0 0.0
    %797 = vmatprep.subr.mxu0 0.0
    %798 = vmatpush1.msra.mxu0 0.0
    %799 = vmatprep.subr.mxu0 0.0
    %800 = vmatpush1.msra.mxu0 0.0
    %801 = vmatprep.subr.mxu0 0.0
    %802 = vmatpush1.msra.mxu0 0.0
    %803 = vmatprep.subr.mxu0 0.0
    %804 = vmatpush1.msra.mxu0 0.0
    %805 = vmatprep.subr.mxu0 0.0
    %806 = vmatpush1.msra.mxu0 0.0
    %807 = vmatprep.subr.mxu0 0.0
    %808 = vmatpush1.msra.mxu0 0.0
    %809 = vmatprep.subr.mxu0 0.0
    %810 = vmatpush1.msra.mxu0 0.0
    %811 = vmatprep.subr.mxu0 0.0
    %812 = vmatpush1.msra.mxu0 0.0
    %813 = vmatprep.subr.mxu0 0.0
    %814 = vmatpush1.msra.mxu0 0.0
    %815 = vmatprep.subr.mxu0 0.0
    %816 = vmatpush1.msra.mxu0 0.0
    %817 = vmatprep.subr.mxu0 0.0
    %818 = vmatpush1.msra.mxu0 0.0
    %819 = vmatprep.subr.mxu0 0.0
    %820 = vmatpush1.msra.mxu0 0.0
    %821 = vmatprep.mubr.f32.mxu0 0.0
    %822 = vmatmul.mubr.f32.gmra.mrb[0].mxu0 %v745
    %v823 = vpop.f32.mrb[0].mxu0
    %v824 = vadd.f32 0.0, %v823
    %v825 = vpop.f32.mrb[0].mxu0
    %826 = vmatprep.mubr.f32.mxu0 0.0
    %827 = vmatmul.mubr.f32.gmra.mrb[0].mxu0 %v747
    %v828 = vpop.f32.mrb[0].mxu0
    %v829 = vadd.f32 0.0, %v828
    %v830 = vpop.f32.mrb[0].mxu0
    %831 = vmatprep.mubr.f32.mxu0 0.0
    %832 = vmatmul.mubr.f32.gmra.mrb[0].mxu0 %v749
    %v833 = vpop.f32.mrb[0].mxu0
    %v834 = vadd.f32 0.0, %v833
    %v835 = vpop.f32.mrb[0].mxu0
    %836 = vmatprep.mubr.f32.mxu0 0.0
    %837 = vmatmul.mubr.f32.gmra.mrb[0].mxu0 %v751
    %v838 = vpop.f32.mrb[0].mxu0
    %v839 = vadd.f32 0.0, %v838
    %v840 = vpop.f32.mrb[0].mxu0
    %841 = vmatprep.mubr.f32.mxu0 0.0
    %842 = vmatmul.mubr.f32.gmra.mrb[0].mxu0 %v753
    %v843 = vpop.f32.mrb[0].mxu0
    %v844 = vadd.f32 0.0, %v843
    %v845 = vpop.f32.mrb[0].mxu0
    %846 = vmatprep.mubr.f32.mxu0 0.0
    %847 = vmatmul.mubr.f32.gmra.mrb[0].mxu0 %v755
    %v848 = vpop.f32.mrb[0].mxu0
    %v849 = vadd.f32 0.0, %v848
    %v850 = vpop.f32.mrb[0].mxu0
    %851 = vdwg.mxu0
    %v858 = vcombine.high %v824, %v824
    %v860 = vunpack.c.l.s4 1983009808
    %v861 = vunpack.c.0.s8 %v860
    %v862 = vlaneseq
    %v863 = vshrl.u32 %v862, 7
    %v864 = vsub.s32 %v861, %v863
    %v865 = vrot.slane %v824, %v864
    %v867 = vunpack.c.l.s4 1983009808
    %v868 = vunpack.c.0.s8 %v867
    %v869 = vlaneseq
    %v870 = vshrl.u32 %v869, 7
    %v871 = vsub.s32 %v868, %v870
    %v872 = vrot.slane %v858, %v871
    %v873 = vcombine.high %v865, %v865
    %v874 = vcombine.high %v872, %v872
    %v875 = vcombine.high %v829, %v829
    %v877 = vunpack.c.l.s4 1983009808
    %v878 = vunpack.c.0.s8 %v877
    %v879 = vlaneseq
    %v880 = vshrl.u32 %v879, 7
    %v881 = vsub.s32 %v878, %v880
    %v882 = vrot.slane %v829, %v881
    %v884 = vunpack.c.l.s4 1983009808
    %v885 = vunpack.c.0.s8 %v884
    %v886 = vlaneseq
    %v887 = vshrl.u32 %v886, 7
    %v888 = vsub.s32 %v885, %v887
    %v889 = vrot.slane %v875, %v888
    %v890 = vcombine.high %v882, %v882
    %v891 = vcombine.high %v889, %v889
    %v892 = vcombine.high %v834, %v834
    %v894 = vunpack.c.l.s4 1983009808
    %v895 = vunpack.c.0.s8 %v894
    %v896 = vlaneseq
    %v897 = vshrl.u32 %v896, 7
    %v898 = vsub.s32 %v895, %v897
    %v899 = vrot.slane %v834, %v898
    %v901 = vunpack.c.l.s4 1983009808
    %v902 = vunpack.c.0.s8 %v901
    %v903 = vlaneseq
    %v904 = vshrl.u32 %v903, 7
    %v905 = vsub.s32 %v902, %v904
    %v906 = vrot.slane %v892, %v905
    %v907 = vcombine.high %v899, %v899
    %v908 = vcombine.high %v906, %v906
    %v909 = vcombine.high %v839, %v839
    %v911 = vunpack.c.l.s4 1983009808
    %v912 = vunpack.c.0.s8 %v911
    %v913 = vlaneseq
    %v914 = vshrl.u32 %v913, 7
    %v915 = vsub.s32 %v912, %v914
    %v916 = vrot.slane %v839, %v915
    %v918 = vunpack.c.l.s4 1983009808
    %v919 = vunpack.c.0.s8 %v918
    %v920 = vlaneseq
    %v921 = vshrl.u32 %v920, 7
    %v922 = vsub.s32 %v919, %v921
    %v923 = vrot.slane %v909, %v922
    %v924 = vcombine.high %v916, %v916
    %v925 = vcombine.high %v923, %v923
    %v926 = vcombine.high %v844, %v844
    %v928 = vunpack.c.l.s4 1983009808
    %v929 = vunpack.c.0.s8 %v928
    %v930 = vlaneseq
    %v931 = vshrl.u32 %v930, 7
    %v932 = vsub.s32 %v929, %v931
    %v933 = vrot.slane %v844, %v932
    %v935 = vunpack.c.l.s4 1983009808
    %v936 = vunpack.c.0.s8 %v935
    %v937 = vlaneseq
    %v938 = vshrl.u32 %v937, 7
    %v939 = vsub.s32 %v936, %v938
    %v940 = vrot.slane %v926, %v939
    %v941 = vcombine.high %v933, %v933
    %v942 = vcombine.high %v940, %v940
    %v943 = vcombine.high %v849, %v849
    %v945 = vunpack.c.l.s4 1983009808
    %v946 = vunpack.c.0.s8 %v945
    %v947 = vlaneseq
    %v948 = vshrl.u32 %v947, 7
    %v949 = vsub.s32 %v946, %v948
    %v950 = vrot.slane %v849, %v949
    %v952 = vunpack.c.l.s4 1983009808
    %v953 = vunpack.c.0.s8 %v952
    %v954 = vlaneseq
    %v955 = vshrl.u32 %v954, 7
    %v956 = vsub.s32 %v953, %v955
    %v957 = vrot.slane %v943, %v956
    %v958 = vcombine.high %v950, %v950
    %v959 = vcombine.high %v957, %v957
    %v985 = vsel %vm57, %v37, 0
    %v988 = vsel %vm57, %v38, 0
    %v991 = vsel %vm57, %v39, 0
    %v994 = vsel %vm57, %v40, 0
    %v997 = vsel %vm57, %v41, 0
    %v1000 = vsel %vm57, %v42, 0
    %v1003 = vsel %vm57, %v43, 0
    %v1006 = vsel %vm57, %v44, 0
    %v1009 = vsel %vm57, %v45, 0
    %v1012 = vsel %vm57, %v46, 0
    %v1015 = vsel %vm57, %v47, 0
    %v1018 = vsel %vm57, %v48, 0
    %v1021 = vsel %vm57, %v49, 0
    %v1024 = vsel %vm57, %v50, 0
    %v1027 = vsel %vm57, %v51, 0
    %v1030 = vsel %vm57, %v52, 0
    %1032 = vmatprep.subr.mxu0 0.0
    %1033 = vmatpush1.msra.mxu0 %v53
    %1034 = vmatprep.subr.mxu0 0.0
    %1035 = vmatpush1.msra.mxu0 %v54
    %1036 = vmatprep.subr.mxu0 0.0
    %1037 = vmatpush1.msra.mxu0 0.0
    %1038 = vmatprep.subr.mxu0 0.0
    %1039 = vmatpush1.msra.mxu0 0.0
    %1040 = vmatprep.subr.mxu0 0.0
    %1041 = vmatpush1.msra.mxu0 0.0
    %1042 = vmatprep.subr.mxu0 0.0
    %1043 = vmatpush1.msra.mxu0 0.0
    %1044 = vmatprep.subr.mxu0 0.0
    %1045 = vmatpush1.msra.mxu0 0.0
    %1046 = vmatprep.subr.mxu0 0.0
    %1047 = vmatpush1.msra.mxu0 0.0
    %1048 = vmatprep.subr.mxu0 0.0
    %1049 = vmatpush1.msra.mxu0 0.0
    %1050 = vmatprep.subr.mxu0 0.0
    %1051 = vmatpush1.msra.mxu0 0.0
    %1052 = vmatprep.subr.mxu0 0.0
    %1053 = vmatpush1.msra.mxu0 0.0
    %1054 = vmatprep.subr.mxu0 0.0
    %1055 = vmatpush1.msra.mxu0 0.0
    %1056 = vmatprep.subr.mxu0 0.0
    %1057 = vmatpush1.msra.mxu0 0.0
    %1058 = vmatprep.subr.mxu0 0.0
    %1059 = vmatpush1.msra.mxu0 0.0
    %1060 = vmatprep.subr.mxu0 0.0
    %1061 = vmatpush1.msra.mxu0 0.0
    %1062 = vmatprep.subr.mxu0 0.0
    %1063 = vmatpush1.msra.mxu0 0.0
    %1064 = vmatprep.subr.mxu0 0.0
    %1065 = vmatpush1.msra.mxu0 0.0
    %1066 = vmatprep.subr.mxu0 0.0
    %1067 = vmatpush1.msra.mxu0 0.0
    %1068 = vmatprep.subr.mxu0 0.0
    %1069 = vmatpush1.msra.mxu0 0.0
    %1070 = vmatprep.subr.mxu0 0.0
    %1071 = vmatpush1.msra.mxu0 0.0
    %1072 = vmatprep.subr.mxu0 0.0
    %1073 = vmatpush1.msra.mxu0 0.0
    %1074 = vmatprep.subr.mxu0 0.0
    %1075 = vmatpush1.msra.mxu0 0.0
    %1076 = vmatprep.subr.mxu0 0.0
    %1077 = vmatpush1.msra.mxu0 0.0
    %1078 = vmatprep.subr.mxu0 0.0
    %1079 = vmatpush1.msra.mxu0 0.0
    %1080 = vmatprep.subr.mxu0 0.0
    %1081 = vmatpush1.msra.mxu0 0.0
    %1082 = vmatprep.subr.mxu0 0.0
    %1083 = vmatpush1.msra.mxu0 0.0
    %1084 = vmatprep.subr.mxu0 0.0
    %1085 = vmatpush1.msra.mxu0 0.0
    %1086 = vmatprep.subr.mxu0 0.0
    %1087 = vmatpush1.msra.mxu0 0.0
    %1088 = vmatprep.subr.mxu0 0.0
    %1089 = vmatpush1.msra.mxu0 0.0
    %1090 = vmatprep.subr.mxu0 0.0
    %1091 = vmatpush1.msra.mxu0 0.0
    %1092 = vmatprep.subr.mxu0 0.0
    %1093 = vmatpush1.msra.mxu0 0.0
    %1094 = vmatprep.subr.mxu0 0.0
    %1095 = vmatpush1.msra.mxu0 0.0
    %1096 = vmatprep.mubr.f32.mxu0 0.0
    %1097 = vmatmul.mubr.f32.gmra.mrb[0].mxu0 %v985
    %v1098 = vpop.f32.mrb[0].mxu0
    %v1099 = vadd.f32 0.0, %v1098
    %v1100 = vpop.f32.mrb[0].mxu0
    %1101 = vmatprep.mubr.f32.mxu0 0.0
    %1102 = vmatmul.mubr.f32.gmra.mrb[0].mxu0 %v988
    %v1103 = vpop.f32.mrb[0].mxu0
    %v1104 = vadd.f32 0.0, %v1103
    %v1105 = vpop.f32.mrb[0].mxu0
    %1106 = vmatprep.mubr.f32.mxu0 0.0
    %1107 = vmatmul.mubr.f32.gmra.mrb[0].mxu0 %v991
    %v1108 = vpop.f32.mrb[0].mxu0
    %v1109 = vadd.f32 0.0, %v1108
    %v1110 = vpop.f32.mrb[0].mxu0
    %1111 = vmatprep.mubr.f32.mxu0 0.0
    %1112 = vmatmul.mubr.f32.gmra.mrb[0].mxu0 %v994
    %v1113 = vpop.f32.mrb[0].mxu0
    %v1114 = vadd.f32 0.0, %v1113
    %v1115 = vpop.f32.mrb[0].mxu0
    %1116 = vmatprep.mubr.f32.mxu0 0.0
    %1117 = vmatmul.mubr.f32.gmra.mrb[0].mxu0 %v997
    %v1118 = vpop.f32.mrb[0].mxu0
    %v1119 = vadd.f32 0.0, %v1118
    %v1120 = vpop.f32.mrb[0].mxu0
    %1121 = vmatprep.mubr.f32.mxu0 0.0
    %1122 = vmatmul.mubr.f32.gmra.mrb[0].mxu0 %v1000
    %v1123 = vpop.f32.mrb[0].mxu0
    %v1124 = vadd.f32 0.0, %v1123
    %v1125 = vpop.f32.mrb[0].mxu0
    %1126 = vmatprep.mubr.f32.mxu0 0.0
    %1127 = vmatmul.mubr.f32.gmra.mrb[0].mxu0 %v1003
    %v1128 = vpop.f32.mrb[0].mxu0
    %v1129 = vadd.f32 0.0, %v1128
    %v1130 = vpop.f32.mrb[0].mxu0
    %1131 = vmatprep.mubr.f32.mxu0 0.0
    %1132 = vmatmul.mubr.f32.gmra.mrb[0].mxu0 %v1006
    %v1133 = vpop.f32.mrb[0].mxu0
    %v1134 = vadd.f32 0.0, %v1133
    %v1135 = vpop.f32.mrb[0].mxu0
    %1136 = vmatprep.mubr.f32.mxu0 0.0
    %1137 = vmatmul.mubr.f32.gmra.mrb[0].mxu0 %v1009
    %v1138 = vpop.f32.mrb[0].mxu0
    %v1139 = vadd.f32 0.0, %v1138
    %v1140 = vpop.f32.mrb[0].mxu0
    %1141 = vmatprep.mubr.f32.mxu0 0.0
    %1142 = vmatmul.mubr.f32.gmra.mrb[0].mxu0 %v1012
    %v1143 = vpop.f32.mrb[0].mxu0
    %v1144 = vadd.f32 0.0, %v1143
    %v1145 = vpop.f32.mrb[0].mxu0
    %1146 = vmatprep.mubr.f32.mxu0 0.0
    %1147 = vmatmul.mubr.f32.gmra.mrb[0].mxu0 %v1015
    %v1148 = vpop.f32.mrb[0].mxu0
    %v1149 = vadd.f32 0.0, %v1148
    %v1150 = vpop.f32.mrb[0].mxu0
    %1151 = vmatprep.mubr.f32.mxu0 0.0
    %1152 = vmatmul.mubr.f32.gmra.mrb[0].mxu0 %v1018
    %v1153 = vpop.f32.mrb[0].mxu0
    %v1154 = vadd.f32 0.0, %v1153
    %v1155 = vpop.f32.mrb[0].mxu0
    %1156 = vmatprep.mubr.f32.mxu0 0.0
    %1157 = vmatmul.mubr.f32.gmra.mrb[0].mxu0 %v1021
    %v1158 = vpop.f32.mrb[0].mxu0
    %v1159 = vadd.f32 0.0, %v1158
    %v1160 = vpop.f32.mrb[0].mxu0
    %1161 = vmatprep.mubr.f32.mxu0 0.0
    %1162 = vmatmul.mubr.f32.gmra.mrb[0].mxu0 %v1024
    %v1163 = vpop.f32.mrb[0].mxu0
    %v1164 = vadd.f32 0.0, %v1163
    %v1165 = vpop.f32.mrb[0].mxu0
    %1166 = vmatprep.mubr.f32.mxu0 0.0
    %1167 = vmatmul.mubr.f32.gmra.mrb[0].mxu0 %v1027
    %v1168 = vpop.f32.mrb[0].mxu0
    %v1169 = vadd.f32 0.0, %v1168
    %v1170 = vpop.f32.mrb[0].mxu0
    %1171 = vmatprep.mubr.f32.mxu0 0.0
    %1172 = vmatmul.mubr.f32.gmra.mrb[0].mxu0 %v1030
    %v1173 = vpop.f32.mrb[0].mxu0
    %v1174 = vadd.f32 0.0, %v1173
    %v1175 = vpop.f32.mrb[0].mxu0
    %1176 = vdwg.mxu0
    %1177 = vxpose.xlu0.b32.start [1/16] %v1099, 128
    %1178 = vxpose.xlu0.b32.cont [2/16] %v1104, 128
    %1179 = vxpose.xlu0.b32.cont [3/16] 0.0, 128
    %1180 = vxpose.xlu0.b32.cont [4/16] 0.0, 128
    %1181 = vxpose.xlu0.b32.cont [5/16] 0.0, 128
    %1182 = vxpose.xlu0.b32.cont [6/16] 0.0, 128
    %1183 = vxpose.xlu0.b32.cont [7/16] 0.0, 128
    %1184 = vxpose.xlu0.b32.cont [8/16] 0.0, 128
    %1185 = vxpose.xlu0.b32.cont [9/16] 0.0, 128
    %1186 = vxpose.xlu0.b32.cont [10/16] 0.0, 128
    %1187 = vxpose.xlu0.b32.cont [11/16] 0.0, 128
    %1188 = vxpose.xlu0.b32.cont [12/16] 0.0, 128
    %1189 = vxpose.xlu0.b32.cont [13/16] 0.0, 128
    %1190 = vxpose.xlu0.b32.cont [14/16] 0.0, 128
    %1191 = vxpose.xlu0.b32.cont [15/16] 0.0, 128
    %1192 = vxpose.xlu0.b32.end [16/16] 0.0, 128
    %v1193 = vpop.trf.xlu0
    %v1194 = vpop.trf.xlu0
    %v1195 = vpop.trf.xlu0
    %v1196 = vpop.trf.xlu0
    %v1197 = vpop.trf.xlu0
    %v1198 = vpop.trf.xlu0
    %v1199 = vpop.trf.xlu0
    %v1200 = vpop.trf.xlu0
    %v1201 = vpop.trf.xlu0
    %v1202 = vpop.trf.xlu0
    %v1203 = vpop.trf.xlu0
    %v1204 = vpop.trf.xlu0
    %v1205 = vpop.trf.xlu0
    %v1206 = vpop.trf.xlu0
    %v1207 = vpop.trf.xlu0
    %v1208 = vpop.trf.xlu0
    %1209 = vxpose.xlu0.b32.start [1/16] %v1109, 128
    %1210 = vxpose.xlu0.b32.cont [2/16] %v1114, 128
    %1211 = vxpose.xlu0.b32.cont [3/16] 0.0, 128
    %1212 = vxpose.xlu0.b32.cont [4/16] 0.0, 128
    %1213 = vxpose.xlu0.b32.cont [5/16] 0.0, 128
    %1214 = vxpose.xlu0.b32.cont [6/16] 0.0, 128
    %1215 = vxpose.xlu0.b32.cont [7/16] 0.0, 128
    %1216 = vxpose.xlu0.b32.cont [8/16] 0.0, 128
    %1217 = vxpose.xlu0.b32.cont [9/16] 0.0, 128
    %1218 = vxpose.xlu0.b32.cont [10/16] 0.0, 128
    %1219 = vxpose.xlu0.b32.cont [11/16] 0.0, 128
    %1220 = vxpose.xlu0.b32.cont [12/16] 0.0, 128
    %1221 = vxpose.xlu0.b32.cont [13/16] 0.0, 128
    %1222 = vxpose.xlu0.b32.cont [14/16] 0.0, 128
    %1223 = vxpose.xlu0.b32.cont [15/16] 0.0, 128
    %1224 = vxpose.xlu0.b32.end [16/16] 0.0, 128
    %v1225 = vpop.trf.xlu0
    %v1226 = vpop.trf.xlu0
    %v1227 = vpop.trf.xlu0
    %v1228 = vpop.trf.xlu0
    %v1229 = vpop.trf.xlu0
    %v1230 = vpop.trf.xlu0
    %v1231 = vpop.trf.xlu0
    %v1232 = vpop.trf.xlu0
    %v1233 = vpop.trf.xlu0
    %v1234 = vpop.trf.xlu0
    %v1235 = vpop.trf.xlu0
    %v1236 = vpop.trf.xlu0
    %v1237 = vpop.trf.xlu0
    %v1238 = vpop.trf.xlu0
    %v1239 = vpop.trf.xlu0
    %v1240 = vpop.trf.xlu0
    %1241 = vxpose.xlu0.b32.start [1/16] %v1119, 128
    %1242 = vxpose.xlu0.b32.cont [2/16] %v1124, 128
    %1243 = vxpose.xlu0.b32.cont [3/16] 0.0, 128
    %1244 = vxpose.xlu0.b32.cont [4/16] 0.0, 128
    %1245 = vxpose.xlu0.b32.cont [5/16] 0.0, 128
    %1246 = vxpose.xlu0.b32.cont [6/16] 0.0, 128
    %1247 = vxpose.xlu0.b32.cont [7/16] 0.0, 128
    %1248 = vxpose.xlu0.b32.cont [8/16] 0.0, 128
    %1249 = vxpose.xlu0.b32.cont [9/16] 0.0, 128
    %1250 = vxpose.xlu0.b32.cont [10/16] 0.0, 128
    %1251 = vxpose.xlu0.b32.cont [11/16] 0.0, 128
    %1252 = vxpose.xlu0.b32.cont [12/16] 0.0, 128
    %1253 = vxpose.xlu0.b32.cont [13/16] 0.0, 128
    %1254 = vxpose.xlu0.b32.cont [14/16] 0.0, 128
    %1255 = vxpose.xlu0.b32.cont [15/16] 0.0, 128
    %1256 = vxpose.xlu0.b32.end [16/16] 0.0, 128
    %v1257 = vpop.trf.xlu0
    %v1258 = vpop.trf.xlu0
    %v1259 = vpop.trf.xlu0
    %v1260 = vpop.trf.xlu0
    %v1261 = vpop.trf.xlu0
    %v1262 = vpop.trf.xlu0
    %v1263 = vpop.trf.xlu0
    %v1264 = vpop.trf.xlu0
    %v1265 = vpop.trf.xlu0
    %v1266 = vpop.trf.xlu0
    %v1267 = vpop.trf.xlu0
    %v1268 = vpop.trf.xlu0
    %v1269 = vpop.trf.xlu0
    %v1270 = vpop.trf.xlu0
    %v1271 = vpop.trf.xlu0
    %v1272 = vpop.trf.xlu0
    %1273 = vxpose.xlu0.b32.start [1/16] %v1129, 128
    %1274 = vxpose.xlu0.b32.cont [2/16] %v1134, 128
    %1275 = vxpose.xlu0.b32.cont [3/16] 0.0, 128
    %1276 = vxpose.xlu0.b32.cont [4/16] 0.0, 128
    %1277 = vxpose.xlu0.b32.cont [5/16] 0.0, 128
    %1278 = vxpose.xlu0.b32.cont [6/16] 0.0, 128
    %1279 = vxpose.xlu0.b32.cont [7/16] 0.0, 128
    %1280 = vxpose.xlu0.b32.cont [8/16] 0.0, 128
    %1281 = vxpose.xlu0.b32.cont [9/16] 0.0, 128
    %1282 = vxpose.xlu0.b32.cont [10/16] 0.0, 128
    %1283 = vxpose.xlu0.b32.cont [11/16] 0.0, 128
    %1284 = vxpose.xlu0.b32.cont [12/16] 0.0, 128
    %1285 = vxpose.xlu0.b32.cont [13/16] 0.0, 128
    %1286 = vxpose.xlu0.b32.cont [14/16] 0.0, 128
    %1287 = vxpose.xlu0.b32.cont [15/16] 0.0, 128
    %1288 = vxpose.xlu0.b32.end [16/16] 0.0, 128
    %v1289 = vpop.trf.xlu0
    %v1290 = vpop.trf.xlu0
    %v1291 = vpop.trf.xlu0
    %v1292 = vpop.trf.xlu0
    %v1293 = vpop.trf.xlu0
    %v1294 = vpop.trf.xlu0
    %v1295 = vpop.trf.xlu0
    %v1296 = vpop.trf.xlu0
    %v1297 = vpop.trf.xlu0
    %v1298 = vpop.trf.xlu0
    %v1299 = vpop.trf.xlu0
    %v1300 = vpop.trf.xlu0
    %v1301 = vpop.trf.xlu0
    %v1302 = vpop.trf.xlu0
    %v1303 = vpop.trf.xlu0
    %v1304 = vpop.trf.xlu0
    %1305 = vxpose.xlu0.b32.start [1/16] %v1139, 128
    %1306 = vxpose.xlu0.b32.cont [2/16] %v1144, 128
    %1307 = vxpose.xlu0.b32.cont [3/16] 0.0, 128
    %1308 = vxpose.xlu0.b32.cont [4/16] 0.0, 128
    %1309 = vxpose.xlu0.b32.cont [5/16] 0.0, 128
    %1310 = vxpose.xlu0.b32.cont [6/16] 0.0, 128
    %1311 = vxpose.xlu0.b32.cont [7/16] 0.0, 128
    %1312 = vxpose.xlu0.b32.cont [8/16] 0.0, 128
    %1313 = vxpose.xlu0.b32.cont [9/16] 0.0, 128
    %1314 = vxpose.xlu0.b32.cont [10/16] 0.0, 128
    %1315 = vxpose.xlu0.b32.cont [11/16] 0.0, 128
    %1316 = vxpose.xlu0.b32.cont [12/16] 0.0, 128
    %1317 = vxpose.xlu0.b32.cont [13/16] 0.0, 128
    %1318 = vxpose.xlu0.b32.cont [14/16] 0.0, 128
    %1319 = vxpose.xlu0.b32.cont [15/16] 0.0, 128
    %1320 = vxpose.xlu0.b32.end [16/16] 0.0, 128
    %v1321 = vpop.trf.xlu0
    %v1322 = vpop.trf.xlu0
    %v1323 = vpop.trf.xlu0
    %v1324 = vpop.trf.xlu0
    %v1325 = vpop.trf.xlu0
    %v1326 = vpop.trf.xlu0
    %v1327 = vpop.trf.xlu0
    %v1328 = vpop.trf.xlu0
    %v1329 = vpop.trf.xlu0
    %v1330 = vpop.trf.xlu0
    %v1331 = vpop.trf.xlu0
    %v1332 = vpop.trf.xlu0
    %v1333 = vpop.trf.xlu0
    %v1334 = vpop.trf.xlu0
    %v1335 = vpop.trf.xlu0
    %v1336 = vpop.trf.xlu0
    %1337 = vxpose.xlu0.b32.start [1/16] %v1149, 128
    %1338 = vxpose.xlu0.b32.cont [2/16] %v1154, 128
    %1339 = vxpose.xlu0.b32.cont [3/16] 0.0, 128
    %1340 = vxpose.xlu0.b32.cont [4/16] 0.0, 128
    %1341 = vxpose.xlu0.b32.cont [5/16] 0.0, 128
    %1342 = vxpose.xlu0.b32.cont [6/16] 0.0, 128
    %1343 = vxpose.xlu0.b32.cont [7/16] 0.0, 128
    %1344 = vxpose.xlu0.b32.cont [8/16] 0.0, 128
    %1345 = vxpose.xlu0.b32.cont [9/16] 0.0, 128
    %1346 = vxpose.xlu0.b32.cont [10/16] 0.0, 128
    %1347 = vxpose.xlu0.b32.cont [11/16] 0.0, 128
    %1348 = vxpose.xlu0.b32.cont [12/16] 0.0, 128
    %1349 = vxpose.xlu0.b32.cont [13/16] 0.0, 128
    %1350 = vxpose.xlu0.b32.cont [14/16] 0.0, 128
    %1351 = vxpose.xlu0.b32.cont [15/16] 0.0, 128
    %1352 = vxpose.xlu0.b32.end [16/16] 0.0, 128
    %v1353 = vpop.trf.xlu0
    %v1354 = vpop.trf.xlu0
    %v1355 = vpop.trf.xlu0
    %v1356 = vpop.trf.xlu0
    %v1357 = vpop.trf.xlu0
    %v1358 = vpop.trf.xlu0
    %v1359 = vpop.trf.xlu0
    %v1360 = vpop.trf.xlu0
    %v1361 = vpop.trf.xlu0
    %v1362 = vpop.trf.xlu0
    %v1363 = vpop.trf.xlu0
    %v1364 = vpop.trf.xlu0
    %v1365 = vpop.trf.xlu0
    %v1366 = vpop.trf.xlu0
    %v1367 = vpop.trf.xlu0
    %v1368 = vpop.trf.xlu0
    %1369 = vxpose.xlu0.b32.start [1/16] %v1159, 128
    %1370 = vxpose.xlu0.b32.cont [2/16] %v1164, 128
    %1371 = vxpose.xlu0.b32.cont [3/16] 0.0, 128
    %1372 = vxpose.xlu0.b32.cont [4/16] 0.0, 128
    %1373 = vxpose.xlu0.b32.cont [5/16] 0.0, 128
    %1374 = vxpose.xlu0.b32.cont [6/16] 0.0, 128
    %1375 = vxpose.xlu0.b32.cont [7/16] 0.0, 128
    %1376 = vxpose.xlu0.b32.cont [8/16] 0.0, 128
    %1377 = vxpose.xlu0.b32.cont [9/16] 0.0, 128
    %1378 = vxpose.xlu0.b32.cont [10/16] 0.0, 128
    %1379 = vxpose.xlu0.b32.cont [11/16] 0.0, 128
    %1380 = vxpose.xlu0.b32.cont [12/16] 0.0, 128
    %1381 = vxpose.xlu0.b32.cont [13/16] 0.0, 128
    %1382 = vxpose.xlu0.b32.cont [14/16] 0.0, 128
    %1383 = vxpose.xlu0.b32.cont [15/16] 0.0, 128
    %1384 = vxpose.xlu0.b32.end [16/16] 0.0, 128
    %v1385 = vpop.trf.xlu0
    %v1386 = vpop.trf.xlu0
    %v1387 = vpop.trf.xlu0
    %v1388 = vpop.trf.xlu0
    %v1389 = vpop.trf.xlu0
    %v1390 = vpop.trf.xlu0
    %v1391 = vpop.trf.xlu0
    %v1392 = vpop.trf.xlu0
    %v1393 = vpop.trf.xlu0
    %v1394 = vpop.trf.xlu0
    %v1395 = vpop.trf.xlu0
    %v1396 = vpop.trf.xlu0
    %v1397 = vpop.trf.xlu0
    %v1398 = vpop.trf.xlu0
    %v1399 = vpop.trf.xlu0
    %v1400 = vpop.trf.xlu0
    %1401 = vxpose.xlu0.b32.start [1/16] %v1169, 128
    %1402 = vxpose.xlu0.b32.cont [2/16] %v1174, 128
    %1403 = vxpose.xlu0.b32.cont [3/16] 0.0, 128
    %1404 = vxpose.xlu0.b32.cont [4/16] 0.0, 128
    %1405 = vxpose.xlu0.b32.cont [5/16] 0.0, 128
    %1406 = vxpose.xlu0.b32.cont [6/16] 0.0, 128
    %1407 = vxpose.xlu0.b32.cont [7/16] 0.0, 128
    %1408 = vxpose.xlu0.b32.cont [8/16] 0.0, 128
    %1409 = vxpose.xlu0.b32.cont [9/16] 0.0, 128
    %1410 = vxpose.xlu0.b32.cont [10/16] 0.0, 128
    %1411 = vxpose.xlu0.b32.cont [11/16] 0.0, 128
    %1412 = vxpose.xlu0.b32.cont [12/16] 0.0, 128
    %1413 = vxpose.xlu0.b32.cont [13/16] 0.0, 128
    %1414 = vxpose.xlu0.b32.cont [14/16] 0.0, 128
    %1415 = vxpose.xlu0.b32.cont [15/16] 0.0, 128
    %1416 = vxpose.xlu0.b32.end [16/16] 0.0, 128
    %v1417 = vpop.trf.xlu0
    %v1418 = vpop.trf.xlu0
    %v1419 = vpop.trf.xlu0
    %v1420 = vpop.trf.xlu0
    %v1421 = vpop.trf.xlu0
    %v1422 = vpop.trf.xlu0
    %v1423 = vpop.trf.xlu0
    %v1424 = vpop.trf.xlu0
    %v1425 = vpop.trf.xlu0
    %v1426 = vpop.trf.xlu0
    %v1427 = vpop.trf.xlu0
    %v1428 = vpop.trf.xlu0
    %v1429 = vpop.trf.xlu0
    %v1430 = vpop.trf.xlu0
    %v1431 = vpop.trf.xlu0
    %v1432 = vpop.trf.xlu0
    %v1441 = vcombine.high %v1193, %v1193
    %v1443 = vunpack.c.l.s4 1983009808
    %v1444 = vunpack.c.0.s8 %v1443
    %v1445 = vlaneseq
    %v1446 = vshrl.u32 %v1445, 7
    %v1447 = vsub.s32 %v1444, %v1446
    %v1448 = vrot.slane %v1193, %v1447
    %v1450 = vunpack.c.l.s4 1983009808
    %v1451 = vunpack.c.0.s8 %v1450
    %v1452 = vlaneseq
    %v1453 = vshrl.u32 %v1452, 7
    %v1454 = vsub.s32 %v1451, %v1453
    %v1455 = vrot.slane %v1441, %v1454
    %v1456 = vcombine.high %v1448, %v1448
    %v1457 = vcombine.high %v1225, %v1225
    %v1459 = vunpack.c.l.s4 1983009808
    %v1460 = vunpack.c.0.s8 %v1459
    %v1461 = vlaneseq
    %v1462 = vshrl.u32 %v1461, 7
    %v1463 = vsub.s32 %v1460, %v1462
    %v1464 = vrot.slane %v1225, %v1463
    %v1466 = vunpack.c.l.s4 1983009808
    %v1467 = vunpack.c.0.s8 %v1466
    %v1468 = vlaneseq
    %v1469 = vshrl.u32 %v1468, 7
    %v1470 = vsub.s32 %v1467, %v1469
    %v1471 = vrot.slane %v1457, %v1470
    %v1472 = vcombine.high %v1464, %v1464
    %v1473 = vcombine.high %v1257, %v1257
    %v1475 = vunpack.c.l.s4 1983009808
    %v1476 = vunpack.c.0.s8 %v1475
    %v1477 = vlaneseq
    %v1478 = vshrl.u32 %v1477, 7
    %v1479 = vsub.s32 %v1476, %v1478
    %v1480 = vrot.slane %v1257, %v1479
    %v1482 = vunpack.c.l.s4 1983009808
    %v1483 = vunpack.c.0.s8 %v1482
    %v1484 = vlaneseq
    %v1485 = vshrl.u32 %v1484, 7
    %v1486 = vsub.s32 %v1483, %v1485
    %v1487 = vrot.slane %v1473, %v1486
    %v1488 = vcombine.high %v1480, %v1480
    %v1489 = vcombine.high %v1289, %v1289
    %v1491 = vunpack.c.l.s4 1983009808
    %v1492 = vunpack.c.0.s8 %v1491
    %v1493 = vlaneseq
    %v1494 = vshrl.u32 %v1493, 7
    %v1495 = vsub.s32 %v1492, %v1494
    %v1496 = vrot.slane %v1289, %v1495
    %v1498 = vunpack.c.l.s4 1983009808
    %v1499 = vunpack.c.0.s8 %v1498
    %v1500 = vlaneseq
    %v1501 = vshrl.u32 %v1500, 7
    %v1502 = vsub.s32 %v1499, %v1501
    %v1503 = vrot.slane %v1489, %v1502
    %v1504 = vcombine.high %v1496, %v1496
    %v1505 = vcombine.high %v1321, %v1321
    %v1507 = vunpack.c.l.s4 1983009808
    %v1508 = vunpack.c.0.s8 %v1507
    %v1509 = vlaneseq
    %v1510 = vshrl.u32 %v1509, 7
    %v1511 = vsub.s32 %v1508, %v1510
    %v1512 = vrot.slane %v1321, %v1511
    %v1514 = vunpack.c.l.s4 1983009808
    %v1515 = vunpack.c.0.s8 %v1514
    %v1516 = vlaneseq
    %v1517 = vshrl.u32 %v1516, 7
    %v1518 = vsub.s32 %v1515, %v1517
    %v1519 = vrot.slane %v1505, %v1518
    %v1520 = vcombine.high %v1512, %v1512
    %v1521 = vcombine.high %v1353, %v1353
    %v1523 = vunpack.c.l.s4 1983009808
    %v1524 = vunpack.c.0.s8 %v1523
    %v1525 = vlaneseq
    %v1526 = vshrl.u32 %v1525, 7
    %v1527 = vsub.s32 %v1524, %v1526
    %v1528 = vrot.slane %v1353, %v1527
    %v1530 = vunpack.c.l.s4 1983009808
    %v1531 = vunpack.c.0.s8 %v1530
    %v1532 = vlaneseq
    %v1533 = vshrl.u32 %v1532, 7
    %v1534 = vsub.s32 %v1531, %v1533
    %v1535 = vrot.slane %v1521, %v1534
    %v1536 = vcombine.high %v1528, %v1528
    %v1537 = vcombine.high %v1385, %v1385
    %v1539 = vunpack.c.l.s4 1983009808
    %v1540 = vunpack.c.0.s8 %v1539
    %v1541 = vlaneseq
    %v1542 = vshrl.u32 %v1541, 7
    %v1543 = vsub.s32 %v1540, %v1542
    %v1544 = vrot.slane %v1385, %v1543
    %v1546 = vunpack.c.l.s4 1983009808
    %v1547 = vunpack.c.0.s8 %v1546
    %v1548 = vlaneseq
    %v1549 = vshrl.u32 %v1548, 7
    %v1550 = vsub.s32 %v1547, %v1549
    %v1551 = vrot.slane %v1537, %v1550
    %v1552 = vcombine.high %v1544, %v1544
    %v1553 = vcombine.high %v1417, %v1417
    %v1555 = vunpack.c.l.s4 1983009808
    %v1556 = vunpack.c.0.s8 %v1555
    %v1557 = vlaneseq
    %v1558 = vshrl.u32 %v1557, 7
    %v1559 = vsub.s32 %v1556, %v1558
    %v1560 = vrot.slane %v1417, %v1559
    %v1562 = vunpack.c.l.s4 1983009808
    %v1563 = vunpack.c.0.s8 %v1562
    %v1564 = vlaneseq
    %v1565 = vshrl.u32 %v1564, 7
    %v1566 = vsub.s32 %v1563, %v1565
    %v1567 = vrot.slane %v1553, %v1566
    %v1568 = vcombine.high %v1560, %v1560
    %v1569 = vcombine.low %v1448, %v1456
    %v1570 = vcombine.low %v1455, %v1464
    %v1572 = vunpack.c.l.s4 1983009808
    %v1573 = vunpack.c.0.s8 %v1572
    %v1574 = vlaneseq
    %v1575 = vshrl.u32 %v1574, 7
    %v1576 = vsub.s32 %v1573, %v1575
    %v1577 = vrot.slane %v1569, %v1576
    %v1579 = vunpack.c.l.s4 1983009808
    %v1580 = vunpack.c.0.s8 %v1579
    %v1581 = vlaneseq
    %v1582 = vshrl.u32 %v1581, 7
    %v1583 = vsub.s32 %v1580, %v1582
    %v1584 = vrot.slane %v1570, %v1583
    %v1585 = vcombine.low %v1577, %v1584
    %v1586 = vcombine.low %v1472, %v1471
    %v1587 = vcombine.low %v1480, %v1488
    %v1589 = vunpack.c.l.s4 1983009808
    %v1590 = vunpack.c.0.s8 %v1589
    %v1591 = vlaneseq
    %v1592 = vshrl.u32 %v1591, 7
    %v1593 = vsub.s32 %v1590, %v1592
    %v1594 = vrot.slane %v1586, %v1593
    %v1596 = vunpack.c.l.s4 1983009808
    %v1597 = vunpack.c.0.s8 %v1596
    %v1598 = vlaneseq
    %v1599 = vshrl.u32 %v1598, 7
    %v1600 = vsub.s32 %v1597, %v1599
    %v1601 = vrot.slane %v1587, %v1600
    %v1602 = vcombine.low %v1594, %v1601
    %v1603 = vcombine.low %v1487, %v1496
    %v1604 = vcombine.low %v1504, %v1503
    %v1606 = vunpack.c.l.s4 1983009808
    %v1607 = vunpack.c.0.s8 %v1606
    %v1608 = vlaneseq
    %v1609 = vshrl.u32 %v1608, 7
    %v1610 = vsub.s32 %v1607, %v1609
    %v1611 = vrot.slane %v1603, %v1610
    %v1613 = vunpack.c.l.s4 1983009808
    %v1614 = vunpack.c.0.s8 %v1613
    %v1615 = vlaneseq
    %v1616 = vshrl.u32 %v1615, 7
    %v1617 = vsub.s32 %v1614, %v1616
    %v1618 = vrot.slane %v1604, %v1617
    %v1619 = vcombine.low %v1611, %v1618
    %v1620 = vcombine.low %v1512, %v1520
    %v1621 = vcombine.low %v1519, %v1528
    %v1623 = vunpack.c.l.s4 1983009808
    %v1624 = vunpack.c.0.s8 %v1623
    %v1625 = vlaneseq
    %v1626 = vshrl.u32 %v1625, 7
    %v1627 = vsub.s32 %v1624, %v1626
    %v1628 = vrot.slane %v1620, %v1627
    %v1630 = vunpack.c.l.s4 1983009808
    %v1631 = vunpack.c.0.s8 %v1630
    %v1632 = vlaneseq
    %v1633 = vshrl.u32 %v1632, 7
    %v1634 = vsub.s32 %v1631, %v1633
    %v1635 = vrot.slane %v1621, %v1634
    %v1636 = vcombine.low %v1628, %v1635
    %v1637 = vcombine.low %v1536, %v1535
    %v1638 = vcombine.low %v1544, %v1552
    %v1640 = vunpack.c.l.s4 1983009808
    %v1641 = vunpack.c.0.s8 %v1640
    %v1642 = vlaneseq
    %v1643 = vshrl.u32 %v1642, 7
    %v1644 = vsub.s32 %v1641, %v1643
    %v1645 = vrot.slane %v1637, %v1644
    %v1647 = vunpack.c.l.s4 1983009808
    %v1648 = vunpack.c.0.s8 %v1647
    %v1649 = vlaneseq
    %v1650 = vshrl.u32 %v1649, 7
    %v1651 = vsub.s32 %v1648, %v1650
    %v1652 = vrot.slane %v1638, %v1651
    %v1653 = vcombine.low %v1645, %v1652
    %v1654 = vcombine.low %v1551, %v1560
    %v1655 = vcombine.low %v1568, %v1567
    %v1657 = vunpack.c.l.s4 1983009808
    %v1658 = vunpack.c.0.s8 %v1657
    %v1659 = vlaneseq
    %v1660 = vshrl.u32 %v1659, 7
    %v1661 = vsub.s32 %v1658, %v1660
    %v1662 = vrot.slane %v1654, %v1661
    %v1664 = vunpack.c.l.s4 1983009808
    %v1665 = vunpack.c.0.s8 %v1664
    %v1666 = vlaneseq
    %v1667 = vshrl.u32 %v1666, 7
    %v1668 = vsub.s32 %v1665, %v1667
    %v1669 = vrot.slane %v1655, %v1668
    %v1670 = vcombine.low %v1662, %v1669
    %v1671 = vsel %vm57, %v1585, 0
    %v1673 = vsel %vm57, %v1602, 0
    %v1675 = vsel %vm57, %v1619, 0
    %v1677 = vsel %vm57, %v1636, 0
    %v1679 = vsel %vm57, %v1653, 0
    %v1681 = vsel %vm57, %v1670, 0
    %1683 = vmatprep.subr.mxu0 0.0
    %1684 = vmatpush1.msra.mxu0 %v55
    %1685 = vmatprep.subr.mxu0 0.0
    %1686 = vmatpush1.msra.mxu0 %v56
    %1687 = vmatprep.subr.mxu0 0.0
    %1688 = vmatpush1.msra.mxu0 0.0
    %1689 = vmatprep.subr.mxu0 0.0
    %1690 = vmatpush1.msra.mxu0 0.0
    %1691 = vmatprep.subr.mxu0 0.0
    %1692 = vmatpush1.msra.mxu0 0.0
    %1693 = vmatprep.subr.mxu0 0.0
    %1694 = vmatpush1.msra.mxu0 0.0
    %1695 = vmatprep.subr.mxu0 0.0
    %1696 = vmatpush1.msra.mxu0 0.0
    %1697 = vmatprep.subr.mxu0 0.0
    %1698 = vmatpush1.msra.mxu0 0.0
    %1699 = vmatprep.subr.mxu0 0.0
    %1700 = vmatpush1.msra.mxu0 0.0
    %1701 = vmatprep.subr.mxu0 0.0
    %1702 = vmatpush1.msra.mxu0 0.0
    %1703 = vmatprep.subr.mxu0 0.0
    %1704 = vmatpush1.msra.mxu0 0.0
    %1705 = vmatprep.subr.mxu0 0.0
    %1706 = vmatpush1.msra.mxu0 0.0
    %1707 = vmatprep.subr.mxu0 0.0
    %1708 = vmatpush1.msra.mxu0 0.0
    %1709 = vmatprep.subr.mxu0 0.0
    %1710 = vmatpush1.msra.mxu0 0.0
    %1711 = vmatprep.subr.mxu0 0.0
    %1712 = vmatpush1.msra.mxu0 0.0
    %1713 = vmatprep.subr.mxu0 0.0
    %1714 = vmatpush1.msra.mxu0 0.0
    %1715 = vmatprep.subr.mxu0 0.0
    %1716 = vmatpush1.msra.mxu0 0.0
    %1717 = vmatprep.subr.mxu0 0.0
    %1718 = vmatpush1.msra.mxu0 0.0
    %1719 = vmatprep.subr.mxu0 0.0
    %1720 = vmatpush1.msra.mxu0 0.0
    %1721 = vmatprep.subr.mxu0 0.0
    %1722 = vmatpush1.msra.mxu0 0.0
    %1723 = vmatprep.subr.mxu0 0.0
    %1724 = vmatpush1.msra.mxu0 0.0
    %1725 = vmatprep.subr.mxu0 0.0
    %1726 = vmatpush1.msra.mxu0 0.0
    %1727 = vmatprep.subr.mxu0 0.0
    %1728 = vmatpush1.msra.mxu0 0.0
    %1729 = vmatprep.subr.mxu0 0.0
    %1730 = vmatpush1.msra.mxu0 0.0
    %1731 = vmatprep.subr.mxu0 0.0
    %1732 = vmatpush1.msra.mxu0 0.0
    %1733 = vmatprep.subr.mxu0 0.0
    %1734 = vmatpush1.msra.mxu0 0.0
    %1735 = vmatprep.subr.mxu0 0.0
    %1736 = vmatpush1.msra.mxu0 0.0
    %1737 = vmatprep.subr.mxu0 0.0
    %1738 = vmatpush1.msra.mxu0 0.0
    %1739 = vmatprep.subr.mxu0 0.0
    %1740 = vmatpush1.msra.mxu0 0.0
    %1741 = vmatprep.subr.mxu0 0.0
    %1742 = vmatpush1.msra.mxu0 0.0
    %1743 = vmatprep.subr.mxu0 0.0
    %1744 = vmatpush1.msra.mxu0 0.0
    %1745 = vmatprep.subr.mxu0 0.0
    %1746 = vmatpush1.msra.mxu0 0.0
    %1747 = vmatprep.mubr.f32.mxu0 0.0
    %1748 = vmatmul.mubr.f32.gmra.mrb[0].mxu0 %v1671
    %v1749 = vpop.f32.mrb[0].mxu0
    %v1750 = vadd.f32 0.0, %v1749
    %v1751 = vpop.f32.mrb[0].mxu0
    %1752 = vmatprep.mubr.f32.mxu0 0.0
    %1753 = vmatmul.mubr.f32.gmra.mrb[0].mxu0 %v1673
    %v1754 = vpop.f32.mrb[0].mxu0
    %v1755 = vadd.f32 0.0, %v1754
    %v1756 = vpop.f32.mrb[0].mxu0
    %1757 = vmatprep.mubr.f32.mxu0 0.0
    %1758 = vmatmul.mubr.f32.gmra.mrb[0].mxu0 %v1675
    %v1759 = vpop.f32.mrb[0].mxu0
    %v1760 = vadd.f32 0.0, %v1759
    %v1761 = vpop.f32.mrb[0].mxu0
    %1762 = vmatprep.mubr.f32.mxu0 0.0
    %1763 = vmatmul.mubr.f32.gmra.mrb[0].mxu0 %v1677
    %v1764 = vpop.f32.mrb[0].mxu0
    %v1765 = vadd.f32 0.0, %v1764
    %v1766 = vpop.f32.mrb[0].mxu0
    %1767 = vmatprep.mubr.f32.mxu0 0.0
    %1768 = vmatmul.mubr.f32.gmra.mrb[0].mxu0 %v1679
    %v1769 = vpop.f32.mrb[0].mxu0
    %v1770 = vadd.f32 0.0, %v1769
    %v1771 = vpop.f32.mrb[0].mxu0
    %1772 = vmatprep.mubr.f32.mxu0 0.0
    %1773 = vmatmul.mubr.f32.gmra.mrb[0].mxu0 %v1681
    %v1774 = vpop.f32.mrb[0].mxu0
    %v1775 = vadd.f32 0.0, %v1774
    %v1776 = vpop.f32.mrb[0].mxu0
    %1777 = vdwg.mxu0
    %v1784 = vcombine.high %v1750, %v1750
    %v1786 = vunpack.c.l.s4 1983009808
    %v1787 = vunpack.c.0.s8 %v1786
    %v1788 = vlaneseq
    %v1789 = vshrl.u32 %v1788, 7
    %v1790 = vsub.s32 %v1787, %v1789
    %v1791 = vrot.slane %v1750, %v1790
    %v1793 = vunpack.c.l.s4 1983009808
    %v1794 = vunpack.c.0.s8 %v1793
    %v1795 = vlaneseq
    %v1796 = vshrl.u32 %v1795, 7
    %v1797 = vsub.s32 %v1794, %v1796
    %v1798 = vrot.slane %v1784, %v1797
    %v1799 = vcombine.high %v1791, %v1791
    %v1800 = vcombine.high %v1798, %v1798
    %v1801 = vcombine.high %v1755, %v1755
    %v1803 = vunpack.c.l.s4 1983009808
    %v1804 = vunpack.c.0.s8 %v1803
    %v1805 = vlaneseq
    %v1806 = vshrl.u32 %v1805, 7
    %v1807 = vsub.s32 %v1804, %v1806
    %v1808 = vrot.slane %v1755, %v1807
    %v1810 = vunpack.c.l.s4 1983009808
    %v1811 = vunpack.c.0.s8 %v1810
    %v1812 = vlaneseq
    %v1813 = vshrl.u32 %v1812, 7
    %v1814 = vsub.s32 %v1811, %v1813
    %v1815 = vrot.slane %v1801, %v1814
    %v1816 = vcombine.high %v1808, %v1808
    %v1817 = vcombine.high %v1815, %v1815
    %v1818 = vcombine.high %v1760, %v1760
    %v1820 = vunpack.c.l.s4 1983009808
    %v1821 = vunpack.c.0.s8 %v1820
    %v1822 = vlaneseq
    %v1823 = vshrl.u32 %v1822, 7
    %v1824 = vsub.s32 %v1821, %v1823
    %v1825 = vrot.slane %v1760, %v1824
    %v1827 = vunpack.c.l.s4 1983009808
    %v1828 = vunpack.c.0.s8 %v1827
    %v1829 = vlaneseq
    %v1830 = vshrl.u32 %v1829, 7
    %v1831 = vsub.s32 %v1828, %v1830
    %v1832 = vrot.slane %v1818, %v1831
    %v1833 = vcombine.high %v1825, %v1825
    %v1834 = vcombine.high %v1832, %v1832
    %v1835 = vcombine.high %v1765, %v1765
    %v1837 = vunpack.c.l.s4 1983009808
    %v1838 = vunpack.c.0.s8 %v1837
    %v1839 = vlaneseq
    %v1840 = vshrl.u32 %v1839, 7
    %v1841 = vsub.s32 %v1838, %v1840
    %v1842 = vrot.slane %v1765, %v1841
    %v1844 = vunpack.c.l.s4 1983009808
    %v1845 = vunpack.c.0.s8 %v1844
    %v1846 = vlaneseq
    %v1847 = vshrl.u32 %v1846, 7
    %v1848 = vsub.s32 %v1845, %v1847
    %v1849 = vrot.slane %v1835, %v1848
    %v1850 = vcombine.high %v1842, %v1842
    %v1851 = vcombine.high %v1849, %v1849
    %v1852 = vcombine.high %v1770, %v1770
    %v1854 = vunpack.c.l.s4 1983009808
    %v1855 = vunpack.c.0.s8 %v1854
    %v1856 = vlaneseq
    %v1857 = vshrl.u32 %v1856, 7
    %v1858 = vsub.s32 %v1855, %v1857
    %v1859 = vrot.slane %v1770, %v1858
    %v1861 = vunpack.c.l.s4 1983009808
    %v1862 = vunpack.c.0.s8 %v1861
    %v1863 = vlaneseq
    %v1864 = vshrl.u32 %v1863, 7
    %v1865 = vsub.s32 %v1862, %v1864
    %v1866 = vrot.slane %v1852, %v1865
    %v1867 = vcombine.high %v1859, %v1859
    %v1868 = vcombine.high %v1866, %v1866
    %v1869 = vcombine.high %v1775, %v1775
    %v1871 = vunpack.c.l.s4 1983009808
    %v1872 = vunpack.c.0.s8 %v1871
    %v1873 = vlaneseq
    %v1874 = vshrl.u32 %v1873, 7
    %v1875 = vsub.s32 %v1872, %v1874
    %v1876 = vrot.slane %v1775, %v1875
    %v1878 = vunpack.c.l.s4 1983009808
    %v1879 = vunpack.c.0.s8 %v1878
    %v1880 = vlaneseq
    %v1881 = vshrl.u32 %v1880, 7
    %v1882 = vsub.s32 %v1879, %v1881
    %v1883 = vrot.slane %v1869, %v1882
    %v1884 = vcombine.high %v1876, %v1876
    %v1885 = vcombine.high %v1883, %v1883
    %v1910 = vmul.f32 %v21, %v21
    %v1911 = vmul.f32 %v22, %v22
    %v1912 = vmul.f32 %v23, %v23
    %v1913 = vmul.f32 %v24, %v24
    %v1914 = vmul.f32 %v25, %v25
    %v1915 = vmul.f32 %v26, %v26
    %v1916 = vmul.f32 %v27, %v27
    %v1917 = vmul.f32 %v28, %v28
    %v1918 = vmul.f32 %v29, %v29
    %v1919 = vmul.f32 %v30, %v30
    %v1920 = vmul.f32 %v31, %v31
    %v1921 = vmul.f32 %v32, %v32
    %v1922 = vmul.f32 %v33, %v33
    %v1923 = vmul.f32 %v34, %v34
    %v1924 = vmul.f32 %v35, %v35
    %v1925 = vmul.f32 %v36, %v36
    %v1927 = vsel %vm57, %v1910, 0
    %v1930 = vsel %vm57, %v1911, 0
    %v1933 = vsel %vm57, %v1912, 0
    %v1936 = vsel %vm57, %v1913, 0
    %v1939 = vsel %vm57, %v1914, 0
    %v1942 = vsel %vm57, %v1915, 0
    %v1945 = vsel %vm57, %v1916, 0
    %v1948 = vsel %vm57, %v1917, 0
    %v1951 = vsel %vm57, %v1918, 0
    %v1954 = vsel %vm57, %v1919, 0
    %v1957 = vsel %vm57, %v1920, 0
    %v1960 = vsel %vm57, %v1921, 0
    %v1963 = vsel %vm57, %v1922, 0
    %v1966 = vsel %vm57, %v1923, 0
    %v1969 = vsel %vm57, %v1924, 0
    %v1972 = vsel %vm57, %v1925, 0
    %1974 = vmatprep.subr.mxu0 0.0
    %1975 = vmatpush1.msra.mxu0 %v53
    %1976 = vmatprep.subr.mxu0 0.0
    %1977 = vmatpush1.msra.mxu0 %v54
    %1978 = vmatprep.subr.mxu0 0.0
    %1979 = vmatpush1.msra.mxu0 0.0
    %1980 = vmatprep.subr.mxu0 0.0
    %1981 = vmatpush1.msra.mxu0 0.0
    %1982 = vmatprep.subr.mxu0 0.0
    %1983 = vmatpush1.msra.mxu0 0.0
    %1984 = vmatprep.subr.mxu0 0.0
    %1985 = vmatpush1.msra.mxu0 0.0
    %1986 = vmatprep.subr.mxu0 0.0
    %1987 = vmatpush1.msra.mxu0 0.0
    %1988 = vmatprep.subr.mxu0 0.0
    %1989 = vmatpush1.msra.mxu0 0.0
    %1990 = vmatprep.subr.mxu0 0.0
    %1991 = vmatpush1.msra.mxu0 0.0
    %1992 = vmatprep.subr.mxu0 0.0
    %1993 = vmatpush1.msra.mxu0 0.0
    %1994 = vmatprep.subr.mxu0 0.0
    %1995 = vmatpush1.msra.mxu0 0.0
    %1996 = vmatprep.subr.mxu0 0.0
    %1997 = vmatpush1.msra.mxu0 0.0
    %1998 = vmatprep.subr.mxu0 0.0
    %1999 = vmatpush1.msra.mxu0 0.0
    %2000 = vmatprep.subr.mxu0 0.0
    %2001 = vmatpush1.msra.mxu0 0.0
    %2002 = vmatprep.subr.mxu0 0.0
    %2003 = vmatpush1.msra.mxu0 0.0
    %2004 = vmatprep.subr.mxu0 0.0
    %2005 = vmatpush1.msra.mxu0 0.0
    %2006 = vmatprep.subr.mxu0 0.0
    %2007 = vmatpush1.msra.mxu0 0.0
    %2008 = vmatprep.subr.mxu0 0.0
    %2009 = vmatpush1.msra.mxu0 0.0
    %2010 = vmatprep.subr.mxu0 0.0
    %2011 = vmatpush1.msra.mxu0 0.0
    %2012 = vmatprep.subr.mxu0 0.0
    %2013 = vmatpush1.msra.mxu0 0.0
    %2014 = vmatprep.subr.mxu0 0.0
    %2015 = vmatpush1.msra.mxu0 0.0
    %2016 = vmatprep.subr.mxu0 0.0
    %2017 = vmatpush1.msra.mxu0 0.0
    %2018 = vmatprep.subr.mxu0 0.0
    %2019 = vmatpush1.msra.mxu0 0.0
    %2020 = vmatprep.subr.mxu0 0.0
    %2021 = vmatpush1.msra.mxu0 0.0
    %2022 = vmatprep.subr.mxu0 0.0
    %2023 = vmatpush1.msra.mxu0 0.0
    %2024 = vmatprep.subr.mxu0 0.0
    %2025 = vmatpush1.msra.mxu0 0.0
    %2026 = vmatprep.subr.mxu0 0.0
    %2027 = vmatpush1.msra.mxu0 0.0
    %2028 = vmatprep.subr.mxu0 0.0
    %2029 = vmatpush1.msra.mxu0 0.0
    %2030 = vmatprep.subr.mxu0 0.0
    %2031 = vmatpush1.msra.mxu0 0.0
    %2032 = vmatprep.subr.mxu0 0.0
    %2033 = vmatpush1.msra.mxu0 0.0
    %2034 = vmatprep.subr.mxu0 0.0
    %2035 = vmatpush1.msra.mxu0 0.0
    %2036 = vmatprep.subr.mxu0 0.0
    %2037 = vmatpush1.msra.mxu0 0.0
    %2038 = vmatprep.mubr.f32.mxu0 0.0
    %2039 = vmatmul.mubr.f32.gmra.mrb[0].mxu0 %v1927
    %v2040 = vpop.f32.mrb[0].mxu0
    %v2041 = vadd.f32 0.0, %v2040
    %v2042 = vpop.f32.mrb[0].mxu0
    %2043 = vmatprep.mubr.f32.mxu0 0.0
    %2044 = vmatmul.mubr.f32.gmra.mrb[0].mxu0 %v1930
    %v2045 = vpop.f32.mrb[0].mxu0
    %v2046 = vadd.f32 0.0, %v2045
    %v2047 = vpop.f32.mrb[0].mxu0
    %2048 = vmatprep.mubr.f32.mxu0 0.0
    %2049 = vmatmul.mubr.f32.gmra.mrb[0].mxu0 %v1933
    %v2050 = vpop.f32.mrb[0].mxu0
    %v2051 = vadd.f32 0.0, %v2050
    %v2052 = vpop.f32.mrb[0].mxu0
    %2053 = vmatprep.mubr.f32.mxu0 0.0
    %2054 = vmatmul.mubr.f32.gmra.mrb[0].mxu0 %v1936
    %v2055 = vpop.f32.mrb[0].mxu0
    %v2056 = vadd.f32 0.0, %v2055
    %v2057 = vpop.f32.mrb[0].mxu0
    %2058 = vmatprep.mubr.f32.mxu0 0.0
    %2059 = vmatmul.mubr.f32.gmra.mrb[0].mxu0 %v1939
    %v2060 = vpop.f32.mrb[0].mxu0
    %v2061 = vadd.f32 0.0, %v2060
    %v2062 = vpop.f32.mrb[0].mxu0
    %2063 = vmatprep.mubr.f32.mxu0 0.0
    %2064 = vmatmul.mubr.f32.gmra.mrb[0].mxu0 %v1942
    %v2065 = vpop.f32.mrb[0].mxu0
    %v2066 = vadd.f32 0.0, %v2065
    %v2067 = vpop.f32.mrb[0].mxu0
    %2068 = vmatprep.mubr.f32.mxu0 0.0
    %2069 = vmatmul.mubr.f32.gmra.mrb[0].mxu0 %v1945
    %v2070 = vpop.f32.mrb[0].mxu0
    %v2071 = vadd.f32 0.0, %v2070
    %v2072 = vpop.f32.mrb[0].mxu0
    %2073 = vmatprep.mubr.f32.mxu0 0.0
    %2074 = vmatmul.mubr.f32.gmra.mrb[0].mxu0 %v1948
    %v2075 = vpop.f32.mrb[0].mxu0
    %v2076 = vadd.f32 0.0, %v2075
    %v2077 = vpop.f32.mrb[0].mxu0
    %2078 = vmatprep.mubr.f32.mxu0 0.0
    %2079 = vmatmul.mubr.f32.gmra.mrb[0].mxu0 %v1951
    %v2080 = vpop.f32.mrb[0].mxu0
    %v2081 = vadd.f32 0.0, %v2080
    %v2082 = vpop.f32.mrb[0].mxu0
    %2083 = vmatprep.mubr.f32.mxu0 0.0
    %2084 = vmatmul.mubr.f32.gmra.mrb[0].mxu0 %v1954
    %v2085 = vpop.f32.mrb[0].mxu0
    %v2086 = vadd.f32 0.0, %v2085
    %v2087 = vpop.f32.mrb[0].mxu0
    %2088 = vmatprep.mubr.f32.mxu0 0.0
    %2089 = vmatmul.mubr.f32.gmra.mrb[0].mxu0 %v1957
    %v2090 = vpop.f32.mrb[0].mxu0
    %v2091 = vadd.f32 0.0, %v2090
    %v2092 = vpop.f32.mrb[0].mxu0
    %2093 = vmatprep.mubr.f32.mxu0 0.0
    %2094 = vmatmul.mubr.f32.gmra.mrb[0].mxu0 %v1960
    %v2095 = vpop.f32.mrb[0].mxu0
    %v2096 = vadd.f32 0.0, %v2095
    %v2097 = vpop.f32.mrb[0].mxu0
    %2098 = vmatprep.mubr.f32.mxu0 0.0
    %2099 = vmatmul.mubr.f32.gmra.mrb[0].mxu0 %v1963
    %v2100 = vpop.f32.mrb[0].mxu0
    %v2101 = vadd.f32 0.0, %v2100
    %v2102 = vpop.f32.mrb[0].mxu0
    %2103 = vmatprep.mubr.f32.mxu0 0.0
    %2104 = vmatmul.mubr.f32.gmra.mrb[0].mxu0 %v1966
    %v2105 = vpop.f32.mrb[0].mxu0
    %v2106 = vadd.f32 0.0, %v2105
    %v2107 = vpop.f32.mrb[0].mxu0
    %2108 = vmatprep.mubr.f32.mxu0 0.0
    %2109 = vmatmul.mubr.f32.gmra.mrb[0].mxu0 %v1969
    %v2110 = vpop.f32.mrb[0].mxu0
    %v2111 = vadd.f32 0.0, %v2110
    %v2112 = vpop.f32.mrb[0].mxu0
    %2113 = vmatprep.mubr.f32.mxu0 0.0
    %2114 = vmatmul.mubr.f32.gmra.mrb[0].mxu0 %v1972
    %v2115 = vpop.f32.mrb[0].mxu0
    %v2116 = vadd.f32 0.0, %v2115
    %v2117 = vpop.f32.mrb[0].mxu0
    %2118 = vdwg.mxu0
    %2119 = vxpose.xlu0.b32.start [1/16] %v2041, 128
    %2120 = vxpose.xlu0.b32.cont [2/16] %v2046, 128
    %2121 = vxpose.xlu0.b32.cont [3/16] 0.0, 128
    %2122 = vxpose.xlu0.b32.cont [4/16] 0.0, 128
    %2123 = vxpose.xlu0.b32.cont [5/16] 0.0, 128
    %2124 = vxpose.xlu0.b32.cont [6/16] 0.0, 128
    %2125 = vxpose.xlu0.b32.cont [7/16] 0.0, 128
    %2126 = vxpose.xlu0.b32.cont [8/16] 0.0, 128
    %2127 = vxpose.xlu0.b32.cont [9/16] 0.0, 128
    %2128 = vxpose.xlu0.b32.cont [10/16] 0.0, 128
    %2129 = vxpose.xlu0.b32.cont [11/16] 0.0, 128
    %2130 = vxpose.xlu0.b32.cont [12/16] 0.0, 128
    %2131 = vxpose.xlu0.b32.cont [13/16] 0.0, 128
    %2132 = vxpose.xlu0.b32.cont [14/16] 0.0, 128
    %2133 = vxpose.xlu0.b32.cont [15/16] 0.0, 128
    %2134 = vxpose.xlu0.b32.end [16/16] 0.0, 128
    %v2135 = vpop.trf.xlu0
    %v2136 = vpop.trf.xlu0
    %v2137 = vpop.trf.xlu0
    %v2138 = vpop.trf.xlu0
    %v2139 = vpop.trf.xlu0
    %v2140 = vpop.trf.xlu0
    %v2141 = vpop.trf.xlu0
    %v2142 = vpop.trf.xlu0
    %v2143 = vpop.trf.xlu0
    %v2144 = vpop.trf.xlu0
    %v2145 = vpop.trf.xlu0
    %v2146 = vpop.trf.xlu0
    %v2147 = vpop.trf.xlu0
    %v2148 = vpop.trf.xlu0
    %v2149 = vpop.trf.xlu0
    %v2150 = vpop.trf.xlu0
    %2151 = vxpose.xlu0.b32.start [1/16] %v2051, 128
    %2152 = vxpose.xlu0.b32.cont [2/16] %v2056, 128
    %2153 = vxpose.xlu0.b32.cont [3/16] 0.0, 128
    %2154 = vxpose.xlu0.b32.cont [4/16] 0.0, 128
    %2155 = vxpose.xlu0.b32.cont [5/16] 0.0, 128
    %2156 = vxpose.xlu0.b32.cont [6/16] 0.0, 128
    %2157 = vxpose.xlu0.b32.cont [7/16] 0.0, 128
    %2158 = vxpose.xlu0.b32.cont [8/16] 0.0, 128
    %2159 = vxpose.xlu0.b32.cont [9/16] 0.0, 128
    %2160 = vxpose.xlu0.b32.cont [10/16] 0.0, 128
    %2161 = vxpose.xlu0.b32.cont [11/16] 0.0, 128
    %2162 = vxpose.xlu0.b32.cont [12/16] 0.0, 128
    %2163 = vxpose.xlu0.b32.cont [13/16] 0.0, 128
    %2164 = vxpose.xlu0.b32.cont [14/16] 0.0, 128
    %2165 = vxpose.xlu0.b32.cont [15/16] 0.0, 128
    %2166 = vxpose.xlu0.b32.end [16/16] 0.0, 128
    %v2167 = vpop.trf.xlu0
    %v2168 = vpop.trf.xlu0
    %v2169 = vpop.trf.xlu0
    %v2170 = vpop.trf.xlu0
    %v2171 = vpop.trf.xlu0
    %v2172 = vpop.trf.xlu0
    %v2173 = vpop.trf.xlu0
    %v2174 = vpop.trf.xlu0
    %v2175 = vpop.trf.xlu0
    %v2176 = vpop.trf.xlu0
    %v2177 = vpop.trf.xlu0
    %v2178 = vpop.trf.xlu0
    %v2179 = vpop.trf.xlu0
    %v2180 = vpop.trf.xlu0
    %v2181 = vpop.trf.xlu0
    %v2182 = vpop.trf.xlu0
    %2183 = vxpose.xlu0.b32.start [1/16] %v2061, 128
    %2184 = vxpose.xlu0.b32.cont [2/16] %v2066, 128
    %2185 = vxpose.xlu0.b32.cont [3/16] 0.0, 128
    %2186 = vxpose.xlu0.b32.cont [4/16] 0.0, 128
    %2187 = vxpose.xlu0.b32.cont [5/16] 0.0, 128
    %2188 = vxpose.xlu0.b32.cont [6/16] 0.0, 128
    %2189 = vxpose.xlu0.b32.cont [7/16] 0.0, 128
    %2190 = vxpose.xlu0.b32.cont [8/16] 0.0, 128
    %2191 = vxpose.xlu0.b32.cont [9/16] 0.0, 128
    %2192 = vxpose.xlu0.b32.cont [10/16] 0.0, 128
    %2193 = vxpose.xlu0.b32.cont [11/16] 0.0, 128
    %2194 = vxpose.xlu0.b32.cont [12/16] 0.0, 128
    %2195 = vxpose.xlu0.b32.cont [13/16] 0.0, 128
    %2196 = vxpose.xlu0.b32.cont [14/16] 0.0, 128
    %2197 = vxpose.xlu0.b32.cont [15/16] 0.0, 128
    %2198 = vxpose.xlu0.b32.end [16/16] 0.0, 128
    %v2199 = vpop.trf.xlu0
    %v2200 = vpop.trf.xlu0
    %v2201 = vpop.trf.xlu0
    %v2202 = vpop.trf.xlu0
    %v2203 = vpop.trf.xlu0
    %v2204 = vpop.trf.xlu0
    %v2205 = vpop.trf.xlu0
    %v2206 = vpop.trf.xlu0
    %v2207 = vpop.trf.xlu0
    %v2208 = vpop.trf.xlu0
    %v2209 = vpop.trf.xlu0
    %v2210 = vpop.trf.xlu0
    %v2211 = vpop.trf.xlu0
    %v2212 = vpop.trf.xlu0
    %v2213 = vpop.trf.xlu0
    %v2214 = vpop.trf.xlu0
    %2215 = vxpose.xlu0.b32.start [1/16] %v2071, 128
    %2216 = vxpose.xlu0.b32.cont [2/16] %v2076, 128
    %2217 = vxpose.xlu0.b32.cont [3/16] 0.0, 128
    %2218 = vxpose.xlu0.b32.cont [4/16] 0.0, 128
    %2219 = vxpose.xlu0.b32.cont [5/16] 0.0, 128
    %2220 = vxpose.xlu0.b32.cont [6/16] 0.0, 128
    %2221 = vxpose.xlu0.b32.cont [7/16] 0.0, 128
    %2222 = vxpose.xlu0.b32.cont [8/16] 0.0, 128
    %2223 = vxpose.xlu0.b32.cont [9/16] 0.0, 128
    %2224 = vxpose.xlu0.b32.cont [10/16] 0.0, 128
    %2225 = vxpose.xlu0.b32.cont [11/16] 0.0, 128
    %2226 = vxpose.xlu0.b32.cont [12/16] 0.0, 128
    %2227 = vxpose.xlu0.b32.cont [13/16] 0.0, 128
    %2228 = vxpose.xlu0.b32.cont [14/16] 0.0, 128
    %2229 = vxpose.xlu0.b32.cont [15/16] 0.0, 128
    %2230 = vxpose.xlu0.b32.end [16/16] 0.0, 128
    %v2231 = vpop.trf.xlu0
    %v2232 = vpop.trf.xlu0
    %v2233 = vpop.trf.xlu0
    %v2234 = vpop.trf.xlu0
    %v2235 = vpop.trf.xlu0
    %v2236 = vpop.trf.xlu0
    %v2237 = vpop.trf.xlu0
    %v2238 = vpop.trf.xlu0
    %v2239 = vpop.trf.xlu0
    %v2240 = vpop.trf.xlu0
    %v2241 = vpop.trf.xlu0
    %v2242 = vpop.trf.xlu0
    %v2243 = vpop.trf.xlu0
    %v2244 = vpop.trf.xlu0
    %v2245 = vpop.trf.xlu0
    %v2246 = vpop.trf.xlu0
    %2247 = vxpose.xlu0.b32.start [1/16] %v2081, 128
    %2248 = vxpose.xlu0.b32.cont [2/16] %v2086, 128
    %2249 = vxpose.xlu0.b32.cont [3/16] 0.0, 128
    %2250 = vxpose.xlu0.b32.cont [4/16] 0.0, 128
    %2251 = vxpose.xlu0.b32.cont [5/16] 0.0, 128
    %2252 = vxpose.xlu0.b32.cont [6/16] 0.0, 128
    %2253 = vxpose.xlu0.b32.cont [7/16] 0.0, 128
    %2254 = vxpose.xlu0.b32.cont [8/16] 0.0, 128
    %2255 = vxpose.xlu0.b32.cont [9/16] 0.0, 128
    %2256 = vxpose.xlu0.b32.cont [10/16] 0.0, 128
    %2257 = vxpose.xlu0.b32.cont [11/16] 0.0, 128
    %2258 = vxpose.xlu0.b32.cont [12/16] 0.0, 128
    %2259 = vxpose.xlu0.b32.cont [13/16] 0.0, 128
    %2260 = vxpose.xlu0.b32.cont [14/16] 0.0, 128
    %2261 = vxpose.xlu0.b32.cont [15/16] 0.0, 128
    %2262 = vxpose.xlu0.b32.end [16/16] 0.0, 128
    %v2263 = vpop.trf.xlu0
    %v2264 = vpop.trf.xlu0
    %v2265 = vpop.trf.xlu0
    %v2266 = vpop.trf.xlu0
    %v2267 = vpop.trf.xlu0
    %v2268 = vpop.trf.xlu0
    %v2269 = vpop.trf.xlu0
    %v2270 = vpop.trf.xlu0
    %v2271 = vpop.trf.xlu0
    %v2272 = vpop.trf.xlu0
    %v2273 = vpop.trf.xlu0
    %v2274 = vpop.trf.xlu0
    %v2275 = vpop.trf.xlu0
    %v2276 = vpop.trf.xlu0
    %v2277 = vpop.trf.xlu0
    %v2278 = vpop.trf.xlu0
    %2279 = vxpose.xlu0.b32.start [1/16] %v2091, 128
    %2280 = vxpose.xlu0.b32.cont [2/16] %v2096, 128
    %2281 = vxpose.xlu0.b32.cont [3/16] 0.0, 128
    %2282 = vxpose.xlu0.b32.cont [4/16] 0.0, 128
    %2283 = vxpose.xlu0.b32.cont [5/16] 0.0, 128
    %2284 = vxpose.xlu0.b32.cont [6/16] 0.0, 128
    %2285 = vxpose.xlu0.b32.cont [7/16] 0.0, 128
    %2286 = vxpose.xlu0.b32.cont [8/16] 0.0, 128
    %2287 = vxpose.xlu0.b32.cont [9/16] 0.0, 128
    %2288 = vxpose.xlu0.b32.cont [10/16] 0.0, 128
    %2289 = vxpose.xlu0.b32.cont [11/16] 0.0, 128
    %2290 = vxpose.xlu0.b32.cont [12/16] 0.0, 128
    %2291 = vxpose.xlu0.b32.cont [13/16] 0.0, 128
    %2292 = vxpose.xlu0.b32.cont [14/16] 0.0, 128
    %2293 = vxpose.xlu0.b32.cont [15/16] 0.0, 128
    %2294 = vxpose.xlu0.b32.end [16/16] 0.0, 128
    %v2295 = vpop.trf.xlu0
    %v2296 = vpop.trf.xlu0
    %v2297 = vpop.trf.xlu0
    %v2298 = vpop.trf.xlu0
    %v2299 = vpop.trf.xlu0
    %v2300 = vpop.trf.xlu0
    %v2301 = vpop.trf.xlu0
    %v2302 = vpop.trf.xlu0
    %v2303 = vpop.trf.xlu0
    %v2304 = vpop.trf.xlu0
    %v2305 = vpop.trf.xlu0
    %v2306 = vpop.trf.xlu0
    %v2307 = vpop.trf.xlu0
    %v2308 = vpop.trf.xlu0
    %v2309 = vpop.trf.xlu0
    %v2310 = vpop.trf.xlu0
    %2311 = vxpose.xlu0.b32.start [1/16] %v2101, 128
    %2312 = vxpose.xlu0.b32.cont [2/16] %v2106, 128
    %2313 = vxpose.xlu0.b32.cont [3/16] 0.0, 128
    %2314 = vxpose.xlu0.b32.cont [4/16] 0.0, 128
    %2315 = vxpose.xlu0.b32.cont [5/16] 0.0, 128
    %2316 = vxpose.xlu0.b32.cont [6/16] 0.0, 128
    %2317 = vxpose.xlu0.b32.cont [7/16] 0.0, 128
    %2318 = vxpose.xlu0.b32.cont [8/16] 0.0, 128
    %2319 = vxpose.xlu0.b32.cont [9/16] 0.0, 128
    %2320 = vxpose.xlu0.b32.cont [10/16] 0.0, 128
    %2321 = vxpose.xlu0.b32.cont [11/16] 0.0, 128
    %2322 = vxpose.xlu0.b32.cont [12/16] 0.0, 128
    %2323 = vxpose.xlu0.b32.cont [13/16] 0.0, 128
    %2324 = vxpose.xlu0.b32.cont [14/16] 0.0, 128
    %2325 = vxpose.xlu0.b32.cont [15/16] 0.0, 128
    %2326 = vxpose.xlu0.b32.end [16/16] 0.0, 128
    %v2327 = vpop.trf.xlu0
    %v2328 = vpop.trf.xlu0
    %v2329 = vpop.trf.xlu0
    %v2330 = vpop.trf.xlu0
    %v2331 = vpop.trf.xlu0
    %v2332 = vpop.trf.xlu0
    %v2333 = vpop.trf.xlu0
    %v2334 = vpop.trf.xlu0
    %v2335 = vpop.trf.xlu0
    %v2336 = vpop.trf.xlu0
    %v2337 = vpop.trf.xlu0
    %v2338 = vpop.trf.xlu0
    %v2339 = vpop.trf.xlu0
    %v2340 = vpop.trf.xlu0
    %v2341 = vpop.trf.xlu0
    %v2342 = vpop.trf.xlu0
    %2343 = vxpose.xlu0.b32.start [1/16] %v2111, 128
    %2344 = vxpose.xlu0.b32.cont [2/16] %v2116, 128
    %2345 = vxpose.xlu0.b32.cont [3/16] 0.0, 128
    %2346 = vxpose.xlu0.b32.cont [4/16] 0.0, 128
    %2347 = vxpose.xlu0.b32.cont [5/16] 0.0, 128
    %2348 = vxpose.xlu0.b32.cont [6/16] 0.0, 128
    %2349 = vxpose.xlu0.b32.cont [7/16] 0.0, 128
    %2350 = vxpose.xlu0.b32.cont [8/16] 0.0, 128
    %2351 = vxpose.xlu0.b32.cont [9/16] 0.0, 128
    %2352 = vxpose.xlu0.b32.cont [10/16] 0.0, 128
    %2353 = vxpose.xlu0.b32.cont [11/16] 0.0, 128
    %2354 = vxpose.xlu0.b32.cont [12/16] 0.0, 128
    %2355 = vxpose.xlu0.b32.cont [13/16] 0.0, 128
    %2356 = vxpose.xlu0.b32.cont [14/16] 0.0, 128
    %2357 = vxpose.xlu0.b32.cont [15/16] 0.0, 128
    %2358 = vxpose.xlu0.b32.end [16/16] 0.0, 128
    %v2359 = vpop.trf.xlu0
    %v2360 = vpop.trf.xlu0
    %v2361 = vpop.trf.xlu0
    %v2362 = vpop.trf.xlu0
    %v2363 = vpop.trf.xlu0
    %v2364 = vpop.trf.xlu0
    %v2365 = vpop.trf.xlu0
    %v2366 = vpop.trf.xlu0
    %v2367 = vpop.trf.xlu0
    %v2368 = vpop.trf.xlu0
    %v2369 = vpop.trf.xlu0
    %v2370 = vpop.trf.xlu0
    %v2371 = vpop.trf.xlu0
    %v2372 = vpop.trf.xlu0
    %v2373 = vpop.trf.xlu0
    %v2374 = vpop.trf.xlu0
    %v2383 = vcombine.high %v2135, %v2135
    %v2385 = vunpack.c.l.s4 1983009808
    %v2386 = vunpack.c.0.s8 %v2385
    %v2387 = vlaneseq
    %v2388 = vshrl.u32 %v2387, 7
    %v2389 = vsub.s32 %v2386, %v2388
    %v2390 = vrot.slane %v2135, %v2389
    %v2392 = vunpack.c.l.s4 1983009808
    %v2393 = vunpack.c.0.s8 %v2392
    %v2394 = vlaneseq
    %v2395 = vshrl.u32 %v2394, 7
    %v2396 = vsub.s32 %v2393, %v2395
    %v2397 = vrot.slane %v2383, %v2396
    %v2398 = vcombine.high %v2390, %v2390
    %v2399 = vcombine.high %v2167, %v2167
    %v2401 = vunpack.c.l.s4 1983009808
    %v2402 = vunpack.c.0.s8 %v2401
    %v2403 = vlaneseq
    %v2404 = vshrl.u32 %v2403, 7
    %v2405 = vsub.s32 %v2402, %v2404
    %v2406 = vrot.slane %v2167, %v2405
    %v2408 = vunpack.c.l.s4 1983009808
    %v2409 = vunpack.c.0.s8 %v2408
    %v2410 = vlaneseq
    %v2411 = vshrl.u32 %v2410, 7
    %v2412 = vsub.s32 %v2409, %v2411
    %v2413 = vrot.slane %v2399, %v2412
    %v2414 = vcombine.high %v2406, %v2406
    %v2415 = vcombine.high %v2199, %v2199
    %v2417 = vunpack.c.l.s4 1983009808
    %v2418 = vunpack.c.0.s8 %v2417
    %v2419 = vlaneseq
    %v2420 = vshrl.u32 %v2419, 7
    %v2421 = vsub.s32 %v2418, %v2420
    %v2422 = vrot.slane %v2199, %v2421
    %v2424 = vunpack.c.l.s4 1983009808
    %v2425 = vunpack.c.0.s8 %v2424
    %v2426 = vlaneseq
    %v2427 = vshrl.u32 %v2426, 7
    %v2428 = vsub.s32 %v2425, %v2427
    %v2429 = vrot.slane %v2415, %v2428
    %v2430 = vcombine.high %v2422, %v2422
    %v2431 = vcombine.high %v2231, %v2231
    %v2433 = vunpack.c.l.s4 1983009808
    %v2434 = vunpack.c.0.s8 %v2433
    %v2435 = vlaneseq
    %v2436 = vshrl.u32 %v2435, 7
    %v2437 = vsub.s32 %v2434, %v2436
    %v2438 = vrot.slane %v2231, %v2437
    %v2440 = vunpack.c.l.s4 1983009808
    %v2441 = vunpack.c.0.s8 %v2440
    %v2442 = vlaneseq
    %v2443 = vshrl.u32 %v2442, 7
    %v2444 = vsub.s32 %v2441, %v2443
    %v2445 = vrot.slane %v2431, %v2444
    %v2446 = vcombine.high %v2438, %v2438
    %v2447 = vcombine.high %v2263, %v2263
    %v2449 = vunpack.c.l.s4 1983009808
    %v2450 = vunpack.c.0.s8 %v2449
    %v2451 = vlaneseq
    %v2452 = vshrl.u32 %v2451, 7
    %v2453 = vsub.s32 %v2450, %v2452
    %v2454 = vrot.slane %v2263, %v2453
    %v2456 = vunpack.c.l.s4 1983009808
    %v2457 = vunpack.c.0.s8 %v2456
    %v2458 = vlaneseq
    %v2459 = vshrl.u32 %v2458, 7
    %v2460 = vsub.s32 %v2457, %v2459
    %v2461 = vrot.slane %v2447, %v2460
    %v2462 = vcombine.high %v2454, %v2454
    %v2463 = vcombine.high %v2295, %v2295
    %v2465 = vunpack.c.l.s4 1983009808
    %v2466 = vunpack.c.0.s8 %v2465
    %v2467 = vlaneseq
    %v2468 = vshrl.u32 %v2467, 7
    %v2469 = vsub.s32 %v2466, %v2468
    %v2470 = vrot.slane %v2295, %v2469
    %v2472 = vunpack.c.l.s4 1983009808
    %v2473 = vunpack.c.0.s8 %v2472
    %v2474 = vlaneseq
    %v2475 = vshrl.u32 %v2474, 7
    %v2476 = vsub.s32 %v2473, %v2475
    %v2477 = vrot.slane %v2463, %v2476
    %v2478 = vcombine.high %v2470, %v2470
    %v2479 = vcombine.high %v2327, %v2327
    %v2481 = vunpack.c.l.s4 1983009808
    %v2482 = vunpack.c.0.s8 %v2481
    %v2483 = vlaneseq
    %v2484 = vshrl.u32 %v2483, 7
    %v2485 = vsub.s32 %v2482, %v2484
    %v2486 = vrot.slane %v2327, %v2485
    %v2488 = vunpack.c.l.s4 1983009808
    %v2489 = vunpack.c.0.s8 %v2488
    %v2490 = vlaneseq
    %v2491 = vshrl.u32 %v2490, 7
    %v2492 = vsub.s32 %v2489, %v2491
    %v2493 = vrot.slane %v2479, %v2492
    %v2494 = vcombine.high %v2486, %v2486
    %v2495 = vcombine.high %v2359, %v2359
    %v2497 = vunpack.c.l.s4 1983009808
    %v2498 = vunpack.c.0.s8 %v2497
    %v2499 = vlaneseq
    %v2500 = vshrl.u32 %v2499, 7
    %v2501 = vsub.s32 %v2498, %v2500
    %v2502 = vrot.slane %v2359, %v2501
    %v2504 = vunpack.c.l.s4 1983009808
    %v2505 = vunpack.c.0.s8 %v2504
    %v2506 = vlaneseq
    %v2507 = vshrl.u32 %v2506, 7
    %v2508 = vsub.s32 %v2505, %v2507
    %v2509 = vrot.slane %v2495, %v2508
    %v2510 = vcombine.high %v2502, %v2502
    %v2511 = vcombine.low %v2390, %v2398
    %v2512 = vcombine.low %v2397, %v2406
    %v2514 = vunpack.c.l.s4 1983009808
    %v2515 = vunpack.c.0.s8 %v2514
    %v2516 = vlaneseq
    %v2517 = vshrl.u32 %v2516, 7
    %v2518 = vsub.s32 %v2515, %v2517
    %v2519 = vrot.slane %v2511, %v2518
    %v2521 = vunpack.c.l.s4 1983009808
    %v2522 = vunpack.c.0.s8 %v2521
    %v2523 = vlaneseq
    %v2524 = vshrl.u32 %v2523, 7
    %v2525 = vsub.s32 %v2522, %v2524
    %v2526 = vrot.slane %v2512, %v2525
    %v2527 = vcombine.low %v2519, %v2526
    %v2528 = vcombine.low %v2414, %v2413
    %v2529 = vcombine.low %v2422, %v2430
    %v2531 = vunpack.c.l.s4 1983009808
    %v2532 = vunpack.c.0.s8 %v2531
    %v2533 = vlaneseq
    %v2534 = vshrl.u32 %v2533, 7
    %v2535 = vsub.s32 %v2532, %v2534
    %v2536 = vrot.slane %v2528, %v2535
    %v2538 = vunpack.c.l.s4 1983009808
    %v2539 = vunpack.c.0.s8 %v2538
    %v2540 = vlaneseq
    %v2541 = vshrl.u32 %v2540, 7
    %v2542 = vsub.s32 %v2539, %v2541
    %v2543 = vrot.slane %v2529, %v2542
    %v2544 = vcombine.low %v2536, %v2543
    %v2545 = vcombine.low %v2429, %v2438
    %v2546 = vcombine.low %v2446, %v2445
    %v2548 = vunpack.c.l.s4 1983009808
    %v2549 = vunpack.c.0.s8 %v2548
    %v2550 = vlaneseq
    %v2551 = vshrl.u32 %v2550, 7
    %v2552 = vsub.s32 %v2549, %v2551
    %v2553 = vrot.slane %v2545, %v2552
    %v2555 = vunpack.c.l.s4 1983009808
    %v2556 = vunpack.c.0.s8 %v2555
    %v2557 = vlaneseq
    %v2558 = vshrl.u32 %v2557, 7
    %v2559 = vsub.s32 %v2556, %v2558
    %v2560 = vrot.slane %v2546, %v2559
    %v2561 = vcombine.low %v2553, %v2560
    %v2562 = vcombine.low %v2454, %v2462
    %v2563 = vcombine.low %v2461, %v2470
    %v2565 = vunpack.c.l.s4 1983009808
    %v2566 = vunpack.c.0.s8 %v2565
    %v2567 = vlaneseq
    %v2568 = vshrl.u32 %v2567, 7
    %v2569 = vsub.s32 %v2566, %v2568
    %v2570 = vrot.slane %v2562, %v2569
    %v2572 = vunpack.c.l.s4 1983009808
    %v2573 = vunpack.c.0.s8 %v2572
    %v2574 = vlaneseq
    %v2575 = vshrl.u32 %v2574, 7
    %v2576 = vsub.s32 %v2573, %v2575
    %v2577 = vrot.slane %v2563, %v2576
    %v2578 = vcombine.low %v2570, %v2577
    %v2579 = vcombine.low %v2478, %v2477
    %v2580 = vcombine.low %v2486, %v2494
    %v2582 = vunpack.c.l.s4 1983009808
    %v2583 = vunpack.c.0.s8 %v2582
    %v2584 = vlaneseq
    %v2585 = vshrl.u32 %v2584, 7
    %v2586 = vsub.s32 %v2583, %v2585
    %v2587 = vrot.slane %v2579, %v2586
    %v2589 = vunpack.c.l.s4 1983009808
    %v2590 = vunpack.c.0.s8 %v2589
    %v2591 = vlaneseq
    %v2592 = vshrl.u32 %v2591, 7
    %v2593 = vsub.s32 %v2590, %v2592
    %v2594 = vrot.slane %v2580, %v2593
    %v2595 = vcombine.low %v2587, %v2594
    %v2596 = vcombine.low %v2493, %v2502
    %v2597 = vcombine.low %v2510, %v2509
    %v2599 = vunpack.c.l.s4 1983009808
    %v2600 = vunpack.c.0.s8 %v2599
    %v2601 = vlaneseq
    %v2602 = vshrl.u32 %v2601, 7
    %v2603 = vsub.s32 %v2600, %v2602
    %v2604 = vrot.slane %v2596, %v2603
    %v2606 = vunpack.c.l.s4 1983009808
    %v2607 = vunpack.c.0.s8 %v2606
    %v2608 = vlaneseq
    %v2609 = vshrl.u32 %v2608, 7
    %v2610 = vsub.s32 %v2607, %v2609
    %v2611 = vrot.slane %v2597, %v2610
    %v2612 = vcombine.low %v2604, %v2611
    %v2613 = vsel %vm57, %v2527, 0
    %v2615 = vsel %vm57, %v2544, 0
    %v2617 = vsel %vm57, %v2561, 0
    %v2619 = vsel %vm57, %v2578, 0
    %v2621 = vsel %vm57, %v2595, 0
    %v2623 = vsel %vm57, %v2612, 0
    %2625 = vmatprep.subr.mxu0 0.0
    %2626 = vmatpush1.msra.mxu0 %v55
    %2627 = vmatprep.subr.mxu0 0.0
    %2628 = vmatpush1.msra.mxu0 %v56
    %2629 = vmatprep.subr.mxu0 0.0
    %2630 = vmatpush1.msra.mxu0 0.0
    %2631 = vmatprep.subr.mxu0 0.0
    %2632 = vmatpush1.msra.mxu0 0.0
    %2633 = vmatprep.subr.mxu0 0.0
    %2634 = vmatpush1.msra.mxu0 0.0
    %2635 = vmatprep.subr.mxu0 0.0
    %2636 = vmatpush1.msra.mxu0 0.0
    %2637 = vmatprep.subr.mxu0 0.0
    %2638 = vmatpush1.msra.mxu0 0.0
    %2639 = vmatprep.subr.mxu0 0.0
    %2640 = vmatpush1.msra.mxu0 0.0
    %2641 = vmatprep.subr.mxu0 0.0
    %2642 = vmatpush1.msra.mxu0 0.0
    %2643 = vmatprep.subr.mxu0 0.0
    %2644 = vmatpush1.msra.mxu0 0.0
    %2645 = vmatprep.subr.mxu0 0.0
    %2646 = vmatpush1.msra.mxu0 0.0
    %2647 = vmatprep.subr.mxu0 0.0
    %2648 = vmatpush1.msra.mxu0 0.0
    %2649 = vmatprep.subr.mxu0 0.0
    %2650 = vmatpush1.msra.mxu0 0.0
    %2651 = vmatprep.subr.mxu0 0.0
    %2652 = vmatpush1.msra.mxu0 0.0
    %2653 = vmatprep.subr.mxu0 0.0
    %2654 = vmatpush1.msra.mxu0 0.0
    %2655 = vmatprep.subr.mxu0 0.0
    %2656 = vmatpush1.msra.mxu0 0.0
    %2657 = vmatprep.subr.mxu0 0.0
    %2658 = vmatpush1.msra.mxu0 0.0
    %2659 = vmatprep.subr.mxu0 0.0
    %2660 = vmatpush1.msra.mxu0 0.0
    %2661 = vmatprep.subr.mxu0 0.0
    %2662 = vmatpush1.msra.mxu0 0.0
    %2663 = vmatprep.subr.mxu0 0.0
    %2664 = vmatpush1.msra.mxu0 0.0
    %2665 = vmatprep.subr.mxu0 0.0
    %2666 = vmatpush1.msra.mxu0 0.0
    %2667 = vmatprep.subr.mxu0 0.0
    %2668 = vmatpush1.msra.mxu0 0.0
    %2669 = vmatprep.subr.mxu0 0.0
    %2670 = vmatpush1.msra.mxu0 0.0
    %2671 = vmatprep.subr.mxu0 0.0
    %2672 = vmatpush1.msra.mxu0 0.0
    %2673 = vmatprep.subr.mxu0 0.0
    %2674 = vmatpush1.msra.mxu0 0.0
    %2675 = vmatprep.subr.mxu0 0.0
    %2676 = vmatpush1.msra.mxu0 0.0
    %2677 = vmatprep.subr.mxu0 0.0
    %2678 = vmatpush1.msra.mxu0 0.0
    %2679 = vmatprep.subr.mxu0 0.0
    %2680 = vmatpush1.msra.mxu0 0.0
    %2681 = vmatprep.subr.mxu0 0.0
    %2682 = vmatpush1.msra.mxu0 0.0
    %2683 = vmatprep.subr.mxu0 0.0
    %2684 = vmatpush1.msra.mxu0 0.0
    %2685 = vmatprep.subr.mxu0 0.0
    %2686 = vmatpush1.msra.mxu0 0.0
    %2687 = vmatprep.subr.mxu0 0.0
    %2688 = vmatpush1.msra.mxu0 0.0
    %2689 = vmatprep.mubr.f32.mxu0 0.0
    %2690 = vmatmul.mubr.f32.gmra.mrb[0].mxu0 %v2613
    %v2691 = vpop.f32.mrb[0].mxu0
    %v2692 = vadd.f32 0.0, %v2691
    %v2693 = vpop.f32.mrb[0].mxu0
    %2694 = vmatprep.mubr.f32.mxu0 0.0
    %2695 = vmatmul.mubr.f32.gmra.mrb[0].mxu0 %v2615
    %v2696 = vpop.f32.mrb[0].mxu0
    %v2697 = vadd.f32 0.0, %v2696
    %v2698 = vpop.f32.mrb[0].mxu0
    %2699 = vmatprep.mubr.f32.mxu0 0.0
    %2700 = vmatmul.mubr.f32.gmra.mrb[0].mxu0 %v2617
    %v2701 = vpop.f32.mrb[0].mxu0
    %v2702 = vadd.f32 0.0, %v2701
    %v2703 = vpop.f32.mrb[0].mxu0
    %2704 = vmatprep.mubr.f32.mxu0 0.0
    %2705 = vmatmul.mubr.f32.gmra.mrb[0].mxu0 %v2619
    %v2706 = vpop.f32.mrb[0].mxu0
    %v2707 = vadd.f32 0.0, %v2706
    %v2708 = vpop.f32.mrb[0].mxu0
    %2709 = vmatprep.mubr.f32.mxu0 0.0
    %2710 = vmatmul.mubr.f32.gmra.mrb[0].mxu0 %v2621
    %v2711 = vpop.f32.mrb[0].mxu0
    %v2712 = vadd.f32 0.0, %v2711
    %v2713 = vpop.f32.mrb[0].mxu0
    %2714 = vmatprep.mubr.f32.mxu0 0.0
    %2715 = vmatmul.mubr.f32.gmra.mrb[0].mxu0 %v2623
    %v2716 = vpop.f32.mrb[0].mxu0
    %v2717 = vadd.f32 0.0, %v2716
    %v2718 = vpop.f32.mrb[0].mxu0
    %2719 = vdwg.mxu0
    %v2726 = vcombine.high %v2692, %v2692
    %v2728 = vunpack.c.l.s4 1983009808
    %v2729 = vunpack.c.0.s8 %v2728
    %v2730 = vlaneseq
    %v2731 = vshrl.u32 %v2730, 7
    %v2732 = vsub.s32 %v2729, %v2731
    %v2733 = vrot.slane %v2692, %v2732
    %v2735 = vunpack.c.l.s4 1983009808
    %v2736 = vunpack.c.0.s8 %v2735
    %v2737 = vlaneseq
    %v2738 = vshrl.u32 %v2737, 7
    %v2739 = vsub.s32 %v2736, %v2738
    %v2740 = vrot.slane %v2726, %v2739
    %v2741 = vcombine.high %v2733, %v2733
    %v2742 = vcombine.high %v2740, %v2740
    %v2743 = vcombine.high %v2697, %v2697
    %v2745 = vunpack.c.l.s4 1983009808
    %v2746 = vunpack.c.0.s8 %v2745
    %v2747 = vlaneseq
    %v2748 = vshrl.u32 %v2747, 7
    %v2749 = vsub.s32 %v2746, %v2748
    %v2750 = vrot.slane %v2697, %v2749
    %v2752 = vunpack.c.l.s4 1983009808
    %v2753 = vunpack.c.0.s8 %v2752
    %v2754 = vlaneseq
    %v2755 = vshrl.u32 %v2754, 7
    %v2756 = vsub.s32 %v2753, %v2755
    %v2757 = vrot.slane %v2743, %v2756
    %v2758 = vcombine.high %v2750, %v2750
    %v2759 = vcombine.high %v2757, %v2757
    %v2760 = vcombine.high %v2702, %v2702
    %v2762 = vunpack.c.l.s4 1983009808
    %v2763 = vunpack.c.0.s8 %v2762
    %v2764 = vlaneseq
    %v2765 = vshrl.u32 %v2764, 7
    %v2766 = vsub.s32 %v2763, %v2765
    %v2767 = vrot.slane %v2702, %v2766
    %v2769 = vunpack.c.l.s4 1983009808
    %v2770 = vunpack.c.0.s8 %v2769
    %v2771 = vlaneseq
    %v2772 = vshrl.u32 %v2771, 7
    %v2773 = vsub.s32 %v2770, %v2772
    %v2774 = vrot.slane %v2760, %v2773
    %v2775 = vcombine.high %v2767, %v2767
    %v2776 = vcombine.high %v2774, %v2774
    %v2777 = vcombine.high %v2707, %v2707
    %v2779 = vunpack.c.l.s4 1983009808
    %v2780 = vunpack.c.0.s8 %v2779
    %v2781 = vlaneseq
    %v2782 = vshrl.u32 %v2781, 7
    %v2783 = vsub.s32 %v2780, %v2782
    %v2784 = vrot.slane %v2707, %v2783
    %v2786 = vunpack.c.l.s4 1983009808
    %v2787 = vunpack.c.0.s8 %v2786
    %v2788 = vlaneseq
    %v2789 = vshrl.u32 %v2788, 7
    %v2790 = vsub.s32 %v2787, %v2789
    %v2791 = vrot.slane %v2777, %v2790
    %v2792 = vcombine.high %v2784, %v2784
    %v2793 = vcombine.high %v2791, %v2791
    %v2794 = vcombine.high %v2712, %v2712
    %v2796 = vunpack.c.l.s4 1983009808
    %v2797 = vunpack.c.0.s8 %v2796
    %v2798 = vlaneseq
    %v2799 = vshrl.u32 %v2798, 7
    %v2800 = vsub.s32 %v2797, %v2799
    %v2801 = vrot.slane %v2712, %v2800
    %v2803 = vunpack.c.l.s4 1983009808
    %v2804 = vunpack.c.0.s8 %v2803
    %v2805 = vlaneseq
    %v2806 = vshrl.u32 %v2805, 7
    %v2807 = vsub.s32 %v2804, %v2806
    %v2808 = vrot.slane %v2794, %v2807
    %v2809 = vcombine.high %v2801, %v2801
    %v2810 = vcombine.high %v2808, %v2808
    %v2811 = vcombine.high %v2717, %v2717
    %v2813 = vunpack.c.l.s4 1983009808
    %v2814 = vunpack.c.0.s8 %v2813
    %v2815 = vlaneseq
    %v2816 = vshrl.u32 %v2815, 7
    %v2817 = vsub.s32 %v2814, %v2816
    %v2818 = vrot.slane %v2717, %v2817
    %v2820 = vunpack.c.l.s4 1983009808
    %v2821 = vunpack.c.0.s8 %v2820
    %v2822 = vlaneseq
    %v2823 = vshrl.u32 %v2822, 7
    %v2824 = vsub.s32 %v2821, %v2823
    %v2825 = vrot.slane %v2811, %v2824
    %v2826 = vcombine.high %v2818, %v2818
    %v2827 = vcombine.high %v2825, %v2825
    %v2852 = vmul.f32 %v37, %v37
    %v2853 = vmul.f32 %v38, %v38
    %v2854 = vmul.f32 %v39, %v39
    %v2855 = vmul.f32 %v40, %v40
    %v2856 = vmul.f32 %v41, %v41
    %v2857 = vmul.f32 %v42, %v42
    %v2858 = vmul.f32 %v43, %v43
    %v2859 = vmul.f32 %v44, %v44
    %v2860 = vmul.f32 %v45, %v45
    %v2861 = vmul.f32 %v46, %v46
    %v2862 = vmul.f32 %v47, %v47
    %v2863 = vmul.f32 %v48, %v48
    %v2864 = vmul.f32 %v49, %v49
    %v2865 = vmul.f32 %v50, %v50
    %v2866 = vmul.f32 %v51, %v51
    %v2867 = vmul.f32 %v52, %v52
    %v2869 = vsel %vm57, %v2852, 0
    %v2872 = vsel %vm57, %v2853, 0
    %v2875 = vsel %vm57, %v2854, 0
    %v2878 = vsel %vm57, %v2855, 0
    %v2881 = vsel %vm57, %v2856, 0
    %v2884 = vsel %vm57, %v2857, 0
    %v2887 = vsel %vm57, %v2858, 0
    %v2890 = vsel %vm57, %v2859, 0
    %v2893 = vsel %vm57, %v2860, 0
    %v2896 = vsel %vm57, %v2861, 0
    %v2899 = vsel %vm57, %v2862, 0
    %v2902 = vsel %vm57, %v2863, 0
    %v2905 = vsel %vm57, %v2864, 0
    %v2908 = vsel %vm57, %v2865, 0
    %v2911 = vsel %vm57, %v2866, 0
    %v2914 = vsel %vm57, %v2867, 0
    %2916 = vmatprep.subr.mxu0 0.0
    %2917 = vmatpush1.msra.mxu0 %v53
    %2918 = vmatprep.subr.mxu0 0.0
    %2919 = vmatpush1.msra.mxu0 %v54
    %2920 = vmatprep.subr.mxu0 0.0
    %2921 = vmatpush1.msra.mxu0 0.0
    %2922 = vmatprep.subr.mxu0 0.0
    %2923 = vmatpush1.msra.mxu0 0.0
    %2924 = vmatprep.subr.mxu0 0.0
    %2925 = vmatpush1.msra.mxu0 0.0
    %2926 = vmatprep.subr.mxu0 0.0
    %2927 = vmatpush1.msra.mxu0 0.0
    %2928 = vmatprep.subr.mxu0 0.0
    %2929 = vmatpush1.msra.mxu0 0.0
    %2930 = vmatprep.subr.mxu0 0.0
    %2931 = vmatpush1.msra.mxu0 0.0
    %2932 = vmatprep.subr.mxu0 0.0
    %2933 = vmatpush1.msra.mxu0 0.0
    %2934 = vmatprep.subr.mxu0 0.0
    %2935 = vmatpush1.msra.mxu0 0.0
    %2936 = vmatprep.subr.mxu0 0.0
    %2937 = vmatpush1.msra.mxu0 0.0
    %2938 = vmatprep.subr.mxu0 0.0
    %2939 = vmatpush1.msra.mxu0 0.0
    %2940 = vmatprep.subr.mxu0 0.0
    %2941 = vmatpush1.msra.mxu0 0.0
    %2942 = vmatprep.subr.mxu0 0.0
    %2943 = vmatpush1.msra.mxu0 0.0
    %2944 = vmatprep.subr.mxu0 0.0
    %2945 = vmatpush1.msra.mxu0 0.0
    %2946 = vmatprep.subr.mxu0 0.0
    %2947 = vmatpush1.msra.mxu0 0.0
    %2948 = vmatprep.subr.mxu0 0.0
    %2949 = vmatpush1.msra.mxu0 0.0
    %2950 = vmatprep.subr.mxu0 0.0
    %2951 = vmatpush1.msra.mxu0 0.0
    %2952 = vmatprep.subr.mxu0 0.0
    %2953 = vmatpush1.msra.mxu0 0.0
    %2954 = vmatprep.subr.mxu0 0.0
    %2955 = vmatpush1.msra.mxu0 0.0
    %2956 = vmatprep.subr.mxu0 0.0
    %2957 = vmatpush1.msra.mxu0 0.0
    %2958 = vmatprep.subr.mxu0 0.0
    %2959 = vmatpush1.msra.mxu0 0.0
    %2960 = vmatprep.subr.mxu0 0.0
    %2961 = vmatpush1.msra.mxu0 0.0
    %2962 = vmatprep.subr.mxu0 0.0
    %2963 = vmatpush1.msra.mxu0 0.0
    %2964 = vmatprep.subr.mxu0 0.0
    %2965 = vmatpush1.msra.mxu0 0.0
    %2966 = vmatprep.subr.mxu0 0.0
    %2967 = vmatpush1.msra.mxu0 0.0
    %2968 = vmatprep.subr.mxu0 0.0
    %2969 = vmatpush1.msra.mxu0 0.0
    %2970 = vmatprep.subr.mxu0 0.0
    %2971 = vmatpush1.msra.mxu0 0.0
    %2972 = vmatprep.subr.mxu0 0.0
    %2973 = vmatpush1.msra.mxu0 0.0
    %2974 = vmatprep.subr.mxu0 0.0
    %2975 = vmatpush1.msra.mxu0 0.0
    %2976 = vmatprep.subr.mxu0 0.0
    %2977 = vmatpush1.msra.mxu0 0.0
    %2978 = vmatprep.subr.mxu0 0.0
    %2979 = vmatpush1.msra.mxu0 0.0
    %2980 = vmatprep.mubr.f32.mxu0 0.0
    %2981 = vmatmul.mubr.f32.gmra.mrb[0].mxu0 %v2869
    %v2982 = vpop.f32.mrb[0].mxu0
    %v2983 = vadd.f32 0.0, %v2982
    %v2984 = vpop.f32.mrb[0].mxu0
    %2985 = vmatprep.mubr.f32.mxu0 0.0
    %2986 = vmatmul.mubr.f32.gmra.mrb[0].mxu0 %v2872
    %v2987 = vpop.f32.mrb[0].mxu0
    %v2988 = vadd.f32 0.0, %v2987
    %v2989 = vpop.f32.mrb[0].mxu0
    %2990 = vmatprep.mubr.f32.mxu0 0.0
    %2991 = vmatmul.mubr.f32.gmra.mrb[0].mxu0 %v2875
    %v2992 = vpop.f32.mrb[0].mxu0
    %v2993 = vadd.f32 0.0, %v2992
    %v2994 = vpop.f32.mrb[0].mxu0
    %2995 = vmatprep.mubr.f32.mxu0 0.0
    %2996 = vmatmul.mubr.f32.gmra.mrb[0].mxu0 %v2878
    %v2997 = vpop.f32.mrb[0].mxu0
    %v2998 = vadd.f32 0.0, %v2997
    %v2999 = vpop.f32.mrb[0].mxu0
    %3000 = vmatprep.mubr.f32.mxu0 0.0
    %3001 = vmatmul.mubr.f32.gmra.mrb[0].mxu0 %v2881
    %v3002 = vpop.f32.mrb[0].mxu0
    %v3003 = vadd.f32 0.0, %v3002
    %v3004 = vpop.f32.mrb[0].mxu0
    %3005 = vmatprep.mubr.f32.mxu0 0.0
    %3006 = vmatmul.mubr.f32.gmra.mrb[0].mxu0 %v2884
    %v3007 = vpop.f32.mrb[0].mxu0
    %v3008 = vadd.f32 0.0, %v3007
    %v3009 = vpop.f32.mrb[0].mxu0
    %3010 = vmatprep.mubr.f32.mxu0 0.0
    %3011 = vmatmul.mubr.f32.gmra.mrb[0].mxu0 %v2887
    %v3012 = vpop.f32.mrb[0].mxu0
    %v3013 = vadd.f32 0.0, %v3012
    %v3014 = vpop.f32.mrb[0].mxu0
    %3015 = vmatprep.mubr.f32.mxu0 0.0
    %3016 = vmatmul.mubr.f32.gmra.mrb[0].mxu0 %v2890
    %v3017 = vpop.f32.mrb[0].mxu0
    %v3018 = vadd.f32 0.0, %v3017
    %v3019 = vpop.f32.mrb[0].mxu0
    %3020 = vmatprep.mubr.f32.mxu0 0.0
    %3021 = vmatmul.mubr.f32.gmra.mrb[0].mxu0 %v2893
    %v3022 = vpop.f32.mrb[0].mxu0
    %v3023 = vadd.f32 0.0, %v3022
    %v3024 = vpop.f32.mrb[0].mxu0
    %3025 = vmatprep.mubr.f32.mxu0 0.0
    %3026 = vmatmul.mubr.f32.gmra.mrb[0].mxu0 %v2896
    %v3027 = vpop.f32.mrb[0].mxu0
    %v3028 = vadd.f32 0.0, %v3027
    %v3029 = vpop.f32.mrb[0].mxu0
    %3030 = vmatprep.mubr.f32.mxu0 0.0
    %3031 = vmatmul.mubr.f32.gmra.mrb[0].mxu0 %v2899
    %v3032 = vpop.f32.mrb[0].mxu0
    %v3033 = vadd.f32 0.0, %v3032
    %v3034 = vpop.f32.mrb[0].mxu0
    %3035 = vmatprep.mubr.f32.mxu0 0.0
    %3036 = vmatmul.mubr.f32.gmra.mrb[0].mxu0 %v2902
    %v3037 = vpop.f32.mrb[0].mxu0
    %v3038 = vadd.f32 0.0, %v3037
    %v3039 = vpop.f32.mrb[0].mxu0
    %3040 = vmatprep.mubr.f32.mxu0 0.0
    %3041 = vmatmul.mubr.f32.gmra.mrb[0].mxu0 %v2905
    %v3042 = vpop.f32.mrb[0].mxu0
    %v3043 = vadd.f32 0.0, %v3042
    %v3044 = vpop.f32.mrb[0].mxu0
    %3045 = vmatprep.mubr.f32.mxu0 0.0
    %3046 = vmatmul.mubr.f32.gmra.mrb[0].mxu0 %v2908
    %v3047 = vpop.f32.mrb[0].mxu0
    %v3048 = vadd.f32 0.0, %v3047
    %v3049 = vpop.f32.mrb[0].mxu0
    %3050 = vmatprep.mubr.f32.mxu0 0.0
    %3051 = vmatmul.mubr.f32.gmra.mrb[0].mxu0 %v2911
    %v3052 = vpop.f32.mrb[0].mxu0
    %v3053 = vadd.f32 0.0, %v3052
    %v3054 = vpop.f32.mrb[0].mxu0
    %3055 = vmatprep.mubr.f32.mxu0 0.0
    %3056 = vmatmul.mubr.f32.gmra.mrb[0].mxu0 %v2914
    %v3057 = vpop.f32.mrb[0].mxu0
    %v3058 = vadd.f32 0.0, %v3057
    %v3059 = vpop.f32.mrb[0].mxu0
    %3060 = vdwg.mxu0
    %3061 = vxpose.xlu0.b32.start [1/16] %v2983, 128
    %3062 = vxpose.xlu0.b32.cont [2/16] %v2988, 128
    %3063 = vxpose.xlu0.b32.cont [3/16] 0.0, 128
    %3064 = vxpose.xlu0.b32.cont [4/16] 0.0, 128
    %3065 = vxpose.xlu0.b32.cont [5/16] 0.0, 128
    %3066 = vxpose.xlu0.b32.cont [6/16] 0.0, 128
    %3067 = vxpose.xlu0.b32.cont [7/16] 0.0, 128
    %3068 = vxpose.xlu0.b32.cont [8/16] 0.0, 128
    %3069 = vxpose.xlu0.b32.cont [9/16] 0.0, 128
    %3070 = vxpose.xlu0.b32.cont [10/16] 0.0, 128
    %3071 = vxpose.xlu0.b32.cont [11/16] 0.0, 128
    %3072 = vxpose.xlu0.b32.cont [12/16] 0.0, 128
    %3073 = vxpose.xlu0.b32.cont [13/16] 0.0, 128
    %3074 = vxpose.xlu0.b32.cont [14/16] 0.0, 128
    %3075 = vxpose.xlu0.b32.cont [15/16] 0.0, 128
    %3076 = vxpose.xlu0.b32.end [16/16] 0.0, 128
    %v3077 = vpop.trf.xlu0
    %v3078 = vpop.trf.xlu0
    %v3079 = vpop.trf.xlu0
    %v3080 = vpop.trf.xlu0
    %v3081 = vpop.trf.xlu0
    %v3082 = vpop.trf.xlu0
    %v3083 = vpop.trf.xlu0
    %v3084 = vpop.trf.xlu0
    %v3085 = vpop.trf.xlu0
    %v3086 = vpop.trf.xlu0
    %v3087 = vpop.trf.xlu0
    %v3088 = vpop.trf.xlu0
    %v3089 = vpop.trf.xlu0
    %v3090 = vpop.trf.xlu0
    %v3091 = vpop.trf.xlu0
    %v3092 = vpop.trf.xlu0
    %3093 = vxpose.xlu0.b32.start [1/16] %v2993, 128
    %3094 = vxpose.xlu0.b32.cont [2/16] %v2998, 128
    %3095 = vxpose.xlu0.b32.cont [3/16] 0.0, 128
    %3096 = vxpose.xlu0.b32.cont [4/16] 0.0, 128
    %3097 = vxpose.xlu0.b32.cont [5/16] 0.0, 128
    %3098 = vxpose.xlu0.b32.cont [6/16] 0.0, 128
    %3099 = vxpose.xlu0.b32.cont [7/16] 0.0, 128
    %3100 = vxpose.xlu0.b32.cont [8/16] 0.0, 128
    %3101 = vxpose.xlu0.b32.cont [9/16] 0.0, 128
    %3102 = vxpose.xlu0.b32.cont [10/16] 0.0, 128
    %3103 = vxpose.xlu0.b32.cont [11/16] 0.0, 128
    %3104 = vxpose.xlu0.b32.cont [12/16] 0.0, 128
    %3105 = vxpose.xlu0.b32.cont [13/16] 0.0, 128
    %3106 = vxpose.xlu0.b32.cont [14/16] 0.0, 128
    %3107 = vxpose.xlu0.b32.cont [15/16] 0.0, 128
    %3108 = vxpose.xlu0.b32.end [16/16] 0.0, 128
    %v3109 = vpop.trf.xlu0
    %v3110 = vpop.trf.xlu0
    %v3111 = vpop.trf.xlu0
    %v3112 = vpop.trf.xlu0
    %v3113 = vpop.trf.xlu0
    %v3114 = vpop.trf.xlu0
    %v3115 = vpop.trf.xlu0
    %v3116 = vpop.trf.xlu0
    %v3117 = vpop.trf.xlu0
    %v3118 = vpop.trf.xlu0
    %v3119 = vpop.trf.xlu0
    %v3120 = vpop.trf.xlu0
    %v3121 = vpop.trf.xlu0
    %v3122 = vpop.trf.xlu0
    %v3123 = vpop.trf.xlu0
    %v3124 = vpop.trf.xlu0
    %3125 = vxpose.xlu0.b32.start [1/16] %v3003, 128
    %3126 = vxpose.xlu0.b32.cont [2/16] %v3008, 128
    %3127 = vxpose.xlu0.b32.cont [3/16] 0.0, 128
    %3128 = vxpose.xlu0.b32.cont [4/16] 0.0, 128
    %3129 = vxpose.xlu0.b32.cont [5/16] 0.0, 128
    %3130 = vxpose.xlu0.b32.cont [6/16] 0.0, 128
    %3131 = vxpose.xlu0.b32.cont [7/16] 0.0, 128
    %3132 = vxpose.xlu0.b32.cont [8/16] 0.0, 128
    %3133 = vxpose.xlu0.b32.cont [9/16] 0.0, 128
    %3134 = vxpose.xlu0.b32.cont [10/16] 0.0, 128
    %3135 = vxpose.xlu0.b32.cont [11/16] 0.0, 128
    %3136 = vxpose.xlu0.b32.cont [12/16] 0.0, 128
    %3137 = vxpose.xlu0.b32.cont [13/16] 0.0, 128
    %3138 = vxpose.xlu0.b32.cont [14/16] 0.0, 128
    %3139 = vxpose.xlu0.b32.cont [15/16] 0.0, 128
    %3140 = vxpose.xlu0.b32.end [16/16] 0.0, 128
    %v3141 = vpop.trf.xlu0
    %v3142 = vpop.trf.xlu0
    %v3143 = vpop.trf.xlu0
    %v3144 = vpop.trf.xlu0
    %v3145 = vpop.trf.xlu0
    %v3146 = vpop.trf.xlu0
    %v3147 = vpop.trf.xlu0
    %v3148 = vpop.trf.xlu0
    %v3149 = vpop.trf.xlu0
    %v3150 = vpop.trf.xlu0
    %v3151 = vpop.trf.xlu0
    %v3152 = vpop.trf.xlu0
    %v3153 = vpop.trf.xlu0
    %v3154 = vpop.trf.xlu0
    %v3155 = vpop.trf.xlu0
    %v3156 = vpop.trf.xlu0
    %3157 = vxpose.xlu0.b32.start [1/16] %v3013, 128
    %3158 = vxpose.xlu0.b32.cont [2/16] %v3018, 128
    %3159 = vxpose.xlu0.b32.cont [3/16] 0.0, 128
    %3160 = vxpose.xlu0.b32.cont [4/16] 0.0, 128
    %3161 = vxpose.xlu0.b32.cont [5/16] 0.0, 128
    %3162 = vxpose.xlu0.b32.cont [6/16] 0.0, 128
    %3163 = vxpose.xlu0.b32.cont [7/16] 0.0, 128
    %3164 = vxpose.xlu0.b32.cont [8/16] 0.0, 128
    %3165 = vxpose.xlu0.b32.cont [9/16] 0.0, 128
    %3166 = vxpose.xlu0.b32.cont [10/16] 0.0, 128
    %3167 = vxpose.xlu0.b32.cont [11/16] 0.0, 128
    %3168 = vxpose.xlu0.b32.cont [12/16] 0.0, 128
    %3169 = vxpose.xlu0.b32.cont [13/16] 0.0, 128
    %3170 = vxpose.xlu0.b32.cont [14/16] 0.0, 128
    %3171 = vxpose.xlu0.b32.cont [15/16] 0.0, 128
    %3172 = vxpose.xlu0.b32.end [16/16] 0.0, 128
    %v3173 = vpop.trf.xlu0
    %v3174 = vpop.trf.xlu0
    %v3175 = vpop.trf.xlu0
    %v3176 = vpop.trf.xlu0
    %v3177 = vpop.trf.xlu0
    %v3178 = vpop.trf.xlu0
    %v3179 = vpop.trf.xlu0
    %v3180 = vpop.trf.xlu0
    %v3181 = vpop.trf.xlu0
    %v3182 = vpop.trf.xlu0
    %v3183 = vpop.trf.xlu0
    %v3184 = vpop.trf.xlu0
    %v3185 = vpop.trf.xlu0
    %v3186 = vpop.trf.xlu0
    %v3187 = vpop.trf.xlu0
    %v3188 = vpop.trf.xlu0
    %3189 = vxpose.xlu0.b32.start [1/16] %v3023, 128
    %3190 = vxpose.xlu0.b32.cont [2/16] %v3028, 128
    %3191 = vxpose.xlu0.b32.cont [3/16] 0.0, 128
    %3192 = vxpose.xlu0.b32.cont [4/16] 0.0, 128
    %3193 = vxpose.xlu0.b32.cont [5/16] 0.0, 128
    %3194 = vxpose.xlu0.b32.cont [6/16] 0.0, 128
    %3195 = vxpose.xlu0.b32.cont [7/16] 0.0, 128
    %3196 = vxpose.xlu0.b32.cont [8/16] 0.0, 128
    %3197 = vxpose.xlu0.b32.cont [9/16] 0.0, 128
    %3198 = vxpose.xlu0.b32.cont [10/16] 0.0, 128
    %3199 = vxpose.xlu0.b32.cont [11/16] 0.0, 128
    %3200 = vxpose.xlu0.b32.cont [12/16] 0.0, 128
    %3201 = vxpose.xlu0.b32.cont [13/16] 0.0, 128
    %3202 = vxpose.xlu0.b32.cont [14/16] 0.0, 128
    %3203 = vxpose.xlu0.b32.cont [15/16] 0.0, 128
    %3204 = vxpose.xlu0.b32.end [16/16] 0.0, 128
    %v3205 = vpop.trf.xlu0
    %v3206 = vpop.trf.xlu0
    %v3207 = vpop.trf.xlu0
    %v3208 = vpop.trf.xlu0
    %v3209 = vpop.trf.xlu0
    %v3210 = vpop.trf.xlu0
    %v3211 = vpop.trf.xlu0
    %v3212 = vpop.trf.xlu0
    %v3213 = vpop.trf.xlu0
    %v3214 = vpop.trf.xlu0
    %v3215 = vpop.trf.xlu0
    %v3216 = vpop.trf.xlu0
    %v3217 = vpop.trf.xlu0
    %v3218 = vpop.trf.xlu0
    %v3219 = vpop.trf.xlu0
    %v3220 = vpop.trf.xlu0
    %3221 = vxpose.xlu0.b32.start [1/16] %v3033, 128
    %3222 = vxpose.xlu0.b32.cont [2/16] %v3038, 128
    %3223 = vxpose.xlu0.b32.cont [3/16] 0.0, 128
    %3224 = vxpose.xlu0.b32.cont [4/16] 0.0, 128
    %3225 = vxpose.xlu0.b32.cont [5/16] 0.0, 128
    %3226 = vxpose.xlu0.b32.cont [6/16] 0.0, 128
    %3227 = vxpose.xlu0.b32.cont [7/16] 0.0, 128
    %3228 = vxpose.xlu0.b32.cont [8/16] 0.0, 128
    %3229 = vxpose.xlu0.b32.cont [9/16] 0.0, 128
    %3230 = vxpose.xlu0.b32.cont [10/16] 0.0, 128
    %3231 = vxpose.xlu0.b32.cont [11/16] 0.0, 128
    %3232 = vxpose.xlu0.b32.cont [12/16] 0.0, 128
    %3233 = vxpose.xlu0.b32.cont [13/16] 0.0, 128
    %3234 = vxpose.xlu0.b32.cont [14/16] 0.0, 128
    %3235 = vxpose.xlu0.b32.cont [15/16] 0.0, 128
    %3236 = vxpose.xlu0.b32.end [16/16] 0.0, 128
    %v3237 = vpop.trf.xlu0
    %v3238 = vpop.trf.xlu0
    %v3239 = vpop.trf.xlu0
    %v3240 = vpop.trf.xlu0
    %v3241 = vpop.trf.xlu0
    %v3242 = vpop.trf.xlu0
    %v3243 = vpop.trf.xlu0
    %v3244 = vpop.trf.xlu0
    %v3245 = vpop.trf.xlu0
    %v3246 = vpop.trf.xlu0
    %v3247 = vpop.trf.xlu0
    %v3248 = vpop.trf.xlu0
    %v3249 = vpop.trf.xlu0
    %v3250 = vpop.trf.xlu0
    %v3251 = vpop.trf.xlu0
    %v3252 = vpop.trf.xlu0
    %3253 = vxpose.xlu0.b32.start [1/16] %v3043, 128
    %3254 = vxpose.xlu0.b32.cont [2/16] %v3048, 128
    %3255 = vxpose.xlu0.b32.cont [3/16] 0.0, 128
    %3256 = vxpose.xlu0.b32.cont [4/16] 0.0, 128
    %3257 = vxpose.xlu0.b32.cont [5/16] 0.0, 128
    %3258 = vxpose.xlu0.b32.cont [6/16] 0.0, 128
    %3259 = vxpose.xlu0.b32.cont [7/16] 0.0, 128
    %3260 = vxpose.xlu0.b32.cont [8/16] 0.0, 128
    %3261 = vxpose.xlu0.b32.cont [9/16] 0.0, 128
    %3262 = vxpose.xlu0.b32.cont [10/16] 0.0, 128
    %3263 = vxpose.xlu0.b32.cont [11/16] 0.0, 128
    %3264 = vxpose.xlu0.b32.cont [12/16] 0.0, 128
    %3265 = vxpose.xlu0.b32.cont [13/16] 0.0, 128
    %3266 = vxpose.xlu0.b32.cont [14/16] 0.0, 128
    %3267 = vxpose.xlu0.b32.cont [15/16] 0.0, 128
    %3268 = vxpose.xlu0.b32.end [16/16] 0.0, 128
    %v3269 = vpop.trf.xlu0
    %v3270 = vpop.trf.xlu0
    %v3271 = vpop.trf.xlu0
    %v3272 = vpop.trf.xlu0
    %v3273 = vpop.trf.xlu0
    %v3274 = vpop.trf.xlu0
    %v3275 = vpop.trf.xlu0
    %v3276 = vpop.trf.xlu0
    %v3277 = vpop.trf.xlu0
    %v3278 = vpop.trf.xlu0
    %v3279 = vpop.trf.xlu0
    %v3280 = vpop.trf.xlu0
    %v3281 = vpop.trf.xlu0
    %v3282 = vpop.trf.xlu0
    %v3283 = vpop.trf.xlu0
    %v3284 = vpop.trf.xlu0
    %3285 = vxpose.xlu0.b32.start [1/16] %v3053, 128
    %3286 = vxpose.xlu0.b32.cont [2/16] %v3058, 128
    %3287 = vxpose.xlu0.b32.cont [3/16] 0.0, 128
    %3288 = vxpose.xlu0.b32.cont [4/16] 0.0, 128
    %3289 = vxpose.xlu0.b32.cont [5/16] 0.0, 128
    %3290 = vxpose.xlu0.b32.cont [6/16] 0.0, 128
    %3291 = vxpose.xlu0.b32.cont [7/16] 0.0, 128
    %3292 = vxpose.xlu0.b32.cont [8/16] 0.0, 128
    %3293 = vxpose.xlu0.b32.cont [9/16] 0.0, 128
    %3294 = vxpose.xlu0.b32.cont [10/16] 0.0, 128
    %3295 = vxpose.xlu0.b32.cont [11/16] 0.0, 128
    %3296 = vxpose.xlu0.b32.cont [12/16] 0.0, 128
    %3297 = vxpose.xlu0.b32.cont [13/16] 0.0, 128
    %3298 = vxpose.xlu0.b32.cont [14/16] 0.0, 128
    %3299 = vxpose.xlu0.b32.cont [15/16] 0.0, 128
    %3300 = vxpose.xlu0.b32.end [16/16] 0.0, 128
    %v3301 = vpop.trf.xlu0
    %v3302 = vpop.trf.xlu0
    %v3303 = vpop.trf.xlu0
    %v3304 = vpop.trf.xlu0
    %v3305 = vpop.trf.xlu0
    %v3306 = vpop.trf.xlu0
    %v3307 = vpop.trf.xlu0
    %v3308 = vpop.trf.xlu0
    %v3309 = vpop.trf.xlu0
    %v3310 = vpop.trf.xlu0
    %v3311 = vpop.trf.xlu0
    %v3312 = vpop.trf.xlu0
    %v3313 = vpop.trf.xlu0
    %v3314 = vpop.trf.xlu0
    %v3315 = vpop.trf.xlu0
    %v3316 = vpop.trf.xlu0
    %v3325 = vcombine.high %v3077, %v3077
    %v3327 = vunpack.c.l.s4 1983009808
    %v3328 = vunpack.c.0.s8 %v3327
    %v3329 = vlaneseq
    %v3330 = vshrl.u32 %v3329, 7
    %v3331 = vsub.s32 %v3328, %v3330
    %v3332 = vrot.slane %v3077, %v3331
    %v3334 = vunpack.c.l.s4 1983009808
    %v3335 = vunpack.c.0.s8 %v3334
    %v3336 = vlaneseq
    %v3337 = vshrl.u32 %v3336, 7
    %v3338 = vsub.s32 %v3335, %v3337
    %v3339 = vrot.slane %v3325, %v3338
    %v3340 = vcombine.high %v3332, %v3332
    %v3341 = vcombine.high %v3109, %v3109
    %v3343 = vunpack.c.l.s4 1983009808
    %v3344 = vunpack.c.0.s8 %v3343
    %v3345 = vlaneseq
    %v3346 = vshrl.u32 %v3345, 7
    %v3347 = vsub.s32 %v3344, %v3346
    %v3348 = vrot.slane %v3109, %v3347
    %v3350 = vunpack.c.l.s4 1983009808
    %v3351 = vunpack.c.0.s8 %v3350
    %v3352 = vlaneseq
    %v3353 = vshrl.u32 %v3352, 7
    %v3354 = vsub.s32 %v3351, %v3353
    %v3355 = vrot.slane %v3341, %v3354
    %v3356 = vcombine.high %v3348, %v3348
    %v3357 = vcombine.high %v3141, %v3141
    %v3359 = vunpack.c.l.s4 1983009808
    %v3360 = vunpack.c.0.s8 %v3359
    %v3361 = vlaneseq
    %v3362 = vshrl.u32 %v3361, 7
    %v3363 = vsub.s32 %v3360, %v3362
    %v3364 = vrot.slane %v3141, %v3363
    %v3366 = vunpack.c.l.s4 1983009808
    %v3367 = vunpack.c.0.s8 %v3366
    %v3368 = vlaneseq
    %v3369 = vshrl.u32 %v3368, 7
    %v3370 = vsub.s32 %v3367, %v3369
    %v3371 = vrot.slane %v3357, %v3370
    %v3372 = vcombine.high %v3364, %v3364
    %v3373 = vcombine.high %v3173, %v3173
    %v3375 = vunpack.c.l.s4 1983009808
    %v3376 = vunpack.c.0.s8 %v3375
    %v3377 = vlaneseq
    %v3378 = vshrl.u32 %v3377, 7
    %v3379 = vsub.s32 %v3376, %v3378
    %v3380 = vrot.slane %v3173, %v3379
    %v3382 = vunpack.c.l.s4 1983009808
    %v3383 = vunpack.c.0.s8 %v3382
    %v3384 = vlaneseq
    %v3385 = vshrl.u32 %v3384, 7
    %v3386 = vsub.s32 %v3383, %v3385
    %v3387 = vrot.slane %v3373, %v3386
    %v3388 = vcombine.high %v3380, %v3380
    %v3389 = vcombine.high %v3205, %v3205
    %v3391 = vunpack.c.l.s4 1983009808
    %v3392 = vunpack.c.0.s8 %v3391
    %v3393 = vlaneseq
    %v3394 = vshrl.u32 %v3393, 7
    %v3395 = vsub.s32 %v3392, %v3394
    %v3396 = vrot.slane %v3205, %v3395
    %v3398 = vunpack.c.l.s4 1983009808
    %v3399 = vunpack.c.0.s8 %v3398
    %v3400 = vlaneseq
    %v3401 = vshrl.u32 %v3400, 7
    %v3402 = vsub.s32 %v3399, %v3401
    %v3403 = vrot.slane %v3389, %v3402
    %v3404 = vcombine.high %v3396, %v3396
    %v3405 = vcombine.high %v3237, %v3237
    %v3407 = vunpack.c.l.s4 1983009808
    %v3408 = vunpack.c.0.s8 %v3407
    %v3409 = vlaneseq
    %v3410 = vshrl.u32 %v3409, 7
    %v3411 = vsub.s32 %v3408, %v3410
    %v3412 = vrot.slane %v3237, %v3411
    %v3414 = vunpack.c.l.s4 1983009808
    %v3415 = vunpack.c.0.s8 %v3414
    %v3416 = vlaneseq
    %v3417 = vshrl.u32 %v3416, 7
    %v3418 = vsub.s32 %v3415, %v3417
    %v3419 = vrot.slane %v3405, %v3418
    %v3420 = vcombine.high %v3412, %v3412
    %v3421 = vcombine.high %v3269, %v3269
    %v3423 = vunpack.c.l.s4 1983009808
    %v3424 = vunpack.c.0.s8 %v3423
    %v3425 = vlaneseq
    %v3426 = vshrl.u32 %v3425, 7
    %v3427 = vsub.s32 %v3424, %v3426
    %v3428 = vrot.slane %v3269, %v3427
    %v3430 = vunpack.c.l.s4 1983009808
    %v3431 = vunpack.c.0.s8 %v3430
    %v3432 = vlaneseq
    %v3433 = vshrl.u32 %v3432, 7
    %v3434 = vsub.s32 %v3431, %v3433
    %v3435 = vrot.slane %v3421, %v3434
    %v3436 = vcombine.high %v3428, %v3428
    %v3437 = vcombine.high %v3301, %v3301
    %v3439 = vunpack.c.l.s4 1983009808
    %v3440 = vunpack.c.0.s8 %v3439
    %v3441 = vlaneseq
    %v3442 = vshrl.u32 %v3441, 7
    %v3443 = vsub.s32 %v3440, %v3442
    %v3444 = vrot.slane %v3301, %v3443
    %v3446 = vunpack.c.l.s4 1983009808
    %v3447 = vunpack.c.0.s8 %v3446
    %v3448 = vlaneseq
    %v3449 = vshrl.u32 %v3448, 7
    %v3450 = vsub.s32 %v3447, %v3449
    %v3451 = vrot.slane %v3437, %v3450
    %v3452 = vcombine.high %v3444, %v3444
    %v3453 = vcombine.low %v3332, %v3340
    %v3454 = vcombine.low %v3339, %v3348
    %v3456 = vunpack.c.l.s4 1983009808
    %v3457 = vunpack.c.0.s8 %v3456
    %v3458 = vlaneseq
    %v3459 = vshrl.u32 %v3458, 7
    %v3460 = vsub.s32 %v3457, %v3459
    %v3461 = vrot.slane %v3453, %v3460
    %v3463 = vunpack.c.l.s4 1983009808
    %v3464 = vunpack.c.0.s8 %v3463
    %v3465 = vlaneseq
    %v3466 = vshrl.u32 %v3465, 7
    %v3467 = vsub.s32 %v3464, %v3466
    %v3468 = vrot.slane %v3454, %v3467
    %v3469 = vcombine.low %v3461, %v3468
    %v3470 = vcombine.low %v3356, %v3355
    %v3471 = vcombine.low %v3364, %v3372
    %v3473 = vunpack.c.l.s4 1983009808
    %v3474 = vunpack.c.0.s8 %v3473
    %v3475 = vlaneseq
    %v3476 = vshrl.u32 %v3475, 7
    %v3477 = vsub.s32 %v3474, %v3476
    %v3478 = vrot.slane %v3470, %v3477
    %v3480 = vunpack.c.l.s4 1983009808
    %v3481 = vunpack.c.0.s8 %v3480
    %v3482 = vlaneseq
    %v3483 = vshrl.u32 %v3482, 7
    %v3484 = vsub.s32 %v3481, %v3483
    %v3485 = vrot.slane %v3471, %v3484
    %v3486 = vcombine.low %v3478, %v3485
    %v3487 = vcombine.low %v3371, %v3380
    %v3488 = vcombine.low %v3388, %v3387
    %v3490 = vunpack.c.l.s4 1983009808
    %v3491 = vunpack.c.0.s8 %v3490
    %v3492 = vlaneseq
    %v3493 = vshrl.u32 %v3492, 7
    %v3494 = vsub.s32 %v3491, %v3493
    %v3495 = vrot.slane %v3487, %v3494
    %v3497 = vunpack.c.l.s4 1983009808
    %v3498 = vunpack.c.0.s8 %v3497
    %v3499 = vlaneseq
    %v3500 = vshrl.u32 %v3499, 7
    %v3501 = vsub.s32 %v3498, %v3500
    %v3502 = vrot.slane %v3488, %v3501
    %v3503 = vcombine.low %v3495, %v3502
    %v3504 = vcombine.low %v3396, %v3404
    %v3505 = vcombine.low %v3403, %v3412
    %v3507 = vunpack.c.l.s4 1983009808
    %v3508 = vunpack.c.0.s8 %v3507
    %v3509 = vlaneseq
    %v3510 = vshrl.u32 %v3509, 7
    %v3511 = vsub.s32 %v3508, %v3510
    %v3512 = vrot.slane %v3504, %v3511
    %v3514 = vunpack.c.l.s4 1983009808
    %v3515 = vunpack.c.0.s8 %v3514
    %v3516 = vlaneseq
    %v3517 = vshrl.u32 %v3516, 7
    %v3518 = vsub.s32 %v3515, %v3517
    %v3519 = vrot.slane %v3505, %v3518
    %v3520 = vcombine.low %v3512, %v3519
    %v3521 = vcombine.low %v3420, %v3419
    %v3522 = vcombine.low %v3428, %v3436
    %v3524 = vunpack.c.l.s4 1983009808
    %v3525 = vunpack.c.0.s8 %v3524
    %v3526 = vlaneseq
    %v3527 = vshrl.u32 %v3526, 7
    %v3528 = vsub.s32 %v3525, %v3527
    %v3529 = vrot.slane %v3521, %v3528
    %v3531 = vunpack.c.l.s4 1983009808
    %v3532 = vunpack.c.0.s8 %v3531
    %v3533 = vlaneseq
    %v3534 = vshrl.u32 %v3533, 7
    %v3535 = vsub.s32 %v3532, %v3534
    %v3536 = vrot.slane %v3522, %v3535
    %v3537 = vcombine.low %v3529, %v3536
    %v3538 = vcombine.low %v3435, %v3444
    %v3539 = vcombine.low %v3452, %v3451
    %v3541 = vunpack.c.l.s4 1983009808
    %v3542 = vunpack.c.0.s8 %v3541
    %v3543 = vlaneseq
    %v3544 = vshrl.u32 %v3543, 7
    %v3545 = vsub.s32 %v3542, %v3544
    %v3546 = vrot.slane %v3538, %v3545
    %v3548 = vunpack.c.l.s4 1983009808
    %v3549 = vunpack.c.0.s8 %v3548
    %v3550 = vlaneseq
    %v3551 = vshrl.u32 %v3550, 7
    %v3552 = vsub.s32 %v3549, %v3551
    %v3553 = vrot.slane %v3539, %v3552
    %v3554 = vcombine.low %v3546, %v3553
    %v3555 = vsel %vm57, %v3469, 0
    %v3557 = vsel %vm57, %v3486, 0
    %v3559 = vsel %vm57, %v3503, 0
    %v3561 = vsel %vm57, %v3520, 0
    %v3563 = vsel %vm57, %v3537, 0
    %v3565 = vsel %vm57, %v3554, 0
    %3567 = vmatprep.subr.mxu0 0.0
    %3568 = vmatpush1.msra.mxu0 %v55
    %3569 = vmatprep.subr.mxu0 0.0
    %3570 = vmatpush1.msra.mxu0 %v56
    %3571 = vmatprep.subr.mxu0 0.0
    %3572 = vmatpush1.msra.mxu0 0.0
    %3573 = vmatprep.subr.mxu0 0.0
    %3574 = vmatpush1.msra.mxu0 0.0
    %3575 = vmatprep.subr.mxu0 0.0
    %3576 = vmatpush1.msra.mxu0 0.0
    %3577 = vmatprep.subr.mxu0 0.0
    %3578 = vmatpush1.msra.mxu0 0.0
    %3579 = vmatprep.subr.mxu0 0.0
    %3580 = vmatpush1.msra.mxu0 0.0
    %3581 = vmatprep.subr.mxu0 0.0
    %3582 = vmatpush1.msra.mxu0 0.0
    %3583 = vmatprep.subr.mxu0 0.0
    %3584 = vmatpush1.msra.mxu0 0.0
    %3585 = vmatprep.subr.mxu0 0.0
    %3586 = vmatpush1.msra.mxu0 0.0
    %3587 = vmatprep.subr.mxu0 0.0
    %3588 = vmatpush1.msra.mxu0 0.0
    %3589 = vmatprep.subr.mxu0 0.0
    %3590 = vmatpush1.msra.mxu0 0.0
    %3591 = vmatprep.subr.mxu0 0.0
    %3592 = vmatpush1.msra.mxu0 0.0
    %3593 = vmatprep.subr.mxu0 0.0
    %3594 = vmatpush1.msra.mxu0 0.0
    %3595 = vmatprep.subr.mxu0 0.0
    %3596 = vmatpush1.msra.mxu0 0.0
    %3597 = vmatprep.subr.mxu0 0.0
    %3598 = vmatpush1.msra.mxu0 0.0
    %3599 = vmatprep.subr.mxu0 0.0
    %3600 = vmatpush1.msra.mxu0 0.0
    %3601 = vmatprep.subr.mxu0 0.0
    %3602 = vmatpush1.msra.mxu0 0.0
    %3603 = vmatprep.subr.mxu0 0.0
    %3604 = vmatpush1.msra.mxu0 0.0
    %3605 = vmatprep.subr.mxu0 0.0
    %3606 = vmatpush1.msra.mxu0 0.0
    %3607 = vmatprep.subr.mxu0 0.0
    %3608 = vmatpush1.msra.mxu0 0.0
    %3609 = vmatprep.subr.mxu0 0.0
    %3610 = vmatpush1.msra.mxu0 0.0
    %3611 = vmatprep.subr.mxu0 0.0
    %3612 = vmatpush1.msra.mxu0 0.0
    %3613 = vmatprep.subr.mxu0 0.0
    %3614 = vmatpush1.msra.mxu0 0.0
    %3615 = vmatprep.subr.mxu0 0.0
    %3616 = vmatpush1.msra.mxu0 0.0
    %3617 = vmatprep.subr.mxu0 0.0
    %3618 = vmatpush1.msra.mxu0 0.0
    %3619 = vmatprep.subr.mxu0 0.0
    %3620 = vmatpush1.msra.mxu0 0.0
    %3621 = vmatprep.subr.mxu0 0.0
    %3622 = vmatpush1.msra.mxu0 0.0
    %3623 = vmatprep.subr.mxu0 0.0
    %3624 = vmatpush1.msra.mxu0 0.0
    %3625 = vmatprep.subr.mxu0 0.0
    %3626 = vmatpush1.msra.mxu0 0.0
    %3627 = vmatprep.subr.mxu0 0.0
    %3628 = vmatpush1.msra.mxu0 0.0
    %3629 = vmatprep.subr.mxu0 0.0
    %3630 = vmatpush1.msra.mxu0 0.0
    %3631 = vmatprep.mubr.f32.mxu0 0.0
    %3632 = vmatmul.mubr.f32.gmra.mrb[0].mxu0 %v3555
    %v3633 = vpop.f32.mrb[0].mxu0
    %v3634 = vadd.f32 0.0, %v3633
    %v3635 = vpop.f32.mrb[0].mxu0
    %3636 = vmatprep.mubr.f32.mxu0 0.0
    %3637 = vmatmul.mubr.f32.gmra.mrb[0].mxu0 %v3557
    %v3638 = vpop.f32.mrb[0].mxu0
    %v3639 = vadd.f32 0.0, %v3638
    %v3640 = vpop.f32.mrb[0].mxu0
    %3641 = vmatprep.mubr.f32.mxu0 0.0
    %3642 = vmatmul.mubr.f32.gmra.mrb[0].mxu0 %v3559
    %v3643 = vpop.f32.mrb[0].mxu0
    %v3644 = vadd.f32 0.0, %v3643
    %v3645 = vpop.f32.mrb[0].mxu0
    %3646 = vmatprep.mubr.f32.mxu0 0.0
    %3647 = vmatmul.mubr.f32.gmra.mrb[0].mxu0 %v3561
    %v3648 = vpop.f32.mrb[0].mxu0
    %v3649 = vadd.f32 0.0, %v3648
    %v3650 = vpop.f32.mrb[0].mxu0
    %3651 = vmatprep.mubr.f32.mxu0 0.0
    %3652 = vmatmul.mubr.f32.gmra.mrb[0].mxu0 %v3563
    %v3653 = vpop.f32.mrb[0].mxu0
    %v3654 = vadd.f32 0.0, %v3653
    %v3655 = vpop.f32.mrb[0].mxu0
    %3656 = vmatprep.mubr.f32.mxu0 0.0
    %3657 = vmatmul.mubr.f32.gmra.mrb[0].mxu0 %v3565
    %v3658 = vpop.f32.mrb[0].mxu0
    %v3659 = vadd.f32 0.0, %v3658
    %v3660 = vpop.f32.mrb[0].mxu0
    %3661 = vdwg.mxu0
    %v3668 = vcombine.high %v3634, %v3634
    %v3670 = vunpack.c.l.s4 1983009808
    %v3671 = vunpack.c.0.s8 %v3670
    %v3672 = vlaneseq
    %v3673 = vshrl.u32 %v3672, 7
    %v3674 = vsub.s32 %v3671, %v3673
    %v3675 = vrot.slane %v3634, %v3674
    %v3677 = vunpack.c.l.s4 1983009808
    %v3678 = vunpack.c.0.s8 %v3677
    %v3679 = vlaneseq
    %v3680 = vshrl.u32 %v3679, 7
    %v3681 = vsub.s32 %v3678, %v3680
    %v3682 = vrot.slane %v3668, %v3681
    %v3683 = vcombine.high %v3675, %v3675
    %v3684 = vcombine.high %v3682, %v3682
    %v3685 = vcombine.high %v3639, %v3639
    %v3687 = vunpack.c.l.s4 1983009808
    %v3688 = vunpack.c.0.s8 %v3687
    %v3689 = vlaneseq
    %v3690 = vshrl.u32 %v3689, 7
    %v3691 = vsub.s32 %v3688, %v3690
    %v3692 = vrot.slane %v3639, %v3691
    %v3694 = vunpack.c.l.s4 1983009808
    %v3695 = vunpack.c.0.s8 %v3694
    %v3696 = vlaneseq
    %v3697 = vshrl.u32 %v3696, 7
    %v3698 = vsub.s32 %v3695, %v3697
    %v3699 = vrot.slane %v3685, %v3698
    %v3700 = vcombine.high %v3692, %v3692
    %v3701 = vcombine.high %v3699, %v3699
    %v3702 = vcombine.high %v3644, %v3644
    %v3704 = vunpack.c.l.s4 1983009808
    %v3705 = vunpack.c.0.s8 %v3704
    %v3706 = vlaneseq
    %v3707 = vshrl.u32 %v3706, 7
    %v3708 = vsub.s32 %v3705, %v3707
    %v3709 = vrot.slane %v3644, %v3708
    %v3711 = vunpack.c.l.s4 1983009808
    %v3712 = vunpack.c.0.s8 %v3711
    %v3713 = vlaneseq
    %v3714 = vshrl.u32 %v3713, 7
    %v3715 = vsub.s32 %v3712, %v3714
    %v3716 = vrot.slane %v3702, %v3715
    %v3717 = vcombine.high %v3709, %v3709
    %v3718 = vcombine.high %v3716, %v3716
    %v3719 = vcombine.high %v3649, %v3649
    %v3721 = vunpack.c.l.s4 1983009808
    %v3722 = vunpack.c.0.s8 %v3721
    %v3723 = vlaneseq
    %v3724 = vshrl.u32 %v3723, 7
    %v3725 = vsub.s32 %v3722, %v3724
    %v3726 = vrot.slane %v3649, %v3725
    %v3728 = vunpack.c.l.s4 1983009808
    %v3729 = vunpack.c.0.s8 %v3728
    %v3730 = vlaneseq
    %v3731 = vshrl.u32 %v3730, 7
    %v3732 = vsub.s32 %v3729, %v3731
    %v3733 = vrot.slane %v3719, %v3732
    %v3734 = vcombine.high %v3726, %v3726
    %v3735 = vcombine.high %v3733, %v3733
    %v3736 = vcombine.high %v3654, %v3654
    %v3738 = vunpack.c.l.s4 1983009808
    %v3739 = vunpack.c.0.s8 %v3738
    %v3740 = vlaneseq
    %v3741 = vshrl.u32 %v3740, 7
    %v3742 = vsub.s32 %v3739, %v3741
    %v3743 = vrot.slane %v3654, %v3742
    %v3745 = vunpack.c.l.s4 1983009808
    %v3746 = vunpack.c.0.s8 %v3745
    %v3747 = vlaneseq
    %v3748 = vshrl.u32 %v3747, 7
    %v3749 = vsub.s32 %v3746, %v3748
    %v3750 = vrot.slane %v3736, %v3749
    %v3751 = vcombine.high %v3743, %v3743
    %v3752 = vcombine.high %v3750, %v3750
    %v3753 = vcombine.high %v3659, %v3659
    %v3755 = vunpack.c.l.s4 1983009808
    %v3756 = vunpack.c.0.s8 %v3755
    %v3757 = vlaneseq
    %v3758 = vshrl.u32 %v3757, 7
    %v3759 = vsub.s32 %v3756, %v3758
    %v3760 = vrot.slane %v3659, %v3759
    %v3762 = vunpack.c.l.s4 1983009808
    %v3763 = vunpack.c.0.s8 %v3762
    %v3764 = vlaneseq
    %v3765 = vshrl.u32 %v3764, 7
    %v3766 = vsub.s32 %v3763, %v3765
    %v3767 = vrot.slane %v3753, %v3766
    %v3768 = vcombine.high %v3760, %v3760
    %v3769 = vcombine.high %v3767, %v3767
    %v3794 = vmul.f32 %v21, %v37
    %v3795 = vmul.f32 %v22, %v38
    %v3796 = vmul.f32 %v23, %v39
    %v3797 = vmul.f32 %v24, %v40
    %v3798 = vmul.f32 %v25, %v41
    %v3799 = vmul.f32 %v26, %v42
    %v3800 = vmul.f32 %v27, %v43
    %v3801 = vmul.f32 %v28, %v44
    %v3802 = vmul.f32 %v29, %v45
    %v3803 = vmul.f32 %v30, %v46
    %v3804 = vmul.f32 %v31, %v47
    %v3805 = vmul.f32 %v32, %v48
    %v3806 = vmul.f32 %v33, %v49
    %v3807 = vmul.f32 %v34, %v50
    %v3808 = vmul.f32 %v35, %v51
    %v3809 = vmul.f32 %v36, %v52
    %v3811 = vsel %vm57, %v3794, 0
    %v3814 = vsel %vm57, %v3795, 0
    %v3817 = vsel %vm57, %v3796, 0
    %v3820 = vsel %vm57, %v3797, 0
    %v3823 = vsel %vm57, %v3798, 0
    %v3826 = vsel %vm57, %v3799, 0
    %v3829 = vsel %vm57, %v3800, 0
    %v3832 = vsel %vm57, %v3801, 0
    %v3835 = vsel %vm57, %v3802, 0
    %v3838 = vsel %vm57, %v3803, 0
    %v3841 = vsel %vm57, %v3804, 0
    %v3844 = vsel %vm57, %v3805, 0
    %v3847 = vsel %vm57, %v3806, 0
    %v3850 = vsel %vm57, %v3807, 0
    %v3853 = vsel %vm57, %v3808, 0
    %v3856 = vsel %vm57, %v3809, 0
    %3858 = vmatprep.subr.mxu0 0.0
    %3859 = vmatpush1.msra.mxu0 %v53
    %3860 = vmatprep.subr.mxu0 0.0
    %3861 = vmatpush1.msra.mxu0 %v54
    %3862 = vmatprep.subr.mxu0 0.0
    %3863 = vmatpush1.msra.mxu0 0.0
    %3864 = vmatprep.subr.mxu0 0.0
    %3865 = vmatpush1.msra.mxu0 0.0
    %3866 = vmatprep.subr.mxu0 0.0
    %3867 = vmatpush1.msra.mxu0 0.0
    %3868 = vmatprep.subr.mxu0 0.0
    %3869 = vmatpush1.msra.mxu0 0.0
    %3870 = vmatprep.subr.mxu0 0.0
    %3871 = vmatpush1.msra.mxu0 0.0
    %3872 = vmatprep.subr.mxu0 0.0
    %3873 = vmatpush1.msra.mxu0 0.0
    %3874 = vmatprep.subr.mxu0 0.0
    %3875 = vmatpush1.msra.mxu0 0.0
    %3876 = vmatprep.subr.mxu0 0.0
    %3877 = vmatpush1.msra.mxu0 0.0
    %3878 = vmatprep.subr.mxu0 0.0
    %3879 = vmatpush1.msra.mxu0 0.0
    %3880 = vmatprep.subr.mxu0 0.0
    %3881 = vmatpush1.msra.mxu0 0.0
    %3882 = vmatprep.subr.mxu0 0.0
    %3883 = vmatpush1.msra.mxu0 0.0
    %3884 = vmatprep.subr.mxu0 0.0
    %3885 = vmatpush1.msra.mxu0 0.0
    %3886 = vmatprep.subr.mxu0 0.0
    %3887 = vmatpush1.msra.mxu0 0.0
    %3888 = vmatprep.subr.mxu0 0.0
    %3889 = vmatpush1.msra.mxu0 0.0
    %3890 = vmatprep.subr.mxu0 0.0
    %3891 = vmatpush1.msra.mxu0 0.0
    %3892 = vmatprep.subr.mxu0 0.0
    %3893 = vmatpush1.msra.mxu0 0.0
    %3894 = vmatprep.subr.mxu0 0.0
    %3895 = vmatpush1.msra.mxu0 0.0
    %3896 = vmatprep.subr.mxu0 0.0
    %3897 = vmatpush1.msra.mxu0 0.0
    %3898 = vmatprep.subr.mxu0 0.0
    %3899 = vmatpush1.msra.mxu0 0.0
    %3900 = vmatprep.subr.mxu0 0.0
    %3901 = vmatpush1.msra.mxu0 0.0
    %3902 = vmatprep.subr.mxu0 0.0
    %3903 = vmatpush1.msra.mxu0 0.0
    %3904 = vmatprep.subr.mxu0 0.0
    %3905 = vmatpush1.msra.mxu0 0.0
    %3906 = vmatprep.subr.mxu0 0.0
    %3907 = vmatpush1.msra.mxu0 0.0
    %3908 = vmatprep.subr.mxu0 0.0
    %3909 = vmatpush1.msra.mxu0 0.0
    %3910 = vmatprep.subr.mxu0 0.0
    %3911 = vmatpush1.msra.mxu0 0.0
    %3912 = vmatprep.subr.mxu0 0.0
    %3913 = vmatpush1.msra.mxu0 0.0
    %3914 = vmatprep.subr.mxu0 0.0
    %3915 = vmatpush1.msra.mxu0 0.0
    %3916 = vmatprep.subr.mxu0 0.0
    %3917 = vmatpush1.msra.mxu0 0.0
    %3918 = vmatprep.subr.mxu0 0.0
    %3919 = vmatpush1.msra.mxu0 0.0
    %3920 = vmatprep.subr.mxu0 0.0
    %3921 = vmatpush1.msra.mxu0 0.0
    %3922 = vmatprep.mubr.f32.mxu0 0.0
    %3923 = vmatmul.mubr.f32.gmra.mrb[0].mxu0 %v3811
    %v3924 = vpop.f32.mrb[0].mxu0
    %v3925 = vadd.f32 0.0, %v3924
    %v3926 = vpop.f32.mrb[0].mxu0
    %3927 = vmatprep.mubr.f32.mxu0 0.0
    %3928 = vmatmul.mubr.f32.gmra.mrb[0].mxu0 %v3814
    %v3929 = vpop.f32.mrb[0].mxu0
    %v3930 = vadd.f32 0.0, %v3929
    %v3931 = vpop.f32.mrb[0].mxu0
    %3932 = vmatprep.mubr.f32.mxu0 0.0
    %3933 = vmatmul.mubr.f32.gmra.mrb[0].mxu0 %v3817
    %v3934 = vpop.f32.mrb[0].mxu0
    %v3935 = vadd.f32 0.0, %v3934
    %v3936 = vpop.f32.mrb[0].mxu0
    %3937 = vmatprep.mubr.f32.mxu0 0.0
    %3938 = vmatmul.mubr.f32.gmra.mrb[0].mxu0 %v3820
    %v3939 = vpop.f32.mrb[0].mxu0
    %v3940 = vadd.f32 0.0, %v3939
    %v3941 = vpop.f32.mrb[0].mxu0
    %3942 = vmatprep.mubr.f32.mxu0 0.0
    %3943 = vmatmul.mubr.f32.gmra.mrb[0].mxu0 %v3823
    %v3944 = vpop.f32.mrb[0].mxu0
    %v3945 = vadd.f32 0.0, %v3944
    %v3946 = vpop.f32.mrb[0].mxu0
    %3947 = vmatprep.mubr.f32.mxu0 0.0
    %3948 = vmatmul.mubr.f32.gmra.mrb[0].mxu0 %v3826
    %v3949 = vpop.f32.mrb[0].mxu0
    %v3950 = vadd.f32 0.0, %v3949
    %v3951 = vpop.f32.mrb[0].mxu0
    %3952 = vmatprep.mubr.f32.mxu0 0.0
    %3953 = vmatmul.mubr.f32.gmra.mrb[0].mxu0 %v3829
    %v3954 = vpop.f32.mrb[0].mxu0
    %v3955 = vadd.f32 0.0, %v3954
    %v3956 = vpop.f32.mrb[0].mxu0
    %3957 = vmatprep.mubr.f32.mxu0 0.0
    %3958 = vmatmul.mubr.f32.gmra.mrb[0].mxu0 %v3832
    %v3959 = vpop.f32.mrb[0].mxu0
    %v3960 = vadd.f32 0.0, %v3959
    %v3961 = vpop.f32.mrb[0].mxu0
    %3962 = vmatprep.mubr.f32.mxu0 0.0
    %3963 = vmatmul.mubr.f32.gmra.mrb[0].mxu0 %v3835
    %v3964 = vpop.f32.mrb[0].mxu0
    %v3965 = vadd.f32 0.0, %v3964
    %v3966 = vpop.f32.mrb[0].mxu0
    %3967 = vmatprep.mubr.f32.mxu0 0.0
    %3968 = vmatmul.mubr.f32.gmra.mrb[0].mxu0 %v3838
    %v3969 = vpop.f32.mrb[0].mxu0
    %v3970 = vadd.f32 0.0, %v3969
    %v3971 = vpop.f32.mrb[0].mxu0
    %3972 = vmatprep.mubr.f32.mxu0 0.0
    %3973 = vmatmul.mubr.f32.gmra.mrb[0].mxu0 %v3841
    %v3974 = vpop.f32.mrb[0].mxu0
    %v3975 = vadd.f32 0.0, %v3974
    %v3976 = vpop.f32.mrb[0].mxu0
    %3977 = vmatprep.mubr.f32.mxu0 0.0
    %3978 = vmatmul.mubr.f32.gmra.mrb[0].mxu0 %v3844
    %v3979 = vpop.f32.mrb[0].mxu0
    %v3980 = vadd.f32 0.0, %v3979
    %v3981 = vpop.f32.mrb[0].mxu0
    %3982 = vmatprep.mubr.f32.mxu0 0.0
    %3983 = vmatmul.mubr.f32.gmra.mrb[0].mxu0 %v3847
    %v3984 = vpop.f32.mrb[0].mxu0
    %v3985 = vadd.f32 0.0, %v3984
    %v3986 = vpop.f32.mrb[0].mxu0
    %3987 = vmatprep.mubr.f32.mxu0 0.0
    %3988 = vmatmul.mubr.f32.gmra.mrb[0].mxu0 %v3850
    %v3989 = vpop.f32.mrb[0].mxu0
    %v3990 = vadd.f32 0.0, %v3989
    %v3991 = vpop.f32.mrb[0].mxu0
    %3992 = vmatprep.mubr.f32.mxu0 0.0
    %3993 = vmatmul.mubr.f32.gmra.mrb[0].mxu0 %v3853
    %v3994 = vpop.f32.mrb[0].mxu0
    %v3995 = vadd.f32 0.0, %v3994
    %v3996 = vpop.f32.mrb[0].mxu0
    %3997 = vmatprep.mubr.f32.mxu0 0.0
    %3998 = vmatmul.mubr.f32.gmra.mrb[0].mxu0 %v3856
    %v3999 = vpop.f32.mrb[0].mxu0
    %v4000 = vadd.f32 0.0, %v3999
    %v4001 = vpop.f32.mrb[0].mxu0
    %4002 = vdwg.mxu0
    %4003 = vxpose.xlu0.b32.start [1/16] %v3925, 128
    %4004 = vxpose.xlu0.b32.cont [2/16] %v3930, 128
    %4005 = vxpose.xlu0.b32.cont [3/16] 0.0, 128
    %4006 = vxpose.xlu0.b32.cont [4/16] 0.0, 128
    %4007 = vxpose.xlu0.b32.cont [5/16] 0.0, 128
    %4008 = vxpose.xlu0.b32.cont [6/16] 0.0, 128
    %4009 = vxpose.xlu0.b32.cont [7/16] 0.0, 128
    %4010 = vxpose.xlu0.b32.cont [8/16] 0.0, 128
    %4011 = vxpose.xlu0.b32.cont [9/16] 0.0, 128
    %4012 = vxpose.xlu0.b32.cont [10/16] 0.0, 128
    %4013 = vxpose.xlu0.b32.cont [11/16] 0.0, 128
    %4014 = vxpose.xlu0.b32.cont [12/16] 0.0, 128
    %4015 = vxpose.xlu0.b32.cont [13/16] 0.0, 128
    %4016 = vxpose.xlu0.b32.cont [14/16] 0.0, 128
    %4017 = vxpose.xlu0.b32.cont [15/16] 0.0, 128
    %4018 = vxpose.xlu0.b32.end [16/16] 0.0, 128
    %v4019 = vpop.trf.xlu0
    %v4020 = vpop.trf.xlu0
    %v4021 = vpop.trf.xlu0
    %v4022 = vpop.trf.xlu0
    %v4023 = vpop.trf.xlu0
    %v4024 = vpop.trf.xlu0
    %v4025 = vpop.trf.xlu0
    %v4026 = vpop.trf.xlu0
    %v4027 = vpop.trf.xlu0
    %v4028 = vpop.trf.xlu0
    %v4029 = vpop.trf.xlu0
    %v4030 = vpop.trf.xlu0
    %v4031 = vpop.trf.xlu0
    %v4032 = vpop.trf.xlu0
    %v4033 = vpop.trf.xlu0
    %v4034 = vpop.trf.xlu0
    %4035 = vxpose.xlu0.b32.start [1/16] %v3935, 128
    %4036 = vxpose.xlu0.b32.cont [2/16] %v3940, 128
    %4037 = vxpose.xlu0.b32.cont [3/16] 0.0, 128
    %4038 = vxpose.xlu0.b32.cont [4/16] 0.0, 128
    %4039 = vxpose.xlu0.b32.cont [5/16] 0.0, 128
    %4040 = vxpose.xlu0.b32.cont [6/16] 0.0, 128
    %4041 = vxpose.xlu0.b32.cont [7/16] 0.0, 128
    %4042 = vxpose.xlu0.b32.cont [8/16] 0.0, 128
    %4043 = vxpose.xlu0.b32.cont [9/16] 0.0, 128
    %4044 = vxpose.xlu0.b32.cont [10/16] 0.0, 128
    %4045 = vxpose.xlu0.b32.cont [11/16] 0.0, 128
    %4046 = vxpose.xlu0.b32.cont [12/16] 0.0, 128
    %4047 = vxpose.xlu0.b32.cont [13/16] 0.0, 128
    %4048 = vxpose.xlu0.b32.cont [14/16] 0.0, 128
    %4049 = vxpose.xlu0.b32.cont [15/16] 0.0, 128
    %4050 = vxpose.xlu0.b32.end [16/16] 0.0, 128
    %v4051 = vpop.trf.xlu0
    %v4052 = vpop.trf.xlu0
    %v4053 = vpop.trf.xlu0
    %v4054 = vpop.trf.xlu0
    %v4055 = vpop.trf.xlu0
    %v4056 = vpop.trf.xlu0
    %v4057 = vpop.trf.xlu0
    %v4058 = vpop.trf.xlu0
    %v4059 = vpop.trf.xlu0
    %v4060 = vpop.trf.xlu0
    %v4061 = vpop.trf.xlu0
    %v4062 = vpop.trf.xlu0
    %v4063 = vpop.trf.xlu0
    %v4064 = vpop.trf.xlu0
    %v4065 = vpop.trf.xlu0
    %v4066 = vpop.trf.xlu0
    %4067 = vxpose.xlu0.b32.start [1/16] %v3945, 128
    %4068 = vxpose.xlu0.b32.cont [2/16] %v3950, 128
    %4069 = vxpose.xlu0.b32.cont [3/16] 0.0, 128
    %4070 = vxpose.xlu0.b32.cont [4/16] 0.0, 128
    %4071 = vxpose.xlu0.b32.cont [5/16] 0.0, 128
    %4072 = vxpose.xlu0.b32.cont [6/16] 0.0, 128
    %4073 = vxpose.xlu0.b32.cont [7/16] 0.0, 128
    %4074 = vxpose.xlu0.b32.cont [8/16] 0.0, 128
    %4075 = vxpose.xlu0.b32.cont [9/16] 0.0, 128
    %4076 = vxpose.xlu0.b32.cont [10/16] 0.0, 128
    %4077 = vxpose.xlu0.b32.cont [11/16] 0.0, 128
    %4078 = vxpose.xlu0.b32.cont [12/16] 0.0, 128
    %4079 = vxpose.xlu0.b32.cont [13/16] 0.0, 128
    %4080 = vxpose.xlu0.b32.cont [14/16] 0.0, 128
    %4081 = vxpose.xlu0.b32.cont [15/16] 0.0, 128
    %4082 = vxpose.xlu0.b32.end [16/16] 0.0, 128
    %v4083 = vpop.trf.xlu0
    %v4084 = vpop.trf.xlu0
    %v4085 = vpop.trf.xlu0
    %v4086 = vpop.trf.xlu0
    %v4087 = vpop.trf.xlu0
    %v4088 = vpop.trf.xlu0
    %v4089 = vpop.trf.xlu0
    %v4090 = vpop.trf.xlu0
    %v4091 = vpop.trf.xlu0
    %v4092 = vpop.trf.xlu0
    %v4093 = vpop.trf.xlu0
    %v4094 = vpop.trf.xlu0
    %v4095 = vpop.trf.xlu0
    %v4096 = vpop.trf.xlu0
    %v4097 = vpop.trf.xlu0
    %v4098 = vpop.trf.xlu0
    %4099 = vxpose.xlu0.b32.start [1/16] %v3955, 128
    %4100 = vxpose.xlu0.b32.cont [2/16] %v3960, 128
    %4101 = vxpose.xlu0.b32.cont [3/16] 0.0, 128
    %4102 = vxpose.xlu0.b32.cont [4/16] 0.0, 128
    %4103 = vxpose.xlu0.b32.cont [5/16] 0.0, 128
    %4104 = vxpose.xlu0.b32.cont [6/16] 0.0, 128
    %4105 = vxpose.xlu0.b32.cont [7/16] 0.0, 128
    %4106 = vxpose.xlu0.b32.cont [8/16] 0.0, 128
    %4107 = vxpose.xlu0.b32.cont [9/16] 0.0, 128
    %4108 = vxpose.xlu0.b32.cont [10/16] 0.0, 128
    %4109 = vxpose.xlu0.b32.cont [11/16] 0.0, 128
    %4110 = vxpose.xlu0.b32.cont [12/16] 0.0, 128
    %4111 = vxpose.xlu0.b32.cont [13/16] 0.0, 128
    %4112 = vxpose.xlu0.b32.cont [14/16] 0.0, 128
    %4113 = vxpose.xlu0.b32.cont [15/16] 0.0, 128
    %4114 = vxpose.xlu0.b32.end [16/16] 0.0, 128
    %v4115 = vpop.trf.xlu0
    %v4116 = vpop.trf.xlu0
    %v4117 = vpop.trf.xlu0
    %v4118 = vpop.trf.xlu0
    %v4119 = vpop.trf.xlu0
    %v4120 = vpop.trf.xlu0
    %v4121 = vpop.trf.xlu0
    %v4122 = vpop.trf.xlu0
    %v4123 = vpop.trf.xlu0
    %v4124 = vpop.trf.xlu0
    %v4125 = vpop.trf.xlu0
    %v4126 = vpop.trf.xlu0
    %v4127 = vpop.trf.xlu0
    %v4128 = vpop.trf.xlu0
    %v4129 = vpop.trf.xlu0
    %v4130 = vpop.trf.xlu0
    %4131 = vxpose.xlu0.b32.start [1/16] %v3965, 128
    %4132 = vxpose.xlu0.b32.cont [2/16] %v3970, 128
    %4133 = vxpose.xlu0.b32.cont [3/16] 0.0, 128
    %4134 = vxpose.xlu0.b32.cont [4/16] 0.0, 128
    %4135 = vxpose.xlu0.b32.cont [5/16] 0.0, 128
    %4136 = vxpose.xlu0.b32.cont [6/16] 0.0, 128
    %4137 = vxpose.xlu0.b32.cont [7/16] 0.0, 128
    %4138 = vxpose.xlu0.b32.cont [8/16] 0.0, 128
    %4139 = vxpose.xlu0.b32.cont [9/16] 0.0, 128
    %4140 = vxpose.xlu0.b32.cont [10/16] 0.0, 128
    %4141 = vxpose.xlu0.b32.cont [11/16] 0.0, 128
    %4142 = vxpose.xlu0.b32.cont [12/16] 0.0, 128
    %4143 = vxpose.xlu0.b32.cont [13/16] 0.0, 128
    %4144 = vxpose.xlu0.b32.cont [14/16] 0.0, 128
    %4145 = vxpose.xlu0.b32.cont [15/16] 0.0, 128
    %4146 = vxpose.xlu0.b32.end [16/16] 0.0, 128
    %v4147 = vpop.trf.xlu0
    %v4148 = vpop.trf.xlu0
    %v4149 = vpop.trf.xlu0
    %v4150 = vpop.trf.xlu0
    %v4151 = vpop.trf.xlu0
    %v4152 = vpop.trf.xlu0
    %v4153 = vpop.trf.xlu0
    %v4154 = vpop.trf.xlu0
    %v4155 = vpop.trf.xlu0
    %v4156 = vpop.trf.xlu0
    %v4157 = vpop.trf.xlu0
    %v4158 = vpop.trf.xlu0
    %v4159 = vpop.trf.xlu0
    %v4160 = vpop.trf.xlu0
    %v4161 = vpop.trf.xlu0
    %v4162 = vpop.trf.xlu0
    %4163 = vxpose.xlu0.b32.start [1/16] %v3975, 128
    %4164 = vxpose.xlu0.b32.cont [2/16] %v3980, 128
    %4165 = vxpose.xlu0.b32.cont [3/16] 0.0, 128
    %4166 = vxpose.xlu0.b32.cont [4/16] 0.0, 128
    %4167 = vxpose.xlu0.b32.cont [5/16] 0.0, 128
    %4168 = vxpose.xlu0.b32.cont [6/16] 0.0, 128
    %4169 = vxpose.xlu0.b32.cont [7/16] 0.0, 128
    %4170 = vxpose.xlu0.b32.cont [8/16] 0.0, 128
    %4171 = vxpose.xlu0.b32.cont [9/16] 0.0, 128
    %4172 = vxpose.xlu0.b32.cont [10/16] 0.0, 128
    %4173 = vxpose.xlu0.b32.cont [11/16] 0.0, 128
    %4174 = vxpose.xlu0.b32.cont [12/16] 0.0, 128
    %4175 = vxpose.xlu0.b32.cont [13/16] 0.0, 128
    %4176 = vxpose.xlu0.b32.cont [14/16] 0.0, 128
    %4177 = vxpose.xlu0.b32.cont [15/16] 0.0, 128
    %4178 = vxpose.xlu0.b32.end [16/16] 0.0, 128
    %v4179 = vpop.trf.xlu0
    %v4180 = vpop.trf.xlu0
    %v4181 = vpop.trf.xlu0
    %v4182 = vpop.trf.xlu0
    %v4183 = vpop.trf.xlu0
    %v4184 = vpop.trf.xlu0
    %v4185 = vpop.trf.xlu0
    %v4186 = vpop.trf.xlu0
    %v4187 = vpop.trf.xlu0
    %v4188 = vpop.trf.xlu0
    %v4189 = vpop.trf.xlu0
    %v4190 = vpop.trf.xlu0
    %v4191 = vpop.trf.xlu0
    %v4192 = vpop.trf.xlu0
    %v4193 = vpop.trf.xlu0
    %v4194 = vpop.trf.xlu0
    %4195 = vxpose.xlu0.b32.start [1/16] %v3985, 128
    %4196 = vxpose.xlu0.b32.cont [2/16] %v3990, 128
    %4197 = vxpose.xlu0.b32.cont [3/16] 0.0, 128
    %4198 = vxpose.xlu0.b32.cont [4/16] 0.0, 128
    %4199 = vxpose.xlu0.b32.cont [5/16] 0.0, 128
    %4200 = vxpose.xlu0.b32.cont [6/16] 0.0, 128
    %4201 = vxpose.xlu0.b32.cont [7/16] 0.0, 128
    %4202 = vxpose.xlu0.b32.cont [8/16] 0.0, 128
    %4203 = vxpose.xlu0.b32.cont [9/16] 0.0, 128
    %4204 = vxpose.xlu0.b32.cont [10/16] 0.0, 128
    %4205 = vxpose.xlu0.b32.cont [11/16] 0.0, 128
    %4206 = vxpose.xlu0.b32.cont [12/16] 0.0, 128
    %4207 = vxpose.xlu0.b32.cont [13/16] 0.0, 128
    %4208 = vxpose.xlu0.b32.cont [14/16] 0.0, 128
    %4209 = vxpose.xlu0.b32.cont [15/16] 0.0, 128
    %4210 = vxpose.xlu0.b32.end [16/16] 0.0, 128
    %v4211 = vpop.trf.xlu0
    %v4212 = vpop.trf.xlu0
    %v4213 = vpop.trf.xlu0
    %v4214 = vpop.trf.xlu0
    %v4215 = vpop.trf.xlu0
    %v4216 = vpop.trf.xlu0
    %v4217 = vpop.trf.xlu0
    %v4218 = vpop.trf.xlu0
    %v4219 = vpop.trf.xlu0
    %v4220 = vpop.trf.xlu0
    %v4221 = vpop.trf.xlu0
    %v4222 = vpop.trf.xlu0
    %v4223 = vpop.trf.xlu0
    %v4224 = vpop.trf.xlu0
    %v4225 = vpop.trf.xlu0
    %v4226 = vpop.trf.xlu0
    %4227 = vxpose.xlu0.b32.start [1/16] %v3995, 128
    %4228 = vxpose.xlu0.b32.cont [2/16] %v4000, 128
    %4229 = vxpose.xlu0.b32.cont [3/16] 0.0, 128
    %4230 = vxpose.xlu0.b32.cont [4/16] 0.0, 128
    %4231 = vxpose.xlu0.b32.cont [5/16] 0.0, 128
    %4232 = vxpose.xlu0.b32.cont [6/16] 0.0, 128
    %4233 = vxpose.xlu0.b32.cont [7/16] 0.0, 128
    %4234 = vxpose.xlu0.b32.cont [8/16] 0.0, 128
    %4235 = vxpose.xlu0.b32.cont [9/16] 0.0, 128
    %4236 = vxpose.xlu0.b32.cont [10/16] 0.0, 128
    %4237 = vxpose.xlu0.b32.cont [11/16] 0.0, 128
    %4238 = vxpose.xlu0.b32.cont [12/16] 0.0, 128
    %4239 = vxpose.xlu0.b32.cont [13/16] 0.0, 128
    %4240 = vxpose.xlu0.b32.cont [14/16] 0.0, 128
    %4241 = vxpose.xlu0.b32.cont [15/16] 0.0, 128
    %4242 = vxpose.xlu0.b32.end [16/16] 0.0, 128
    %v4243 = vpop.trf.xlu0
    %v4244 = vpop.trf.xlu0
    %v4245 = vpop.trf.xlu0
    %v4246 = vpop.trf.xlu0
    %v4247 = vpop.trf.xlu0
    %v4248 = vpop.trf.xlu0
    %v4249 = vpop.trf.xlu0
    %v4250 = vpop.trf.xlu0
    %v4251 = vpop.trf.xlu0
    %v4252 = vpop.trf.xlu0
    %v4253 = vpop.trf.xlu0
    %v4254 = vpop.trf.xlu0
    %v4255 = vpop.trf.xlu0
    %v4256 = vpop.trf.xlu0
    %v4257 = vpop.trf.xlu0
    %v4258 = vpop.trf.xlu0
    %v4267 = vcombine.high %v4019, %v4019
    %v4269 = vunpack.c.l.s4 1983009808
    %v4270 = vunpack.c.0.s8 %v4269
    %v4271 = vlaneseq
    %v4272 = vshrl.u32 %v4271, 7
    %v4273 = vsub.s32 %v4270, %v4272
    %v4274 = vrot.slane %v4019, %v4273
    %v4276 = vunpack.c.l.s4 1983009808
    %v4277 = vunpack.c.0.s8 %v4276
    %v4278 = vlaneseq
    %v4279 = vshrl.u32 %v4278, 7
    %v4280 = vsub.s32 %v4277, %v4279
    %v4281 = vrot.slane %v4267, %v4280
    %v4282 = vcombine.high %v4274, %v4274
    %v4283 = vcombine.high %v4051, %v4051
    %v4285 = vunpack.c.l.s4 1983009808
    %v4286 = vunpack.c.0.s8 %v4285
    %v4287 = vlaneseq
    %v4288 = vshrl.u32 %v4287, 7
    %v4289 = vsub.s32 %v4286, %v4288
    %v4290 = vrot.slane %v4051, %v4289
    %v4292 = vunpack.c.l.s4 1983009808
    %v4293 = vunpack.c.0.s8 %v4292
    %v4294 = vlaneseq
    %v4295 = vshrl.u32 %v4294, 7
    %v4296 = vsub.s32 %v4293, %v4295
    %v4297 = vrot.slane %v4283, %v4296
    %v4298 = vcombine.high %v4290, %v4290
    %v4299 = vcombine.high %v4083, %v4083
    %v4301 = vunpack.c.l.s4 1983009808
    %v4302 = vunpack.c.0.s8 %v4301
    %v4303 = vlaneseq
    %v4304 = vshrl.u32 %v4303, 7
    %v4305 = vsub.s32 %v4302, %v4304
    %v4306 = vrot.slane %v4083, %v4305
    %v4308 = vunpack.c.l.s4 1983009808
    %v4309 = vunpack.c.0.s8 %v4308
    %v4310 = vlaneseq
    %v4311 = vshrl.u32 %v4310, 7
    %v4312 = vsub.s32 %v4309, %v4311
    %v4313 = vrot.slane %v4299, %v4312
    %v4314 = vcombine.high %v4306, %v4306
    %v4315 = vcombine.high %v4115, %v4115
    %v4317 = vunpack.c.l.s4 1983009808
    %v4318 = vunpack.c.0.s8 %v4317
    %v4319 = vlaneseq
    %v4320 = vshrl.u32 %v4319, 7
    %v4321 = vsub.s32 %v4318, %v4320
    %v4322 = vrot.slane %v4115, %v4321
    %v4324 = vunpack.c.l.s4 1983009808
    %v4325 = vunpack.c.0.s8 %v4324
    %v4326 = vlaneseq
    %v4327 = vshrl.u32 %v4326, 7
    %v4328 = vsub.s32 %v4325, %v4327
    %v4329 = vrot.slane %v4315, %v4328
    %v4330 = vcombine.high %v4322, %v4322
    %v4331 = vcombine.high %v4147, %v4147
    %v4333 = vunpack.c.l.s4 1983009808
    %v4334 = vunpack.c.0.s8 %v4333
    %v4335 = vlaneseq
    %v4336 = vshrl.u32 %v4335, 7
    %v4337 = vsub.s32 %v4334, %v4336
    %v4338 = vrot.slane %v4147, %v4337
    %v4340 = vunpack.c.l.s4 1983009808
    %v4341 = vunpack.c.0.s8 %v4340
    %v4342 = vlaneseq
    %v4343 = vshrl.u32 %v4342, 7
    %v4344 = vsub.s32 %v4341, %v4343
    %v4345 = vrot.slane %v4331, %v4344
    %v4346 = vcombine.high %v4338, %v4338
    %v4347 = vcombine.high %v4179, %v4179
    %v4349 = vunpack.c.l.s4 1983009808
    %v4350 = vunpack.c.0.s8 %v4349
    %v4351 = vlaneseq
    %v4352 = vshrl.u32 %v4351, 7
    %v4353 = vsub.s32 %v4350, %v4352
    %v4354 = vrot.slane %v4179, %v4353
    %v4356 = vunpack.c.l.s4 1983009808
    %v4357 = vunpack.c.0.s8 %v4356
    %v4358 = vlaneseq
    %v4359 = vshrl.u32 %v4358, 7
    %v4360 = vsub.s32 %v4357, %v4359
    %v4361 = vrot.slane %v4347, %v4360
    %v4362 = vcombine.high %v4354, %v4354
    %v4363 = vcombine.high %v4211, %v4211
    %v4365 = vunpack.c.l.s4 1983009808
    %v4366 = vunpack.c.0.s8 %v4365
    %v4367 = vlaneseq
    %v4368 = vshrl.u32 %v4367, 7
    %v4369 = vsub.s32 %v4366, %v4368
    %v4370 = vrot.slane %v4211, %v4369
    %v4372 = vunpack.c.l.s4 1983009808
    %v4373 = vunpack.c.0.s8 %v4372
    %v4374 = vlaneseq
    %v4375 = vshrl.u32 %v4374, 7
    %v4376 = vsub.s32 %v4373, %v4375
    %v4377 = vrot.slane %v4363, %v4376
    %v4378 = vcombine.high %v4370, %v4370
    %v4379 = vcombine.high %v4243, %v4243
    %v4381 = vunpack.c.l.s4 1983009808
    %v4382 = vunpack.c.0.s8 %v4381
    %v4383 = vlaneseq
    %v4384 = vshrl.u32 %v4383, 7
    %v4385 = vsub.s32 %v4382, %v4384
    %v4386 = vrot.slane %v4243, %v4385
    %v4388 = vunpack.c.l.s4 1983009808
    %v4389 = vunpack.c.0.s8 %v4388
    %v4390 = vlaneseq
    %v4391 = vshrl.u32 %v4390, 7
    %v4392 = vsub.s32 %v4389, %v4391
    %v4393 = vrot.slane %v4379, %v4392
    %v4394 = vcombine.high %v4386, %v4386
    %v4395 = vcombine.low %v4274, %v4282
    %v4396 = vcombine.low %v4281, %v4290
    %v4398 = vunpack.c.l.s4 1983009808
    %v4399 = vunpack.c.0.s8 %v4398
    %v4400 = vlaneseq
    %v4401 = vshrl.u32 %v4400, 7
    %v4402 = vsub.s32 %v4399, %v4401
    %v4403 = vrot.slane %v4395, %v4402
    %v4405 = vunpack.c.l.s4 1983009808
    %v4406 = vunpack.c.0.s8 %v4405
    %v4407 = vlaneseq
    %v4408 = vshrl.u32 %v4407, 7
    %v4409 = vsub.s32 %v4406, %v4408
    %v4410 = vrot.slane %v4396, %v4409
    %v4411 = vcombine.low %v4403, %v4410
    %v4412 = vcombine.low %v4298, %v4297
    %v4413 = vcombine.low %v4306, %v4314
    %v4415 = vunpack.c.l.s4 1983009808
    %v4416 = vunpack.c.0.s8 %v4415
    %v4417 = vlaneseq
    %v4418 = vshrl.u32 %v4417, 7
    %v4419 = vsub.s32 %v4416, %v4418
    %v4420 = vrot.slane %v4412, %v4419
    %v4422 = vunpack.c.l.s4 1983009808
    %v4423 = vunpack.c.0.s8 %v4422
    %v4424 = vlaneseq
    %v4425 = vshrl.u32 %v4424, 7
    %v4426 = vsub.s32 %v4423, %v4425
    %v4427 = vrot.slane %v4413, %v4426
    %v4428 = vcombine.low %v4420, %v4427
    %v4429 = vcombine.low %v4313, %v4322
    %v4430 = vcombine.low %v4330, %v4329
    %v4432 = vunpack.c.l.s4 1983009808
    %v4433 = vunpack.c.0.s8 %v4432
    %v4434 = vlaneseq
    %v4435 = vshrl.u32 %v4434, 7
    %v4436 = vsub.s32 %v4433, %v4435
    %v4437 = vrot.slane %v4429, %v4436
    %v4439 = vunpack.c.l.s4 1983009808
    %v4440 = vunpack.c.0.s8 %v4439
    %v4441 = vlaneseq
    %v4442 = vshrl.u32 %v4441, 7
    %v4443 = vsub.s32 %v4440, %v4442
    %v4444 = vrot.slane %v4430, %v4443
    %v4445 = vcombine.low %v4437, %v4444
    %v4446 = vcombine.low %v4338, %v4346
    %v4447 = vcombine.low %v4345, %v4354
    %v4449 = vunpack.c.l.s4 1983009808
    %v4450 = vunpack.c.0.s8 %v4449
    %v4451 = vlaneseq
    %v4452 = vshrl.u32 %v4451, 7
    %v4453 = vsub.s32 %v4450, %v4452
    %v4454 = vrot.slane %v4446, %v4453
    %v4456 = vunpack.c.l.s4 1983009808
    %v4457 = vunpack.c.0.s8 %v4456
    %v4458 = vlaneseq
    %v4459 = vshrl.u32 %v4458, 7
    %v4460 = vsub.s32 %v4457, %v4459
    %v4461 = vrot.slane %v4447, %v4460
    %v4462 = vcombine.low %v4454, %v4461
    %v4463 = vcombine.low %v4362, %v4361
    %v4464 = vcombine.low %v4370, %v4378
    %v4466 = vunpack.c.l.s4 1983009808
    %v4467 = vunpack.c.0.s8 %v4466
    %v4468 = vlaneseq
    %v4469 = vshrl.u32 %v4468, 7
    %v4470 = vsub.s32 %v4467, %v4469
    %v4471 = vrot.slane %v4463, %v4470
    %v4473 = vunpack.c.l.s4 1983009808
    %v4474 = vunpack.c.0.s8 %v4473
    %v4475 = vlaneseq
    %v4476 = vshrl.u32 %v4475, 7
    %v4477 = vsub.s32 %v4474, %v4476
    %v4478 = vrot.slane %v4464, %v4477
    %v4479 = vcombine.low %v4471, %v4478
    %v4480 = vcombine.low %v4377, %v4386
    %v4481 = vcombine.low %v4394, %v4393
    %v4483 = vunpack.c.l.s4 1983009808
    %v4484 = vunpack.c.0.s8 %v4483
    %v4485 = vlaneseq
    %v4486 = vshrl.u32 %v4485, 7
    %v4487 = vsub.s32 %v4484, %v4486
    %v4488 = vrot.slane %v4480, %v4487
    %v4490 = vunpack.c.l.s4 1983009808
    %v4491 = vunpack.c.0.s8 %v4490
    %v4492 = vlaneseq
    %v4493 = vshrl.u32 %v4492, 7
    %v4494 = vsub.s32 %v4491, %v4493
    %v4495 = vrot.slane %v4481, %v4494
    %v4496 = vcombine.low %v4488, %v4495
    %v4497 = vsel %vm57, %v4411, 0
    %v4499 = vsel %vm57, %v4428, 0
    %v4501 = vsel %vm57, %v4445, 0
    %v4503 = vsel %vm57, %v4462, 0
    %v4505 = vsel %vm57, %v4479, 0
    %v4507 = vsel %vm57, %v4496, 0
    %4509 = vmatprep.subr.mxu0 0.0
    %4510 = vmatpush1.msra.mxu0 %v55
    %4511 = vmatprep.subr.mxu0 0.0
    %4512 = vmatpush1.msra.mxu0 %v56
    %4513 = vmatprep.subr.mxu0 0.0
    %4514 = vmatpush1.msra.mxu0 0.0
    %4515 = vmatprep.subr.mxu0 0.0
    %4516 = vmatpush1.msra.mxu0 0.0
    %4517 = vmatprep.subr.mxu0 0.0
    %4518 = vmatpush1.msra.mxu0 0.0
    %4519 = vmatprep.subr.mxu0 0.0
    %4520 = vmatpush1.msra.mxu0 0.0
    %4521 = vmatprep.subr.mxu0 0.0
    %4522 = vmatpush1.msra.mxu0 0.0
    %4523 = vmatprep.subr.mxu0 0.0
    %4524 = vmatpush1.msra.mxu0 0.0
    %4525 = vmatprep.subr.mxu0 0.0
    %4526 = vmatpush1.msra.mxu0 0.0
    %4527 = vmatprep.subr.mxu0 0.0
    %4528 = vmatpush1.msra.mxu0 0.0
    %4529 = vmatprep.subr.mxu0 0.0
    %4530 = vmatpush1.msra.mxu0 0.0
    %4531 = vmatprep.subr.mxu0 0.0
    %4532 = vmatpush1.msra.mxu0 0.0
    %4533 = vmatprep.subr.mxu0 0.0
    %4534 = vmatpush1.msra.mxu0 0.0
    %4535 = vmatprep.subr.mxu0 0.0
    %4536 = vmatpush1.msra.mxu0 0.0
    %4537 = vmatprep.subr.mxu0 0.0
    %4538 = vmatpush1.msra.mxu0 0.0
    %4539 = vmatprep.subr.mxu0 0.0
    %4540 = vmatpush1.msra.mxu0 0.0
    %4541 = vmatprep.subr.mxu0 0.0
    %4542 = vmatpush1.msra.mxu0 0.0
    %4543 = vmatprep.subr.mxu0 0.0
    %4544 = vmatpush1.msra.mxu0 0.0
    %4545 = vmatprep.subr.mxu0 0.0
    %4546 = vmatpush1.msra.mxu0 0.0
    %4547 = vmatprep.subr.mxu0 0.0
    %4548 = vmatpush1.msra.mxu0 0.0
    %4549 = vmatprep.subr.mxu0 0.0
    %4550 = vmatpush1.msra.mxu0 0.0
    %4551 = vmatprep.subr.mxu0 0.0
    %4552 = vmatpush1.msra.mxu0 0.0
    %4553 = vmatprep.subr.mxu0 0.0
    %4554 = vmatpush1.msra.mxu0 0.0
    %4555 = vmatprep.subr.mxu0 0.0
    %4556 = vmatpush1.msra.mxu0 0.0
    %4557 = vmatprep.subr.mxu0 0.0
    %4558 = vmatpush1.msra.mxu0 0.0
    %4559 = vmatprep.subr.mxu0 0.0
    %4560 = vmatpush1.msra.mxu0 0.0
    %4561 = vmatprep.subr.mxu0 0.0
    %4562 = vmatpush1.msra.mxu0 0.0
    %4563 = vmatprep.subr.mxu0 0.0
    %4564 = vmatpush1.msra.mxu0 0.0
    %4565 = vmatprep.subr.mxu0 0.0
    %4566 = vmatpush1.msra.mxu0 0.0
    %4567 = vmatprep.subr.mxu0 0.0
    %4568 = vmatpush1.msra.mxu0 0.0
    %4569 = vmatprep.subr.mxu0 0.0
    %4570 = vmatpush1.msra.mxu0 0.0
    %4571 = vmatprep.subr.mxu0 0.0
    %4572 = vmatpush1.msra.mxu0 0.0
    %4573 = vmatprep.mubr.f32.mxu0 0.0
    %4574 = vmatmul.mubr.f32.gmra.mrb[0].mxu0 %v4497
    %v4575 = vpop.f32.mrb[0].mxu0
    %v4576 = vadd.f32 0.0, %v4575
    %v4577 = vpop.f32.mrb[0].mxu0
    %4578 = vmatprep.mubr.f32.mxu0 0.0
    %4579 = vmatmul.mubr.f32.gmra.mrb[0].mxu0 %v4499
    %v4580 = vpop.f32.mrb[0].mxu0
    %v4581 = vadd.f32 0.0, %v4580
    %v4582 = vpop.f32.mrb[0].mxu0
    %4583 = vmatprep.mubr.f32.mxu0 0.0
    %4584 = vmatmul.mubr.f32.gmra.mrb[0].mxu0 %v4501
    %v4585 = vpop.f32.mrb[0].mxu0
    %v4586 = vadd.f32 0.0, %v4585
    %v4587 = vpop.f32.mrb[0].mxu0
    %4588 = vmatprep.mubr.f32.mxu0 0.0
    %4589 = vmatmul.mubr.f32.gmra.mrb[0].mxu0 %v4503
    %v4590 = vpop.f32.mrb[0].mxu0
    %v4591 = vadd.f32 0.0, %v4590
    %v4592 = vpop.f32.mrb[0].mxu0
    %4593 = vmatprep.mubr.f32.mxu0 0.0
    %4594 = vmatmul.mubr.f32.gmra.mrb[0].mxu0 %v4505
    %v4595 = vpop.f32.mrb[0].mxu0
    %v4596 = vadd.f32 0.0, %v4595
    %v4597 = vpop.f32.mrb[0].mxu0
    %4598 = vmatprep.mubr.f32.mxu0 0.0
    %4599 = vmatmul.mubr.f32.gmra.mrb[0].mxu0 %v4507
    %v4600 = vpop.f32.mrb[0].mxu0
    %v4601 = vadd.f32 0.0, %v4600
    %v4602 = vpop.f32.mrb[0].mxu0
    %4603 = vdwg.mxu0
    %v4610 = vcombine.high %v4576, %v4576
    %v4612 = vunpack.c.l.s4 1983009808
    %v4613 = vunpack.c.0.s8 %v4612
    %v4614 = vlaneseq
    %v4615 = vshrl.u32 %v4614, 7
    %v4616 = vsub.s32 %v4613, %v4615
    %v4617 = vrot.slane %v4576, %v4616
    %v4619 = vunpack.c.l.s4 1983009808
    %v4620 = vunpack.c.0.s8 %v4619
    %v4621 = vlaneseq
    %v4622 = vshrl.u32 %v4621, 7
    %v4623 = vsub.s32 %v4620, %v4622
    %v4624 = vrot.slane %v4610, %v4623
    %v4625 = vcombine.high %v4617, %v4617
    %v4626 = vcombine.high %v4624, %v4624
    %v4627 = vcombine.high %v4581, %v4581
    %v4629 = vunpack.c.l.s4 1983009808
    %v4630 = vunpack.c.0.s8 %v4629
    %v4631 = vlaneseq
    %v4632 = vshrl.u32 %v4631, 7
    %v4633 = vsub.s32 %v4630, %v4632
    %v4634 = vrot.slane %v4581, %v4633
    %v4636 = vunpack.c.l.s4 1983009808
    %v4637 = vunpack.c.0.s8 %v4636
    %v4638 = vlaneseq
    %v4639 = vshrl.u32 %v4638, 7
    %v4640 = vsub.s32 %v4637, %v4639
    %v4641 = vrot.slane %v4627, %v4640
    %v4642 = vcombine.high %v4634, %v4634
    %v4643 = vcombine.high %v4641, %v4641
    %v4644 = vcombine.high %v4586, %v4586
    %v4646 = vunpack.c.l.s4 1983009808
    %v4647 = vunpack.c.0.s8 %v4646
    %v4648 = vlaneseq
    %v4649 = vshrl.u32 %v4648, 7
    %v4650 = vsub.s32 %v4647, %v4649
    %v4651 = vrot.slane %v4586, %v4650
    %v4653 = vunpack.c.l.s4 1983009808
    %v4654 = vunpack.c.0.s8 %v4653
    %v4655 = vlaneseq
    %v4656 = vshrl.u32 %v4655, 7
    %v4657 = vsub.s32 %v4654, %v4656
    %v4658 = vrot.slane %v4644, %v4657
    %v4659 = vcombine.high %v4651, %v4651
    %v4660 = vcombine.high %v4658, %v4658
    %v4661 = vcombine.high %v4591, %v4591
    %v4663 = vunpack.c.l.s4 1983009808
    %v4664 = vunpack.c.0.s8 %v4663
    %v4665 = vlaneseq
    %v4666 = vshrl.u32 %v4665, 7
    %v4667 = vsub.s32 %v4664, %v4666
    %v4668 = vrot.slane %v4591, %v4667
    %v4670 = vunpack.c.l.s4 1983009808
    %v4671 = vunpack.c.0.s8 %v4670
    %v4672 = vlaneseq
    %v4673 = vshrl.u32 %v4672, 7
    %v4674 = vsub.s32 %v4671, %v4673
    %v4675 = vrot.slane %v4661, %v4674
    %v4676 = vcombine.high %v4668, %v4668
    %v4677 = vcombine.high %v4675, %v4675
    %v4678 = vcombine.high %v4596, %v4596
    %v4680 = vunpack.c.l.s4 1983009808
    %v4681 = vunpack.c.0.s8 %v4680
    %v4682 = vlaneseq
    %v4683 = vshrl.u32 %v4682, 7
    %v4684 = vsub.s32 %v4681, %v4683
    %v4685 = vrot.slane %v4596, %v4684
    %v4687 = vunpack.c.l.s4 1983009808
    %v4688 = vunpack.c.0.s8 %v4687
    %v4689 = vlaneseq
    %v4690 = vshrl.u32 %v4689, 7
    %v4691 = vsub.s32 %v4688, %v4690
    %v4692 = vrot.slane %v4678, %v4691
    %v4693 = vcombine.high %v4685, %v4685
    %v4694 = vcombine.high %v4692, %v4692
    %v4695 = vcombine.high %v4601, %v4601
    %v4697 = vunpack.c.l.s4 1983009808
    %v4698 = vunpack.c.0.s8 %v4697
    %v4699 = vlaneseq
    %v4700 = vshrl.u32 %v4699, 7
    %v4701 = vsub.s32 %v4698, %v4700
    %v4702 = vrot.slane %v4601, %v4701
    %v4704 = vunpack.c.l.s4 1983009808
    %v4705 = vunpack.c.0.s8 %v4704
    %v4706 = vlaneseq
    %v4707 = vshrl.u32 %v4706, 7
    %v4708 = vsub.s32 %v4705, %v4707
    %v4709 = vrot.slane %v4695, %v4708
    %v4710 = vcombine.high %v4702, %v4702
    %v4711 = vcombine.high %v4709, %v4709
    %v4736 = vld [vmem:[%s4] sm:$0x1]
    %s4737 = vtos %v4736
    %4739 = vrot.lane.b32.xlu0 %v4736, 127
    %v4740 = vpop.permute.xlu0 %4739
    %s4742 = vtos %v4740
    %v4743 = vmul.f32 %v865, %v865
    %v4744 = vmul.f32 %v873, %v873
    %v4745 = vmul.f32 %v872, %v872
    %v4746 = vmul.f32 %v874, %v874
    %v4747 = vmul.f32 %v882, %v882
    %v4748 = vmul.f32 %v890, %v890
    %v4749 = vmul.f32 %v889, %v889
    %v4750 = vmul.f32 %v891, %v891
    %v4751 = vmul.f32 %v899, %v899
    %v4752 = vmul.f32 %v907, %v907
    %v4753 = vmul.f32 %v906, %v906
    %v4754 = vmul.f32 %v908, %v908
    %v4755 = vmul.f32 %v916, %v916
    %v4756 = vmul.f32 %v924, %v924
    %v4757 = vmul.f32 %v923, %v923
    %v4758 = vmul.f32 %v925, %v925
    %v4759 = vmul.f32 %v933, %v933
    %v4760 = vmul.f32 %v941, %v941
    %v4761 = vmul.f32 %v940, %v940
    %v4762 = vmul.f32 %v942, %v942
    %v4763 = vmul.f32 %v950, %v950
    %v4764 = vmul.f32 %v958, %v958
    %v4765 = vmul.f32 %v957, %v957
    %v4766 = vmul.f32 %v959, %v959
    %v4767 = vmul.f32 %v1791, %v1791
    %v4768 = vmul.f32 %v1799, %v1799
    %v4769 = vmul.f32 %v1798, %v1798
    %v4770 = vmul.f32 %v1800, %v1800
    %v4771 = vmul.f32 %v1808, %v1808
    %v4772 = vmul.f32 %v1816, %v1816
    %v4773 = vmul.f32 %v1815, %v1815
    %v4774 = vmul.f32 %v1817, %v1817
    %v4775 = vmul.f32 %v1825, %v1825
    %v4776 = vmul.f32 %v1833, %v1833
    %v4777 = vmul.f32 %v1832, %v1832
    %v4778 = vmul.f32 %v1834, %v1834
    %v4779 = vmul.f32 %v1842, %v1842
    %v4780 = vmul.f32 %v1850, %v1850
    %v4781 = vmul.f32 %v1849, %v1849
    %v4782 = vmul.f32 %v1851, %v1851
    %v4783 = vmul.f32 %v1859, %v1859
    %v4784 = vmul.f32 %v1867, %v1867
    %v4785 = vmul.f32 %v1866, %v1866
    %v4786 = vmul.f32 %v1868, %v1868
    %v4787 = vmul.f32 %v1876, %v1876
    %v4788 = vmul.f32 %v1884, %v1884
    %v4789 = vmul.f32 %v1883, %v1883
    %v4790 = vmul.f32 %v1885, %v1885
    %v4791 = vmul.f32 %v865, %v1791
    %v4792 = vmul.f32 %v873, %v1799
    %v4793 = vmul.f32 %v872, %v1798
    %v4794 = vmul.f32 %v874, %v1800
    %v4795 = vmul.f32 %v882, %v1808
    %v4796 = vmul.f32 %v890, %v1816
    %v4797 = vmul.f32 %v889, %v1815
    %v4798 = vmul.f32 %v891, %v1817
    %v4799 = vmul.f32 %v899, %v1825
    %v4800 = vmul.f32 %v907, %v1833
    %v4801 = vmul.f32 %v906, %v1832
    %v4802 = vmul.f32 %v908, %v1834
    %v4803 = vmul.f32 %v916, %v1842
    %v4804 = vmul.f32 %v924, %v1850
    %v4805 = vmul.f32 %v923, %v1849
    %v4806 = vmul.f32 %v925, %v1851
    %v4807 = vmul.f32 %v933, %v1859
    %v4808 = vmul.f32 %v941, %v1867
    %v4809 = vmul.f32 %v940, %v1866
    %v4810 = vmul.f32 %v942, %v1868
    %v4811 = vmul.f32 %v950, %v1876
    %v4812 = vmul.f32 %v958, %v1884
    %v4813 = vmul.f32 %v957, %v1883
    %v4814 = vmul.f32 %v959, %v1885
    %v4815 = vsub.f32 %v2733, %v4743
    %v4816 = vsub.f32 %v2741, %v4744
    %v4817 = vsub.f32 %v2740, %v4745
    %v4818 = vsub.f32 %v2742, %v4746
    %v4819 = vsub.f32 %v2750, %v4747
    %v4820 = vsub.f32 %v2758, %v4748
    %v4821 = vsub.f32 %v2757, %v4749
    %v4822 = vsub.f32 %v2759, %v4750
    %v4823 = vsub.f32 %v2767, %v4751
    %v4824 = vsub.f32 %v2775, %v4752
    %v4825 = vsub.f32 %v2774, %v4753
    %v4826 = vsub.f32 %v2776, %v4754
    %v4827 = vsub.f32 %v2784, %v4755
    %v4828 = vsub.f32 %v2792, %v4756
    %v4829 = vsub.f32 %v2791, %v4757
    %v4830 = vsub.f32 %v2793, %v4758
    %v4831 = vsub.f32 %v2801, %v4759
    %v4832 = vsub.f32 %v2809, %v4760
    %v4833 = vsub.f32 %v2808, %v4761
    %v4834 = vsub.f32 %v2810, %v4762
    %v4835 = vsub.f32 %v2818, %v4763
    %v4836 = vsub.f32 %v2826, %v4764
    %v4837 = vsub.f32 %v2825, %v4765
    %v4838 = vsub.f32 %v2827, %v4766
    %v4839 = vsub.f32 %v3675, %v4767
    %v4840 = vsub.f32 %v3683, %v4768
    %v4841 = vsub.f32 %v3682, %v4769
    %v4842 = vsub.f32 %v3684, %v4770
    %v4843 = vsub.f32 %v3692, %v4771
    %v4844 = vsub.f32 %v3700, %v4772
    %v4845 = vsub.f32 %v3699, %v4773
    %v4846 = vsub.f32 %v3701, %v4774
    %v4847 = vsub.f32 %v3709, %v4775
    %v4848 = vsub.f32 %v3717, %v4776
    %v4849 = vsub.f32 %v3716, %v4777
    %v4850 = vsub.f32 %v3718, %v4778
    %v4851 = vsub.f32 %v3726, %v4779
    %v4852 = vsub.f32 %v3734, %v4780
    %v4853 = vsub.f32 %v3733, %v4781
    %v4854 = vsub.f32 %v3735, %v4782
    %v4855 = vsub.f32 %v3743, %v4783
    %v4856 = vsub.f32 %v3751, %v4784
    %v4857 = vsub.f32 %v3750, %v4785
    %v4858 = vsub.f32 %v3752, %v4786
    %v4859 = vsub.f32 %v3760, %v4787
    %v4860 = vsub.f32 %v3768, %v4788
    %v4861 = vsub.f32 %v3767, %v4789
    %v4862 = vsub.f32 %v3769, %v4790
    %v4863 = vsub.f32 %v4617, %v4791
    %v4864 = vsub.f32 %v4625, %v4792
    %v4865 = vsub.f32 %v4624, %v4793
    %v4866 = vsub.f32 %v4626, %v4794
    %v4867 = vsub.f32 %v4634, %v4795
    %v4868 = vsub.f32 %v4642, %v4796
    %v4869 = vsub.f32 %v4641, %v4797
    %v4870 = vsub.f32 %v4643, %v4798
    %v4871 = vsub.f32 %v4651, %v4799
    %v4872 = vsub.f32 %v4659, %v4800
    %v4873 = vsub.f32 %v4658, %v4801
    %v4874 = vsub.f32 %v4660, %v4802
    %v4875 = vsub.f32 %v4668, %v4803
    %v4876 = vsub.f32 %v4676, %v4804
    %v4877 = vsub.f32 %v4675, %v4805
    %v4878 = vsub.f32 %v4677, %v4806
    %v4879 = vsub.f32 %v4685, %v4807
    %v4880 = vsub.f32 %v4693, %v4808
    %v4881 = vsub.f32 %v4692, %v4809
    %v4882 = vsub.f32 %v4694, %v4810
    %v4883 = vsub.f32 %v4702, %v4811
    %v4884 = vsub.f32 %v4710, %v4812
    %v4885 = vsub.f32 %v4709, %v4813
    %v4886 = vsub.f32 %v4711, %v4814
    %v4887 = vmul.f32 %v4863, 2.0
    %v4888 = vmul.f32 %v4864, 2.0
    %v4889 = vmul.f32 %v4865, 2.0
    %v4890 = vmul.f32 %v4866, 2.0
    %v4891 = vmul.f32 %v4867, 2.0
    %v4892 = vmul.f32 %v4868, 2.0
    %v4893 = vmul.f32 %v4869, 2.0
    %v4894 = vmul.f32 %v4870, 2.0
    %v4895 = vmul.f32 %v4871, 2.0
    %v4896 = vmul.f32 %v4872, 2.0
    %v4897 = vmul.f32 %v4873, 2.0
    %v4898 = vmul.f32 %v4874, 2.0
    %v4899 = vmul.f32 %v4875, 2.0
    %v4900 = vmul.f32 %v4876, 2.0
    %v4901 = vmul.f32 %v4877, 2.0
    %v4902 = vmul.f32 %v4878, 2.0
    %v4903 = vmul.f32 %v4879, 2.0
    %v4904 = vmul.f32 %v4880, 2.0
    %v4905 = vmul.f32 %v4881, 2.0
    %v4906 = vmul.f32 %v4882, 2.0
    %v4907 = vmul.f32 %v4883, 2.0
    %v4908 = vmul.f32 %v4884, 2.0
    %v4909 = vmul.f32 %v4885, 2.0
    %v4910 = vmul.f32 %v4886, 2.0
    %v4911 = vstv %s4742
    %v4912 = vadd.f32 %v4887, %v4911
    %v4913 = vadd.f32 %v4888, %v4911
    %v4914 = vadd.f32 %v4889, %v4911
    %v4915 = vadd.f32 %v4890, %v4911
    %v4916 = vadd.f32 %v4891, %v4911
    %v4917 = vadd.f32 %v4892, %v4911
    %v4918 = vadd.f32 %v4893, %v4911
    %v4919 = vadd.f32 %v4894, %v4911
    %v4920 = vadd.f32 %v4895, %v4911
    %v4921 = vadd.f32 %v4896, %v4911
    %v4922 = vadd.f32 %v4897, %v4911
    %v4923 = vadd.f32 %v4898, %v4911
    %v4924 = vadd.f32 %v4899, %v4911
    %v4925 = vadd.f32 %v4900, %v4911
    %v4926 = vadd.f32 %v4901, %v4911
    %v4927 = vadd.f32 %v4902, %v4911
    %v4928 = vadd.f32 %v4903, %v4911
    %v4929 = vadd.f32 %v4904, %v4911
    %v4930 = vadd.f32 %v4905, %v4911
    %v4931 = vadd.f32 %v4906, %v4911
    %v4932 = vadd.f32 %v4907, %v4911
    %v4933 = vadd.f32 %v4908, %v4911
    %v4934 = vadd.f32 %v4909, %v4911
    %v4935 = vadd.f32 %v4910, %v4911
    %v4936 = vadd.f32 %v4815, %v4839
    %v4937 = vadd.f32 %v4816, %v4840
    %v4938 = vadd.f32 %v4817, %v4841
    %v4939 = vadd.f32 %v4818, %v4842
    %v4940 = vadd.f32 %v4819, %v4843
    %v4941 = vadd.f32 %v4820, %v4844
    %v4942 = vadd.f32 %v4821, %v4845
    %v4943 = vadd.f32 %v4822, %v4846
    %v4944 = vadd.f32 %v4823, %v4847
    %v4945 = vadd.f32 %v4824, %v4848
    %v4946 = vadd.f32 %v4825, %v4849
    %v4947 = vadd.f32 %v4826, %v4850
    %v4948 = vadd.f32 %v4827, %v4851
    %v4949 = vadd.f32 %v4828, %v4852
    %v4950 = vadd.f32 %v4829, %v4853
    %v4951 = vadd.f32 %v4830, %v4854
    %v4952 = vadd.f32 %v4831, %v4855
    %v4953 = vadd.f32 %v4832, %v4856
    %v4954 = vadd.f32 %v4833, %v4857
    %v4955 = vadd.f32 %v4834, %v4858
    %v4956 = vadd.f32 %v4835, %v4859
    %v4957 = vadd.f32 %v4836, %v4860
    %v4958 = vadd.f32 %v4837, %v4861
    %v4959 = vadd.f32 %v4838, %v4862
    %v4960 = vadd.f32 %v4936, %v4911
    %v4961 = vadd.f32 %v4937, %v4911
    %v4962 = vadd.f32 %v4938, %v4911
    %v4963 = vadd.f32 %v4939, %v4911
    %v4964 = vadd.f32 %v4940, %v4911
    %v4965 = vadd.f32 %v4941, %v4911
    %v4966 = vadd.f32 %v4942, %v4911
    %v4967 = vadd.f32 %v4943, %v4911
    %v4968 = vadd.f32 %v4944, %v4911
    %v4969 = vadd.f32 %v4945, %v4911
    %v4970 = vadd.f32 %v4946, %v4911
    %v4971 = vadd.f32 %v4947, %v4911
    %v4972 = vadd.f32 %v4948, %v4911
    %v4973 = vadd.f32 %v4949, %v4911
    %v4974 = vadd.f32 %v4950, %v4911
    %v4975 = vadd.f32 %v4951, %v4911
    %v4976 = vadd.f32 %v4952, %v4911
    %v4977 = vadd.f32 %v4953, %v4911
    %v4978 = vadd.f32 %v4954, %v4911
    %v4979 = vadd.f32 %v4955, %v4911
    %v4980 = vadd.f32 %v4956, %v4911
    %v4981 = vadd.f32 %v4957, %v4911
    %v4982 = vadd.f32 %v4958, %v4911
    %v4983 = vadd.f32 %v4959, %v4911
    %v4984 = vmul.f32 %v4791, 2.0
    %v4985 = vmul.f32 %v4792, 2.0
    %v4986 = vmul.f32 %v4793, 2.0
    %v4987 = vmul.f32 %v4794, 2.0
    %v4988 = vmul.f32 %v4795, 2.0
    %v4989 = vmul.f32 %v4796, 2.0
    %v4990 = vmul.f32 %v4797, 2.0
    %v4991 = vmul.f32 %v4798, 2.0
    %v4992 = vmul.f32 %v4799, 2.0
    %v4993 = vmul.f32 %v4800, 2.0
    %v4994 = vmul.f32 %v4801, 2.0
    %v4995 = vmul.f32 %v4802, 2.0
    %v4996 = vmul.f32 %v4803, 2.0
    %v4997 = vmul.f32 %v4804, 2.0
    %v4998 = vmul.f32 %v4805, 2.0
    %v4999 = vmul.f32 %v4806, 2.0
    %v5000 = vmul.f32 %v4807, 2.0
    %v5001 = vmul.f32 %v4808, 2.0
    %v5002 = vmul.f32 %v4809, 2.0
    %v5003 = vmul.f32 %v4810, 2.0
    %v5004 = vmul.f32 %v4811, 2.0
    %v5005 = vmul.f32 %v4812, 2.0
    %v5006 = vmul.f32 %v4813, 2.0
    %v5007 = vmul.f32 %v4814, 2.0
    %v5008 = vstv %s4737
    %v5009 = vadd.f32 %v4984, %v5008
    %v5010 = vadd.f32 %v4985, %v5008
    %v5011 = vadd.f32 %v4986, %v5008
    %v5012 = vadd.f32 %v4987, %v5008
    %v5013 = vadd.f32 %v4988, %v5008
    %v5014 = vadd.f32 %v4989, %v5008
    %v5015 = vadd.f32 %v4990, %v5008
    %v5016 = vadd.f32 %v4991, %v5008
    %v5017 = vadd.f32 %v4992, %v5008
    %v5018 = vadd.f32 %v4993, %v5008
    %v5019 = vadd.f32 %v4994, %v5008
    %v5020 = vadd.f32 %v4995, %v5008
    %v5021 = vadd.f32 %v4996, %v5008
    %v5022 = vadd.f32 %v4997, %v5008
    %v5023 = vadd.f32 %v4998, %v5008
    %v5024 = vadd.f32 %v4999, %v5008
    %v5025 = vadd.f32 %v5000, %v5008
    %v5026 = vadd.f32 %v5001, %v5008
    %v5027 = vadd.f32 %v5002, %v5008
    %v5028 = vadd.f32 %v5003, %v5008
    %v5029 = vadd.f32 %v5004, %v5008
    %v5030 = vadd.f32 %v5005, %v5008
    %v5031 = vadd.f32 %v5006, %v5008
    %v5032 = vadd.f32 %v5007, %v5008
    %v5033 = vmul.f32 %v5009, %v4912
    %v5034 = vmul.f32 %v5010, %v4913
    %v5035 = vmul.f32 %v5011, %v4914
    %v5036 = vmul.f32 %v5012, %v4915
    %v5037 = vmul.f32 %v5013, %v4916
    %v5038 = vmul.f32 %v5014, %v4917
    %v5039 = vmul.f32 %v5015, %v4918
    %v5040 = vmul.f32 %v5016, %v4919
    %v5041 = vmul.f32 %v5017, %v4920
    %v5042 = vmul.f32 %v5018, %v4921
    %v5043 = vmul.f32 %v5019, %v4922
    %v5044 = vmul.f32 %v5020, %v4923
    %v5045 = vmul.f32 %v5021, %v4924
    %v5046 = vmul.f32 %v5022, %v4925
    %v5047 = vmul.f32 %v5023, %v4926
    %v5048 = vmul.f32 %v5024, %v4927
    %v5049 = vmul.f32 %v5025, %v4928
    %v5050 = vmul.f32 %v5026, %v4929
    %v5051 = vmul.f32 %v5027, %v4930
    %v5052 = vmul.f32 %v5028, %v4931
    %v5053 = vmul.f32 %v5029, %v4932
    %v5054 = vmul.f32 %v5030, %v4933
    %v5055 = vmul.f32 %v5031, %v4934
    %v5056 = vmul.f32 %v5032, %v4935
    %v5057 = vadd.f32 %v4743, %v4767
    %v5058 = vadd.f32 %v4744, %v4768
    %v5059 = vadd.f32 %v4745, %v4769
    %v5060 = vadd.f32 %v4746, %v4770
    %v5061 = vadd.f32 %v4747, %v4771
    %v5062 = vadd.f32 %v4748, %v4772
    %v5063 = vadd.f32 %v4749, %v4773
    %v5064 = vadd.f32 %v4750, %v4774
    %v5065 = vadd.f32 %v4751, %v4775
    %v5066 = vadd.f32 %v4752, %v4776
    %v5067 = vadd.f32 %v4753, %v4777
    %v5068 = vadd.f32 %v4754, %v4778
    %v5069 = vadd.f32 %v4755, %v4779
    %v5070 = vadd.f32 %v4756, %v4780
    %v5071 = vadd.f32 %v4757, %v4781
    %v5072 = vadd.f32 %v4758, %v4782
    %v5073 = vadd.f32 %v4759, %v4783
    %v5074 = vadd.f32 %v4760, %v4784
    %v5075 = vadd.f32 %v4761, %v4785
    %v5076 = vadd.f32 %v4762, %v4786
    %v5077 = vadd.f32 %v4763, %v4787
    %v5078 = vadd.f32 %v4764, %v4788
    %v5079 = vadd.f32 %v4765, %v4789
    %v5080 = vadd.f32 %v4766, %v4790
    %v5081 = vadd.f32 %v5057, %v5008
    %v5082 = vadd.f32 %v5058, %v5008
    %v5083 = vadd.f32 %v5059, %v5008
    %v5084 = vadd.f32 %v5060, %v5008
    %v5085 = vadd.f32 %v5061, %v5008
    %v5086 = vadd.f32 %v5062, %v5008
    %v5087 = vadd.f32 %v5063, %v5008
    %v5088 = vadd.f32 %v5064, %v5008
    %v5089 = vadd.f32 %v5065, %v5008
    %v5090 = vadd.f32 %v5066, %v5008
    %v5091 = vadd.f32 %v5067, %v5008
    %v5092 = vadd.f32 %v5068, %v5008
    %v5093 = vadd.f32 %v5069, %v5008
    %v5094 = vadd.f32 %v5070, %v5008
    %v5095 = vadd.f32 %v5071, %v5008
    %v5096 = vadd.f32 %v5072, %v5008
    %v5097 = vadd.f32 %v5073, %v5008
    %v5098 = vadd.f32 %v5074, %v5008
    %v5099 = vadd.f32 %v5075, %v5008
    %v5100 = vadd.f32 %v5076, %v5008
    %v5101 = vadd.f32 %v5077, %v5008
    %v5102 = vadd.f32 %v5078, %v5008
    %v5103 = vadd.f32 %v5079, %v5008
    %v5104 = vadd.f32 %v5080, %v5008
    %v5105 = vmul.f32 %v5081, %v4960
    %v5106 = vmul.f32 %v5082, %v4961
    %v5107 = vmul.f32 %v5083, %v4962
    %v5108 = vmul.f32 %v5084, %v4963
    %v5109 = vmul.f32 %v5085, %v4964
    %v5110 = vmul.f32 %v5086, %v4965
    %v5111 = vmul.f32 %v5087, %v4966
    %v5112 = vmul.f32 %v5088, %v4967
    %v5113 = vmul.f32 %v5089, %v4968
    %v5114 = vmul.f32 %v5090, %v4969
    %v5115 = vmul.f32 %v5091, %v4970
    %v5116 = vmul.f32 %v5092, %v4971
    %v5117 = vmul.f32 %v5093, %v4972
    %v5118 = vmul.f32 %v5094, %v4973
    %v5119 = vmul.f32 %v5095, %v4974
    %v5120 = vmul.f32 %v5096, %v4975
    %v5121 = vmul.f32 %v5097, %v4976
    %v5122 = vmul.f32 %v5098, %v4977
    %v5123 = vmul.f32 %v5099, %v4978
    %v5124 = vmul.f32 %v5100, %v4979
    %v5125 = vmul.f32 %v5101, %v4980
    %v5126 = vmul.f32 %v5102, %v4981
    %v5127 = vmul.f32 %v5103, %v4982
    %v5128 = vmul.f32 %v5104, %v4983
    %v5129 = vrcp.pop %v5105
    %v5130 = vrcp.pop %v5106
    %v5131 = vrcp.pop %v5107
    %v5132 = vrcp.pop %v5108
    %v5133 = vrcp.pop %v5109
    %v5134 = vrcp.pop %v5110
    %v5135 = vrcp.pop %v5111
    %v5136 = vrcp.pop %v5112
    %v5137 = vrcp.pop %v5113
    %v5138 = vrcp.pop %v5114
    %v5139 = vrcp.pop %v5115
    %v5140 = vrcp.pop %v5116
    %v5141 = vrcp.pop %v5117
    %v5142 = vrcp.pop %v5118
    %v5143 = vrcp.pop %v5119
    %v5144 = vrcp.pop %v5120
    %v5145 = vrcp.pop %v5121
    %v5146 = vrcp.pop %v5122
    %v5147 = vrcp.pop %v5123
    %v5148 = vrcp.pop %v5124
    %v5149 = vrcp.pop %v5125
    %v5150 = vrcp.pop %v5126
    %v5151 = vrcp.pop %v5127
    %v5152 = vrcp.pop %v5128
    %v5153 = vmul.f32 %v5033, %v5129
    %v5154 = vmul.f32 %v5034, %v5130
    %v5155 = vmul.f32 %v5035, %v5131
    %v5156 = vmul.f32 %v5036, %v5132
    %v5157 = vmul.f32 %v5037, %v5133
    %v5158 = vmul.f32 %v5038, %v5134
    %v5159 = vmul.f32 %v5039, %v5135
    %v5160 = vmul.f32 %v5040, %v5136
    %v5161 = vmul.f32 %v5041, %v5137
    %v5162 = vmul.f32 %v5042, %v5138
    %v5163 = vmul.f32 %v5043, %v5139
    %v5164 = vmul.f32 %v5044, %v5140
    %v5165 = vmul.f32 %v5045, %v5141
    %v5166 = vmul.f32 %v5046, %v5142
    %v5167 = vmul.f32 %v5047, %v5143
    %v5168 = vmul.f32 %v5048, %v5144
    %v5169 = vmul.f32 %v5049, %v5145
    %v5170 = vmul.f32 %v5050, %v5146
    %v5171 = vmul.f32 %v5051, %v5147
    %v5172 = vmul.f32 %v5052, %v5148
    %v5173 = vmul.f32 %v5053, %v5149
    %v5174 = vmul.f32 %v5054, %v5150
    %v5175 = vmul.f32 %v5055, %v5151
    %v5176 = vmul.f32 %v5056, %v5152
    %v5201 = vcombine.low %v5153, %v5154
    %v5203 = vunpack.c.l.s4 1983009808
    %v5204 = vunpack.c.0.s8 %v5203
    %v5205 = vlaneseq
    %v5206 = vshrl.u32 %v5205, 7
    %v5207 = vsub.s32 %v5204, %v5206
    %v5208 = vrot.slane %v5201, %v5207
    %v5210 = vunpack.c.l.s4 1983009808
    %v5211 = vunpack.c.0.s8 %v5210
    %v5212 = vlaneseq
    %v5213 = vshrl.u32 %v5212, 7
    %v5214 = vsub.s32 %v5211, %v5213
    %v5215 = vrot.slane %v5155, %v5214
    %v5216 = vcombine.low %v5208, %v5215
    %v5217 = vcombine.low %v5156, %v5157
    %v5219 = vunpack.c.l.s4 1983009808
    %v5220 = vunpack.c.0.s8 %v5219
    %v5221 = vlaneseq
    %v5222 = vshrl.u32 %v5221, 7
    %v5223 = vsub.s32 %v5220, %v5222
    %v5224 = vrot.slane %v5217, %v5223
    %v5226 = vunpack.c.l.s4 1983009808
    %v5227 = vunpack.c.0.s8 %v5226
    %v5228 = vlaneseq
    %v5229 = vshrl.u32 %v5228, 7
    %v5230 = vsub.s32 %v5227, %v5229
    %v5231 = vrot.slane %v5158, %v5230
    %v5232 = vcombine.low %v5224, %v5231
    %v5233 = vcombine.low %v5159, %v5160
    %v5235 = vunpack.c.l.s4 1983009808
    %v5236 = vunpack.c.0.s8 %v5235
    %v5237 = vlaneseq
    %v5238 = vshrl.u32 %v5237, 7
    %v5239 = vsub.s32 %v5236, %v5238
    %v5240 = vrot.slane %v5233, %v5239
    %v5242 = vunpack.c.l.s4 1983009808
    %v5243 = vunpack.c.0.s8 %v5242
    %v5244 = vlaneseq
    %v5245 = vshrl.u32 %v5244, 7
    %v5246 = vsub.s32 %v5243, %v5245
    %v5247 = vrot.slane %v5161, %v5246
    %v5248 = vcombine.low %v5240, %v5247
    %v5249 = vcombine.low %v5162, %v5163
    %v5251 = vunpack.c.l.s4 1983009808
    %v5252 = vunpack.c.0.s8 %v5251
    %v5253 = vlaneseq
    %v5254 = vshrl.u32 %v5253, 7
    %v5255 = vsub.s32 %v5252, %v5254
    %v5256 = vrot.slane %v5249, %v5255
    %v5258 = vunpack.c.l.s4 1983009808
    %v5259 = vunpack.c.0.s8 %v5258
    %v5260 = vlaneseq
    %v5261 = vshrl.u32 %v5260, 7
    %v5262 = vsub.s32 %v5259, %v5261
    %v5263 = vrot.slane %v5164, %v5262
    %v5264 = vcombine.low %v5256, %v5263
    %v5265 = vcombine.low %v5165, %v5166
    %v5267 = vunpack.c.l.s4 1983009808
    %v5268 = vunpack.c.0.s8 %v5267
    %v5269 = vlaneseq
    %v5270 = vshrl.u32 %v5269, 7
    %v5271 = vsub.s32 %v5268, %v5270
    %v5272 = vrot.slane %v5265, %v5271
    %v5274 = vunpack.c.l.s4 1983009808
    %v5275 = vunpack.c.0.s8 %v5274
    %v5276 = vlaneseq
    %v5277 = vshrl.u32 %v5276, 7
    %v5278 = vsub.s32 %v5275, %v5277
    %v5279 = vrot.slane %v5167, %v5278
    %v5280 = vcombine.low %v5272, %v5279
    %v5281 = vcombine.low %v5168, %v5169
    %v5283 = vunpack.c.l.s4 1983009808
    %v5284 = vunpack.c.0.s8 %v5283
    %v5285 = vlaneseq
    %v5286 = vshrl.u32 %v5285, 7
    %v5287 = vsub.s32 %v5284, %v5286
    %v5288 = vrot.slane %v5281, %v5287
    %v5290 = vunpack.c.l.s4 1983009808
    %v5291 = vunpack.c.0.s8 %v5290
    %v5292 = vlaneseq
    %v5293 = vshrl.u32 %v5292, 7
    %v5294 = vsub.s32 %v5291, %v5293
    %v5295 = vrot.slane %v5170, %v5294
    %v5296 = vcombine.low %v5288, %v5295
    %v5297 = vcombine.low %v5171, %v5172
    %v5299 = vunpack.c.l.s4 1983009808
    %v5300 = vunpack.c.0.s8 %v5299
    %v5301 = vlaneseq
    %v5302 = vshrl.u32 %v5301, 7
    %v5303 = vsub.s32 %v5300, %v5302
    %v5304 = vrot.slane %v5297, %v5303
    %v5306 = vunpack.c.l.s4 1983009808
    %v5307 = vunpack.c.0.s8 %v5306
    %v5308 = vlaneseq
    %v5309 = vshrl.u32 %v5308, 7
    %v5310 = vsub.s32 %v5307, %v5309
    %v5311 = vrot.slane %v5173, %v5310
    %v5312 = vcombine.low %v5304, %v5311
    %v5313 = vcombine.low %v5174, %v5175
    %v5315 = vunpack.c.l.s4 1983009808
    %v5316 = vunpack.c.0.s8 %v5315
    %v5317 = vlaneseq
    %v5318 = vshrl.u32 %v5317, 7
    %v5319 = vsub.s32 %v5316, %v5318
    %v5320 = vrot.slane %v5313, %v5319
    %v5322 = vunpack.c.l.s4 1983009808
    %v5323 = vunpack.c.0.s8 %v5322
    %v5324 = vlaneseq
    %v5325 = vshrl.u32 %v5324, 7
    %v5326 = vsub.s32 %v5323, %v5325
    %v5327 = vrot.slane %v5176, %v5326
    %v5328 = vcombine.low %v5320, %v5327
    %vm5337 = vcmask 46080
    %v5338 = vsel %vm5337, %v5216, 0.0
    %v5339 = vsel %vm5337, %v5232, 0.0
    %v5340 = vadd.f32 %v5338, %v5339
    %v5341 = vsel %vm5337, %v5248, 0.0
    %v5342 = vadd.f32 %v5340, %v5341
    %v5343 = vsel %vm5337, %v5264, 0.0
    %v5344 = vadd.f32 %v5342, %v5343
    %v5345 = vsel %vm5337, %v5280, 0.0
    %v5346 = vadd.f32 %v5344, %v5345
    %v5347 = vsel %vm5337, %v5296, 0.0
    %v5348 = vadd.f32 %v5346, %v5347
    %v5349 = vsel %vm5337, %v5312, 0.0
    %v5350 = vadd.f32 %v5348, %v5349
    %v5351 = vsel %vm5337, %v5328, 0.0
    %v5352 = vadd.f32 %v5350, %v5351
    %5353 = vadd.xlane.f32.xlu0 %v5352
    %v5354 = vpop.xlane.xlu0 %5353
    %v5355 = vrot.slane %v5354, 4
    %v5356 = vadd.f32 %v5354, %v5355
    %v5357 = vrot.slane %v5356, 2
    %v5358 = vadd.f32 %v5356, %v5357
    %v5359 = vrot.slane %v5358, 1
    %v5360 = vadd.f32 %v5358, %v5359
    %s5361 = vtos %v5360
    %v5362 = vstv %s5361
    %5363 = vst [vmem:[#allocation2] sm:$0xff] %v5362
    // Predicated region
    $region22: #{tpu_custom_call.1} parent=1 // pred_check
      _
    $region23: #{tpu_custom_call.1} parent=1 // pred_check_branch
      %5365 = sbr.rel (0) target = $region25
    $region24: #{tpu_custom_call.1} parent=1 // pred_region
      %s5367 = ssub.s32 128, 128
      %5368 = vsyncadd [#allocation3], %s5367
      %s5370 = sshll.u32 [#allocation2], 4
      %s5371 = int_to_ptr.vmem [resolvable:$true] %s5370
      %5373 = dma.vmem_to_hbm [thread:$0]  %s5371, 128, %s5, [#allocation3]
    $region25: #{tpu_custom_call.1} parent=1 // pred_fallthru
      _
    // Predicated region
    $region26: #{tpu_custom_call.1} parent=1 // pred_check
      _
    $region27: #{tpu_custom_call.1} parent=1 // pred_check_branch
      %5375 = sbr.rel (0) target = $region29
    $region28: #{tpu_custom_call.1} parent=1 // pred_region
      %5376 = dma.done [#allocation3], 128
    $region29: #{tpu_custom_call.1} parent=1 // pred_fallthru
      _
    %5377 = vsyncpa [#allocation3], 1

// kernel: tpu_custom_call.1
$region0: #{tpu_custom_call.1}
  #allocation0 [shape = 'u32[]', space=smem, size = 0x4, offset = 0x4, fixed_abs, tag = 'smem constant byte address 0x4 - core index']
  #allocation1 [shape = 'u32[144,128]{1,0:T(1,128)}', space=vmem, size = 0x12000, scoped, tag = 'internal scratch']
  %s0 = inlined_call_operand.vmem [shape: f32[128,16], index: 0, kind: input, shape index: {}]
  %s1 = inlined_call_operand.vmem [shape: f32[128,16], index: 1, kind: input, shape index: {}]
  %s2 = inlined_call_operand.vmem [shape: f32[16,6], index: 2, kind: input, shape index: {}]
  %s3 = inlined_call_operand.vmem [shape: f32[16,6], index: 3, kind: input, shape index: {}]
  %s4 = inlined_call_operand.vmem [shape: f32[1,128], index: 4, kind: input, shape index: {}]
  %s5 = inlined_call_operand.hbm [shape: f32[1,8,128], index: 5, kind: output, shape index: {}]
  %s6 = sld [smem:[#allocation0]]
  $region30: #{tpu_custom_call.1} parent=0
    _
  %s8 = ssub.s32 1, %s6
  %s9 = scalar_select 0, %s8, %s6
  $region1: #{tpu_custom_call.1} parent=0
    #allocation2 [shape = 'u8[4096]{0}', space=vmem, size = 0x1000, scoped, tag = 'output window, operand 0, single buffered']
    #allocation3 [shape = 's32[1]{0}', space=sflag, size = 0x4, scoped, tag = 'scoped memory for tpu_custom_call.1']
    %10 = vsyncpa [#allocation3], 0
    // Predicated region
    $region2: #{tpu_custom_call.1} parent=1 // pred_check
      _
    $region3: #{tpu_custom_call.1} parent=1 // pred_check_branch
      %12 = sbr.rel (0) target = $region5
    $region4: #{tpu_custom_call.1} parent=1 // pred_region
      _
    $region5: #{tpu_custom_call.1} parent=1 // pred_fallthru
      _
    // Predicated region
    $region6: #{tpu_custom_call.1} parent=1 // pred_check
      _
    $region7: #{tpu_custom_call.1} parent=1 // pred_check_branch
      %14 = sbr.rel (0) target = $region9
    $region8: #{tpu_custom_call.1} parent=1 // pred_region
      _
    $region9: #{tpu_custom_call.1} parent=1 // pred_fallthru
      _
    // Predicated region
    $region10: #{tpu_custom_call.1} parent=1 // pred_check
      _
    $region11: #{tpu_custom_call.1} parent=1 // pred_check_branch
      %16 = sbr.rel (0) target = $region13
    $region12: #{tpu_custom_call.1} parent=1 // pred_region
      _
    $region13: #{tpu_custom_call.1} parent=1 // pred_fallthru
      _
    // Predicated region
    $region14: #{tpu_custom_call.1} parent=1 // pred_check
      _
    $region15: #{tpu_custom_call.1} parent=1 // pred_check_branch
      %18 = sbr.rel (0) target = $region17
    $region16: #{tpu_custom_call.1} parent=1 // pred_region
      _
    $region17: #{tpu_custom_call.1} parent=1 // pred_fallthru
      _
    // Predicated region
    $region18: #{tpu_custom_call.1} parent=1 // pred_check
      _
    $region19: #{tpu_custom_call.1} parent=1 // pred_check_branch
      %20 = sbr.rel (0) target = $region21
    $region20: #{tpu_custom_call.1} parent=1 // pred_region
      _
    $region21: #{tpu_custom_call.1} parent=1 // pred_fallthru
      _
    %v21 = vld [vmem:[%s0] sm:$0xff]
    %v22 = vld [vmem:[%s0 + $0x8] sm:$0xff]
    %v23 = vld [vmem:[%s0 + $0x10] sm:$0xff]
    %v24 = vld [vmem:[%s0 + $0x18] sm:$0xff]
    %v25 = vld [vmem:[%s0 + $0x20] sm:$0xff]
    %v26 = vld [vmem:[%s0 + $0x28] sm:$0xff]
    %v27 = vld [vmem:[%s0 + $0x30] sm:$0xff]
    %v28 = vld [vmem:[%s0 + $0x38] sm:$0xff]
    %v29 = vld [vmem:[%s0 + $0x40] sm:$0xff]
    %v30 = vld [vmem:[%s0 + $0x48] sm:$0xff]
    %v31 = vld [vmem:[%s0 + $0x50] sm:$0xff]
    %v32 = vld [vmem:[%s0 + $0x58] sm:$0xff]
    %v33 = vld [vmem:[%s0 + $0x60] sm:$0xff]
    %v34 = vld [vmem:[%s0 + $0x68] sm:$0xff]
    %v35 = vld [vmem:[%s0 + $0x70] sm:$0xff]
    %v36 = vld [vmem:[%s0 + $0x78] sm:$0xff]
    %v37 = vld [vmem:[%s1] sm:$0xff]
    %v38 = vld [vmem:[%s1 + $0x8] sm:$0xff]
    %v39 = vld [vmem:[%s1 + $0x10] sm:$0xff]
    %v40 = vld [vmem:[%s1 + $0x18] sm:$0xff]
    %v41 = vld [vmem:[%s1 + $0x20] sm:$0xff]
    %v42 = vld [vmem:[%s1 + $0x28] sm:$0xff]
    %v43 = vld [vmem:[%s1 + $0x30] sm:$0xff]
    %v44 = vld [vmem:[%s1 + $0x38] sm:$0xff]
    %v45 = vld [vmem:[%s1 + $0x40] sm:$0xff]
    %v46 = vld [vmem:[%s1 + $0x48] sm:$0xff]
    %v47 = vld [vmem:[%s1 + $0x50] sm:$0xff]
    %v48 = vld [vmem:[%s1 + $0x58] sm:$0xff]
    %v49 = vld [vmem:[%s1 + $0x60] sm:$0xff]
    %v50 = vld [vmem:[%s1 + $0x68] sm:$0xff]
    %v51 = vld [vmem:[%s1 + $0x70] sm:$0xff]
    %v52 = vld [vmem:[%s1 + $0x78] sm:$0xff]
    %v53 = vld [vmem:[%s3] sm:$0xff]
    %v54 = vld [vmem:[%s3 + $0x8] sm:$0xff]
    %v55 = vld [vmem:[%s2] sm:$0xff]
    %v56 = vld [vmem:[%s2 + $0x8] sm:$0xff]
    %vm57 = vcmask 130048
    %v59 = vsel %vm57, %v21, 0
    %v62 = vsel %vm57, %v22, 0
    %v65 = vsel %vm57, %v23, 0
    %v68 = vsel %vm57, %v24, 0
    %v71 = vsel %vm57, %v25, 0
    %v74 = vsel %vm57, %v26, 0
    %v77 = vsel %vm57, %v27, 0
    %v80 = vsel %vm57, %v28, 0
    %v83 = vsel %vm57, %v29, 0
    %v86 = vsel %vm57, %v30, 0
    %v89 = vsel %vm57, %v31, 0
    %v92 = vsel %vm57, %v32, 0
    %v95 = vsel %vm57, %v33, 0
    %v98 = vsel %vm57, %v34, 0
    %v101 = vsel %vm57, %v35, 0
    %v104 = vsel %vm57, %v36, 0
    %106 = vmatprep.subr.mxu0 0.0
    %107 = vmatpush1.msra.mxu0 %v53
    %108 = vmatprep.subr.mxu0 0.0
    %109 = vmatpush1.msra.mxu0 %v54
    %110 = vmatprep.subr.mxu0 0.0
    %111 = vmatpush1.msra.mxu0 0.0
    %112 = vmatprep.subr.mxu0 0.0
    %113 = vmatpush1.msra.mxu0 0.0
    %114 = vmatprep.subr.mxu0 0.0
    %115 = vmatpush1.msra.mxu0 0.0
    %116 = vmatprep.subr.mxu0 0.0
    %117 = vmatpush1.msra.mxu0 0.0
    %118 = vmatprep.subr.mxu0 0.0
    %119 = vmatpush1.msra.mxu0 0.0
    %120 = vmatprep.subr.mxu0 0.0
    %121 = vmatpush1.msra.mxu0 0.0
    %122 = vmatprep.subr.mxu0 0.0
    %123 = vmatpush1.msra.mxu0 0.0
    %124 = vmatprep.subr.mxu0 0.0
    %125 = vmatpush1.msra.mxu0 0.0
    %126 = vmatprep.subr.mxu0 0.0
    %127 = vmatpush1.msra.mxu0 0.0
    %128 = vmatprep.subr.mxu0 0.0
    %129 = vmatpush1.msra.mxu0 0.0
    %130 = vmatprep.subr.mxu0 0.0
    %131 = vmatpush1.msra.mxu0 0.0
    %132 = vmatprep.subr.mxu0 0.0
    %133 = vmatpush1.msra.mxu0 0.0
    %134 = vmatprep.subr.mxu0 0.0
    %135 = vmatpush1.msra.mxu0 0.0
    %136 = vmatprep.subr.mxu0 0.0
    %137 = vmatpush1.msra.mxu0 0.0
    %138 = vmatprep.subr.mxu0 0.0
    %139 = vmatpush1.msra.mxu0 0.0
    %140 = vmatprep.subr.mxu0 0.0
    %141 = vmatpush1.msra.mxu0 0.0
    %142 = vmatprep.subr.mxu0 0.0
    %143 = vmatpush1.msra.mxu0 0.0
    %144 = vmatprep.subr.mxu0 0.0
    %145 = vmatpush1.msra.mxu0 0.0
    %146 = vmatprep.subr.mxu0 0.0
    %147 = vmatpush1.msra.mxu0 0.0
    %148 = vmatprep.subr.mxu0 0.0
    %149 = vmatpush1.msra.mxu0 0.0
    %150 = vmatprep.subr.mxu0 0.0
    %151 = vmatpush1.msra.mxu0 0.0
    %152 = vmatprep.subr.mxu0 0.0
    %153 = vmatpush1.msra.mxu0 0.0
    %154 = vmatprep.subr.mxu0 0.0
    %155 = vmatpush1.msra.mxu0 0.0
    %156 = vmatprep.subr.mxu0 0.0
    %157 = vmatpush1.msra.mxu0 0.0
    %158 = vmatprep.subr.mxu0 0.0
    %159 = vmatpush1.msra.mxu0 0.0
    %160 = vmatprep.subr.mxu0 0.0
    %161 = vmatpush1.msra.mxu0 0.0
    %162 = vmatprep.subr.mxu0 0.0
    %163 = vmatpush1.msra.mxu0 0.0
    %164 = vmatprep.subr.mxu0 0.0
    %165 = vmatpush1.msra.mxu0 0.0
    %166 = vmatprep.subr.mxu0 0.0
    %167 = vmatpush1.msra.mxu0 0.0
    %168 = vmatprep.subr.mxu0 0.0
    %169 = vmatpush1.msra.mxu0 0.0
    %170 = vmatprep.mubr.f32.mxu0 0.0
    %171 = vmatmul.mubr.f32.gmra.mrb[0].mxu0 %v59
    %v172 = vpop.f32.mrb[0].mxu0
    %v173 = vadd.f32 0.0, %v172
    %v174 = vpop.f32.mrb[0].mxu0
    %175 = vmatprep.mubr.f32.mxu0 0.0
    %176 = vmatmul.mubr.f32.gmra.mrb[0].mxu0 %v62
    %v177 = vpop.f32.mrb[0].mxu0
    %v178 = vadd.f32 0.0, %v177
    %v179 = vpop.f32.mrb[0].mxu0
    %180 = vmatprep.mubr.f32.mxu0 0.0
    %181 = vmatmul.mubr.f32.gmra.mrb[0].mxu0 %v65
    %v182 = vpop.f32.mrb[0].mxu0
    %v183 = vadd.f32 0.0, %v182
    %v184 = vpop.f32.mrb[0].mxu0
    %185 = vmatprep.mubr.f32.mxu0 0.0
    %186 = vmatmul.mubr.f32.gmra.mrb[0].mxu0 %v68
    %v187 = vpop.f32.mrb[0].mxu0
    %v188 = vadd.f32 0.0, %v187
    %v189 = vpop.f32.mrb[0].mxu0
    %190 = vmatprep.mubr.f32.mxu0 0.0
    %191 = vmatmul.mubr.f32.gmra.mrb[0].mxu0 %v71
    %v192 = vpop.f32.mrb[0].mxu0
    %v193 = vadd.f32 0.0, %v192
    %v194 = vpop.f32.mrb[0].mxu0
    %195 = vmatprep.mubr.f32.mxu0 0.0
    %196 = vmatmul.mubr.f32.gmra.mrb[0].mxu0 %v74
    %v197 = vpop.f32.mrb[0].mxu0
    %v198 = vadd.f32 0.0, %v197
    %v199 = vpop.f32.mrb[0].mxu0
    %200 = vmatprep.mubr.f32.mxu0 0.0
    %201 = vmatmul.mubr.f32.gmra.mrb[0].mxu0 %v77
    %v202 = vpop.f32.mrb[0].mxu0
    %v203 = vadd.f32 0.0, %v202
    %v204 = vpop.f32.mrb[0].mxu0
    %205 = vmatprep.mubr.f32.mxu0 0.0
    %206 = vmatmul.mubr.f32.gmra.mrb[0].mxu0 %v80
    %v207 = vpop.f32.mrb[0].mxu0
    %v208 = vadd.f32 0.0, %v207
    %v209 = vpop.f32.mrb[0].mxu0
    %210 = vmatprep.mubr.f32.mxu0 0.0
    %211 = vmatmul.mubr.f32.gmra.mrb[0].mxu0 %v83
    %v212 = vpop.f32.mrb[0].mxu0
    %v213 = vadd.f32 0.0, %v212
    %v214 = vpop.f32.mrb[0].mxu0
    %215 = vmatprep.mubr.f32.mxu0 0.0
    %216 = vmatmul.mubr.f32.gmra.mrb[0].mxu0 %v86
    %v217 = vpop.f32.mrb[0].mxu0
    %v218 = vadd.f32 0.0, %v217
    %v219 = vpop.f32.mrb[0].mxu0
    %220 = vmatprep.mubr.f32.mxu0 0.0
    %221 = vmatmul.mubr.f32.gmra.mrb[0].mxu0 %v89
    %v222 = vpop.f32.mrb[0].mxu0
    %v223 = vadd.f32 0.0, %v222
    %v224 = vpop.f32.mrb[0].mxu0
    %225 = vmatprep.mubr.f32.mxu0 0.0
    %226 = vmatmul.mubr.f32.gmra.mrb[0].mxu0 %v92
    %v227 = vpop.f32.mrb[0].mxu0
    %v228 = vadd.f32 0.0, %v227
    %v229 = vpop.f32.mrb[0].mxu0
    %230 = vmatprep.mubr.f32.mxu0 0.0
    %231 = vmatmul.mubr.f32.gmra.mrb[0].mxu0 %v95
    %v232 = vpop.f32.mrb[0].mxu0
    %v233 = vadd.f32 0.0, %v232
    %v234 = vpop.f32.mrb[0].mxu0
    %235 = vmatprep.mubr.f32.mxu0 0.0
    %236 = vmatmul.mubr.f32.gmra.mrb[0].mxu0 %v98
    %v237 = vpop.f32.mrb[0].mxu0
    %v238 = vadd.f32 0.0, %v237
    %v239 = vpop.f32.mrb[0].mxu0
    %240 = vmatprep.mubr.f32.mxu0 0.0
    %241 = vmatmul.mubr.f32.gmra.mrb[0].mxu0 %v101
    %v242 = vpop.f32.mrb[0].mxu0
    %v243 = vadd.f32 0.0, %v242
    %v244 = vpop.f32.mrb[0].mxu0
    %245 = vmatprep.mubr.f32.mxu0 0.0
    %246 = vmatmul.mubr.f32.gmra.mrb[0].mxu0 %v104
    %v247 = vpop.f32.mrb[0].mxu0
    %v248 = vadd.f32 0.0, %v247
    %v249 = vpop.f32.mrb[0].mxu0
    %250 = vdwg.mxu0
    %251 = vxpose.xlu0.b32.start [1/16] %v173, 128
    %252 = vxpose.xlu0.b32.cont [2/16] %v178, 128
    %253 = vxpose.xlu0.b32.cont [3/16] 0.0, 128
    %254 = vxpose.xlu0.b32.cont [4/16] 0.0, 128
    %255 = vxpose.xlu0.b32.cont [5/16] 0.0, 128
    %256 = vxpose.xlu0.b32.cont [6/16] 0.0, 128
    %257 = vxpose.xlu0.b32.cont [7/16] 0.0, 128
    %258 = vxpose.xlu0.b32.cont [8/16] 0.0, 128
    %259 = vxpose.xlu0.b32.cont [9/16] 0.0, 128
    %260 = vxpose.xlu0.b32.cont [10/16] 0.0, 128
    %261 = vxpose.xlu0.b32.cont [11/16] 0.0, 128
    %262 = vxpose.xlu0.b32.cont [12/16] 0.0, 128
    %263 = vxpose.xlu0.b32.cont [13/16] 0.0, 128
    %264 = vxpose.xlu0.b32.cont [14/16] 0.0, 128
    %265 = vxpose.xlu0.b32.cont [15/16] 0.0, 128
    %266 = vxpose.xlu0.b32.end [16/16] 0.0, 128
    %v267 = vpop.trf.xlu0
    %v268 = vpop.trf.xlu0
    %v269 = vpop.trf.xlu0
    %v270 = vpop.trf.xlu0
    %v271 = vpop.trf.xlu0
    %v272 = vpop.trf.xlu0
    %v273 = vpop.trf.xlu0
    %v274 = vpop.trf.xlu0
    %v275 = vpop.trf.xlu0
    %v276 = vpop.trf.xlu0
    %v277 = vpop.trf.xlu0
    %v278 = vpop.trf.xlu0
    %v279 = vpop.trf.xlu0
    %v280 = vpop.trf.xlu0
    %v281 = vpop.trf.xlu0
    %v282 = vpop.trf.xlu0
    %283 = vxpose.xlu0.b32.start [1/16] %v183, 128
    %284 = vxpose.xlu0.b32.cont [2/16] %v188, 128
    %285 = vxpose.xlu0.b32.cont [3/16] 0.0, 128
    %286 = vxpose.xlu0.b32.cont [4/16] 0.0, 128
    %287 = vxpose.xlu0.b32.cont [5/16] 0.0, 128
    %288 = vxpose.xlu0.b32.cont [6/16] 0.0, 128
    %289 = vxpose.xlu0.b32.cont [7/16] 0.0, 128
    %290 = vxpose.xlu0.b32.cont [8/16] 0.0, 128
    %291 = vxpose.xlu0.b32.cont [9/16] 0.0, 128
    %292 = vxpose.xlu0.b32.cont [10/16] 0.0, 128
    %293 = vxpose.xlu0.b32.cont [11/16] 0.0, 128
    %294 = vxpose.xlu0.b32.cont [12/16] 0.0, 128
    %295 = vxpose.xlu0.b32.cont [13/16] 0.0, 128
    %296 = vxpose.xlu0.b32.cont [14/16] 0.0, 128
    %297 = vxpose.xlu0.b32.cont [15/16] 0.0, 128
    %298 = vxpose.xlu0.b32.end [16/16] 0.0, 128
    %v299 = vpop.trf.xlu0
    %v300 = vpop.trf.xlu0
    %v301 = vpop.trf.xlu0
    %v302 = vpop.trf.xlu0
    %v303 = vpop.trf.xlu0
    %v304 = vpop.trf.xlu0
    %v305 = vpop.trf.xlu0
    %v306 = vpop.trf.xlu0
    %v307 = vpop.trf.xlu0
    %v308 = vpop.trf.xlu0
    %v309 = vpop.trf.xlu0
    %v310 = vpop.trf.xlu0
    %v311 = vpop.trf.xlu0
    %v312 = vpop.trf.xlu0
    %v313 = vpop.trf.xlu0
    %v314 = vpop.trf.xlu0
    %315 = vxpose.xlu0.b32.start [1/16] %v193, 128
    %316 = vxpose.xlu0.b32.cont [2/16] %v198, 128
    %317 = vxpose.xlu0.b32.cont [3/16] 0.0, 128
    %318 = vxpose.xlu0.b32.cont [4/16] 0.0, 128
    %319 = vxpose.xlu0.b32.cont [5/16] 0.0, 128
    %320 = vxpose.xlu0.b32.cont [6/16] 0.0, 128
    %321 = vxpose.xlu0.b32.cont [7/16] 0.0, 128
    %322 = vxpose.xlu0.b32.cont [8/16] 0.0, 128
    %323 = vxpose.xlu0.b32.cont [9/16] 0.0, 128
    %324 = vxpose.xlu0.b32.cont [10/16] 0.0, 128
    %325 = vxpose.xlu0.b32.cont [11/16] 0.0, 128
    %326 = vxpose.xlu0.b32.cont [12/16] 0.0, 128
    %327 = vxpose.xlu0.b32.cont [13/16] 0.0, 128
    %328 = vxpose.xlu0.b32.cont [14/16] 0.0, 128
    %329 = vxpose.xlu0.b32.cont [15/16] 0.0, 128
    %330 = vxpose.xlu0.b32.end [16/16] 0.0, 128
    %v331 = vpop.trf.xlu0
    %v332 = vpop.trf.xlu0
    %v333 = vpop.trf.xlu0
    %v334 = vpop.trf.xlu0
    %v335 = vpop.trf.xlu0
    %v336 = vpop.trf.xlu0
    %v337 = vpop.trf.xlu0
    %v338 = vpop.trf.xlu0
    %v339 = vpop.trf.xlu0
    %v340 = vpop.trf.xlu0
    %v341 = vpop.trf.xlu0
    %v342 = vpop.trf.xlu0
    %v343 = vpop.trf.xlu0
    %v344 = vpop.trf.xlu0
    %v345 = vpop.trf.xlu0
    %v346 = vpop.trf.xlu0
    %347 = vxpose.xlu0.b32.start [1/16] %v203, 128
    %348 = vxpose.xlu0.b32.cont [2/16] %v208, 128
    %349 = vxpose.xlu0.b32.cont [3/16] 0.0, 128
    %350 = vxpose.xlu0.b32.cont [4/16] 0.0, 128
    %351 = vxpose.xlu0.b32.cont [5/16] 0.0, 128
    %352 = vxpose.xlu0.b32.cont [6/16] 0.0, 128
    %353 = vxpose.xlu0.b32.cont [7/16] 0.0, 128
    %354 = vxpose.xlu0.b32.cont [8/16] 0.0, 128
    %355 = vxpose.xlu0.b32.cont [9/16] 0.0, 128
    %356 = vxpose.xlu0.b32.cont [10/16] 0.0, 128
    %357 = vxpose.xlu0.b32.cont [11/16] 0.0, 128
    %358 = vxpose.xlu0.b32.cont [12/16] 0.0, 128
    %359 = vxpose.xlu0.b32.cont [13/16] 0.0, 128
    %360 = vxpose.xlu0.b32.cont [14/16] 0.0, 128
    %361 = vxpose.xlu0.b32.cont [15/16] 0.0, 128
    %362 = vxpose.xlu0.b32.end [16/16] 0.0, 128
    %v363 = vpop.trf.xlu0
    %v364 = vpop.trf.xlu0
    %v365 = vpop.trf.xlu0
    %v366 = vpop.trf.xlu0
    %v367 = vpop.trf.xlu0
    %v368 = vpop.trf.xlu0
    %v369 = vpop.trf.xlu0
    %v370 = vpop.trf.xlu0
    %v371 = vpop.trf.xlu0
    %v372 = vpop.trf.xlu0
    %v373 = vpop.trf.xlu0
    %v374 = vpop.trf.xlu0
    %v375 = vpop.trf.xlu0
    %v376 = vpop.trf.xlu0
    %v377 = vpop.trf.xlu0
    %v378 = vpop.trf.xlu0
    %379 = vxpose.xlu0.b32.start [1/16] %v213, 128
    %380 = vxpose.xlu0.b32.cont [2/16] %v218, 128
    %381 = vxpose.xlu0.b32.cont [3/16] 0.0, 128
    %382 = vxpose.xlu0.b32.cont [4/16] 0.0, 128
    %383 = vxpose.xlu0.b32.cont [5/16] 0.0, 128
    %384 = vxpose.xlu0.b32.cont [6/16] 0.0, 128
    %385 = vxpose.xlu0.b32.cont [7/16] 0.0, 128
    %386 = vxpose.xlu0.b32.cont [8/16] 0.0, 128
    %387 = vxpose.xlu0.b32.cont [9/16] 0.0, 128
    %388 = vxpose.xlu0.b32.cont [10/16] 0.0, 128
    %389 = vxpose.xlu0.b32.cont [11/16] 0.0, 128
    %390 = vxpose.xlu0.b32.cont [12/16] 0.0, 128
    %391 = vxpose.xlu0.b32.cont [13/16] 0.0, 128
    %392 = vxpose.xlu0.b32.cont [14/16] 0.0, 128
    %393 = vxpose.xlu0.b32.cont [15/16] 0.0, 128
    %394 = vxpose.xlu0.b32.end [16/16] 0.0, 128
    %v395 = vpop.trf.xlu0
    %v396 = vpop.trf.xlu0
    %v397 = vpop.trf.xlu0
    %v398 = vpop.trf.xlu0
    %v399 = vpop.trf.xlu0
    %v400 = vpop.trf.xlu0
    %v401 = vpop.trf.xlu0
    %v402 = vpop.trf.xlu0
    %v403 = vpop.trf.xlu0
    %v404 = vpop.trf.xlu0
    %v405 = vpop.trf.xlu0
    %v406 = vpop.trf.xlu0
    %v407 = vpop.trf.xlu0
    %v408 = vpop.trf.xlu0
    %v409 = vpop.trf.xlu0
    %v410 = vpop.trf.xlu0
    %411 = vxpose.xlu0.b32.start [1/16] %v223, 128
    %412 = vxpose.xlu0.b32.cont [2/16] %v228, 128
    %413 = vxpose.xlu0.b32.cont [3/16] 0.0, 128
    %414 = vxpose.xlu0.b32.cont [4/16] 0.0, 128
    %415 = vxpose.xlu0.b32.cont [5/16] 0.0, 128
    %416 = vxpose.xlu0.b32.cont [6/16] 0.0, 128
    %417 = vxpose.xlu0.b32.cont [7/16] 0.0, 128
    %418 = vxpose.xlu0.b32.cont [8/16] 0.0, 128
    %419 = vxpose.xlu0.b32.cont [9/16] 0.0, 128
    %420 = vxpose.xlu0.b32.cont [10/16] 0.0, 128
    %421 = vxpose.xlu0.b32.cont [11/16] 0.0, 128
    %422 = vxpose.xlu0.b32.cont [12/16] 0.0, 128
    %423 = vxpose.xlu0.b32.cont [13/16] 0.0, 128
    %424 = vxpose.xlu0.b32.cont [14/16] 0.0, 128
    %425 = vxpose.xlu0.b32.cont [15/16] 0.0, 128
    %426 = vxpose.xlu0.b32.end [16/16] 0.0, 128
    %v427 = vpop.trf.xlu0
    %v428 = vpop.trf.xlu0
    %v429 = vpop.trf.xlu0
    %v430 = vpop.trf.xlu0
    %v431 = vpop.trf.xlu0
    %v432 = vpop.trf.xlu0
    %v433 = vpop.trf.xlu0
    %v434 = vpop.trf.xlu0
    %v435 = vpop.trf.xlu0
    %v436 = vpop.trf.xlu0
    %v437 = vpop.trf.xlu0
    %v438 = vpop.trf.xlu0
    %v439 = vpop.trf.xlu0
    %v440 = vpop.trf.xlu0
    %v441 = vpop.trf.xlu0
    %v442 = vpop.trf.xlu0
    %443 = vxpose.xlu0.b32.start [1/16] %v233, 128
    %444 = vxpose.xlu0.b32.cont [2/16] %v238, 128
    %445 = vxpose.xlu0.b32.cont [3/16] 0.0, 128
    %446 = vxpose.xlu0.b32.cont [4/16] 0.0, 128
    %447 = vxpose.xlu0.b32.cont [5/16] 0.0, 128
    %448 = vxpose.xlu0.b32.cont [6/16] 0.0, 128
    %449 = vxpose.xlu0.b32.cont [7/16] 0.0, 128
    %450 = vxpose.xlu0.b32.cont [8/16] 0.0, 128
    %451 = vxpose.xlu0.b32.cont [9/16] 0.0, 128
    %452 = vxpose.xlu0.b32.cont [10/16] 0.0, 128
    %453 = vxpose.xlu0.b32.cont [11/16] 0.0, 128
    %454 = vxpose.xlu0.b32.cont [12/16] 0.0, 128
    %455 = vxpose.xlu0.b32.cont [13/16] 0.0, 128
    %456 = vxpose.xlu0.b32.cont [14/16] 0.0, 128
    %457 = vxpose.xlu0.b32.cont [15/16] 0.0, 128
    %458 = vxpose.xlu0.b32.end [16/16] 0.0, 128
    %v459 = vpop.trf.xlu0
    %v460 = vpop.trf.xlu0
    %v461 = vpop.trf.xlu0
    %v462 = vpop.trf.xlu0
    %v463 = vpop.trf.xlu0
    %v464 = vpop.trf.xlu0
    %v465 = vpop.trf.xlu0
    %v466 = vpop.trf.xlu0
    %v467 = vpop.trf.xlu0
    %v468 = vpop.trf.xlu0
    %v469 = vpop.trf.xlu0
    %v470 = vpop.trf.xlu0
    %v471 = vpop.trf.xlu0
    %v472 = vpop.trf.xlu0
    %v473 = vpop.trf.xlu0
    %v474 = vpop.trf.xlu0
    %475 = vxpose.xlu0.b32.start [1/16] %v243, 128
    %476 = vxpose.xlu0.b32.cont [2/16] %v248, 128
    %477 = vxpose.xlu0.b32.cont [3/16] 0.0, 128
    %478 = vxpose.xlu0.b32.cont [4/16] 0.0, 128
    %479 = vxpose.xlu0.b32.cont [5/16] 0.0, 128
    %480 = vxpose.xlu0.b32.cont [6/16] 0.0, 128
    %481 = vxpose.xlu0.b32.cont [7/16] 0.0, 128
    %482 = vxpose.xlu0.b32.cont [8/16] 0.0, 128
    %483 = vxpose.xlu0.b32.cont [9/16] 0.0, 128
    %484 = vxpose.xlu0.b32.cont [10/16] 0.0, 128
    %485 = vxpose.xlu0.b32.cont [11/16] 0.0, 128
    %486 = vxpose.xlu0.b32.cont [12/16] 0.0, 128
    %487 = vxpose.xlu0.b32.cont [13/16] 0.0, 128
    %488 = vxpose.xlu0.b32.cont [14/16] 0.0, 128
    %489 = vxpose.xlu0.b32.cont [15/16] 0.0, 128
    %490 = vxpose.xlu0.b32.end [16/16] 0.0, 128
    %v491 = vpop.trf.xlu0
    %v492 = vpop.trf.xlu0
    %v493 = vpop.trf.xlu0
    %v494 = vpop.trf.xlu0
    %v495 = vpop.trf.xlu0
    %v496 = vpop.trf.xlu0
    %v497 = vpop.trf.xlu0
    %v498 = vpop.trf.xlu0
    %v499 = vpop.trf.xlu0
    %v500 = vpop.trf.xlu0
    %v501 = vpop.trf.xlu0
    %v502 = vpop.trf.xlu0
    %v503 = vpop.trf.xlu0
    %v504 = vpop.trf.xlu0
    %v505 = vpop.trf.xlu0
    %v506 = vpop.trf.xlu0
    %v515 = vcombine.high %v267, %v267
    %v517 = vunpack.c.l.s4 1983009808
    %v518 = vunpack.c.0.s8 %v517
    %v519 = vlaneseq
    %v520 = vshrl.u32 %v519, 7
    %v521 = vsub.s32 %v518, %v520
    %v522 = vrot.slane %v267, %v521
    %v524 = vunpack.c.l.s4 1983009808
    %v525 = vunpack.c.0.s8 %v524
    %v526 = vlaneseq
    %v527 = vshrl.u32 %v526, 7
    %v528 = vsub.s32 %v525, %v527
    %v529 = vrot.slane %v515, %v528
    %v530 = vcombine.high %v522, %v522
    %v531 = vcombine.high %v299, %v299
    %v533 = vunpack.c.l.s4 1983009808
    %v534 = vunpack.c.0.s8 %v533
    %v535 = vlaneseq
    %v536 = vshrl.u32 %v535, 7
    %v537 = vsub.s32 %v534, %v536
    %v538 = vrot.slane %v299, %v537
    %v540 = vunpack.c.l.s4 1983009808
    %v541 = vunpack.c.0.s8 %v540
    %v542 = vlaneseq
    %v543 = vshrl.u32 %v542, 7
    %v544 = vsub.s32 %v541, %v543
    %v545 = vrot.slane %v531, %v544
    %v546 = vcombine.high %v538, %v538
    %v547 = vcombine.high %v331, %v331
    %v549 = vunpack.c.l.s4 1983009808
    %v550 = vunpack.c.0.s8 %v549
    %v551 = vlaneseq
    %v552 = vshrl.u32 %v551, 7
    %v553 = vsub.s32 %v550, %v552
    %v554 = vrot.slane %v331, %v553
    %v556 = vunpack.c.l.s4 1983009808
    %v557 = vunpack.c.0.s8 %v556
    %v558 = vlaneseq
    %v559 = vshrl.u32 %v558, 7
    %v560 = vsub.s32 %v557, %v559
    %v561 = vrot.slane %v547, %v560
    %v562 = vcombine.high %v554, %v554
    %v563 = vcombine.high %v363, %v363
    %v565 = vunpack.c.l.s4 1983009808
    %v566 = vunpack.c.0.s8 %v565
    %v567 = vlaneseq
    %v568 = vshrl.u32 %v567, 7
    %v569 = vsub.s32 %v566, %v568
    %v570 = vrot.slane %v363, %v569
    %v572 = vunpack.c.l.s4 1983009808
    %v573 = vunpack.c.0.s8 %v572
    %v574 = vlaneseq
    %v575 = vshrl.u32 %v574, 7
    %v576 = vsub.s32 %v573, %v575
    %v577 = vrot.slane %v563, %v576
    %v578 = vcombine.high %v570, %v570
    %v579 = vcombine.high %v395, %v395
    %v581 = vunpack.c.l.s4 1983009808
    %v582 = vunpack.c.0.s8 %v581
    %v583 = vlaneseq
    %v584 = vshrl.u32 %v583, 7
    %v585 = vsub.s32 %v582, %v584
    %v586 = vrot.slane %v395, %v585
    %v588 = vunpack.c.l.s4 1983009808
    %v589 = vunpack.c.0.s8 %v588
    %v590 = vlaneseq
    %v591 = vshrl.u32 %v590, 7
    %v592 = vsub.s32 %v589, %v591
    %v593 = vrot.slane %v579, %v592
    %v594 = vcombine.high %v586, %v586
    %v595 = vcombine.high %v427, %v427
    %v597 = vunpack.c.l.s4 1983009808
    %v598 = vunpack.c.0.s8 %v597
    %v599 = vlaneseq
    %v600 = vshrl.u32 %v599, 7
    %v601 = vsub.s32 %v598, %v600
    %v602 = vrot.slane %v427, %v601
    %v604 = vunpack.c.l.s4 1983009808
    %v605 = vunpack.c.0.s8 %v604
    %v606 = vlaneseq
    %v607 = vshrl.u32 %v606, 7
    %v608 = vsub.s32 %v605, %v607
    %v609 = vrot.slane %v595, %v608
    %v610 = vcombine.high %v602, %v602
    %v611 = vcombine.high %v459, %v459
    %v613 = vunpack.c.l.s4 1983009808
    %v614 = vunpack.c.0.s8 %v613
    %v615 = vlaneseq
    %v616 = vshrl.u32 %v615, 7
    %v617 = vsub.s32 %v614, %v616
    %v618 = vrot.slane %v459, %v617
    %v620 = vunpack.c.l.s4 1983009808
    %v621 = vunpack.c.0.s8 %v620
    %v622 = vlaneseq
    %v623 = vshrl.u32 %v622, 7
    %v624 = vsub.s32 %v621, %v623
    %v625 = vrot.slane %v611, %v624
    %v626 = vcombine.high %v618, %v618
    %v627 = vcombine.high %v491, %v491
    %v629 = vunpack.c.l.s4 1983009808
    %v630 = vunpack.c.0.s8 %v629
    %v631 = vlaneseq
    %v632 = vshrl.u32 %v631, 7
    %v633 = vsub.s32 %v630, %v632
    %v634 = vrot.slane %v491, %v633
    %v636 = vunpack.c.l.s4 1983009808
    %v637 = vunpack.c.0.s8 %v636
    %v638 = vlaneseq
    %v639 = vshrl.u32 %v638, 7
    %v640 = vsub.s32 %v637, %v639
    %v641 = vrot.slane %v627, %v640
    %v642 = vcombine.high %v634, %v634
    %v643 = vcombine.low %v522, %v530
    %v644 = vcombine.low %v529, %v538
    %v646 = vunpack.c.l.s4 1983009808
    %v647 = vunpack.c.0.s8 %v646
    %v648 = vlaneseq
    %v649 = vshrl.u32 %v648, 7
    %v650 = vsub.s32 %v647, %v649
    %v651 = vrot.slane %v643, %v650
    %v653 = vunpack.c.l.s4 1983009808
    %v654 = vunpack.c.0.s8 %v653
    %v655 = vlaneseq
    %v656 = vshrl.u32 %v655, 7
    %v657 = vsub.s32 %v654, %v656
    %v658 = vrot.slane %v644, %v657
    %v659 = vcombine.low %v651, %v658
    %v660 = vcombine.low %v546, %v545
    %v661 = vcombine.low %v554, %v562
    %v663 = vunpack.c.l.s4 1983009808
    %v664 = vunpack.c.0.s8 %v663
    %v665 = vlaneseq
    %v666 = vshrl.u32 %v665, 7
    %v667 = vsub.s32 %v664, %v666
    %v668 = vrot.slane %v660, %v667
    %v670 = vunpack.c.l.s4 1983009808
    %v671 = vunpack.c.0.s8 %v670
    %v672 = vlaneseq
    %v673 = vshrl.u32 %v672, 7
    %v674 = vsub.s32 %v671, %v673
    %v675 = vrot.slane %v661, %v674
    %v676 = vcombine.low %v668, %v675
    %v677 = vcombine.low %v561, %v570
    %v678 = vcombine.low %v578, %v577
    %v680 = vunpack.c.l.s4 1983009808
    %v681 = vunpack.c.0.s8 %v680
    %v682 = vlaneseq
    %v683 = vshrl.u32 %v682, 7
    %v684 = vsub.s32 %v681, %v683
    %v685 = vrot.slane %v677, %v684
    %v687 = vunpack.c.l.s4 1983009808
    %v688 = vunpack.c.0.s8 %v687
    %v689 = vlaneseq
    %v690 = vshrl.u32 %v689, 7
    %v691 = vsub.s32 %v688, %v690
    %v692 = vrot.slane %v678, %v691
    %v693 = vcombine.low %v685, %v692
    %v694 = vcombine.low %v586, %v594
    %v695 = vcombine.low %v593, %v602
    %v697 = vunpack.c.l.s4 1983009808
    %v698 = vunpack.c.0.s8 %v697
    %v699 = vlaneseq
    %v700 = vshrl.u32 %v699, 7
    %v701 = vsub.s32 %v698, %v700
    %v702 = vrot.slane %v694, %v701
    %v704 = vunpack.c.l.s4 1983009808
    %v705 = vunpack.c.0.s8 %v704
    %v706 = vlaneseq
    %v707 = vshrl.u32 %v706, 7
    %v708 = vsub.s32 %v705, %v707
    %v709 = vrot.slane %v695, %v708
    %v710 = vcombine.low %v702, %v709
    %v711 = vcombine.low %v610, %v609
    %v712 = vcombine.low %v618, %v626
    %v714 = vunpack.c.l.s4 1983009808
    %v715 = vunpack.c.0.s8 %v714
    %v716 = vlaneseq
    %v717 = vshrl.u32 %v716, 7
    %v718 = vsub.s32 %v715, %v717
    %v719 = vrot.slane %v711, %v718
    %v721 = vunpack.c.l.s4 1983009808
    %v722 = vunpack.c.0.s8 %v721
    %v723 = vlaneseq
    %v724 = vshrl.u32 %v723, 7
    %v725 = vsub.s32 %v722, %v724
    %v726 = vrot.slane %v712, %v725
    %v727 = vcombine.low %v719, %v726
    %v728 = vcombine.low %v625, %v634
    %v729 = vcombine.low %v642, %v641
    %v731 = vunpack.c.l.s4 1983009808
    %v732 = vunpack.c.0.s8 %v731
    %v733 = vlaneseq
    %v734 = vshrl.u32 %v733, 7
    %v735 = vsub.s32 %v732, %v734
    %v736 = vrot.slane %v728, %v735
    %v738 = vunpack.c.l.s4 1983009808
    %v739 = vunpack.c.0.s8 %v738
    %v740 = vlaneseq
    %v741 = vshrl.u32 %v740, 7
    %v742 = vsub.s32 %v739, %v741
    %v743 = vrot.slane %v729, %v742
    %v744 = vcombine.low %v736, %v743
    %v745 = vsel %vm57, %v659, 0
    %v747 = vsel %vm57, %v676, 0
    %v749 = vsel %vm57, %v693, 0
    %v751 = vsel %vm57, %v710, 0
    %v753 = vsel %vm57, %v727, 0
    %v755 = vsel %vm57, %v744, 0
    %757 = vmatprep.subr.mxu0 0.0
    %758 = vmatpush1.msra.mxu0 %v55
    %759 = vmatprep.subr.mxu0 0.0
    %760 = vmatpush1.msra.mxu0 %v56
    %761 = vmatprep.subr.mxu0 0.0
    %762 = vmatpush1.msra.mxu0 0.0
    %763 = vmatprep.subr.mxu0 0.0
    %764 = vmatpush1.msra.mxu0 0.0
    %765 = vmatprep.subr.mxu0 0.0
    %766 = vmatpush1.msra.mxu0 0.0
    %767 = vmatprep.subr.mxu0 0.0
    %768 = vmatpush1.msra.mxu0 0.0
    %769 = vmatprep.subr.mxu0 0.0
    %770 = vmatpush1.msra.mxu0 0.0
    %771 = vmatprep.subr.mxu0 0.0
    %772 = vmatpush1.msra.mxu0 0.0
    %773 = vmatprep.subr.mxu0 0.0
    %774 = vmatpush1.msra.mxu0 0.0
    %775 = vmatprep.subr.mxu0 0.0
    %776 = vmatpush1.msra.mxu0 0.0
    %777 = vmatprep.subr.mxu0 0.0
    %778 = vmatpush1.msra.mxu0 0.0
    %779 = vmatprep.subr.mxu0 0.0
    %780 = vmatpush1.msra.mxu0 0.0
    %781 = vmatprep.subr.mxu0 0.0
    %782 = vmatpush1.msra.mxu0 0.0
    %783 = vmatprep.subr.mxu0 0.0
    %784 = vmatpush1.msra.mxu0 0.0
    %785 = vmatprep.subr.mxu0 0.0
    %786 = vmatpush1.msra.mxu0 0.0
    %787 = vmatprep.subr.mxu0 0.0
    %788 = vmatpush1.msra.mxu0 0.0
    %789 = vmatprep.subr.mxu0 0.0
    %790 = vmatpush1.msra.mxu0 0.0
    %791 = vmatprep.subr.mxu0 0.0
    %792 = vmatpush1.msra.mxu0 0.0
    %793 = vmatprep.subr.mxu0 0.0
    %794 = vmatpush1.msra.mxu0 0.0
    %795 = vmatprep.subr.mxu0 0.0
    %796 = vmatpush1.msra.mxu0 0.0
    %797 = vmatprep.subr.mxu0 0.0
    %798 = vmatpush1.msra.mxu0 0.0
    %799 = vmatprep.subr.mxu0 0.0
    %800 = vmatpush1.msra.mxu0 0.0
    %801 = vmatprep.subr.mxu0 0.0
    %802 = vmatpush1.msra.mxu0 0.0
    %803 = vmatprep.subr.mxu0 0.0
    %804 = vmatpush1.msra.mxu0 0.0
    %805 = vmatprep.subr.mxu0 0.0
    %806 = vmatpush1.msra.mxu0 0.0
    %807 = vmatprep.subr.mxu0 0.0
    %808 = vmatpush1.msra.mxu0 0.0
    %809 = vmatprep.subr.mxu0 0.0
    %810 = vmatpush1.msra.mxu0 0.0
    %811 = vmatprep.subr.mxu0 0.0
    %812 = vmatpush1.msra.mxu0 0.0
    %813 = vmatprep.subr.mxu0 0.0
    %814 = vmatpush1.msra.mxu0 0.0
    %815 = vmatprep.subr.mxu0 0.0
    %816 = vmatpush1.msra.mxu0 0.0
    %817 = vmatprep.subr.mxu0 0.0
    %818 = vmatpush1.msra.mxu0 0.0
    %819 = vmatprep.subr.mxu0 0.0
    %820 = vmatpush1.msra.mxu0 0.0
    %821 = vmatprep.mubr.f32.mxu0 0.0
    %822 = vmatmul.mubr.f32.gmra.mrb[0].mxu0 %v745
    %v823 = vpop.f32.mrb[0].mxu0
    %v824 = vadd.f32 0.0, %v823
    %v825 = vpop.f32.mrb[0].mxu0
    %826 = vmatprep.mubr.f32.mxu0 0.0
    %827 = vmatmul.mubr.f32.gmra.mrb[0].mxu0 %v747
    %v828 = vpop.f32.mrb[0].mxu0
    %v829 = vadd.f32 0.0, %v828
    %v830 = vpop.f32.mrb[0].mxu0
    %831 = vmatprep.mubr.f32.mxu0 0.0
    %832 = vmatmul.mubr.f32.gmra.mrb[0].mxu0 %v749
    %v833 = vpop.f32.mrb[0].mxu0
    %v834 = vadd.f32 0.0, %v833
    %v835 = vpop.f32.mrb[0].mxu0
    %836 = vmatprep.mubr.f32.mxu0 0.0
    %837 = vmatmul.mubr.f32.gmra.mrb[0].mxu0 %v751
    %v838 = vpop.f32.mrb[0].mxu0
    %v839 = vadd.f32 0.0, %v838
    %v840 = vpop.f32.mrb[0].mxu0
    %841 = vmatprep.mubr.f32.mxu0 0.0
    %842 = vmatmul.mubr.f32.gmra.mrb[0].mxu0 %v753
    %v843 = vpop.f32.mrb[0].mxu0
    %v844 = vadd.f32 0.0, %v843
    %v845 = vpop.f32.mrb[0].mxu0
    %846 = vmatprep.mubr.f32.mxu0 0.0
    %847 = vmatmul.mubr.f32.gmra.mrb[0].mxu0 %v755
    %v848 = vpop.f32.mrb[0].mxu0
    %v849 = vadd.f32 0.0, %v848
    %v850 = vpop.f32.mrb[0].mxu0
    %851 = vdwg.mxu0
    %v858 = vcombine.high %v824, %v824
    %v860 = vunpack.c.l.s4 1983009808
    %v861 = vunpack.c.0.s8 %v860
    %v862 = vlaneseq
    %v863 = vshrl.u32 %v862, 7
    %v864 = vsub.s32 %v861, %v863
    %v865 = vrot.slane %v824, %v864
    %v867 = vunpack.c.l.s4 1983009808
    %v868 = vunpack.c.0.s8 %v867
    %v869 = vlaneseq
    %v870 = vshrl.u32 %v869, 7
    %v871 = vsub.s32 %v868, %v870
    %v872 = vrot.slane %v858, %v871
    %v873 = vcombine.high %v865, %v865
    %v874 = vcombine.high %v872, %v872
    %v875 = vcombine.high %v829, %v829
    %v877 = vunpack.c.l.s4 1983009808
    %v878 = vunpack.c.0.s8 %v877
    %v879 = vlaneseq
    %v880 = vshrl.u32 %v879, 7
    %v881 = vsub.s32 %v878, %v880
    %v882 = vrot.slane %v829, %v881
    %v884 = vunpack.c.l.s4 1983009808
    %v885 = vunpack.c.0.s8 %v884
    %v886 = vlaneseq
    %v887 = vshrl.u32 %v886, 7
    %v888 = vsub.s32 %v885, %v887
    %v889 = vrot.slane %v875, %v888
    %v890 = vcombine.high %v882, %v882
    %v891 = vcombine.high %v889, %v889
    %v892 = vcombine.high %v834, %v834
    %v894 = vunpack.c.l.s4 1983009808
    %v895 = vunpack.c.0.s8 %v894
    %v896 = vlaneseq
    %v897 = vshrl.u32 %v896, 7
    %v898 = vsub.s32 %v895, %v897
    %v899 = vrot.slane %v834, %v898
    %v901 = vunpack.c.l.s4 1983009808
    %v902 = vunpack.c.0.s8 %v901
    %v903 = vlaneseq
    %v904 = vshrl.u32 %v903, 7
    %v905 = vsub.s32 %v902, %v904
    %v906 = vrot.slane %v892, %v905
    %v907 = vcombine.high %v899, %v899
    %v908 = vcombine.high %v906, %v906
    %v909 = vcombine.high %v839, %v839
    %v911 = vunpack.c.l.s4 1983009808
    %v912 = vunpack.c.0.s8 %v911
    %v913 = vlaneseq
    %v914 = vshrl.u32 %v913, 7
    %v915 = vsub.s32 %v912, %v914
    %v916 = vrot.slane %v839, %v915
    %v918 = vunpack.c.l.s4 1983009808
    %v919 = vunpack.c.0.s8 %v918
    %v920 = vlaneseq
    %v921 = vshrl.u32 %v920, 7
    %v922 = vsub.s32 %v919, %v921
    %v923 = vrot.slane %v909, %v922
    %v924 = vcombine.high %v916, %v916
    %v925 = vcombine.high %v923, %v923
    %v926 = vcombine.high %v844, %v844
    %v928 = vunpack.c.l.s4 1983009808
    %v929 = vunpack.c.0.s8 %v928
    %v930 = vlaneseq
    %v931 = vshrl.u32 %v930, 7
    %v932 = vsub.s32 %v929, %v931
    %v933 = vrot.slane %v844, %v932
    %v935 = vunpack.c.l.s4 1983009808
    %v936 = vunpack.c.0.s8 %v935
    %v937 = vlaneseq
    %v938 = vshrl.u32 %v937, 7
    %v939 = vsub.s32 %v936, %v938
    %v940 = vrot.slane %v926, %v939
    %v941 = vcombine.high %v933, %v933
    %v942 = vcombine.high %v940, %v940
    %v943 = vcombine.high %v849, %v849
    %v945 = vunpack.c.l.s4 1983009808
    %v946 = vunpack.c.0.s8 %v945
    %v947 = vlaneseq
    %v948 = vshrl.u32 %v947, 7
    %v949 = vsub.s32 %v946, %v948
    %v950 = vrot.slane %v849, %v949
    %v952 = vunpack.c.l.s4 1983009808
    %v953 = vunpack.c.0.s8 %v952
    %v954 = vlaneseq
    %v955 = vshrl.u32 %v954, 7
    %v956 = vsub.s32 %v953, %v955
    %v957 = vrot.slane %v943, %v956
    %v958 = vcombine.high %v950, %v950
    %v959 = vcombine.high %v957, %v957
    %v985 = vsel %vm57, %v37, 0
    %v988 = vsel %vm57, %v38, 0
    %v991 = vsel %vm57, %v39, 0
    %v994 = vsel %vm57, %v40, 0
    %v997 = vsel %vm57, %v41, 0
    %v1000 = vsel %vm57, %v42, 0
    %v1003 = vsel %vm57, %v43, 0
    %v1006 = vsel %vm57, %v44, 0
    %v1009 = vsel %vm57, %v45, 0
    %v1012 = vsel %vm57, %v46, 0
    %v1015 = vsel %vm57, %v47, 0
    %v1018 = vsel %vm57, %v48, 0
    %v1021 = vsel %vm57, %v49, 0
    %v1024 = vsel %vm57, %v50, 0
    %v1027 = vsel %vm57, %v51, 0
    %v1030 = vsel %vm57, %v52, 0
    %1032 = vmatprep.subr.mxu0 0.0
    %1033 = vmatpush1.msra.mxu0 %v53
    %1034 = vmatprep.subr.mxu0 0.0
    %1035 = vmatpush1.msra.mxu0 %v54
    %1036 = vmatprep.subr.mxu0 0.0
    %1037 = vmatpush1.msra.mxu0 0.0
    %1038 = vmatprep.subr.mxu0 0.0
    %1039 = vmatpush1.msra.mxu0 0.0
    %1040 = vmatprep.subr.mxu0 0.0
    %1041 = vmatpush1.msra.mxu0 0.0
    %1042 = vmatprep.subr.mxu0 0.0
    %1043 = vmatpush1.msra.mxu0 0.0
    %1044 = vmatprep.subr.mxu0 0.0
    %1045 = vmatpush1.msra.mxu0 0.0
    %1046 = vmatprep.subr.mxu0 0.0
    %1047 = vmatpush1.msra.mxu0 0.0
    %1048 = vmatprep.subr.mxu0 0.0
    %1049 = vmatpush1.msra.mxu0 0.0
    %1050 = vmatprep.subr.mxu0 0.0
    %1051 = vmatpush1.msra.mxu0 0.0
    %1052 = vmatprep.subr.mxu0 0.0
    %1053 = vmatpush1.msra.mxu0 0.0
    %1054 = vmatprep.subr.mxu0 0.0
    %1055 = vmatpush1.msra.mxu0 0.0
    %1056 = vmatprep.subr.mxu0 0.0
    %1057 = vmatpush1.msra.mxu0 0.0
    %1058 = vmatprep.subr.mxu0 0.0
    %1059 = vmatpush1.msra.mxu0 0.0
    %1060 = vmatprep.subr.mxu0 0.0
    %1061 = vmatpush1.msra.mxu0 0.0
    %1062 = vmatprep.subr.mxu0 0.0
    %1063 = vmatpush1.msra.mxu0 0.0
    %1064 = vmatprep.subr.mxu0 0.0
    %1065 = vmatpush1.msra.mxu0 0.0
    %1066 = vmatprep.subr.mxu0 0.0
    %1067 = vmatpush1.msra.mxu0 0.0
    %1068 = vmatprep.subr.mxu0 0.0
    %1069 = vmatpush1.msra.mxu0 0.0
    %1070 = vmatprep.subr.mxu0 0.0
    %1071 = vmatpush1.msra.mxu0 0.0
    %1072 = vmatprep.subr.mxu0 0.0
    %1073 = vmatpush1.msra.mxu0 0.0
    %1074 = vmatprep.subr.mxu0 0.0
    %1075 = vmatpush1.msra.mxu0 0.0
    %1076 = vmatprep.subr.mxu0 0.0
    %1077 = vmatpush1.msra.mxu0 0.0
    %1078 = vmatprep.subr.mxu0 0.0
    %1079 = vmatpush1.msra.mxu0 0.0
    %1080 = vmatprep.subr.mxu0 0.0
    %1081 = vmatpush1.msra.mxu0 0.0
    %1082 = vmatprep.subr.mxu0 0.0
    %1083 = vmatpush1.msra.mxu0 0.0
    %1084 = vmatprep.subr.mxu0 0.0
    %1085 = vmatpush1.msra.mxu0 0.0
    %1086 = vmatprep.subr.mxu0 0.0
    %1087 = vmatpush1.msra.mxu0 0.0
    %1088 = vmatprep.subr.mxu0 0.0
    %1089 = vmatpush1.msra.mxu0 0.0
    %1090 = vmatprep.subr.mxu0 0.0
    %1091 = vmatpush1.msra.mxu0 0.0
    %1092 = vmatprep.subr.mxu0 0.0
    %1093 = vmatpush1.msra.mxu0 0.0
    %1094 = vmatprep.subr.mxu0 0.0
    %1095 = vmatpush1.msra.mxu0 0.0
    %1096 = vmatprep.mubr.f32.mxu0 0.0
    %1097 = vmatmul.mubr.f32.gmra.mrb[0].mxu0 %v985
    %v1098 = vpop.f32.mrb[0].mxu0
    %v1099 = vadd.f32 0.0, %v1098
    %v1100 = vpop.f32.mrb[0].mxu0
    %1101 = vmatprep.mubr.f32.mxu0 0.0
    %1102 = vmatmul.mubr.f32.gmra.mrb[0].mxu0 %v988
    %v1103 = vpop.f32.mrb[0].mxu0
    %v1104 = vadd.f32 0.0, %v1103
    %v1105 = vpop.f32.mrb[0].mxu0
    %1106 = vmatprep.mubr.f32.mxu0 0.0
    %1107 = vmatmul.mubr.f32.gmra.mrb[0].mxu0 %v991
    %v1108 = vpop.f32.mrb[0].mxu0
    %v1109 = vadd.f32 0.0, %v1108
    %v1110 = vpop.f32.mrb[0].mxu0
    %1111 = vmatprep.mubr.f32.mxu0 0.0
    %1112 = vmatmul.mubr.f32.gmra.mrb[0].mxu0 %v994
    %v1113 = vpop.f32.mrb[0].mxu0
    %v1114 = vadd.f32 0.0, %v1113
    %v1115 = vpop.f32.mrb[0].mxu0
    %1116 = vmatprep.mubr.f32.mxu0 0.0
    %1117 = vmatmul.mubr.f32.gmra.mrb[0].mxu0 %v997
    %v1118 = vpop.f32.mrb[0].mxu0
    %v1119 = vadd.f32 0.0, %v1118
    %v1120 = vpop.f32.mrb[0].mxu0
    %1121 = vmatprep.mubr.f32.mxu0 0.0
    %1122 = vmatmul.mubr.f32.gmra.mrb[0].mxu0 %v1000
    %v1123 = vpop.f32.mrb[0].mxu0
    %v1124 = vadd.f32 0.0, %v1123
    %v1125 = vpop.f32.mrb[0].mxu0
    %1126 = vmatprep.mubr.f32.mxu0 0.0
    %1127 = vmatmul.mubr.f32.gmra.mrb[0].mxu0 %v1003
    %v1128 = vpop.f32.mrb[0].mxu0
    %v1129 = vadd.f32 0.0, %v1128
    %v1130 = vpop.f32.mrb[0].mxu0
    %1131 = vmatprep.mubr.f32.mxu0 0.0
    %1132 = vmatmul.mubr.f32.gmra.mrb[0].mxu0 %v1006
    %v1133 = vpop.f32.mrb[0].mxu0
    %v1134 = vadd.f32 0.0, %v1133
    %v1135 = vpop.f32.mrb[0].mxu0
    %1136 = vmatprep.mubr.f32.mxu0 0.0
    %1137 = vmatmul.mubr.f32.gmra.mrb[0].mxu0 %v1009
    %v1138 = vpop.f32.mrb[0].mxu0
    %v1139 = vadd.f32 0.0, %v1138
    %v1140 = vpop.f32.mrb[0].mxu0
    %1141 = vmatprep.mubr.f32.mxu0 0.0
    %1142 = vmatmul.mubr.f32.gmra.mrb[0].mxu0 %v1012
    %v1143 = vpop.f32.mrb[0].mxu0
    %v1144 = vadd.f32 0.0, %v1143
    %v1145 = vpop.f32.mrb[0].mxu0
    %1146 = vmatprep.mubr.f32.mxu0 0.0
    %1147 = vmatmul.mubr.f32.gmra.mrb[0].mxu0 %v1015
    %v1148 = vpop.f32.mrb[0].mxu0
    %v1149 = vadd.f32 0.0, %v1148
    %v1150 = vpop.f32.mrb[0].mxu0
    %1151 = vmatprep.mubr.f32.mxu0 0.0
    %1152 = vmatmul.mubr.f32.gmra.mrb[0].mxu0 %v1018
    %v1153 = vpop.f32.mrb[0].mxu0
    %v1154 = vadd.f32 0.0, %v1153
    %v1155 = vpop.f32.mrb[0].mxu0
    %1156 = vmatprep.mubr.f32.mxu0 0.0
    %1157 = vmatmul.mubr.f32.gmra.mrb[0].mxu0 %v1021
    %v1158 = vpop.f32.mrb[0].mxu0
    %v1159 = vadd.f32 0.0, %v1158
    %v1160 = vpop.f32.mrb[0].mxu0
    %1161 = vmatprep.mubr.f32.mxu0 0.0
    %1162 = vmatmul.mubr.f32.gmra.mrb[0].mxu0 %v1024
    %v1163 = vpop.f32.mrb[0].mxu0
    %v1164 = vadd.f32 0.0, %v1163
    %v1165 = vpop.f32.mrb[0].mxu0
    %1166 = vmatprep.mubr.f32.mxu0 0.0
    %1167 = vmatmul.mubr.f32.gmra.mrb[0].mxu0 %v1027
    %v1168 = vpop.f32.mrb[0].mxu0
    %v1169 = vadd.f32 0.0, %v1168
    %v1170 = vpop.f32.mrb[0].mxu0
    %1171 = vmatprep.mubr.f32.mxu0 0.0
    %1172 = vmatmul.mubr.f32.gmra.mrb[0].mxu0 %v1030
    %v1173 = vpop.f32.mrb[0].mxu0
    %v1174 = vadd.f32 0.0, %v1173
    %v1175 = vpop.f32.mrb[0].mxu0
    %1176 = vdwg.mxu0
    %1177 = vxpose.xlu0.b32.start [1/16] %v1099, 128
    %1178 = vxpose.xlu0.b32.cont [2/16] %v1104, 128
    %1179 = vxpose.xlu0.b32.cont [3/16] 0.0, 128
    %1180 = vxpose.xlu0.b32.cont [4/16] 0.0, 128
    %1181 = vxpose.xlu0.b32.cont [5/16] 0.0, 128
    %1182 = vxpose.xlu0.b32.cont [6/16] 0.0, 128
    %1183 = vxpose.xlu0.b32.cont [7/16] 0.0, 128
    %1184 = vxpose.xlu0.b32.cont [8/16] 0.0, 128
    %1185 = vxpose.xlu0.b32.cont [9/16] 0.0, 128
    %1186 = vxpose.xlu0.b32.cont [10/16] 0.0, 128
    %1187 = vxpose.xlu0.b32.cont [11/16] 0.0, 128
    %1188 = vxpose.xlu0.b32.cont [12/16] 0.0, 128
    %1189 = vxpose.xlu0.b32.cont [13/16] 0.0, 128
    %1190 = vxpose.xlu0.b32.cont [14/16] 0.0, 128
    %1191 = vxpose.xlu0.b32.cont [15/16] 0.0, 128
    %1192 = vxpose.xlu0.b32.end [16/16] 0.0, 128
    %v1193 = vpop.trf.xlu0
    %v1194 = vpop.trf.xlu0
    %v1195 = vpop.trf.xlu0
    %v1196 = vpop.trf.xlu0
    %v1197 = vpop.trf.xlu0
    %v1198 = vpop.trf.xlu0
    %v1199 = vpop.trf.xlu0
    %v1200 = vpop.trf.xlu0
    %v1201 = vpop.trf.xlu0
    %v1202 = vpop.trf.xlu0
    %v1203 = vpop.trf.xlu0
    %v1204 = vpop.trf.xlu0
    %v1205 = vpop.trf.xlu0
    %v1206 = vpop.trf.xlu0
    %v1207 = vpop.trf.xlu0
    %v1208 = vpop.trf.xlu0
    %1209 = vxpose.xlu0.b32.start [1/16] %v1109, 128
    %1210 = vxpose.xlu0.b32.cont [2/16] %v1114, 128
    %1211 = vxpose.xlu0.b32.cont [3/16] 0.0, 128
    %1212 = vxpose.xlu0.b32.cont [4/16] 0.0, 128
    %1213 = vxpose.xlu0.b32.cont [5/16] 0.0, 128
    %1214 = vxpose.xlu0.b32.cont [6/16] 0.0, 128
    %1215 = vxpose.xlu0.b32.cont [7/16] 0.0, 128
    %1216 = vxpose.xlu0.b32.cont [8/16] 0.0, 128
    %1217 = vxpose.xlu0.b32.cont [9/16] 0.0, 128
    %1218 = vxpose.xlu0.b32.cont [10/16] 0.0, 128
    %1219 = vxpose.xlu0.b32.cont [11/16] 0.0, 128
    %1220 = vxpose.xlu0.b32.cont [12/16] 0.0, 128
    %1221 = vxpose.xlu0.b32.cont [13/16] 0.0, 128
    %1222 = vxpose.xlu0.b32.cont [14/16] 0.0, 128
    %1223 = vxpose.xlu0.b32.cont [15/16] 0.0, 128
    %1224 = vxpose.xlu0.b32.end [16/16] 0.0, 128
    %v1225 = vpop.trf.xlu0
    %v1226 = vpop.trf.xlu0
    %v1227 = vpop.trf.xlu0
    %v1228 = vpop.trf.xlu0
    %v1229 = vpop.trf.xlu0
    %v1230 = vpop.trf.xlu0
    %v1231 = vpop.trf.xlu0
    %v1232 = vpop.trf.xlu0
    %v1233 = vpop.trf.xlu0
    %v1234 = vpop.trf.xlu0
    %v1235 = vpop.trf.xlu0
    %v1236 = vpop.trf.xlu0
    %v1237 = vpop.trf.xlu0
    %v1238 = vpop.trf.xlu0
    %v1239 = vpop.trf.xlu0
    %v1240 = vpop.trf.xlu0
    %1241 = vxpose.xlu0.b32.start [1/16] %v1119, 128
    %1242 = vxpose.xlu0.b32.cont [2/16] %v1124, 128
    %1243 = vxpose.xlu0.b32.cont [3/16] 0.0, 128
    %1244 = vxpose.xlu0.b32.cont [4/16] 0.0, 128
    %1245 = vxpose.xlu0.b32.cont [5/16] 0.0, 128
    %1246 = vxpose.xlu0.b32.cont [6/16] 0.0, 128
    %1247 = vxpose.xlu0.b32.cont [7/16] 0.0, 128
    %1248 = vxpose.xlu0.b32.cont [8/16] 0.0, 128
    %1249 = vxpose.xlu0.b32.cont [9/16] 0.0, 128
    %1250 = vxpose.xlu0.b32.cont [10/16] 0.0, 128
    %1251 = vxpose.xlu0.b32.cont [11/16] 0.0, 128
    %1252 = vxpose.xlu0.b32.cont [12/16] 0.0, 128
    %1253 = vxpose.xlu0.b32.cont [13/16] 0.0, 128
    %1254 = vxpose.xlu0.b32.cont [14/16] 0.0, 128
    %1255 = vxpose.xlu0.b32.cont [15/16] 0.0, 128
    %1256 = vxpose.xlu0.b32.end [16/16] 0.0, 128
    %v1257 = vpop.trf.xlu0
    %v1258 = vpop.trf.xlu0
    %v1259 = vpop.trf.xlu0
    %v1260 = vpop.trf.xlu0
    %v1261 = vpop.trf.xlu0
    %v1262 = vpop.trf.xlu0
    %v1263 = vpop.trf.xlu0
    %v1264 = vpop.trf.xlu0
    %v1265 = vpop.trf.xlu0
    %v1266 = vpop.trf.xlu0
    %v1267 = vpop.trf.xlu0
    %v1268 = vpop.trf.xlu0
    %v1269 = vpop.trf.xlu0
    %v1270 = vpop.trf.xlu0
    %v1271 = vpop.trf.xlu0
    %v1272 = vpop.trf.xlu0
    %1273 = vxpose.xlu0.b32.start [1/16] %v1129, 128
    %1274 = vxpose.xlu0.b32.cont [2/16] %v1134, 128
    %1275 = vxpose.xlu0.b32.cont [3/16] 0.0, 128
    %1276 = vxpose.xlu0.b32.cont [4/16] 0.0, 128
    %1277 = vxpose.xlu0.b32.cont [5/16] 0.0, 128
    %1278 = vxpose.xlu0.b32.cont [6/16] 0.0, 128
    %1279 = vxpose.xlu0.b32.cont [7/16] 0.0, 128
    %1280 = vxpose.xlu0.b32.cont [8/16] 0.0, 128
    %1281 = vxpose.xlu0.b32.cont [9/16] 0.0, 128
    %1282 = vxpose.xlu0.b32.cont [10/16] 0.0, 128
    %1283 = vxpose.xlu0.b32.cont [11/16] 0.0, 128
    %1284 = vxpose.xlu0.b32.cont [12/16] 0.0, 128
    %1285 = vxpose.xlu0.b32.cont [13/16] 0.0, 128
    %1286 = vxpose.xlu0.b32.cont [14/16] 0.0, 128
    %1287 = vxpose.xlu0.b32.cont [15/16] 0.0, 128
    %1288 = vxpose.xlu0.b32.end [16/16] 0.0, 128
    %v1289 = vpop.trf.xlu0
    %v1290 = vpop.trf.xlu0
    %v1291 = vpop.trf.xlu0
    %v1292 = vpop.trf.xlu0
    %v1293 = vpop.trf.xlu0
    %v1294 = vpop.trf.xlu0
    %v1295 = vpop.trf.xlu0
    %v1296 = vpop.trf.xlu0
    %v1297 = vpop.trf.xlu0
    %v1298 = vpop.trf.xlu0
    %v1299 = vpop.trf.xlu0
    %v1300 = vpop.trf.xlu0
    %v1301 = vpop.trf.xlu0
    %v1302 = vpop.trf.xlu0
    %v1303 = vpop.trf.xlu0
    %v1304 = vpop.trf.xlu0
    %1305 = vxpose.xlu0.b32.start [1/16] %v1139, 128
    %1306 = vxpose.xlu0.b32.cont [2/16] %v1144, 128
    %1307 = vxpose.xlu0.b32.cont [3/16] 0.0, 128
    %1308 = vxpose.xlu0.b32.cont [4/16] 0.0, 128
    %1309 = vxpose.xlu0.b32.cont [5/16] 0.0, 128
    %1310 = vxpose.xlu0.b32.cont [6/16] 0.0, 128
    %1311 = vxpose.xlu0.b32.cont [7/16] 0.0, 128
    %1312 = vxpose.xlu0.b32.cont [8/16] 0.0, 128
    %1313 = vxpose.xlu0.b32.cont [9/16] 0.0, 128
    %1314 = vxpose.xlu0.b32.cont [10/16] 0.0, 128
    %1315 = vxpose.xlu0.b32.cont [11/16] 0.0, 128
    %1316 = vxpose.xlu0.b32.cont [12/16] 0.0, 128
    %1317 = vxpose.xlu0.b32.cont [13/16] 0.0, 128
    %1318 = vxpose.xlu0.b32.cont [14/16] 0.0, 128
    %1319 = vxpose.xlu0.b32.cont [15/16] 0.0, 128
    %1320 = vxpose.xlu0.b32.end [16/16] 0.0, 128
    %v1321 = vpop.trf.xlu0
    %v1322 = vpop.trf.xlu0
    %v1323 = vpop.trf.xlu0
    %v1324 = vpop.trf.xlu0
    %v1325 = vpop.trf.xlu0
    %v1326 = vpop.trf.xlu0
    %v1327 = vpop.trf.xlu0
    %v1328 = vpop.trf.xlu0
    %v1329 = vpop.trf.xlu0
    %v1330 = vpop.trf.xlu0
    %v1331 = vpop.trf.xlu0
    %v1332 = vpop.trf.xlu0
    %v1333 = vpop.trf.xlu0
    %v1334 = vpop.trf.xlu0
    %v1335 = vpop.trf.xlu0
    %v1336 = vpop.trf.xlu0
    %1337 = vxpose.xlu0.b32.start [1/16] %v1149, 128
    %1338 = vxpose.xlu0.b32.cont [2/16] %v1154, 128
    %1339 = vxpose.xlu0.b32.cont [3/16] 0.0, 128
    %1340 = vxpose.xlu0.b32.cont [4/16] 0.0, 128
    %1341 = vxpose.xlu0.b32.cont [5/16] 0.0, 128
    %1342 = vxpose.xlu0.b32.cont [6/16] 0.0, 128
    %1343 = vxpose.xlu0.b32.cont [7/16] 0.0, 128
    %1344 = vxpose.xlu0.b32.cont [8/16] 0.0, 128
    %1345 = vxpose.xlu0.b32.cont [9/16] 0.0, 128
    %1346 = vxpose.xlu0.b32.cont [10/16] 0.0, 128
    %1347 = vxpose.xlu0.b32.cont [11/16] 0.0, 128
    %1348 = vxpose.xlu0.b32.cont [12/16] 0.0, 128
    %1349 = vxpose.xlu0.b32.cont [13/16] 0.0, 128
    %1350 = vxpose.xlu0.b32.cont [14/16] 0.0, 128
    %1351 = vxpose.xlu0.b32.cont [15/16] 0.0, 128
    %1352 = vxpose.xlu0.b32.end [16/16] 0.0, 128
    %v1353 = vpop.trf.xlu0
    %v1354 = vpop.trf.xlu0
    %v1355 = vpop.trf.xlu0
    %v1356 = vpop.trf.xlu0
    %v1357 = vpop.trf.xlu0
    %v1358 = vpop.trf.xlu0
    %v1359 = vpop.trf.xlu0
    %v1360 = vpop.trf.xlu0
    %v1361 = vpop.trf.xlu0
    %v1362 = vpop.trf.xlu0
    %v1363 = vpop.trf.xlu0
    %v1364 = vpop.trf.xlu0
    %v1365 = vpop.trf.xlu0
    %v1366 = vpop.trf.xlu0
    %v1367 = vpop.trf.xlu0
    %v1368 = vpop.trf.xlu0
    %1369 = vxpose.xlu0.b32.start [1/16] %v1159, 128
    %1370 = vxpose.xlu0.b32.cont [2/16] %v1164, 128
    %1371 = vxpose.xlu0.b32.cont [3/16] 0.0, 128
    %1372 = vxpose.xlu0.b32.cont [4/16] 0.0, 128
    %1373 = vxpose.xlu0.b32.cont [5/16] 0.0, 128
    %1374 = vxpose.xlu0.b32.cont [6/16] 0.0, 128
    %1375 = vxpose.xlu0.b32.cont [7/16] 0.0, 128
    %1376 = vxpose.xlu0.b32.cont [8/16] 0.0, 128
    %1377 = vxpose.xlu0.b32.cont [9/16] 0.0, 128
    %1378 = vxpose.xlu0.b32.cont [10/16] 0.0, 128
    %1379 = vxpose.xlu0.b32.cont [11/16] 0.0, 128
    %1380 = vxpose.xlu0.b32.cont [12/16] 0.0, 128
    %1381 = vxpose.xlu0.b32.cont [13/16] 0.0, 128
    %1382 = vxpose.xlu0.b32.cont [14/16] 0.0, 128
    %1383 = vxpose.xlu0.b32.cont [15/16] 0.0, 128
    %1384 = vxpose.xlu0.b32.end [16/16] 0.0, 128
    %v1385 = vpop.trf.xlu0
    %v1386 = vpop.trf.xlu0
    %v1387 = vpop.trf.xlu0
    %v1388 = vpop.trf.xlu0
    %v1389 = vpop.trf.xlu0
    %v1390 = vpop.trf.xlu0
    %v1391 = vpop.trf.xlu0
    %v1392 = vpop.trf.xlu0
    %v1393 = vpop.trf.xlu0
    %v1394 = vpop.trf.xlu0
    %v1395 = vpop.trf.xlu0
    %v1396 = vpop.trf.xlu0
    %v1397 = vpop.trf.xlu0
    %v1398 = vpop.trf.xlu0
    %v1399 = vpop.trf.xlu0
    %v1400 = vpop.trf.xlu0
    %1401 = vxpose.xlu0.b32.start [1/16] %v1169, 128
    %1402 = vxpose.xlu0.b32.cont [2/16] %v1174, 128
    %1403 = vxpose.xlu0.b32.cont [3/16] 0.0, 128
    %1404 = vxpose.xlu0.b32.cont [4/16] 0.0, 128
    %1405 = vxpose.xlu0.b32.cont [5/16] 0.0, 128
    %1406 = vxpose.xlu0.b32.cont [6/16] 0.0, 128
    %1407 = vxpose.xlu0.b32.cont [7/16] 0.0, 128
    %1408 = vxpose.xlu0.b32.cont [8/16] 0.0, 128
    %1409 = vxpose.xlu0.b32.cont [9/16] 0.0, 128
    %1410 = vxpose.xlu0.b32.cont [10/16] 0.0, 128
    %1411 = vxpose.xlu0.b32.cont [11/16] 0.0, 128
    %1412 = vxpose.xlu0.b32.cont [12/16] 0.0, 128
    %1413 = vxpose.xlu0.b32.cont [13/16] 0.0, 128
    %1414 = vxpose.xlu0.b32.cont [14/16] 0.0, 128
    %1415 = vxpose.xlu0.b32.cont [15/16] 0.0, 128
    %1416 = vxpose.xlu0.b32.end [16/16] 0.0, 128
    %v1417 = vpop.trf.xlu0
    %v1418 = vpop.trf.xlu0
    %v1419 = vpop.trf.xlu0
    %v1420 = vpop.trf.xlu0
    %v1421 = vpop.trf.xlu0
    %v1422 = vpop.trf.xlu0
    %v1423 = vpop.trf.xlu0
    %v1424 = vpop.trf.xlu0
    %v1425 = vpop.trf.xlu0
    %v1426 = vpop.trf.xlu0
    %v1427 = vpop.trf.xlu0
    %v1428 = vpop.trf.xlu0
    %v1429 = vpop.trf.xlu0
    %v1430 = vpop.trf.xlu0
    %v1431 = vpop.trf.xlu0
    %v1432 = vpop.trf.xlu0
    %v1441 = vcombine.high %v1193, %v1193
    %v1443 = vunpack.c.l.s4 1983009808
    %v1444 = vunpack.c.0.s8 %v1443
    %v1445 = vlaneseq
    %v1446 = vshrl.u32 %v1445, 7
    %v1447 = vsub.s32 %v1444, %v1446
    %v1448 = vrot.slane %v1193, %v1447
    %v1450 = vunpack.c.l.s4 1983009808
    %v1451 = vunpack.c.0.s8 %v1450
    %v1452 = vlaneseq
    %v1453 = vshrl.u32 %v1452, 7
    %v1454 = vsub.s32 %v1451, %v1453
    %v1455 = vrot.slane %v1441, %v1454
    %v1456 = vcombine.high %v1448, %v1448
    %v1457 = vcombine.high %v1225, %v1225
    %v1459 = vunpack.c.l.s4 1983009808
    %v1460 = vunpack.c.0.s8 %v1459
    %v1461 = vlaneseq
    %v1462 = vshrl.u32 %v1461, 7
    %v1463 = vsub.s32 %v1460, %v1462
    %v1464 = vrot.slane %v1225, %v1463
    %v1466 = vunpack.c.l.s4 1983009808
    %v1467 = vunpack.c.0.s8 %v1466
    %v1468 = vlaneseq
    %v1469 = vshrl.u32 %v1468, 7
    %v1470 = vsub.s32 %v1467, %v1469
    %v1471 = vrot.slane %v1457, %v1470
    %v1472 = vcombine.high %v1464, %v1464
    %v1473 = vcombine.high %v1257, %v1257
    %v1475 = vunpack.c.l.s4 1983009808
    %v1476 = vunpack.c.0.s8 %v1475
    %v1477 = vlaneseq
    %v1478 = vshrl.u32 %v1477, 7
    %v1479 = vsub.s32 %v1476, %v1478
    %v1480 = vrot.slane %v1257, %v1479
    %v1482 = vunpack.c.l.s4 1983009808
    %v1483 = vunpack.c.0.s8 %v1482
    %v1484 = vlaneseq
    %v1485 = vshrl.u32 %v1484, 7
    %v1486 = vsub.s32 %v1483, %v1485
    %v1487 = vrot.slane %v1473, %v1486
    %v1488 = vcombine.high %v1480, %v1480
    %v1489 = vcombine.high %v1289, %v1289
    %v1491 = vunpack.c.l.s4 1983009808
    %v1492 = vunpack.c.0.s8 %v1491
    %v1493 = vlaneseq
    %v1494 = vshrl.u32 %v1493, 7
    %v1495 = vsub.s32 %v1492, %v1494
    %v1496 = vrot.slane %v1289, %v1495
    %v1498 = vunpack.c.l.s4 1983009808
    %v1499 = vunpack.c.0.s8 %v1498
    %v1500 = vlaneseq
    %v1501 = vshrl.u32 %v1500, 7
    %v1502 = vsub.s32 %v1499, %v1501
    %v1503 = vrot.slane %v1489, %v1502
    %v1504 = vcombine.high %v1496, %v1496
    %v1505 = vcombine.high %v1321, %v1321
    %v1507 = vunpack.c.l.s4 1983009808
    %v1508 = vunpack.c.0.s8 %v1507
    %v1509 = vlaneseq
    %v1510 = vshrl.u32 %v1509, 7
    %v1511 = vsub.s32 %v1508, %v1510
    %v1512 = vrot.slane %v1321, %v1511
    %v1514 = vunpack.c.l.s4 1983009808
    %v1515 = vunpack.c.0.s8 %v1514
    %v1516 = vlaneseq
    %v1517 = vshrl.u32 %v1516, 7
    %v1518 = vsub.s32 %v1515, %v1517
    %v1519 = vrot.slane %v1505, %v1518
    %v1520 = vcombine.high %v1512, %v1512
    %v1521 = vcombine.high %v1353, %v1353
    %v1523 = vunpack.c.l.s4 1983009808
    %v1524 = vunpack.c.0.s8 %v1523
    %v1525 = vlaneseq
    %v1526 = vshrl.u32 %v1525, 7
    %v1527 = vsub.s32 %v1524, %v1526
    %v1528 = vrot.slane %v1353, %v1527
    %v1530 = vunpack.c.l.s4 1983009808
    %v1531 = vunpack.c.0.s8 %v1530
    %v1532 = vlaneseq
    %v1533 = vshrl.u32 %v1532, 7
    %v1534 = vsub.s32 %v1531, %v1533
    %v1535 = vrot.slane %v1521, %v1534
    %v1536 = vcombine.high %v1528, %v1528
    %v1537 = vcombine.high %v1385, %v1385
    %v1539 = vunpack.c.l.s4 1983009808
    %v1540 = vunpack.c.0.s8 %v1539
    %v1541 = vlaneseq
    %v1542 = vshrl.u32 %v1541, 7
    %v1543 = vsub.s32 %v1540, %v1542
    %v1544 = vrot.slane %v1385, %v1543
    %v1546 = vunpack.c.l.s4 1983009808
    %v1547 = vunpack.c.0.s8 %v1546
    %v1548 = vlaneseq
    %v1549 = vshrl.u32 %v1548, 7
    %v1550 = vsub.s32 %v1547, %v1549
    %v1551 = vrot.slane %v1537, %v1550
    %v1552 = vcombine.high %v1544, %v1544
    %v1553 = vcombine.high %v1417, %v1417
    %v1555 = vunpack.c.l.s4 1983009808
    %v1556 = vunpack.c.0.s8 %v1555
    %v1557 = vlaneseq
    %v1558 = vshrl.u32 %v1557, 7
    %v1559 = vsub.s32 %v1556, %v1558
    %v1560 = vrot.slane %v1417, %v1559
    %v1562 = vunpack.c.l.s4 1983009808
    %v1563 = vunpack.c.0.s8 %v1562
    %v1564 = vlaneseq
    %v1565 = vshrl.u32 %v1564, 7
    %v1566 = vsub.s32 %v1563, %v1565
    %v1567 = vrot.slane %v1553, %v1566
    %v1568 = vcombine.high %v1560, %v1560
    %v1569 = vcombine.low %v1448, %v1456
    %v1570 = vcombine.low %v1455, %v1464
    %v1572 = vunpack.c.l.s4 1983009808
    %v1573 = vunpack.c.0.s8 %v1572
    %v1574 = vlaneseq
    %v1575 = vshrl.u32 %v1574, 7
    %v1576 = vsub.s32 %v1573, %v1575
    %v1577 = vrot.slane %v1569, %v1576
    %v1579 = vunpack.c.l.s4 1983009808
    %v1580 = vunpack.c.0.s8 %v1579
    %v1581 = vlaneseq
    %v1582 = vshrl.u32 %v1581, 7
    %v1583 = vsub.s32 %v1580, %v1582
    %v1584 = vrot.slane %v1570, %v1583
    %v1585 = vcombine.low %v1577, %v1584
    %v1586 = vcombine.low %v1472, %v1471
    %v1587 = vcombine.low %v1480, %v1488
    %v1589 = vunpack.c.l.s4 1983009808
    %v1590 = vunpack.c.0.s8 %v1589
    %v1591 = vlaneseq
    %v1592 = vshrl.u32 %v1591, 7
    %v1593 = vsub.s32 %v1590, %v1592
    %v1594 = vrot.slane %v1586, %v1593
    %v1596 = vunpack.c.l.s4 1983009808
    %v1597 = vunpack.c.0.s8 %v1596
    %v1598 = vlaneseq
    %v1599 = vshrl.u32 %v1598, 7
    %v1600 = vsub.s32 %v1597, %v1599
    %v1601 = vrot.slane %v1587, %v1600
    %v1602 = vcombine.low %v1594, %v1601
    %v1603 = vcombine.low %v1487, %v1496
    %v1604 = vcombine.low %v1504, %v1503
    %v1606 = vunpack.c.l.s4 1983009808
    %v1607 = vunpack.c.0.s8 %v1606
    %v1608 = vlaneseq
    %v1609 = vshrl.u32 %v1608, 7
    %v1610 = vsub.s32 %v1607, %v1609
    %v1611 = vrot.slane %v1603, %v1610
    %v1613 = vunpack.c.l.s4 1983009808
    %v1614 = vunpack.c.0.s8 %v1613
    %v1615 = vlaneseq
    %v1616 = vshrl.u32 %v1615, 7
    %v1617 = vsub.s32 %v1614, %v1616
    %v1618 = vrot.slane %v1604, %v1617
    %v1619 = vcombine.low %v1611, %v1618
    %v1620 = vcombine.low %v1512, %v1520
    %v1621 = vcombine.low %v1519, %v1528
    %v1623 = vunpack.c.l.s4 1983009808
    %v1624 = vunpack.c.0.s8 %v1623
    %v1625 = vlaneseq
    %v1626 = vshrl.u32 %v1625, 7
    %v1627 = vsub.s32 %v1624, %v1626
    %v1628 = vrot.slane %v1620, %v1627
    %v1630 = vunpack.c.l.s4 1983009808
    %v1631 = vunpack.c.0.s8 %v1630
    %v1632 = vlaneseq
    %v1633 = vshrl.u32 %v1632, 7
    %v1634 = vsub.s32 %v1631, %v1633
    %v1635 = vrot.slane %v1621, %v1634
    %v1636 = vcombine.low %v1628, %v1635
    %v1637 = vcombine.low %v1536, %v1535
    %v1638 = vcombine.low %v1544, %v1552
    %v1640 = vunpack.c.l.s4 1983009808
    %v1641 = vunpack.c.0.s8 %v1640
    %v1642 = vlaneseq
    %v1643 = vshrl.u32 %v1642, 7
    %v1644 = vsub.s32 %v1641, %v1643
    %v1645 = vrot.slane %v1637, %v1644
    %v1647 = vunpack.c.l.s4 1983009808
    %v1648 = vunpack.c.0.s8 %v1647
    %v1649 = vlaneseq
    %v1650 = vshrl.u32 %v1649, 7
    %v1651 = vsub.s32 %v1648, %v1650
    %v1652 = vrot.slane %v1638, %v1651
    %v1653 = vcombine.low %v1645, %v1652
    %v1654 = vcombine.low %v1551, %v1560
    %v1655 = vcombine.low %v1568, %v1567
    %v1657 = vunpack.c.l.s4 1983009808
    %v1658 = vunpack.c.0.s8 %v1657
    %v1659 = vlaneseq
    %v1660 = vshrl.u32 %v1659, 7
    %v1661 = vsub.s32 %v1658, %v1660
    %v1662 = vrot.slane %v1654, %v1661
    %v1664 = vunpack.c.l.s4 1983009808
    %v1665 = vunpack.c.0.s8 %v1664
    %v1666 = vlaneseq
    %v1667 = vshrl.u32 %v1666, 7
    %v1668 = vsub.s32 %v1665, %v1667
    %v1669 = vrot.slane %v1655, %v1668
    %v1670 = vcombine.low %v1662, %v1669
    %v1671 = vsel %vm57, %v1585, 0
    %v1673 = vsel %vm57, %v1602, 0
    %v1675 = vsel %vm57, %v1619, 0
    %v1677 = vsel %vm57, %v1636, 0
    %v1679 = vsel %vm57, %v1653, 0
    %v1681 = vsel %vm57, %v1670, 0
    %1683 = vmatprep.subr.mxu0 0.0
    %1684 = vmatpush1.msra.mxu0 %v55
    %1685 = vmatprep.subr.mxu0 0.0
    %1686 = vmatpush1.msra.mxu0 %v56
    %1687 = vmatprep.subr.mxu0 0.0
    %1688 = vmatpush1.msra.mxu0 0.0
    %1689 = vmatprep.subr.mxu0 0.0
    %1690 = vmatpush1.msra.mxu0 0.0
    %1691 = vmatprep.subr.mxu0 0.0
    %1692 = vmatpush1.msra.mxu0 0.0
    %1693 = vmatprep.subr.mxu0 0.0
    %1694 = vmatpush1.msra.mxu0 0.0
    %1695 = vmatprep.subr.mxu0 0.0
    %1696 = vmatpush1.msra.mxu0 0.0
    %1697 = vmatprep.subr.mxu0 0.0
    %1698 = vmatpush1.msra.mxu0 0.0
    %1699 = vmatprep.subr.mxu0 0.0
    %1700 = vmatpush1.msra.mxu0 0.0
    %1701 = vmatprep.subr.mxu0 0.0
    %1702 = vmatpush1.msra.mxu0 0.0
    %1703 = vmatprep.subr.mxu0 0.0
    %1704 = vmatpush1.msra.mxu0 0.0
    %1705 = vmatprep.subr.mxu0 0.0
    %1706 = vmatpush1.msra.mxu0 0.0
    %1707 = vmatprep.subr.mxu0 0.0
    %1708 = vmatpush1.msra.mxu0 0.0
    %1709 = vmatprep.subr.mxu0 0.0
    %1710 = vmatpush1.msra.mxu0 0.0
    %1711 = vmatprep.subr.mxu0 0.0
    %1712 = vmatpush1.msra.mxu0 0.0
    %1713 = vmatprep.subr.mxu0 0.0
    %1714 = vmatpush1.msra.mxu0 0.0
    %1715 = vmatprep.subr.mxu0 0.0
    %1716 = vmatpush1.msra.mxu0 0.0
    %1717 = vmatprep.subr.mxu0 0.0
    %1718 = vmatpush1.msra.mxu0 0.0
    %1719 = vmatprep.subr.mxu0 0.0
    %1720 = vmatpush1.msra.mxu0 0.0
    %1721 = vmatprep.subr.mxu0 0.0
    %1722 = vmatpush1.msra.mxu0 0.0
    %1723 = vmatprep.subr.mxu0 0.0
    %1724 = vmatpush1.msra.mxu0 0.0
    %1725 = vmatprep.subr.mxu0 0.0
    %1726 = vmatpush1.msra.mxu0 0.0
    %1727 = vmatprep.subr.mxu0 0.0
    %1728 = vmatpush1.msra.mxu0 0.0
    %1729 = vmatprep.subr.mxu0 0.0
    %1730 = vmatpush1.msra.mxu0 0.0
    %1731 = vmatprep.subr.mxu0 0.0
    %1732 = vmatpush1.msra.mxu0 0.0
    %1733 = vmatprep.subr.mxu0 0.0
    %1734 = vmatpush1.msra.mxu0 0.0
    %1735 = vmatprep.subr.mxu0 0.0
    %1736 = vmatpush1.msra.mxu0 0.0
    %1737 = vmatprep.subr.mxu0 0.0
    %1738 = vmatpush1.msra.mxu0 0.0
    %1739 = vmatprep.subr.mxu0 0.0
    %1740 = vmatpush1.msra.mxu0 0.0
    %1741 = vmatprep.subr.mxu0 0.0
    %1742 = vmatpush1.msra.mxu0 0.0
    %1743 = vmatprep.subr.mxu0 0.0
    %1744 = vmatpush1.msra.mxu0 0.0
    %1745 = vmatprep.subr.mxu0 0.0
    %1746 = vmatpush1.msra.mxu0 0.0
    %1747 = vmatprep.mubr.f32.mxu0 0.0
    %1748 = vmatmul.mubr.f32.gmra.mrb[0].mxu0 %v1671
    %v1749 = vpop.f32.mrb[0].mxu0
    %v1750 = vadd.f32 0.0, %v1749
    %v1751 = vpop.f32.mrb[0].mxu0
    %1752 = vmatprep.mubr.f32.mxu0 0.0
    %1753 = vmatmul.mubr.f32.gmra.mrb[0].mxu0 %v1673
    %v1754 = vpop.f32.mrb[0].mxu0
    %v1755 = vadd.f32 0.0, %v1754
    %v1756 = vpop.f32.mrb[0].mxu0
    %1757 = vmatprep.mubr.f32.mxu0 0.0
    %1758 = vmatmul.mubr.f32.gmra.mrb[0].mxu0 %v1675
    %v1759 = vpop.f32.mrb[0].mxu0
    %v1760 = vadd.f32 0.0, %v1759
    %v1761 = vpop.f32.mrb[0].mxu0
    %1762 = vmatprep.mubr.f32.mxu0 0.0
    %1763 = vmatmul.mubr.f32.gmra.mrb[0].mxu0 %v1677
    %v1764 = vpop.f32.mrb[0].mxu0
    %v1765 = vadd.f32 0.0, %v1764
    %v1766 = vpop.f32.mrb[0].mxu0
    %1767 = vmatprep.mubr.f32.mxu0 0.0
    %1768 = vmatmul.mubr.f32.gmra.mrb[0].mxu0 %v1679
    %v1769 = vpop.f32.mrb[0].mxu0
    %v1770 = vadd.f32 0.0, %v1769
    %v1771 = vpop.f32.mrb[0].mxu0
    %1772 = vmatprep.mubr.f32.mxu0 0.0
    %1773 = vmatmul.mubr.f32.gmra.mrb[0].mxu0 %v1681
    %v1774 = vpop.f32.mrb[0].mxu0
    %v1775 = vadd.f32 0.0, %v1774
    %v1776 = vpop.f32.mrb[0].mxu0
    %1777 = vdwg.mxu0
    %v1784 = vcombine.high %v1750, %v1750
    %v1786 = vunpack.c.l.s4 1983009808
    %v1787 = vunpack.c.0.s8 %v1786
    %v1788 = vlaneseq
    %v1789 = vshrl.u32 %v1788, 7
    %v1790 = vsub.s32 %v1787, %v1789
    %v1791 = vrot.slane %v1750, %v1790
    %v1793 = vunpack.c.l.s4 1983009808
    %v1794 = vunpack.c.0.s8 %v1793
    %v1795 = vlaneseq
    %v1796 = vshrl.u32 %v1795, 7
    %v1797 = vsub.s32 %v1794, %v1796
    %v1798 = vrot.slane %v1784, %v1797
    %v1799 = vcombine.high %v1791, %v1791
    %v1800 = vcombine.high %v1798, %v1798
    %v1801 = vcombine.high %v1755, %v1755
    %v1803 = vunpack.c.l.s4 1983009808
    %v1804 = vunpack.c.0.s8 %v1803
    %v1805 = vlaneseq
    %v1806 = vshrl.u32 %v1805, 7
    %v1807 = vsub.s32 %v1804, %v1806
    %v1808 = vrot.slane %v1755, %v1807
    %v1810 = vunpack.c.l.s4 1983009808
    %v1811 = vunpack.c.0.s8 %v1810
    %v1812 = vlaneseq
    %v1813 = vshrl.u32 %v1812, 7
    %v1814 = vsub.s32 %v1811, %v1813
    %v1815 = vrot.slane %v1801, %v1814
    %v1816 = vcombine.high %v1808, %v1808
    %v1817 = vcombine.high %v1815, %v1815
    %v1818 = vcombine.high %v1760, %v1760
    %v1820 = vunpack.c.l.s4 1983009808
    %v1821 = vunpack.c.0.s8 %v1820
    %v1822 = vlaneseq
    %v1823 = vshrl.u32 %v1822, 7
    %v1824 = vsub.s32 %v1821, %v1823
    %v1825 = vrot.slane %v1760, %v1824
    %v1827 = vunpack.c.l.s4 1983009808
    %v1828 = vunpack.c.0.s8 %v1827
    %v1829 = vlaneseq
    %v1830 = vshrl.u32 %v1829, 7
    %v1831 = vsub.s32 %v1828, %v1830
    %v1832 = vrot.slane %v1818, %v1831
    %v1833 = vcombine.high %v1825, %v1825
    %v1834 = vcombine.high %v1832, %v1832
    %v1835 = vcombine.high %v1765, %v1765
    %v1837 = vunpack.c.l.s4 1983009808
    %v1838 = vunpack.c.0.s8 %v1837
    %v1839 = vlaneseq
    %v1840 = vshrl.u32 %v1839, 7
    %v1841 = vsub.s32 %v1838, %v1840
    %v1842 = vrot.slane %v1765, %v1841
    %v1844 = vunpack.c.l.s4 1983009808
    %v1845 = vunpack.c.0.s8 %v1844
    %v1846 = vlaneseq
    %v1847 = vshrl.u32 %v1846, 7
    %v1848 = vsub.s32 %v1845, %v1847
    %v1849 = vrot.slane %v1835, %v1848
    %v1850 = vcombine.high %v1842, %v1842
    %v1851 = vcombine.high %v1849, %v1849
    %v1852 = vcombine.high %v1770, %v1770
    %v1854 = vunpack.c.l.s4 1983009808
    %v1855 = vunpack.c.0.s8 %v1854
    %v1856 = vlaneseq
    %v1857 = vshrl.u32 %v1856, 7
    %v1858 = vsub.s32 %v1855, %v1857
    %v1859 = vrot.slane %v1770, %v1858
    %v1861 = vunpack.c.l.s4 1983009808
    %v1862 = vunpack.c.0.s8 %v1861
    %v1863 = vlaneseq
    %v1864 = vshrl.u32 %v1863, 7
    %v1865 = vsub.s32 %v1862, %v1864
    %v1866 = vrot.slane %v1852, %v1865
    %v1867 = vcombine.high %v1859, %v1859
    %v1868 = vcombine.high %v1866, %v1866
    %v1869 = vcombine.high %v1775, %v1775
    %v1871 = vunpack.c.l.s4 1983009808
    %v1872 = vunpack.c.0.s8 %v1871
    %v1873 = vlaneseq
    %v1874 = vshrl.u32 %v1873, 7
    %v1875 = vsub.s32 %v1872, %v1874
    %v1876 = vrot.slane %v1775, %v1875
    %v1878 = vunpack.c.l.s4 1983009808
    %v1879 = vunpack.c.0.s8 %v1878
    %v1880 = vlaneseq
    %v1881 = vshrl.u32 %v1880, 7
    %v1882 = vsub.s32 %v1879, %v1881
    %v1883 = vrot.slane %v1869, %v1882
    %v1884 = vcombine.high %v1876, %v1876
    %v1885 = vcombine.high %v1883, %v1883
    %v1910 = vmul.f32 %v21, %v21
    %v1911 = vmul.f32 %v22, %v22
    %v1912 = vmul.f32 %v23, %v23
    %v1913 = vmul.f32 %v24, %v24
    %v1914 = vmul.f32 %v25, %v25
    %v1915 = vmul.f32 %v26, %v26
    %v1916 = vmul.f32 %v27, %v27
    %v1917 = vmul.f32 %v28, %v28
    %v1918 = vmul.f32 %v29, %v29
    %v1919 = vmul.f32 %v30, %v30
    %v1920 = vmul.f32 %v31, %v31
    %v1921 = vmul.f32 %v32, %v32
    %v1922 = vmul.f32 %v33, %v33
    %v1923 = vmul.f32 %v34, %v34
    %v1924 = vmul.f32 %v35, %v35
    %v1925 = vmul.f32 %v36, %v36
    %v1927 = vsel %vm57, %v1910, 0
    %v1930 = vsel %vm57, %v1911, 0
    %v1933 = vsel %vm57, %v1912, 0
    %v1936 = vsel %vm57, %v1913, 0
    %v1939 = vsel %vm57, %v1914, 0
    %v1942 = vsel %vm57, %v1915, 0
    %v1945 = vsel %vm57, %v1916, 0
    %v1948 = vsel %vm57, %v1917, 0
    %v1951 = vsel %vm57, %v1918, 0
    %v1954 = vsel %vm57, %v1919, 0
    %v1957 = vsel %vm57, %v1920, 0
    %v1960 = vsel %vm57, %v1921, 0
    %v1963 = vsel %vm57, %v1922, 0
    %v1966 = vsel %vm57, %v1923, 0
    %v1969 = vsel %vm57, %v1924, 0
    %v1972 = vsel %vm57, %v1925, 0
    %1974 = vmatprep.subr.mxu0 0.0
    %1975 = vmatpush1.msra.mxu0 %v53
    %1976 = vmatprep.subr.mxu0 0.0
    %1977 = vmatpush1.msra.mxu0 %v54
    %1978 = vmatprep.subr.mxu0 0.0
    %1979 = vmatpush1.msra.mxu0 0.0
    %1980 = vmatprep.subr.mxu0 0.0
    %1981 = vmatpush1.msra.mxu0 0.0
    %1982 = vmatprep.subr.mxu0 0.0
    %1983 = vmatpush1.msra.mxu0 0.0
    %1984 = vmatprep.subr.mxu0 0.0
    %1985 = vmatpush1.msra.mxu0 0.0
    %1986 = vmatprep.subr.mxu0 0.0
    %1987 = vmatpush1.msra.mxu0 0.0
    %1988 = vmatprep.subr.mxu0 0.0
    %1989 = vmatpush1.msra.mxu0 0.0
    %1990 = vmatprep.subr.mxu0 0.0
    %1991 = vmatpush1.msra.mxu0 0.0
    %1992 = vmatprep.subr.mxu0 0.0
    %1993 = vmatpush1.msra.mxu0 0.0
    %1994 = vmatprep.subr.mxu0 0.0
    %1995 = vmatpush1.msra.mxu0 0.0
    %1996 = vmatprep.subr.mxu0 0.0
    %1997 = vmatpush1.msra.mxu0 0.0
    %1998 = vmatprep.subr.mxu0 0.0
    %1999 = vmatpush1.msra.mxu0 0.0
    %2000 = vmatprep.subr.mxu0 0.0
    %2001 = vmatpush1.msra.mxu0 0.0
    %2002 = vmatprep.subr.mxu0 0.0
    %2003 = vmatpush1.msra.mxu0 0.0
    %2004 = vmatprep.subr.mxu0 0.0
    %2005 = vmatpush1.msra.mxu0 0.0
    %2006 = vmatprep.subr.mxu0 0.0
    %2007 = vmatpush1.msra.mxu0 0.0
    %2008 = vmatprep.subr.mxu0 0.0
    %2009 = vmatpush1.msra.mxu0 0.0
    %2010 = vmatprep.subr.mxu0 0.0
    %2011 = vmatpush1.msra.mxu0 0.0
    %2012 = vmatprep.subr.mxu0 0.0
    %2013 = vmatpush1.msra.mxu0 0.0
    %2014 = vmatprep.subr.mxu0 0.0
    %2015 = vmatpush1.msra.mxu0 0.0
    %2016 = vmatprep.subr.mxu0 0.0
    %2017 = vmatpush1.msra.mxu0 0.0
    %2018 = vmatprep.subr.mxu0 0.0
    %2019 = vmatpush1.msra.mxu0 0.0
    %2020 = vmatprep.subr.mxu0 0.0
    %2021 = vmatpush1.msra.mxu0 0.0
    %2022 = vmatprep.subr.mxu0 0.0
    %2023 = vmatpush1.msra.mxu0 0.0
    %2024 = vmatprep.subr.mxu0 0.0
    %2025 = vmatpush1.msra.mxu0 0.0
    %2026 = vmatprep.subr.mxu0 0.0
    %2027 = vmatpush1.msra.mxu0 0.0
    %2028 = vmatprep.subr.mxu0 0.0
    %2029 = vmatpush1.msra.mxu0 0.0
    %2030 = vmatprep.subr.mxu0 0.0
    %2031 = vmatpush1.msra.mxu0 0.0
    %2032 = vmatprep.subr.mxu0 0.0
    %2033 = vmatpush1.msra.mxu0 0.0
    %2034 = vmatprep.subr.mxu0 0.0
    %2035 = vmatpush1.msra.mxu0 0.0
    %2036 = vmatprep.subr.mxu0 0.0
    %2037 = vmatpush1.msra.mxu0 0.0
    %2038 = vmatprep.mubr.f32.mxu0 0.0
    %2039 = vmatmul.mubr.f32.gmra.mrb[0].mxu0 %v1927
    %v2040 = vpop.f32.mrb[0].mxu0
    %v2041 = vadd.f32 0.0, %v2040
    %v2042 = vpop.f32.mrb[0].mxu0
    %2043 = vmatprep.mubr.f32.mxu0 0.0
    %2044 = vmatmul.mubr.f32.gmra.mrb[0].mxu0 %v1930
    %v2045 = vpop.f32.mrb[0].mxu0
    %v2046 = vadd.f32 0.0, %v2045
    %v2047 = vpop.f32.mrb[0].mxu0
    %2048 = vmatprep.mubr.f32.mxu0 0.0
    %2049 = vmatmul.mubr.f32.gmra.mrb[0].mxu0 %v1933
    %v2050 = vpop.f32.mrb[0].mxu0
    %v2051 = vadd.f32 0.0, %v2050
    %v2052 = vpop.f32.mrb[0].mxu0
    %2053 = vmatprep.mubr.f32.mxu0 0.0
    %2054 = vmatmul.mubr.f32.gmra.mrb[0].mxu0 %v1936
    %v2055 = vpop.f32.mrb[0].mxu0
    %v2056 = vadd.f32 0.0, %v2055
    %v2057 = vpop.f32.mrb[0].mxu0
    %2058 = vmatprep.mubr.f32.mxu0 0.0
    %2059 = vmatmul.mubr.f32.gmra.mrb[0].mxu0 %v1939
    %v2060 = vpop.f32.mrb[0].mxu0
    %v2061 = vadd.f32 0.0, %v2060
    %v2062 = vpop.f32.mrb[0].mxu0
    %2063 = vmatprep.mubr.f32.mxu0 0.0
    %2064 = vmatmul.mubr.f32.gmra.mrb[0].mxu0 %v1942
    %v2065 = vpop.f32.mrb[0].mxu0
    %v2066 = vadd.f32 0.0, %v2065
    %v2067 = vpop.f32.mrb[0].mxu0
    %2068 = vmatprep.mubr.f32.mxu0 0.0
    %2069 = vmatmul.mubr.f32.gmra.mrb[0].mxu0 %v1945
    %v2070 = vpop.f32.mrb[0].mxu0
    %v2071 = vadd.f32 0.0, %v2070
    %v2072 = vpop.f32.mrb[0].mxu0
    %2073 = vmatprep.mubr.f32.mxu0 0.0
    %2074 = vmatmul.mubr.f32.gmra.mrb[0].mxu0 %v1948
    %v2075 = vpop.f32.mrb[0].mxu0
    %v2076 = vadd.f32 0.0, %v2075
    %v2077 = vpop.f32.mrb[0].mxu0
    %2078 = vmatprep.mubr.f32.mxu0 0.0
    %2079 = vmatmul.mubr.f32.gmra.mrb[0].mxu0 %v1951
    %v2080 = vpop.f32.mrb[0].mxu0
    %v2081 = vadd.f32 0.0, %v2080
    %v2082 = vpop.f32.mrb[0].mxu0
    %2083 = vmatprep.mubr.f32.mxu0 0.0
    %2084 = vmatmul.mubr.f32.gmra.mrb[0].mxu0 %v1954
    %v2085 = vpop.f32.mrb[0].mxu0
    %v2086 = vadd.f32 0.0, %v2085
    %v2087 = vpop.f32.mrb[0].mxu0
    %2088 = vmatprep.mubr.f32.mxu0 0.0
    %2089 = vmatmul.mubr.f32.gmra.mrb[0].mxu0 %v1957
    %v2090 = vpop.f32.mrb[0].mxu0
    %v2091 = vadd.f32 0.0, %v2090
    %v2092 = vpop.f32.mrb[0].mxu0
    %2093 = vmatprep.mubr.f32.mxu0 0.0
    %2094 = vmatmul.mubr.f32.gmra.mrb[0].mxu0 %v1960
    %v2095 = vpop.f32.mrb[0].mxu0
    %v2096 = vadd.f32 0.0, %v2095
    %v2097 = vpop.f32.mrb[0].mxu0
    %2098 = vmatprep.mubr.f32.mxu0 0.0
    %2099 = vmatmul.mubr.f32.gmra.mrb[0].mxu0 %v1963
    %v2100 = vpop.f32.mrb[0].mxu0
    %v2101 = vadd.f32 0.0, %v2100
    %v2102 = vpop.f32.mrb[0].mxu0
    %2103 = vmatprep.mubr.f32.mxu0 0.0
    %2104 = vmatmul.mubr.f32.gmra.mrb[0].mxu0 %v1966
    %v2105 = vpop.f32.mrb[0].mxu0
    %v2106 = vadd.f32 0.0, %v2105
    %v2107 = vpop.f32.mrb[0].mxu0
    %2108 = vmatprep.mubr.f32.mxu0 0.0
    %2109 = vmatmul.mubr.f32.gmra.mrb[0].mxu0 %v1969
    %v2110 = vpop.f32.mrb[0].mxu0
    %v2111 = vadd.f32 0.0, %v2110
    %v2112 = vpop.f32.mrb[0].mxu0
    %2113 = vmatprep.mubr.f32.mxu0 0.0
    %2114 = vmatmul.mubr.f32.gmra.mrb[0].mxu0 %v1972
    %v2115 = vpop.f32.mrb[0].mxu0
    %v2116 = vadd.f32 0.0, %v2115
    %v2117 = vpop.f32.mrb[0].mxu0
    %2118 = vdwg.mxu0
    %2119 = vxpose.xlu0.b32.start [1/16] %v2041, 128
    %2120 = vxpose.xlu0.b32.cont [2/16] %v2046, 128
    %2121 = vxpose.xlu0.b32.cont [3/16] 0.0, 128
    %2122 = vxpose.xlu0.b32.cont [4/16] 0.0, 128
    %2123 = vxpose.xlu0.b32.cont [5/16] 0.0, 128
    %2124 = vxpose.xlu0.b32.cont [6/16] 0.0, 128
    %2125 = vxpose.xlu0.b32.cont [7/16] 0.0, 128
    %2126 = vxpose.xlu0.b32.cont [8/16] 0.0, 128
    %2127 = vxpose.xlu0.b32.cont [9/16] 0.0, 128
    %2128 = vxpose.xlu0.b32.cont [10/16] 0.0, 128
    %2129 = vxpose.xlu0.b32.cont [11/16] 0.0, 128
    %2130 = vxpose.xlu0.b32.cont [12/16] 0.0, 128
    %2131 = vxpose.xlu0.b32.cont [13/16] 0.0, 128
    %2132 = vxpose.xlu0.b32.cont [14/16] 0.0, 128
    %2133 = vxpose.xlu0.b32.cont [15/16] 0.0, 128
    %2134 = vxpose.xlu0.b32.end [16/16] 0.0, 128
    %v2135 = vpop.trf.xlu0
    %v2136 = vpop.trf.xlu0
    %v2137 = vpop.trf.xlu0
    %v2138 = vpop.trf.xlu0
    %v2139 = vpop.trf.xlu0
    %v2140 = vpop.trf.xlu0
    %v2141 = vpop.trf.xlu0
    %v2142 = vpop.trf.xlu0
    %v2143 = vpop.trf.xlu0
    %v2144 = vpop.trf.xlu0
    %v2145 = vpop.trf.xlu0
    %v2146 = vpop.trf.xlu0
    %v2147 = vpop.trf.xlu0
    %v2148 = vpop.trf.xlu0
    %v2149 = vpop.trf.xlu0
    %v2150 = vpop.trf.xlu0
    %2151 = vxpose.xlu0.b32.start [1/16] %v2051, 128
    %2152 = vxpose.xlu0.b32.cont [2/16] %v2056, 128
    %2153 = vxpose.xlu0.b32.cont [3/16] 0.0, 128
    %2154 = vxpose.xlu0.b32.cont [4/16] 0.0, 128
    %2155 = vxpose.xlu0.b32.cont [5/16] 0.0, 128
    %2156 = vxpose.xlu0.b32.cont [6/16] 0.0, 128
    %2157 = vxpose.xlu0.b32.cont [7/16] 0.0, 128
    %2158 = vxpose.xlu0.b32.cont [8/16] 0.0, 128
    %2159 = vxpose.xlu0.b32.cont [9/16] 0.0, 128
    %2160 = vxpose.xlu0.b32.cont [10/16] 0.0, 128
    %2161 = vxpose.xlu0.b32.cont [11/16] 0.0, 128
    %2162 = vxpose.xlu0.b32.cont [12/16] 0.0, 128
    %2163 = vxpose.xlu0.b32.cont [13/16] 0.0, 128
    %2164 = vxpose.xlu0.b32.cont [14/16] 0.0, 128
    %2165 = vxpose.xlu0.b32.cont [15/16] 0.0, 128
    %2166 = vxpose.xlu0.b32.end [16/16] 0.0, 128
    %v2167 = vpop.trf.xlu0
    %v2168 = vpop.trf.xlu0
    %v2169 = vpop.trf.xlu0
    %v2170 = vpop.trf.xlu0
    %v2171 = vpop.trf.xlu0
    %v2172 = vpop.trf.xlu0
    %v2173 = vpop.trf.xlu0
    %v2174 = vpop.trf.xlu0
    %v2175 = vpop.trf.xlu0
    %v2176 = vpop.trf.xlu0
    %v2177 = vpop.trf.xlu0
    %v2178 = vpop.trf.xlu0
    %v2179 = vpop.trf.xlu0
    %v2180 = vpop.trf.xlu0
    %v2181 = vpop.trf.xlu0
    %v2182 = vpop.trf.xlu0
    %2183 = vxpose.xlu0.b32.start [1/16] %v2061, 128
    %2184 = vxpose.xlu0.b32.cont [2/16] %v2066, 128
    %2185 = vxpose.xlu0.b32.cont [3/16] 0.0, 128
    %2186 = vxpose.xlu0.b32.cont [4/16] 0.0, 128
    %2187 = vxpose.xlu0.b32.cont [5/16] 0.0, 128
    %2188 = vxpose.xlu0.b32.cont [6/16] 0.0, 128
    %2189 = vxpose.xlu0.b32.cont [7/16] 0.0, 128
    %2190 = vxpose.xlu0.b32.cont [8/16] 0.0, 128
    %2191 = vxpose.xlu0.b32.cont [9/16] 0.0, 128
    %2192 = vxpose.xlu0.b32.cont [10/16] 0.0, 128
    %2193 = vxpose.xlu0.b32.cont [11/16] 0.0, 128
    %2194 = vxpose.xlu0.b32.cont [12/16] 0.0, 128
    %2195 = vxpose.xlu0.b32.cont [13/16] 0.0, 128
    %2196 = vxpose.xlu0.b32.cont [14/16] 0.0, 128
    %2197 = vxpose.xlu0.b32.cont [15/16] 0.0, 128
    %2198 = vxpose.xlu0.b32.end [16/16] 0.0, 128
    %v2199 = vpop.trf.xlu0
    %v2200 = vpop.trf.xlu0
    %v2201 = vpop.trf.xlu0
    %v2202 = vpop.trf.xlu0
    %v2203 = vpop.trf.xlu0
    %v2204 = vpop.trf.xlu0
    %v2205 = vpop.trf.xlu0
    %v2206 = vpop.trf.xlu0
    %v2207 = vpop.trf.xlu0
    %v2208 = vpop.trf.xlu0
    %v2209 = vpop.trf.xlu0
    %v2210 = vpop.trf.xlu0
    %v2211 = vpop.trf.xlu0
    %v2212 = vpop.trf.xlu0
    %v2213 = vpop.trf.xlu0
    %v2214 = vpop.trf.xlu0
    %2215 = vxpose.xlu0.b32.start [1/16] %v2071, 128
    %2216 = vxpose.xlu0.b32.cont [2/16] %v2076, 128
    %2217 = vxpose.xlu0.b32.cont [3/16] 0.0, 128
    %2218 = vxpose.xlu0.b32.cont [4/16] 0.0, 128
    %2219 = vxpose.xlu0.b32.cont [5/16] 0.0, 128
    %2220 = vxpose.xlu0.b32.cont [6/16] 0.0, 128
    %2221 = vxpose.xlu0.b32.cont [7/16] 0.0, 128
    %2222 = vxpose.xlu0.b32.cont [8/16] 0.0, 128
    %2223 = vxpose.xlu0.b32.cont [9/16] 0.0, 128
    %2224 = vxpose.xlu0.b32.cont [10/16] 0.0, 128
    %2225 = vxpose.xlu0.b32.cont [11/16] 0.0, 128
    %2226 = vxpose.xlu0.b32.cont [12/16] 0.0, 128
    %2227 = vxpose.xlu0.b32.cont [13/16] 0.0, 128
    %2228 = vxpose.xlu0.b32.cont [14/16] 0.0, 128
    %2229 = vxpose.xlu0.b32.cont [15/16] 0.0, 128
    %2230 = vxpose.xlu0.b32.end [16/16] 0.0, 128
    %v2231 = vpop.trf.xlu0
    %v2232 = vpop.trf.xlu0
    %v2233 = vpop.trf.xlu0
    %v2234 = vpop.trf.xlu0
    %v2235 = vpop.trf.xlu0
    %v2236 = vpop.trf.xlu0
    %v2237 = vpop.trf.xlu0
    %v2238 = vpop.trf.xlu0
    %v2239 = vpop.trf.xlu0
    %v2240 = vpop.trf.xlu0
    %v2241 = vpop.trf.xlu0
    %v2242 = vpop.trf.xlu0
    %v2243 = vpop.trf.xlu0
    %v2244 = vpop.trf.xlu0
    %v2245 = vpop.trf.xlu0
    %v2246 = vpop.trf.xlu0
    %2247 = vxpose.xlu0.b32.start [1/16] %v2081, 128
    %2248 = vxpose.xlu0.b32.cont [2/16] %v2086, 128
    %2249 = vxpose.xlu0.b32.cont [3/16] 0.0, 128
    %2250 = vxpose.xlu0.b32.cont [4/16] 0.0, 128
    %2251 = vxpose.xlu0.b32.cont [5/16] 0.0, 128
    %2252 = vxpose.xlu0.b32.cont [6/16] 0.0, 128
    %2253 = vxpose.xlu0.b32.cont [7/16] 0.0, 128
    %2254 = vxpose.xlu0.b32.cont [8/16] 0.0, 128
    %2255 = vxpose.xlu0.b32.cont [9/16] 0.0, 128
    %2256 = vxpose.xlu0.b32.cont [10/16] 0.0, 128
    %2257 = vxpose.xlu0.b32.cont [11/16] 0.0, 128
    %2258 = vxpose.xlu0.b32.cont [12/16] 0.0, 128
    %2259 = vxpose.xlu0.b32.cont [13/16] 0.0, 128
    %2260 = vxpose.xlu0.b32.cont [14/16] 0.0, 128
    %2261 = vxpose.xlu0.b32.cont [15/16] 0.0, 128
    %2262 = vxpose.xlu0.b32.end [16/16] 0.0, 128
    %v2263 = vpop.trf.xlu0
    %v2264 = vpop.trf.xlu0
    %v2265 = vpop.trf.xlu0
    %v2266 = vpop.trf.xlu0
    %v2267 = vpop.trf.xlu0
    %v2268 = vpop.trf.xlu0
    %v2269 = vpop.trf.xlu0
    %v2270 = vpop.trf.xlu0
    %v2271 = vpop.trf.xlu0
    %v2272 = vpop.trf.xlu0
    %v2273 = vpop.trf.xlu0
    %v2274 = vpop.trf.xlu0
    %v2275 = vpop.trf.xlu0
    %v2276 = vpop.trf.xlu0
    %v2277 = vpop.trf.xlu0
    %v2278 = vpop.trf.xlu0
    %2279 = vxpose.xlu0.b32.start [1/16] %v2091, 128
    %2280 = vxpose.xlu0.b32.cont [2/16] %v2096, 128
    %2281 = vxpose.xlu0.b32.cont [3/16] 0.0, 128
    %2282 = vxpose.xlu0.b32.cont [4/16] 0.0, 128
    %2283 = vxpose.xlu0.b32.cont [5/16] 0.0, 128
    %2284 = vxpose.xlu0.b32.cont [6/16] 0.0, 128
    %2285 = vxpose.xlu0.b32.cont [7/16] 0.0, 128
    %2286 = vxpose.xlu0.b32.cont [8/16] 0.0, 128
    %2287 = vxpose.xlu0.b32.cont [9/16] 0.0, 128
    %2288 = vxpose.xlu0.b32.cont [10/16] 0.0, 128
    %2289 = vxpose.xlu0.b32.cont [11/16] 0.0, 128
    %2290 = vxpose.xlu0.b32.cont [12/16] 0.0, 128
    %2291 = vxpose.xlu0.b32.cont [13/16] 0.0, 128
    %2292 = vxpose.xlu0.b32.cont [14/16] 0.0, 128
    %2293 = vxpose.xlu0.b32.cont [15/16] 0.0, 128
    %2294 = vxpose.xlu0.b32.end [16/16] 0.0, 128
    %v2295 = vpop.trf.xlu0
    %v2296 = vpop.trf.xlu0
    %v2297 = vpop.trf.xlu0
    %v2298 = vpop.trf.xlu0
    %v2299 = vpop.trf.xlu0
    %v2300 = vpop.trf.xlu0
    %v2301 = vpop.trf.xlu0
    %v2302 = vpop.trf.xlu0
    %v2303 = vpop.trf.xlu0
    %v2304 = vpop.trf.xlu0
    %v2305 = vpop.trf.xlu0
    %v2306 = vpop.trf.xlu0
    %v2307 = vpop.trf.xlu0
    %v2308 = vpop.trf.xlu0
    %v2309 = vpop.trf.xlu0
    %v2310 = vpop.trf.xlu0
    %2311 = vxpose.xlu0.b32.start [1/16] %v2101, 128
    %2312 = vxpose.xlu0.b32.cont [2/16] %v2106, 128
    %2313 = vxpose.xlu0.b32.cont [3/16] 0.0, 128
    %2314 = vxpose.xlu0.b32.cont [4/16] 0.0, 128
    %2315 = vxpose.xlu0.b32.cont [5/16] 0.0, 128
    %2316 = vxpose.xlu0.b32.cont [6/16] 0.0, 128
    %2317 = vxpose.xlu0.b32.cont [7/16] 0.0, 128
    %2318 = vxpose.xlu0.b32.cont [8/16] 0.0, 128
    %2319 = vxpose.xlu0.b32.cont [9/16] 0.0, 128
    %2320 = vxpose.xlu0.b32.cont [10/16] 0.0, 128
    %2321 = vxpose.xlu0.b32.cont [11/16] 0.0, 128
    %2322 = vxpose.xlu0.b32.cont [12/16] 0.0, 128
    %2323 = vxpose.xlu0.b32.cont [13/16] 0.0, 128
    %2324 = vxpose.xlu0.b32.cont [14/16] 0.0, 128
    %2325 = vxpose.xlu0.b32.cont [15/16] 0.0, 128
    %2326 = vxpose.xlu0.b32.end [16/16] 0.0, 128
    %v2327 = vpop.trf.xlu0
    %v2328 = vpop.trf.xlu0
    %v2329 = vpop.trf.xlu0
    %v2330 = vpop.trf.xlu0
    %v2331 = vpop.trf.xlu0
    %v2332 = vpop.trf.xlu0
    %v2333 = vpop.trf.xlu0
    %v2334 = vpop.trf.xlu0
    %v2335 = vpop.trf.xlu0
    %v2336 = vpop.trf.xlu0
    %v2337 = vpop.trf.xlu0
    %v2338 = vpop.trf.xlu0
    %v2339 = vpop.trf.xlu0
    %v2340 = vpop.trf.xlu0
    %v2341 = vpop.trf.xlu0
    %v2342 = vpop.trf.xlu0
    %2343 = vxpose.xlu0.b32.start [1/16] %v2111, 128
    %2344 = vxpose.xlu0.b32.cont [2/16] %v2116, 128
    %2345 = vxpose.xlu0.b32.cont [3/16] 0.0, 128
    %2346 = vxpose.xlu0.b32.cont [4/16] 0.0, 128
    %2347 = vxpose.xlu0.b32.cont [5/16] 0.0, 128
    %2348 = vxpose.xlu0.b32.cont [6/16] 0.0, 128
    %2349 = vxpose.xlu0.b32.cont [7/16] 0.0, 128
    %2350 = vxpose.xlu0.b32.cont [8/16] 0.0, 128
    %2351 = vxpose.xlu0.b32.cont [9/16] 0.0, 128
    %2352 = vxpose.xlu0.b32.cont [10/16] 0.0, 128
    %2353 = vxpose.xlu0.b32.cont [11/16] 0.0, 128
    %2354 = vxpose.xlu0.b32.cont [12/16] 0.0, 128
    %2355 = vxpose.xlu0.b32.cont [13/16] 0.0, 128
    %2356 = vxpose.xlu0.b32.cont [14/16] 0.0, 128
    %2357 = vxpose.xlu0.b32.cont [15/16] 0.0, 128
    %2358 = vxpose.xlu0.b32.end [16/16] 0.0, 128
    %v2359 = vpop.trf.xlu0
    %v2360 = vpop.trf.xlu0
    %v2361 = vpop.trf.xlu0
    %v2362 = vpop.trf.xlu0
    %v2363 = vpop.trf.xlu0
    %v2364 = vpop.trf.xlu0
    %v2365 = vpop.trf.xlu0
    %v2366 = vpop.trf.xlu0
    %v2367 = vpop.trf.xlu0
    %v2368 = vpop.trf.xlu0
    %v2369 = vpop.trf.xlu0
    %v2370 = vpop.trf.xlu0
    %v2371 = vpop.trf.xlu0
    %v2372 = vpop.trf.xlu0
    %v2373 = vpop.trf.xlu0
    %v2374 = vpop.trf.xlu0
    %v2383 = vcombine.high %v2135, %v2135
    %v2385 = vunpack.c.l.s4 1983009808
    %v2386 = vunpack.c.0.s8 %v2385
    %v2387 = vlaneseq
    %v2388 = vshrl.u32 %v2387, 7
    %v2389 = vsub.s32 %v2386, %v2388
    %v2390 = vrot.slane %v2135, %v2389
    %v2392 = vunpack.c.l.s4 1983009808
    %v2393 = vunpack.c.0.s8 %v2392
    %v2394 = vlaneseq
    %v2395 = vshrl.u32 %v2394, 7
    %v2396 = vsub.s32 %v2393, %v2395
    %v2397 = vrot.slane %v2383, %v2396
    %v2398 = vcombine.high %v2390, %v2390
    %v2399 = vcombine.high %v2167, %v2167
    %v2401 = vunpack.c.l.s4 1983009808
    %v2402 = vunpack.c.0.s8 %v2401
    %v2403 = vlaneseq
    %v2404 = vshrl.u32 %v2403, 7
    %v2405 = vsub.s32 %v2402, %v2404
    %v2406 = vrot.slane %v2167, %v2405
    %v2408 = vunpack.c.l.s4 1983009808
    %v2409 = vunpack.c.0.s8 %v2408
    %v2410 = vlaneseq
    %v2411 = vshrl.u32 %v2410, 7
    %v2412 = vsub.s32 %v2409, %v2411
    %v2413 = vrot.slane %v2399, %v2412
    %v2414 = vcombine.high %v2406, %v2406
    %v2415 = vcombine.high %v2199, %v2199
    %v2417 = vunpack.c.l.s4 1983009808
    %v2418 = vunpack.c.0.s8 %v2417
    %v2419 = vlaneseq
    %v2420 = vshrl.u32 %v2419, 7
    %v2421 = vsub.s32 %v2418, %v2420
    %v2422 = vrot.slane %v2199, %v2421
    %v2424 = vunpack.c.l.s4 1983009808
    %v2425 = vunpack.c.0.s8 %v2424
    %v2426 = vlaneseq
    %v2427 = vshrl.u32 %v2426, 7
    %v2428 = vsub.s32 %v2425, %v2427
    %v2429 = vrot.slane %v2415, %v2428
    %v2430 = vcombine.high %v2422, %v2422
    %v2431 = vcombine.high %v2231, %v2231
    %v2433 = vunpack.c.l.s4 1983009808
    %v2434 = vunpack.c.0.s8 %v2433
    %v2435 = vlaneseq
    %v2436 = vshrl.u32 %v2435, 7
    %v2437 = vsub.s32 %v2434, %v2436
    %v2438 = vrot.slane %v2231, %v2437
    %v2440 = vunpack.c.l.s4 1983009808
    %v2441 = vunpack.c.0.s8 %v2440
    %v2442 = vlaneseq
    %v2443 = vshrl.u32 %v2442, 7
    %v2444 = vsub.s32 %v2441, %v2443
    %v2445 = vrot.slane %v2431, %v2444
    %v2446 = vcombine.high %v2438, %v2438
    %v2447 = vcombine.high %v2263, %v2263
    %v2449 = vunpack.c.l.s4 1983009808
    %v2450 = vunpack.c.0.s8 %v2449
    %v2451 = vlaneseq
    %v2452 = vshrl.u32 %v2451, 7
    %v2453 = vsub.s32 %v2450, %v2452
    %v2454 = vrot.slane %v2263, %v2453
    %v2456 = vunpack.c.l.s4 1983009808
    %v2457 = vunpack.c.0.s8 %v2456
    %v2458 = vlaneseq
    %v2459 = vshrl.u32 %v2458, 7
    %v2460 = vsub.s32 %v2457, %v2459
    %v2461 = vrot.slane %v2447, %v2460
    %v2462 = vcombine.high %v2454, %v2454
    %v2463 = vcombine.high %v2295, %v2295
    %v2465 = vunpack.c.l.s4 1983009808
    %v2466 = vunpack.c.0.s8 %v2465
    %v2467 = vlaneseq
    %v2468 = vshrl.u32 %v2467, 7
    %v2469 = vsub.s32 %v2466, %v2468
    %v2470 = vrot.slane %v2295, %v2469
    %v2472 = vunpack.c.l.s4 1983009808
    %v2473 = vunpack.c.0.s8 %v2472
    %v2474 = vlaneseq
    %v2475 = vshrl.u32 %v2474, 7
    %v2476 = vsub.s32 %v2473, %v2475
    %v2477 = vrot.slane %v2463, %v2476
    %v2478 = vcombine.high %v2470, %v2470
    %v2479 = vcombine.high %v2327, %v2327
    %v2481 = vunpack.c.l.s4 1983009808
    %v2482 = vunpack.c.0.s8 %v2481
    %v2483 = vlaneseq
    %v2484 = vshrl.u32 %v2483, 7
    %v2485 = vsub.s32 %v2482, %v2484
    %v2486 = vrot.slane %v2327, %v2485
    %v2488 = vunpack.c.l.s4 1983009808
    %v2489 = vunpack.c.0.s8 %v2488
    %v2490 = vlaneseq
    %v2491 = vshrl.u32 %v2490, 7
    %v2492 = vsub.s32 %v2489, %v2491
    %v2493 = vrot.slane %v2479, %v2492
    %v2494 = vcombine.high %v2486, %v2486
    %v2495 = vcombine.high %v2359, %v2359
    %v2497 = vunpack.c.l.s4 1983009808
    %v2498 = vunpack.c.0.s8 %v2497
    %v2499 = vlaneseq
    %v2500 = vshrl.u32 %v2499, 7
    %v2501 = vsub.s32 %v2498, %v2500
    %v2502 = vrot.slane %v2359, %v2501
    %v2504 = vunpack.c.l.s4 1983009808
    %v2505 = vunpack.c.0.s8 %v2504
    %v2506 = vlaneseq
    %v2507 = vshrl.u32 %v2506, 7
    %v2508 = vsub.s32 %v2505, %v2507
    %v2509 = vrot.slane %v2495, %v2508
    %v2510 = vcombine.high %v2502, %v2502
    %v2511 = vcombine.low %v2390, %v2398
    %v2512 = vcombine.low %v2397, %v2406
    %v2514 = vunpack.c.l.s4 1983009808
    %v2515 = vunpack.c.0.s8 %v2514
    %v2516 = vlaneseq
    %v2517 = vshrl.u32 %v2516, 7
    %v2518 = vsub.s32 %v2515, %v2517
    %v2519 = vrot.slane %v2511, %v2518
    %v2521 = vunpack.c.l.s4 1983009808
    %v2522 = vunpack.c.0.s8 %v2521
    %v2523 = vlaneseq
    %v2524 = vshrl.u32 %v2523, 7
    %v2525 = vsub.s32 %v2522, %v2524
    %v2526 = vrot.slane %v2512, %v2525
    %v2527 = vcombine.low %v2519, %v2526
    %v2528 = vcombine.low %v2414, %v2413
    %v2529 = vcombine.low %v2422, %v2430
    %v2531 = vunpack.c.l.s4 1983009808
    %v2532 = vunpack.c.0.s8 %v2531
    %v2533 = vlaneseq
    %v2534 = vshrl.u32 %v2533, 7
    %v2535 = vsub.s32 %v2532, %v2534
    %v2536 = vrot.slane %v2528, %v2535
    %v2538 = vunpack.c.l.s4 1983009808
    %v2539 = vunpack.c.0.s8 %v2538
    %v2540 = vlaneseq
    %v2541 = vshrl.u32 %v2540, 7
    %v2542 = vsub.s32 %v2539, %v2541
    %v2543 = vrot.slane %v2529, %v2542
    %v2544 = vcombine.low %v2536, %v2543
    %v2545 = vcombine.low %v2429, %v2438
    %v2546 = vcombine.low %v2446, %v2445
    %v2548 = vunpack.c.l.s4 1983009808
    %v2549 = vunpack.c.0.s8 %v2548
    %v2550 = vlaneseq
    %v2551 = vshrl.u32 %v2550, 7
    %v2552 = vsub.s32 %v2549, %v2551
    %v2553 = vrot.slane %v2545, %v2552
    %v2555 = vunpack.c.l.s4 1983009808
    %v2556 = vunpack.c.0.s8 %v2555
    %v2557 = vlaneseq
    %v2558 = vshrl.u32 %v2557, 7
    %v2559 = vsub.s32 %v2556, %v2558
    %v2560 = vrot.slane %v2546, %v2559
    %v2561 = vcombine.low %v2553, %v2560
    %v2562 = vcombine.low %v2454, %v2462
    %v2563 = vcombine.low %v2461, %v2470
    %v2565 = vunpack.c.l.s4 1983009808
    %v2566 = vunpack.c.0.s8 %v2565
    %v2567 = vlaneseq
    %v2568 = vshrl.u32 %v2567, 7
    %v2569 = vsub.s32 %v2566, %v2568
    %v2570 = vrot.slane %v2562, %v2569
    %v2572 = vunpack.c.l.s4 1983009808
    %v2573 = vunpack.c.0.s8 %v2572
    %v2574 = vlaneseq
    %v2575 = vshrl.u32 %v2574, 7
    %v2576 = vsub.s32 %v2573, %v2575
    %v2577 = vrot.slane %v2563, %v2576
    %v2578 = vcombine.low %v2570, %v2577
    %v2579 = vcombine.low %v2478, %v2477
    %v2580 = vcombine.low %v2486, %v2494
    %v2582 = vunpack.c.l.s4 1983009808
    %v2583 = vunpack.c.0.s8 %v2582
    %v2584 = vlaneseq
    %v2585 = vshrl.u32 %v2584, 7
    %v2586 = vsub.s32 %v2583, %v2585
    %v2587 = vrot.slane %v2579, %v2586
    %v2589 = vunpack.c.l.s4 1983009808
    %v2590 = vunpack.c.0.s8 %v2589
    %v2591 = vlaneseq
    %v2592 = vshrl.u32 %v2591, 7
    %v2593 = vsub.s32 %v2590, %v2592
    %v2594 = vrot.slane %v2580, %v2593
    %v2595 = vcombine.low %v2587, %v2594
    %v2596 = vcombine.low %v2493, %v2502
    %v2597 = vcombine.low %v2510, %v2509
    %v2599 = vunpack.c.l.s4 1983009808
    %v2600 = vunpack.c.0.s8 %v2599
    %v2601 = vlaneseq
    %v2602 = vshrl.u32 %v2601, 7
    %v2603 = vsub.s32 %v2600, %v2602
    %v2604 = vrot.slane %v2596, %v2603
    %v2606 = vunpack.c.l.s4 1983009808
    %v2607 = vunpack.c.0.s8 %v2606
    %v2608 = vlaneseq
    %v2609 = vshrl.u32 %v2608, 7
    %v2610 = vsub.s32 %v2607, %v2609
    %v2611 = vrot.slane %v2597, %v2610
    %v2612 = vcombine.low %v2604, %v2611
    %v2613 = vsel %vm57, %v2527, 0
    %v2615 = vsel %vm57, %v2544, 0
    %v2617 = vsel %vm57, %v2561, 0
    %v2619 = vsel %vm57, %v2578, 0
    %v2621 = vsel %vm57, %v2595, 0
    %v2623 = vsel %vm57, %v2612, 0
    %2625 = vmatprep.subr.mxu0 0.0
    %2626 = vmatpush1.msra.mxu0 %v55
    %2627 = vmatprep.subr.mxu0 0.0
    %2628 = vmatpush1.msra.mxu0 %v56
    %2629 = vmatprep.subr.mxu0 0.0
    %2630 = vmatpush1.msra.mxu0 0.0
    %2631 = vmatprep.subr.mxu0 0.0
    %2632 = vmatpush1.msra.mxu0 0.0
    %2633 = vmatprep.subr.mxu0 0.0
    %2634 = vmatpush1.msra.mxu0 0.0
    %2635 = vmatprep.subr.mxu0 0.0
    %2636 = vmatpush1.msra.mxu0 0.0
    %2637 = vmatprep.subr.mxu0 0.0
    %2638 = vmatpush1.msra.mxu0 0.0
    %2639 = vmatprep.subr.mxu0 0.0
    %2640 = vmatpush1.msra.mxu0 0.0
    %2641 = vmatprep.subr.mxu0 0.0
    %2642 = vmatpush1.msra.mxu0 0.0
    %2643 = vmatprep.subr.mxu0 0.0
    %2644 = vmatpush1.msra.mxu0 0.0
    %2645 = vmatprep.subr.mxu0 0.0
    %2646 = vmatpush1.msra.mxu0 0.0
    %2647 = vmatprep.subr.mxu0 0.0
    %2648 = vmatpush1.msra.mxu0 0.0
    %2649 = vmatprep.subr.mxu0 0.0
    %2650 = vmatpush1.msra.mxu0 0.0
    %2651 = vmatprep.subr.mxu0 0.0
    %2652 = vmatpush1.msra.mxu0 0.0
    %2653 = vmatprep.subr.mxu0 0.0
    %2654 = vmatpush1.msra.mxu0 0.0
    %2655 = vmatprep.subr.mxu0 0.0
    %2656 = vmatpush1.msra.mxu0 0.0
    %2657 = vmatprep.subr.mxu0 0.0
    %2658 = vmatpush1.msra.mxu0 0.0
    %2659 = vmatprep.subr.mxu0 0.0
    %2660 = vmatpush1.msra.mxu0 0.0
    %2661 = vmatprep.subr.mxu0 0.0
    %2662 = vmatpush1.msra.mxu0 0.0
    %2663 = vmatprep.subr.mxu0 0.0
    %2664 = vmatpush1.msra.mxu0 0.0
    %2665 = vmatprep.subr.mxu0 0.0
    %2666 = vmatpush1.msra.mxu0 0.0
    %2667 = vmatprep.subr.mxu0 0.0
    %2668 = vmatpush1.msra.mxu0 0.0
    %2669 = vmatprep.subr.mxu0 0.0
    %2670 = vmatpush1.msra.mxu0 0.0
    %2671 = vmatprep.subr.mxu0 0.0
    %2672 = vmatpush1.msra.mxu0 0.0
    %2673 = vmatprep.subr.mxu0 0.0
    %2674 = vmatpush1.msra.mxu0 0.0
    %2675 = vmatprep.subr.mxu0 0.0
    %2676 = vmatpush1.msra.mxu0 0.0
    %2677 = vmatprep.subr.mxu0 0.0
    %2678 = vmatpush1.msra.mxu0 0.0
    %2679 = vmatprep.subr.mxu0 0.0
    %2680 = vmatpush1.msra.mxu0 0.0
    %2681 = vmatprep.subr.mxu0 0.0
    %2682 = vmatpush1.msra.mxu0 0.0
    %2683 = vmatprep.subr.mxu0 0.0
    %2684 = vmatpush1.msra.mxu0 0.0
    %2685 = vmatprep.subr.mxu0 0.0
    %2686 = vmatpush1.msra.mxu0 0.0
    %2687 = vmatprep.subr.mxu0 0.0
    %2688 = vmatpush1.msra.mxu0 0.0
    %2689 = vmatprep.mubr.f32.mxu0 0.0
    %2690 = vmatmul.mubr.f32.gmra.mrb[0].mxu0 %v2613
    %v2691 = vpop.f32.mrb[0].mxu0
    %v2692 = vadd.f32 0.0, %v2691
    %v2693 = vpop.f32.mrb[0].mxu0
    %2694 = vmatprep.mubr.f32.mxu0 0.0
    %2695 = vmatmul.mubr.f32.gmra.mrb[0].mxu0 %v2615
    %v2696 = vpop.f32.mrb[0].mxu0
    %v2697 = vadd.f32 0.0, %v2696
    %v2698 = vpop.f32.mrb[0].mxu0
    %2699 = vmatprep.mubr.f32.mxu0 0.0
    %2700 = vmatmul.mubr.f32.gmra.mrb[0].mxu0 %v2617
    %v2701 = vpop.f32.mrb[0].mxu0
    %v2702 = vadd.f32 0.0, %v2701
    %v2703 = vpop.f32.mrb[0].mxu0
    %2704 = vmatprep.mubr.f32.mxu0 0.0
    %2705 = vmatmul.mubr.f32.gmra.mrb[0].mxu0 %v2619
    %v2706 = vpop.f32.mrb[0].mxu0
    %v2707 = vadd.f32 0.0, %v2706
    %v2708 = vpop.f32.mrb[0].mxu0
    %2709 = vmatprep.mubr.f32.mxu0 0.0
    %2710 = vmatmul.mubr.f32.gmra.mrb[0].mxu0 %v2621
    %v2711 = vpop.f32.mrb[0].mxu0
    %v2712 = vadd.f32 0.0, %v2711
    %v2713 = vpop.f32.mrb[0].mxu0
    %2714 = vmatprep.mubr.f32.mxu0 0.0
    %2715 = vmatmul.mubr.f32.gmra.mrb[0].mxu0 %v2623
    %v2716 = vpop.f32.mrb[0].mxu0
    %v2717 = vadd.f32 0.0, %v2716
    %v2718 = vpop.f32.mrb[0].mxu0
    %2719 = vdwg.mxu0
    %v2726 = vcombine.high %v2692, %v2692
    %v2728 = vunpack.c.l.s4 1983009808
    %v2729 = vunpack.c.0.s8 %v2728
    %v2730 = vlaneseq
    %v2731 = vshrl.u32 %v2730, 7
    %v2732 = vsub.s32 %v2729, %v2731
    %v2733 = vrot.slane %v2692, %v2732
    %v2735 = vunpack.c.l.s4 1983009808
    %v2736 = vunpack.c.0.s8 %v2735
    %v2737 = vlaneseq
    %v2738 = vshrl.u32 %v2737, 7
    %v2739 = vsub.s32 %v2736, %v2738
    %v2740 = vrot.slane %v2726, %v2739
    %v2741 = vcombine.high %v2733, %v2733
    %v2742 = vcombine.high %v2740, %v2740
    %v2743 = vcombine.high %v2697, %v2697
    %v2745 = vunpack.c.l.s4 1983009808
    %v2746 = vunpack.c.0.s8 %v2745
    %v2747 = vlaneseq
    %v2748 = vshrl.u32 %v2747, 7
    %v2749 = vsub.s32 %v2746, %v2748
    %v2750 = vrot.slane %v2697, %v2749
    %v2752 = vunpack.c.l.s4 1983009808
    %v2753 = vunpack.c.0.s8 %v2752
    %v2754 = vlaneseq
    %v2755 = vshrl.u32 %v2754, 7
    %v2756 = vsub.s32 %v2753, %v2755
    %v2757 = vrot.slane %v2743, %v2756
    %v2758 = vcombine.high %v2750, %v2750
    %v2759 = vcombine.high %v2757, %v2757
    %v2760 = vcombine.high %v2702, %v2702
    %v2762 = vunpack.c.l.s4 1983009808
    %v2763 = vunpack.c.0.s8 %v2762
    %v2764 = vlaneseq
    %v2765 = vshrl.u32 %v2764, 7
    %v2766 = vsub.s32 %v2763, %v2765
    %v2767 = vrot.slane %v2702, %v2766
    %v2769 = vunpack.c.l.s4 1983009808
    %v2770 = vunpack.c.0.s8 %v2769
    %v2771 = vlaneseq
    %v2772 = vshrl.u32 %v2771, 7
    %v2773 = vsub.s32 %v2770, %v2772
    %v2774 = vrot.slane %v2760, %v2773
    %v2775 = vcombine.high %v2767, %v2767
    %v2776 = vcombine.high %v2774, %v2774
    %v2777 = vcombine.high %v2707, %v2707
    %v2779 = vunpack.c.l.s4 1983009808
    %v2780 = vunpack.c.0.s8 %v2779
    %v2781 = vlaneseq
    %v2782 = vshrl.u32 %v2781, 7
    %v2783 = vsub.s32 %v2780, %v2782
    %v2784 = vrot.slane %v2707, %v2783
    %v2786 = vunpack.c.l.s4 1983009808
    %v2787 = vunpack.c.0.s8 %v2786
    %v2788 = vlaneseq
    %v2789 = vshrl.u32 %v2788, 7
    %v2790 = vsub.s32 %v2787, %v2789
    %v2791 = vrot.slane %v2777, %v2790
    %v2792 = vcombine.high %v2784, %v2784
    %v2793 = vcombine.high %v2791, %v2791
    %v2794 = vcombine.high %v2712, %v2712
    %v2796 = vunpack.c.l.s4 1983009808
    %v2797 = vunpack.c.0.s8 %v2796
    %v2798 = vlaneseq
    %v2799 = vshrl.u32 %v2798, 7
    %v2800 = vsub.s32 %v2797, %v2799
    %v2801 = vrot.slane %v2712, %v2800
    %v2803 = vunpack.c.l.s4 1983009808
    %v2804 = vunpack.c.0.s8 %v2803
    %v2805 = vlaneseq
    %v2806 = vshrl.u32 %v2805, 7
    %v2807 = vsub.s32 %v2804, %v2806
    %v2808 = vrot.slane %v2794, %v2807
    %v2809 = vcombine.high %v2801, %v2801
    %v2810 = vcombine.high %v2808, %v2808
    %v2811 = vcombine.high %v2717, %v2717
    %v2813 = vunpack.c.l.s4 1983009808
    %v2814 = vunpack.c.0.s8 %v2813
    %v2815 = vlaneseq
    %v2816 = vshrl.u32 %v2815, 7
    %v2817 = vsub.s32 %v2814, %v2816
    %v2818 = vrot.slane %v2717, %v2817
    %v2820 = vunpack.c.l.s4 1983009808
    %v2821 = vunpack.c.0.s8 %v2820
    %v2822 = vlaneseq
    %v2823 = vshrl.u32 %v2822, 7
    %v2824 = vsub.s32 %v2821, %v2823
    %v2825 = vrot.slane %v2811, %v2824
    %v2826 = vcombine.high %v2818, %v2818
    %v2827 = vcombine.high %v2825, %v2825
    %v2852 = vmul.f32 %v37, %v37
    %v2853 = vmul.f32 %v38, %v38
    %v2854 = vmul.f32 %v39, %v39
    %v2855 = vmul.f32 %v40, %v40
    %v2856 = vmul.f32 %v41, %v41
    %v2857 = vmul.f32 %v42, %v42
    %v2858 = vmul.f32 %v43, %v43
    %v2859 = vmul.f32 %v44, %v44
    %v2860 = vmul.f32 %v45, %v45
    %v2861 = vmul.f32 %v46, %v46
    %v2862 = vmul.f32 %v47, %v47
    %v2863 = vmul.f32 %v48, %v48
    %v2864 = vmul.f32 %v49, %v49
    %v2865 = vmul.f32 %v50, %v50
    %v2866 = vmul.f32 %v51, %v51
    %v2867 = vmul.f32 %v52, %v52
    %v2869 = vsel %vm57, %v2852, 0
    %v2872 = vsel %vm57, %v2853, 0
    %v2875 = vsel %vm57, %v2854, 0
    %v2878 = vsel %vm57, %v2855, 0
    %v2881 = vsel %vm57, %v2856, 0
    %v2884 = vsel %vm57, %v2857, 0
    %v2887 = vsel %vm57, %v2858, 0
    %v2890 = vsel %vm57, %v2859, 0
    %v2893 = vsel %vm57, %v2860, 0
    %v2896 = vsel %vm57, %v2861, 0
    %v2899 = vsel %vm57, %v2862, 0
    %v2902 = vsel %vm57, %v2863, 0
    %v2905 = vsel %vm57, %v2864, 0
    %v2908 = vsel %vm57, %v2865, 0
    %v2911 = vsel %vm57, %v2866, 0
    %v2914 = vsel %vm57, %v2867, 0
    %2916 = vmatprep.subr.mxu0 0.0
    %2917 = vmatpush1.msra.mxu0 %v53
    %2918 = vmatprep.subr.mxu0 0.0
    %2919 = vmatpush1.msra.mxu0 %v54
    %2920 = vmatprep.subr.mxu0 0.0
    %2921 = vmatpush1.msra.mxu0 0.0
    %2922 = vmatprep.subr.mxu0 0.0
    %2923 = vmatpush1.msra.mxu0 0.0
    %2924 = vmatprep.subr.mxu0 0.0
    %2925 = vmatpush1.msra.mxu0 0.0
    %2926 = vmatprep.subr.mxu0 0.0
    %2927 = vmatpush1.msra.mxu0 0.0
    %2928 = vmatprep.subr.mxu0 0.0
    %2929 = vmatpush1.msra.mxu0 0.0
    %2930 = vmatprep.subr.mxu0 0.0
    %2931 = vmatpush1.msra.mxu0 0.0
    %2932 = vmatprep.subr.mxu0 0.0
    %2933 = vmatpush1.msra.mxu0 0.0
    %2934 = vmatprep.subr.mxu0 0.0
    %2935 = vmatpush1.msra.mxu0 0.0
    %2936 = vmatprep.subr.mxu0 0.0
    %2937 = vmatpush1.msra.mxu0 0.0
    %2938 = vmatprep.subr.mxu0 0.0
    %2939 = vmatpush1.msra.mxu0 0.0
    %2940 = vmatprep.subr.mxu0 0.0
    %2941 = vmatpush1.msra.mxu0 0.0
    %2942 = vmatprep.subr.mxu0 0.0
    %2943 = vmatpush1.msra.mxu0 0.0
    %2944 = vmatprep.subr.mxu0 0.0
    %2945 = vmatpush1.msra.mxu0 0.0
    %2946 = vmatprep.subr.mxu0 0.0
    %2947 = vmatpush1.msra.mxu0 0.0
    %2948 = vmatprep.subr.mxu0 0.0
    %2949 = vmatpush1.msra.mxu0 0.0
    %2950 = vmatprep.subr.mxu0 0.0
    %2951 = vmatpush1.msra.mxu0 0.0
    %2952 = vmatprep.subr.mxu0 0.0
    %2953 = vmatpush1.msra.mxu0 0.0
    %2954 = vmatprep.subr.mxu0 0.0
    %2955 = vmatpush1.msra.mxu0 0.0
    %2956 = vmatprep.subr.mxu0 0.0
    %2957 = vmatpush1.msra.mxu0 0.0
    %2958 = vmatprep.subr.mxu0 0.0
    %2959 = vmatpush1.msra.mxu0 0.0
    %2960 = vmatprep.subr.mxu0 0.0
    %2961 = vmatpush1.msra.mxu0 0.0
    %2962 = vmatprep.subr.mxu0 0.0
    %2963 = vmatpush1.msra.mxu0 0.0
    %2964 = vmatprep.subr.mxu0 0.0
    %2965 = vmatpush1.msra.mxu0 0.0
    %2966 = vmatprep.subr.mxu0 0.0
    %2967 = vmatpush1.msra.mxu0 0.0
    %2968 = vmatprep.subr.mxu0 0.0
    %2969 = vmatpush1.msra.mxu0 0.0
    %2970 = vmatprep.subr.mxu0 0.0
    %2971 = vmatpush1.msra.mxu0 0.0
    %2972 = vmatprep.subr.mxu0 0.0
    %2973 = vmatpush1.msra.mxu0 0.0
    %2974 = vmatprep.subr.mxu0 0.0
    %2975 = vmatpush1.msra.mxu0 0.0
    %2976 = vmatprep.subr.mxu0 0.0
    %2977 = vmatpush1.msra.mxu0 0.0
    %2978 = vmatprep.subr.mxu0 0.0
    %2979 = vmatpush1.msra.mxu0 0.0
    %2980 = vmatprep.mubr.f32.mxu0 0.0
    %2981 = vmatmul.mubr.f32.gmra.mrb[0].mxu0 %v2869
    %v2982 = vpop.f32.mrb[0].mxu0
    %v2983 = vadd.f32 0.0, %v2982
    %v2984 = vpop.f32.mrb[0].mxu0
    %2985 = vmatprep.mubr.f32.mxu0 0.0
    %2986 = vmatmul.mubr.f32.gmra.mrb[0].mxu0 %v2872
    %v2987 = vpop.f32.mrb[0].mxu0
    %v2988 = vadd.f32 0.0, %v2987
    %v2989 = vpop.f32.mrb[0].mxu0
    %2990 = vmatprep.mubr.f32.mxu0 0.0
    %2991 = vmatmul.mubr.f32.gmra.mrb[0].mxu0 %v2875
    %v2992 = vpop.f32.mrb[0].mxu0
    %v2993 = vadd.f32 0.0, %v2992
    %v2994 = vpop.f32.mrb[0].mxu0
    %2995 = vmatprep.mubr.f32.mxu0 0.0
    %2996 = vmatmul.mubr.f32.gmra.mrb[0].mxu0 %v2878
    %v2997 = vpop.f32.mrb[0].mxu0
    %v2998 = vadd.f32 0.0, %v2997
    %v2999 = vpop.f32.mrb[0].mxu0
    %3000 = vmatprep.mubr.f32.mxu0 0.0
    %3001 = vmatmul.mubr.f32.gmra.mrb[0].mxu0 %v2881
    %v3002 = vpop.f32.mrb[0].mxu0
    %v3003 = vadd.f32 0.0, %v3002
    %v3004 = vpop.f32.mrb[0].mxu0
    %3005 = vmatprep.mubr.f32.mxu0 0.0
    %3006 = vmatmul.mubr.f32.gmra.mrb[0].mxu0 %v2884
    %v3007 = vpop.f32.mrb[0].mxu0
    %v3008 = vadd.f32 0.0, %v3007
    %v3009 = vpop.f32.mrb[0].mxu0
    %3010 = vmatprep.mubr.f32.mxu0 0.0
    %3011 = vmatmul.mubr.f32.gmra.mrb[0].mxu0 %v2887
    %v3012 = vpop.f32.mrb[0].mxu0
    %v3013 = vadd.f32 0.0, %v3012
    %v3014 = vpop.f32.mrb[0].mxu0
    %3015 = vmatprep.mubr.f32.mxu0 0.0
    %3016 = vmatmul.mubr.f32.gmra.mrb[0].mxu0 %v2890
    %v3017 = vpop.f32.mrb[0].mxu0
    %v3018 = vadd.f32 0.0, %v3017
    %v3019 = vpop.f32.mrb[0].mxu0
    %3020 = vmatprep.mubr.f32.mxu0 0.0
    %3021 = vmatmul.mubr.f32.gmra.mrb[0].mxu0 %v2893
    %v3022 = vpop.f32.mrb[0].mxu0
    %v3023 = vadd.f32 0.0, %v3022
    %v3024 = vpop.f32.mrb[0].mxu0
    %3025 = vmatprep.mubr.f32.mxu0 0.0
    %3026 = vmatmul.mubr.f32.gmra.mrb[0].mxu0 %v2896
    %v3027 = vpop.f32.mrb[0].mxu0
    %v3028 = vadd.f32 0.0, %v3027
    %v3029 = vpop.f32.mrb[0].mxu0
    %3030 = vmatprep.mubr.f32.mxu0 0.0
    %3031 = vmatmul.mubr.f32.gmra.mrb[0].mxu0 %v2899
    %v3032 = vpop.f32.mrb[0].mxu0
    %v3033 = vadd.f32 0.0, %v3032
    %v3034 = vpop.f32.mrb[0].mxu0
    %3035 = vmatprep.mubr.f32.mxu0 0.0
    %3036 = vmatmul.mubr.f32.gmra.mrb[0].mxu0 %v2902
    %v3037 = vpop.f32.mrb[0].mxu0
    %v3038 = vadd.f32 0.0, %v3037
    %v3039 = vpop.f32.mrb[0].mxu0
    %3040 = vmatprep.mubr.f32.mxu0 0.0
    %3041 = vmatmul.mubr.f32.gmra.mrb[0].mxu0 %v2905
    %v3042 = vpop.f32.mrb[0].mxu0
    %v3043 = vadd.f32 0.0, %v3042
    %v3044 = vpop.f32.mrb[0].mxu0
    %3045 = vmatprep.mubr.f32.mxu0 0.0
    %3046 = vmatmul.mubr.f32.gmra.mrb[0].mxu0 %v2908
    %v3047 = vpop.f32.mrb[0].mxu0
    %v3048 = vadd.f32 0.0, %v3047
    %v3049 = vpop.f32.mrb[0].mxu0
    %3050 = vmatprep.mubr.f32.mxu0 0.0
    %3051 = vmatmul.mubr.f32.gmra.mrb[0].mxu0 %v2911
    %v3052 = vpop.f32.mrb[0].mxu0
    %v3053 = vadd.f32 0.0, %v3052
    %v3054 = vpop.f32.mrb[0].mxu0
    %3055 = vmatprep.mubr.f32.mxu0 0.0
    %3056 = vmatmul.mubr.f32.gmra.mrb[0].mxu0 %v2914
    %v3057 = vpop.f32.mrb[0].mxu0
    %v3058 = vadd.f32 0.0, %v3057
    %v3059 = vpop.f32.mrb[0].mxu0
    %3060 = vdwg.mxu0
    %3061 = vxpose.xlu0.b32.start [1/16] %v2983, 128
    %3062 = vxpose.xlu0.b32.cont [2/16] %v2988, 128
    %3063 = vxpose.xlu0.b32.cont [3/16] 0.0, 128
    %3064 = vxpose.xlu0.b32.cont [4/16] 0.0, 128
    %3065 = vxpose.xlu0.b32.cont [5/16] 0.0, 128
    %3066 = vxpose.xlu0.b32.cont [6/16] 0.0, 128
    %3067 = vxpose.xlu0.b32.cont [7/16] 0.0, 128
    %3068 = vxpose.xlu0.b32.cont [8/16] 0.0, 128
    %3069 = vxpose.xlu0.b32.cont [9/16] 0.0, 128
    %3070 = vxpose.xlu0.b32.cont [10/16] 0.0, 128
    %3071 = vxpose.xlu0.b32.cont [11/16] 0.0, 128
    %3072 = vxpose.xlu0.b32.cont [12/16] 0.0, 128
    %3073 = vxpose.xlu0.b32.cont [13/16] 0.0, 128
    %3074 = vxpose.xlu0.b32.cont [14/16] 0.0, 128
    %3075 = vxpose.xlu0.b32.cont [15/16] 0.0, 128
    %3076 = vxpose.xlu0.b32.end [16/16] 0.0, 128
    %v3077 = vpop.trf.xlu0
    %v3078 = vpop.trf.xlu0
    %v3079 = vpop.trf.xlu0
    %v3080 = vpop.trf.xlu0
    %v3081 = vpop.trf.xlu0
    %v3082 = vpop.trf.xlu0
    %v3083 = vpop.trf.xlu0
    %v3084 = vpop.trf.xlu0
    %v3085 = vpop.trf.xlu0
    %v3086 = vpop.trf.xlu0
    %v3087 = vpop.trf.xlu0
    %v3088 = vpop.trf.xlu0
    %v3089 = vpop.trf.xlu0
    %v3090 = vpop.trf.xlu0
    %v3091 = vpop.trf.xlu0
    %v3092 = vpop.trf.xlu0
    %3093 = vxpose.xlu0.b32.start [1/16] %v2993, 128
    %3094 = vxpose.xlu0.b32.cont [2/16] %v2998, 128
    %3095 = vxpose.xlu0.b32.cont [3/16] 0.0, 128
    %3096 = vxpose.xlu0.b32.cont [4/16] 0.0, 128
    %3097 = vxpose.xlu0.b32.cont [5/16] 0.0, 128
    %3098 = vxpose.xlu0.b32.cont [6/16] 0.0, 128
    %3099 = vxpose.xlu0.b32.cont [7/16] 0.0, 128
    %3100 = vxpose.xlu0.b32.cont [8/16] 0.0, 128
    %3101 = vxpose.xlu0.b32.cont [9/16] 0.0, 128
    %3102 = vxpose.xlu0.b32.cont [10/16] 0.0, 128
    %3103 = vxpose.xlu0.b32.cont [11/16] 0.0, 128
    %3104 = vxpose.xlu0.b32.cont [12/16] 0.0, 128
    %3105 = vxpose.xlu0.b32.cont [13/16] 0.0, 128
    %3106 = vxpose.xlu0.b32.cont [14/16] 0.0, 128
    %3107 = vxpose.xlu0.b32.cont [15/16] 0.0, 128
    %3108 = vxpose.xlu0.b32.end [16/16] 0.0, 128
    %v3109 = vpop.trf.xlu0
    %v3110 = vpop.trf.xlu0
    %v3111 = vpop.trf.xlu0
    %v3112 = vpop.trf.xlu0
    %v3113 = vpop.trf.xlu0
    %v3114 = vpop.trf.xlu0
    %v3115 = vpop.trf.xlu0
    %v3116 = vpop.trf.xlu0
    %v3117 = vpop.trf.xlu0
    %v3118 = vpop.trf.xlu0
    %v3119 = vpop.trf.xlu0
    %v3120 = vpop.trf.xlu0
    %v3121 = vpop.trf.xlu0
    %v3122 = vpop.trf.xlu0
    %v3123 = vpop.trf.xlu0
    %v3124 = vpop.trf.xlu0
    %3125 = vxpose.xlu0.b32.start [1/16] %v3003, 128
    %3126 = vxpose.xlu0.b32.cont [2/16] %v3008, 128
    %3127 = vxpose.xlu0.b32.cont [3/16] 0.0, 128
    %3128 = vxpose.xlu0.b32.cont [4/16] 0.0, 128
    %3129 = vxpose.xlu0.b32.cont [5/16] 0.0, 128
    %3130 = vxpose.xlu0.b32.cont [6/16] 0.0, 128
    %3131 = vxpose.xlu0.b32.cont [7/16] 0.0, 128
    %3132 = vxpose.xlu0.b32.cont [8/16] 0.0, 128
    %3133 = vxpose.xlu0.b32.cont [9/16] 0.0, 128
    %3134 = vxpose.xlu0.b32.cont [10/16] 0.0, 128
    %3135 = vxpose.xlu0.b32.cont [11/16] 0.0, 128
    %3136 = vxpose.xlu0.b32.cont [12/16] 0.0, 128
    %3137 = vxpose.xlu0.b32.cont [13/16] 0.0, 128
    %3138 = vxpose.xlu0.b32.cont [14/16] 0.0, 128
    %3139 = vxpose.xlu0.b32.cont [15/16] 0.0, 128
    %3140 = vxpose.xlu0.b32.end [16/16] 0.0, 128
    %v3141 = vpop.trf.xlu0
    %v3142 = vpop.trf.xlu0
    %v3143 = vpop.trf.xlu0
    %v3144 = vpop.trf.xlu0
    %v3145 = vpop.trf.xlu0
    %v3146 = vpop.trf.xlu0
    %v3147 = vpop.trf.xlu0
    %v3148 = vpop.trf.xlu0
    %v3149 = vpop.trf.xlu0
    %v3150 = vpop.trf.xlu0
    %v3151 = vpop.trf.xlu0
    %v3152 = vpop.trf.xlu0
    %v3153 = vpop.trf.xlu0
    %v3154 = vpop.trf.xlu0
    %v3155 = vpop.trf.xlu0
    %v3156 = vpop.trf.xlu0
    %3157 = vxpose.xlu0.b32.start [1/16] %v3013, 128
    %3158 = vxpose.xlu0.b32.cont [2/16] %v3018, 128
    %3159 = vxpose.xlu0.b32.cont [3/16] 0.0, 128
    %3160 = vxpose.xlu0.b32.cont [4/16] 0.0, 128
    %3161 = vxpose.xlu0.b32.cont [5/16] 0.0, 128
    %3162 = vxpose.xlu0.b32.cont [6/16] 0.0, 128
    %3163 = vxpose.xlu0.b32.cont [7/16] 0.0, 128
    %3164 = vxpose.xlu0.b32.cont [8/16] 0.0, 128
    %3165 = vxpose.xlu0.b32.cont [9/16] 0.0, 128
    %3166 = vxpose.xlu0.b32.cont [10/16] 0.0, 128
    %3167 = vxpose.xlu0.b32.cont [11/16] 0.0, 128
    %3168 = vxpose.xlu0.b32.cont [12/16] 0.0, 128
    %3169 = vxpose.xlu0.b32.cont [13/16] 0.0, 128
    %3170 = vxpose.xlu0.b32.cont [14/16] 0.0, 128
    %3171 = vxpose.xlu0.b32.cont [15/16] 0.0, 128
    %3172 = vxpose.xlu0.b32.end [16/16] 0.0, 128
    %v3173 = vpop.trf.xlu0
    %v3174 = vpop.trf.xlu0
    %v3175 = vpop.trf.xlu0
    %v3176 = vpop.trf.xlu0
    %v3177 = vpop.trf.xlu0
    %v3178 = vpop.trf.xlu0
    %v3179 = vpop.trf.xlu0
    %v3180 = vpop.trf.xlu0
    %v3181 = vpop.trf.xlu0
    %v3182 = vpop.trf.xlu0
    %v3183 = vpop.trf.xlu0
    %v3184 = vpop.trf.xlu0
    %v3185 = vpop.trf.xlu0
    %v3186 = vpop.trf.xlu0
    %v3187 = vpop.trf.xlu0
    %v3188 = vpop.trf.xlu0
    %3189 = vxpose.xlu0.b32.start [1/16] %v3023, 128
    %3190 = vxpose.xlu0.b32.cont [2/16] %v3028, 128
    %3191 = vxpose.xlu0.b32.cont [3/16] 0.0, 128
    %3192 = vxpose.xlu0.b32.cont [4/16] 0.0, 128
    %3193 = vxpose.xlu0.b32.cont [5/16] 0.0, 128
    %3194 = vxpose.xlu0.b32.cont [6/16] 0.0, 128
    %3195 = vxpose.xlu0.b32.cont [7/16] 0.0, 128
    %3196 = vxpose.xlu0.b32.cont [8/16] 0.0, 128
    %3197 = vxpose.xlu0.b32.cont [9/16] 0.0, 128
    %3198 = vxpose.xlu0.b32.cont [10/16] 0.0, 128
    %3199 = vxpose.xlu0.b32.cont [11/16] 0.0, 128
    %3200 = vxpose.xlu0.b32.cont [12/16] 0.0, 128
    %3201 = vxpose.xlu0.b32.cont [13/16] 0.0, 128
    %3202 = vxpose.xlu0.b32.cont [14/16] 0.0, 128
    %3203 = vxpose.xlu0.b32.cont [15/16] 0.0, 128
    %3204 = vxpose.xlu0.b32.end [16/16] 0.0, 128
    %v3205 = vpop.trf.xlu0
    %v3206 = vpop.trf.xlu0
    %v3207 = vpop.trf.xlu0
    %v3208 = vpop.trf.xlu0
    %v3209 = vpop.trf.xlu0
    %v3210 = vpop.trf.xlu0
    %v3211 = vpop.trf.xlu0
    %v3212 = vpop.trf.xlu0
    %v3213 = vpop.trf.xlu0
    %v3214 = vpop.trf.xlu0
    %v3215 = vpop.trf.xlu0
    %v3216 = vpop.trf.xlu0
    %v3217 = vpop.trf.xlu0
    %v3218 = vpop.trf.xlu0
    %v3219 = vpop.trf.xlu0
    %v3220 = vpop.trf.xlu0
    %3221 = vxpose.xlu0.b32.start [1/16] %v3033, 128
    %3222 = vxpose.xlu0.b32.cont [2/16] %v3038, 128
    %3223 = vxpose.xlu0.b32.cont [3/16] 0.0, 128
    %3224 = vxpose.xlu0.b32.cont [4/16] 0.0, 128
    %3225 = vxpose.xlu0.b32.cont [5/16] 0.0, 128
    %3226 = vxpose.xlu0.b32.cont [6/16] 0.0, 128
    %3227 = vxpose.xlu0.b32.cont [7/16] 0.0, 128
    %3228 = vxpose.xlu0.b32.cont [8/16] 0.0, 128
    %3229 = vxpose.xlu0.b32.cont [9/16] 0.0, 128
    %3230 = vxpose.xlu0.b32.cont [10/16] 0.0, 128
    %3231 = vxpose.xlu0.b32.cont [11/16] 0.0, 128
    %3232 = vxpose.xlu0.b32.cont [12/16] 0.0, 128
    %3233 = vxpose.xlu0.b32.cont [13/16] 0.0, 128
    %3234 = vxpose.xlu0.b32.cont [14/16] 0.0, 128
    %3235 = vxpose.xlu0.b32.cont [15/16] 0.0, 128
    %3236 = vxpose.xlu0.b32.end [16/16] 0.0, 128
    %v3237 = vpop.trf.xlu0
    %v3238 = vpop.trf.xlu0
    %v3239 = vpop.trf.xlu0
    %v3240 = vpop.trf.xlu0
    %v3241 = vpop.trf.xlu0
    %v3242 = vpop.trf.xlu0
    %v3243 = vpop.trf.xlu0
    %v3244 = vpop.trf.xlu0
    %v3245 = vpop.trf.xlu0
    %v3246 = vpop.trf.xlu0
    %v3247 = vpop.trf.xlu0
    %v3248 = vpop.trf.xlu0
    %v3249 = vpop.trf.xlu0
    %v3250 = vpop.trf.xlu0
    %v3251 = vpop.trf.xlu0
    %v3252 = vpop.trf.xlu0
    %3253 = vxpose.xlu0.b32.start [1/16] %v3043, 128
    %3254 = vxpose.xlu0.b32.cont [2/16] %v3048, 128
    %3255 = vxpose.xlu0.b32.cont [3/16] 0.0, 128
    %3256 = vxpose.xlu0.b32.cont [4/16] 0.0, 128
    %3257 = vxpose.xlu0.b32.cont [5/16] 0.0, 128
    %3258 = vxpose.xlu0.b32.cont [6/16] 0.0, 128
    %3259 = vxpose.xlu0.b32.cont [7/16] 0.0, 128
    %3260 = vxpose.xlu0.b32.cont [8/16] 0.0, 128
    %3261 = vxpose.xlu0.b32.cont [9/16] 0.0, 128
    %3262 = vxpose.xlu0.b32.cont [10/16] 0.0, 128
    %3263 = vxpose.xlu0.b32.cont [11/16] 0.0, 128
    %3264 = vxpose.xlu0.b32.cont [12/16] 0.0, 128
    %3265 = vxpose.xlu0.b32.cont [13/16] 0.0, 128
    %3266 = vxpose.xlu0.b32.cont [14/16] 0.0, 128
    %3267 = vxpose.xlu0.b32.cont [15/16] 0.0, 128
    %3268 = vxpose.xlu0.b32.end [16/16] 0.0, 128
    %v3269 = vpop.trf.xlu0
    %v3270 = vpop.trf.xlu0
    %v3271 = vpop.trf.xlu0
    %v3272 = vpop.trf.xlu0
    %v3273 = vpop.trf.xlu0
    %v3274 = vpop.trf.xlu0
    %v3275 = vpop.trf.xlu0
    %v3276 = vpop.trf.xlu0
    %v3277 = vpop.trf.xlu0
    %v3278 = vpop.trf.xlu0
    %v3279 = vpop.trf.xlu0
    %v3280 = vpop.trf.xlu0
    %v3281 = vpop.trf.xlu0
    %v3282 = vpop.trf.xlu0
    %v3283 = vpop.trf.xlu0
    %v3284 = vpop.trf.xlu0
    %3285 = vxpose.xlu0.b32.start [1/16] %v3053, 128
    %3286 = vxpose.xlu0.b32.cont [2/16] %v3058, 128
    %3287 = vxpose.xlu0.b32.cont [3/16] 0.0, 128
    %3288 = vxpose.xlu0.b32.cont [4/16] 0.0, 128
    %3289 = vxpose.xlu0.b32.cont [5/16] 0.0, 128
    %3290 = vxpose.xlu0.b32.cont [6/16] 0.0, 128
    %3291 = vxpose.xlu0.b32.cont [7/16] 0.0, 128
    %3292 = vxpose.xlu0.b32.cont [8/16] 0.0, 128
    %3293 = vxpose.xlu0.b32.cont [9/16] 0.0, 128
    %3294 = vxpose.xlu0.b32.cont [10/16] 0.0, 128
    %3295 = vxpose.xlu0.b32.cont [11/16] 0.0, 128
    %3296 = vxpose.xlu0.b32.cont [12/16] 0.0, 128
    %3297 = vxpose.xlu0.b32.cont [13/16] 0.0, 128
    %3298 = vxpose.xlu0.b32.cont [14/16] 0.0, 128
    %3299 = vxpose.xlu0.b32.cont [15/16] 0.0, 128
    %3300 = vxpose.xlu0.b32.end [16/16] 0.0, 128
    %v3301 = vpop.trf.xlu0
    %v3302 = vpop.trf.xlu0
    %v3303 = vpop.trf.xlu0
    %v3304 = vpop.trf.xlu0
    %v3305 = vpop.trf.xlu0
    %v3306 = vpop.trf.xlu0
    %v3307 = vpop.trf.xlu0
    %v3308 = vpop.trf.xlu0
    %v3309 = vpop.trf.xlu0
    %v3310 = vpop.trf.xlu0
    %v3311 = vpop.trf.xlu0
    %v3312 = vpop.trf.xlu0
    %v3313 = vpop.trf.xlu0
    %v3314 = vpop.trf.xlu0
    %v3315 = vpop.trf.xlu0
    %v3316 = vpop.trf.xlu0
    %v3325 = vcombine.high %v3077, %v3077
    %v3327 = vunpack.c.l.s4 1983009808
    %v3328 = vunpack.c.0.s8 %v3327
    %v3329 = vlaneseq
    %v3330 = vshrl.u32 %v3329, 7
    %v3331 = vsub.s32 %v3328, %v3330
    %v3332 = vrot.slane %v3077, %v3331
    %v3334 = vunpack.c.l.s4 1983009808
    %v3335 = vunpack.c.0.s8 %v3334
    %v3336 = vlaneseq
    %v3337 = vshrl.u32 %v3336, 7
    %v3338 = vsub.s32 %v3335, %v3337
    %v3339 = vrot.slane %v3325, %v3338
    %v3340 = vcombine.high %v3332, %v3332
    %v3341 = vcombine.high %v3109, %v3109
    %v3343 = vunpack.c.l.s4 1983009808
    %v3344 = vunpack.c.0.s8 %v3343
    %v3345 = vlaneseq
    %v3346 = vshrl.u32 %v3345, 7
    %v3347 = vsub.s32 %v3344, %v3346
    %v3348 = vrot.slane %v3109, %v3347
    %v3350 = vunpack.c.l.s4 1983009808
    %v3351 = vunpack.c.0.s8 %v3350
    %v3352 = vlaneseq
    %v3353 = vshrl.u32 %v3352, 7
    %v3354 = vsub.s32 %v3351, %v3353
    %v3355 = vrot.slane %v3341, %v3354
    %v3356 = vcombine.high %v3348, %v3348
    %v3357 = vcombine.high %v3141, %v3141
    %v3359 = vunpack.c.l.s4 1983009808
    %v3360 = vunpack.c.0.s8 %v3359
    %v3361 = vlaneseq
    %v3362 = vshrl.u32 %v3361, 7
    %v3363 = vsub.s32 %v3360, %v3362
    %v3364 = vrot.slane %v3141, %v3363
    %v3366 = vunpack.c.l.s4 1983009808
    %v3367 = vunpack.c.0.s8 %v3366
    %v3368 = vlaneseq
    %v3369 = vshrl.u32 %v3368, 7
    %v3370 = vsub.s32 %v3367, %v3369
    %v3371 = vrot.slane %v3357, %v3370
    %v3372 = vcombine.high %v3364, %v3364
    %v3373 = vcombine.high %v3173, %v3173
    %v3375 = vunpack.c.l.s4 1983009808
    %v3376 = vunpack.c.0.s8 %v3375
    %v3377 = vlaneseq
    %v3378 = vshrl.u32 %v3377, 7
    %v3379 = vsub.s32 %v3376, %v3378
    %v3380 = vrot.slane %v3173, %v3379
    %v3382 = vunpack.c.l.s4 1983009808
    %v3383 = vunpack.c.0.s8 %v3382
    %v3384 = vlaneseq
    %v3385 = vshrl.u32 %v3384, 7
    %v3386 = vsub.s32 %v3383, %v3385
    %v3387 = vrot.slane %v3373, %v3386
    %v3388 = vcombine.high %v3380, %v3380
    %v3389 = vcombine.high %v3205, %v3205
    %v3391 = vunpack.c.l.s4 1983009808
    %v3392 = vunpack.c.0.s8 %v3391
    %v3393 = vlaneseq
    %v3394 = vshrl.u32 %v3393, 7
    %v3395 = vsub.s32 %v3392, %v3394
    %v3396 = vrot.slane %v3205, %v3395
    %v3398 = vunpack.c.l.s4 1983009808
    %v3399 = vunpack.c.0.s8 %v3398
    %v3400 = vlaneseq
    %v3401 = vshrl.u32 %v3400, 7
    %v3402 = vsub.s32 %v3399, %v3401
    %v3403 = vrot.slane %v3389, %v3402
    %v3404 = vcombine.high %v3396, %v3396
    %v3405 = vcombine.high %v3237, %v3237
    %v3407 = vunpack.c.l.s4 1983009808
    %v3408 = vunpack.c.0.s8 %v3407
    %v3409 = vlaneseq
    %v3410 = vshrl.u32 %v3409, 7
    %v3411 = vsub.s32 %v3408, %v3410
    %v3412 = vrot.slane %v3237, %v3411
    %v3414 = vunpack.c.l.s4 1983009808
    %v3415 = vunpack.c.0.s8 %v3414
    %v3416 = vlaneseq
    %v3417 = vshrl.u32 %v3416, 7
    %v3418 = vsub.s32 %v3415, %v3417
    %v3419 = vrot.slane %v3405, %v3418
    %v3420 = vcombine.high %v3412, %v3412
    %v3421 = vcombine.high %v3269, %v3269
    %v3423 = vunpack.c.l.s4 1983009808
    %v3424 = vunpack.c.0.s8 %v3423
    %v3425 = vlaneseq
    %v3426 = vshrl.u32 %v3425, 7
    %v3427 = vsub.s32 %v3424, %v3426
    %v3428 = vrot.slane %v3269, %v3427
    %v3430 = vunpack.c.l.s4 1983009808
    %v3431 = vunpack.c.0.s8 %v3430
    %v3432 = vlaneseq
    %v3433 = vshrl.u32 %v3432, 7
    %v3434 = vsub.s32 %v3431, %v3433
    %v3435 = vrot.slane %v3421, %v3434
    %v3436 = vcombine.high %v3428, %v3428
    %v3437 = vcombine.high %v3301, %v3301
    %v3439 = vunpack.c.l.s4 1983009808
    %v3440 = vunpack.c.0.s8 %v3439
    %v3441 = vlaneseq
    %v3442 = vshrl.u32 %v3441, 7
    %v3443 = vsub.s32 %v3440, %v3442
    %v3444 = vrot.slane %v3301, %v3443
    %v3446 = vunpack.c.l.s4 1983009808
    %v3447 = vunpack.c.0.s8 %v3446
    %v3448 = vlaneseq
    %v3449 = vshrl.u32 %v3448, 7
    %v3450 = vsub.s32 %v3447, %v3449
    %v3451 = vrot.slane %v3437, %v3450
    %v3452 = vcombine.high %v3444, %v3444
    %v3453 = vcombine.low %v3332, %v3340
    %v3454 = vcombine.low %v3339, %v3348
    %v3456 = vunpack.c.l.s4 1983009808
    %v3457 = vunpack.c.0.s8 %v3456
    %v3458 = vlaneseq
    %v3459 = vshrl.u32 %v3458, 7
    %v3460 = vsub.s32 %v3457, %v3459
    %v3461 = vrot.slane %v3453, %v3460
    %v3463 = vunpack.c.l.s4 1983009808
    %v3464 = vunpack.c.0.s8 %v3463
    %v3465 = vlaneseq
    %v3466 = vshrl.u32 %v3465, 7
    %v3467 = vsub.s32 %v3464, %v3466
    %v3468 = vrot.slane %v3454, %v3467
    %v3469 = vcombine.low %v3461, %v3468
    %v3470 = vcombine.low %v3356, %v3355
    %v3471 = vcombine.low %v3364, %v3372
    %v3473 = vunpack.c.l.s4 1983009808
    %v3474 = vunpack.c.0.s8 %v3473
    %v3475 = vlaneseq
    %v3476 = vshrl.u32 %v3475, 7
    %v3477 = vsub.s32 %v3474, %v3476
    %v3478 = vrot.slane %v3470, %v3477
    %v3480 = vunpack.c.l.s4 1983009808
    %v3481 = vunpack.c.0.s8 %v3480
    %v3482 = vlaneseq
    %v3483 = vshrl.u32 %v3482, 7
    %v3484 = vsub.s32 %v3481, %v3483
    %v3485 = vrot.slane %v3471, %v3484
    %v3486 = vcombine.low %v3478, %v3485
    %v3487 = vcombine.low %v3371, %v3380
    %v3488 = vcombine.low %v3388, %v3387
    %v3490 = vunpack.c.l.s4 1983009808
    %v3491 = vunpack.c.0.s8 %v3490
    %v3492 = vlaneseq
    %v3493 = vshrl.u32 %v3492, 7
    %v3494 = vsub.s32 %v3491, %v3493
    %v3495 = vrot.slane %v3487, %v3494
    %v3497 = vunpack.c.l.s4 1983009808
    %v3498 = vunpack.c.0.s8 %v3497
    %v3499 = vlaneseq
    %v3500 = vshrl.u32 %v3499, 7
    %v3501 = vsub.s32 %v3498, %v3500
    %v3502 = vrot.slane %v3488, %v3501
    %v3503 = vcombine.low %v3495, %v3502
    %v3504 = vcombine.low %v3396, %v3404
    %v3505 = vcombine.low %v3403, %v3412
    %v3507 = vunpack.c.l.s4 1983009808
    %v3508 = vunpack.c.0.s8 %v3507
    %v3509 = vlaneseq
    %v3510 = vshrl.u32 %v3509, 7
    %v3511 = vsub.s32 %v3508, %v3510
    %v3512 = vrot.slane %v3504, %v3511
    %v3514 = vunpack.c.l.s4 1983009808
    %v3515 = vunpack.c.0.s8 %v3514
    %v3516 = vlaneseq
    %v3517 = vshrl.u32 %v3516, 7
    %v3518 = vsub.s32 %v3515, %v3517
    %v3519 = vrot.slane %v3505, %v3518
    %v3520 = vcombine.low %v3512, %v3519
    %v3521 = vcombine.low %v3420, %v3419
    %v3522 = vcombine.low %v3428, %v3436
    %v3524 = vunpack.c.l.s4 1983009808
    %v3525 = vunpack.c.0.s8 %v3524
    %v3526 = vlaneseq
    %v3527 = vshrl.u32 %v3526, 7
    %v3528 = vsub.s32 %v3525, %v3527
    %v3529 = vrot.slane %v3521, %v3528
    %v3531 = vunpack.c.l.s4 1983009808
    %v3532 = vunpack.c.0.s8 %v3531
    %v3533 = vlaneseq
    %v3534 = vshrl.u32 %v3533, 7
    %v3535 = vsub.s32 %v3532, %v3534
    %v3536 = vrot.slane %v3522, %v3535
    %v3537 = vcombine.low %v3529, %v3536
    %v3538 = vcombine.low %v3435, %v3444
    %v3539 = vcombine.low %v3452, %v3451
    %v3541 = vunpack.c.l.s4 1983009808
    %v3542 = vunpack.c.0.s8 %v3541
    %v3543 = vlaneseq
    %v3544 = vshrl.u32 %v3543, 7
    %v3545 = vsub.s32 %v3542, %v3544
    %v3546 = vrot.slane %v3538, %v3545
    %v3548 = vunpack.c.l.s4 1983009808
    %v3549 = vunpack.c.0.s8 %v3548
    %v3550 = vlaneseq
    %v3551 = vshrl.u32 %v3550, 7
    %v3552 = vsub.s32 %v3549, %v3551
    %v3553 = vrot.slane %v3539, %v3552
    %v3554 = vcombine.low %v3546, %v3553
    %v3555 = vsel %vm57, %v3469, 0
    %v3557 = vsel %vm57, %v3486, 0
    %v3559 = vsel %vm57, %v3503, 0
    %v3561 = vsel %vm57, %v3520, 0
    %v3563 = vsel %vm57, %v3537, 0
    %v3565 = vsel %vm57, %v3554, 0
    %3567 = vmatprep.subr.mxu0 0.0
    %3568 = vmatpush1.msra.mxu0 %v55
    %3569 = vmatprep.subr.mxu0 0.0
    %3570 = vmatpush1.msra.mxu0 %v56
    %3571 = vmatprep.subr.mxu0 0.0
    %3572 = vmatpush1.msra.mxu0 0.0
    %3573 = vmatprep.subr.mxu0 0.0
    %3574 = vmatpush1.msra.mxu0 0.0
    %3575 = vmatprep.subr.mxu0 0.0
    %3576 = vmatpush1.msra.mxu0 0.0
    %3577 = vmatprep.subr.mxu0 0.0
    %3578 = vmatpush1.msra.mxu0 0.0
    %3579 = vmatprep.subr.mxu0 0.0
    %3580 = vmatpush1.msra.mxu0 0.0
    %3581 = vmatprep.subr.mxu0 0.0
    %3582 = vmatpush1.msra.mxu0 0.0
    %3583 = vmatprep.subr.mxu0 0.0
    %3584 = vmatpush1.msra.mxu0 0.0
    %3585 = vmatprep.subr.mxu0 0.0
    %3586 = vmatpush1.msra.mxu0 0.0
    %3587 = vmatprep.subr.mxu0 0.0
    %3588 = vmatpush1.msra.mxu0 0.0
    %3589 = vmatprep.subr.mxu0 0.0
    %3590 = vmatpush1.msra.mxu0 0.0
    %3591 = vmatprep.subr.mxu0 0.0
    %3592 = vmatpush1.msra.mxu0 0.0
    %3593 = vmatprep.subr.mxu0 0.0
    %3594 = vmatpush1.msra.mxu0 0.0
    %3595 = vmatprep.subr.mxu0 0.0
    %3596 = vmatpush1.msra.mxu0 0.0
    %3597 = vmatprep.subr.mxu0 0.0
    %3598 = vmatpush1.msra.mxu0 0.0
    %3599 = vmatprep.subr.mxu0 0.0
    %3600 = vmatpush1.msra.mxu0 0.0
    %3601 = vmatprep.subr.mxu0 0.0
    %3602 = vmatpush1.msra.mxu0 0.0
    %3603 = vmatprep.subr.mxu0 0.0
    %3604 = vmatpush1.msra.mxu0 0.0
    %3605 = vmatprep.subr.mxu0 0.0
    %3606 = vmatpush1.msra.mxu0 0.0
    %3607 = vmatprep.subr.mxu0 0.0
    %3608 = vmatpush1.msra.mxu0 0.0
    %3609 = vmatprep.subr.mxu0 0.0
    %3610 = vmatpush1.msra.mxu0 0.0
    %3611 = vmatprep.subr.mxu0 0.0
    %3612 = vmatpush1.msra.mxu0 0.0
    %3613 = vmatprep.subr.mxu0 0.0
    %3614 = vmatpush1.msra.mxu0 0.0
    %3615 = vmatprep.subr.mxu0 0.0
    %3616 = vmatpush1.msra.mxu0 0.0
    %3617 = vmatprep.subr.mxu0 0.0
    %3618 = vmatpush1.msra.mxu0 0.0
    %3619 = vmatprep.subr.mxu0 0.0
    %3620 = vmatpush1.msra.mxu0 0.0
    %3621 = vmatprep.subr.mxu0 0.0
    %3622 = vmatpush1.msra.mxu0 0.0
    %3623 = vmatprep.subr.mxu0 0.0
    %3624 = vmatpush1.msra.mxu0 0.0
    %3625 = vmatprep.subr.mxu0 0.0
    %3626 = vmatpush1.msra.mxu0 0.0
    %3627 = vmatprep.subr.mxu0 0.0
    %3628 = vmatpush1.msra.mxu0 0.0
    %3629 = vmatprep.subr.mxu0 0.0
    %3630 = vmatpush1.msra.mxu0 0.0
    %3631 = vmatprep.mubr.f32.mxu0 0.0
    %3632 = vmatmul.mubr.f32.gmra.mrb[0].mxu0 %v3555
    %v3633 = vpop.f32.mrb[0].mxu0
    %v3634 = vadd.f32 0.0, %v3633
    %v3635 = vpop.f32.mrb[0].mxu0
    %3636 = vmatprep.mubr.f32.mxu0 0.0
    %3637 = vmatmul.mubr.f32.gmra.mrb[0].mxu0 %v3557
    %v3638 = vpop.f32.mrb[0].mxu0
    %v3639 = vadd.f32 0.0, %v3638
    %v3640 = vpop.f32.mrb[0].mxu0
    %3641 = vmatprep.mubr.f32.mxu0 0.0
    %3642 = vmatmul.mubr.f32.gmra.mrb[0].mxu0 %v3559
    %v3643 = vpop.f32.mrb[0].mxu0
    %v3644 = vadd.f32 0.0, %v3643
    %v3645 = vpop.f32.mrb[0].mxu0
    %3646 = vmatprep.mubr.f32.mxu0 0.0
    %3647 = vmatmul.mubr.f32.gmra.mrb[0].mxu0 %v3561
    %v3648 = vpop.f32.mrb[0].mxu0
    %v3649 = vadd.f32 0.0, %v3648
    %v3650 = vpop.f32.mrb[0].mxu0
    %3651 = vmatprep.mubr.f32.mxu0 0.0
    %3652 = vmatmul.mubr.f32.gmra.mrb[0].mxu0 %v3563
    %v3653 = vpop.f32.mrb[0].mxu0
    %v3654 = vadd.f32 0.0, %v3653
    %v3655 = vpop.f32.mrb[0].mxu0
    %3656 = vmatprep.mubr.f32.mxu0 0.0
    %3657 = vmatmul.mubr.f32.gmra.mrb[0].mxu0 %v3565
    %v3658 = vpop.f32.mrb[0].mxu0
    %v3659 = vadd.f32 0.0, %v3658
    %v3660 = vpop.f32.mrb[0].mxu0
    %3661 = vdwg.mxu0
    %v3668 = vcombine.high %v3634, %v3634
    %v3670 = vunpack.c.l.s4 1983009808
    %v3671 = vunpack.c.0.s8 %v3670
    %v3672 = vlaneseq
    %v3673 = vshrl.u32 %v3672, 7
    %v3674 = vsub.s32 %v3671, %v3673
    %v3675 = vrot.slane %v3634, %v3674
    %v3677 = vunpack.c.l.s4 1983009808
    %v3678 = vunpack.c.0.s8 %v3677
    %v3679 = vlaneseq
    %v3680 = vshrl.u32 %v3679, 7
    %v3681 = vsub.s32 %v3678, %v3680
    %v3682 = vrot.slane %v3668, %v3681
    %v3683 = vcombine.high %v3675, %v3675
    %v3684 = vcombine.high %v3682, %v3682
    %v3685 = vcombine.high %v3639, %v3639
    %v3687 = vunpack.c.l.s4 1983009808
    %v3688 = vunpack.c.0.s8 %v3687
    %v3689 = vlaneseq
    %v3690 = vshrl.u32 %v3689, 7
    %v3691 = vsub.s32 %v3688, %v3690
    %v3692 = vrot.slane %v3639, %v3691
    %v3694 = vunpack.c.l.s4 1983009808
    %v3695 = vunpack.c.0.s8 %v3694
    %v3696 = vlaneseq
    %v3697 = vshrl.u32 %v3696, 7
    %v3698 = vsub.s32 %v3695, %v3697
    %v3699 = vrot.slane %v3685, %v3698
    %v3700 = vcombine.high %v3692, %v3692
    %v3701 = vcombine.high %v3699, %v3699
    %v3702 = vcombine.high %v3644, %v3644
    %v3704 = vunpack.c.l.s4 1983009808
    %v3705 = vunpack.c.0.s8 %v3704
    %v3706 = vlaneseq
    %v3707 = vshrl.u32 %v3706, 7
    %v3708 = vsub.s32 %v3705, %v3707
    %v3709 = vrot.slane %v3644, %v3708
    %v3711 = vunpack.c.l.s4 1983009808
    %v3712 = vunpack.c.0.s8 %v3711
    %v3713 = vlaneseq
    %v3714 = vshrl.u32 %v3713, 7
    %v3715 = vsub.s32 %v3712, %v3714
    %v3716 = vrot.slane %v3702, %v3715
    %v3717 = vcombine.high %v3709, %v3709
    %v3718 = vcombine.high %v3716, %v3716
    %v3719 = vcombine.high %v3649, %v3649
    %v3721 = vunpack.c.l.s4 1983009808
    %v3722 = vunpack.c.0.s8 %v3721
    %v3723 = vlaneseq
    %v3724 = vshrl.u32 %v3723, 7
    %v3725 = vsub.s32 %v3722, %v3724
    %v3726 = vrot.slane %v3649, %v3725
    %v3728 = vunpack.c.l.s4 1983009808
    %v3729 = vunpack.c.0.s8 %v3728
    %v3730 = vlaneseq
    %v3731 = vshrl.u32 %v3730, 7
    %v3732 = vsub.s32 %v3729, %v3731
    %v3733 = vrot.slane %v3719, %v3732
    %v3734 = vcombine.high %v3726, %v3726
    %v3735 = vcombine.high %v3733, %v3733
    %v3736 = vcombine.high %v3654, %v3654
    %v3738 = vunpack.c.l.s4 1983009808
    %v3739 = vunpack.c.0.s8 %v3738
    %v3740 = vlaneseq
    %v3741 = vshrl.u32 %v3740, 7
    %v3742 = vsub.s32 %v3739, %v3741
    %v3743 = vrot.slane %v3654, %v3742
    %v3745 = vunpack.c.l.s4 1983009808
    %v3746 = vunpack.c.0.s8 %v3745
    %v3747 = vlaneseq
    %v3748 = vshrl.u32 %v3747, 7
    %v3749 = vsub.s32 %v3746, %v3748
    %v3750 = vrot.slane %v3736, %v3749
    %v3751 = vcombine.high %v3743, %v3743
    %v3752 = vcombine.high %v3750, %v3750
    %v3753 = vcombine.high %v3659, %v3659
    %v3755 = vunpack.c.l.s4 1983009808
    %v3756 = vunpack.c.0.s8 %v3755
    %v3757 = vlaneseq
    %v3758 = vshrl.u32 %v3757, 7
    %v3759 = vsub.s32 %v3756, %v3758
    %v3760 = vrot.slane %v3659, %v3759
    %v3762 = vunpack.c.l.s4 1983009808
    %v3763 = vunpack.c.0.s8 %v3762
    %v3764 = vlaneseq
    %v3765 = vshrl.u32 %v3764, 7
    %v3766 = vsub.s32 %v3763, %v3765
    %v3767 = vrot.slane %v3753, %v3766
    %v3768 = vcombine.high %v3760, %v3760
    %v3769 = vcombine.high %v3767, %v3767
    %v3794 = vmul.f32 %v21, %v37
    %v3795 = vmul.f32 %v22, %v38
    %v3796 = vmul.f32 %v23, %v39
    %v3797 = vmul.f32 %v24, %v40
    %v3798 = vmul.f32 %v25, %v41
    %v3799 = vmul.f32 %v26, %v42
    %v3800 = vmul.f32 %v27, %v43
    %v3801 = vmul.f32 %v28, %v44
    %v3802 = vmul.f32 %v29, %v45
    %v3803 = vmul.f32 %v30, %v46
    %v3804 = vmul.f32 %v31, %v47
    %v3805 = vmul.f32 %v32, %v48
    %v3806 = vmul.f32 %v33, %v49
    %v3807 = vmul.f32 %v34, %v50
    %v3808 = vmul.f32 %v35, %v51
    %v3809 = vmul.f32 %v36, %v52
    %v3811 = vsel %vm57, %v3794, 0
    %v3814 = vsel %vm57, %v3795, 0
    %v3817 = vsel %vm57, %v3796, 0
    %v3820 = vsel %vm57, %v3797, 0
    %v3823 = vsel %vm57, %v3798, 0
    %v3826 = vsel %vm57, %v3799, 0
    %v3829 = vsel %vm57, %v3800, 0
    %v3832 = vsel %vm57, %v3801, 0
    %v3835 = vsel %vm57, %v3802, 0
    %v3838 = vsel %vm57, %v3803, 0
    %v3841 = vsel %vm57, %v3804, 0
    %v3844 = vsel %vm57, %v3805, 0
    %v3847 = vsel %vm57, %v3806, 0
    %v3850 = vsel %vm57, %v3807, 0
    %v3853 = vsel %vm57, %v3808, 0
    %v3856 = vsel %vm57, %v3809, 0
    %3858 = vmatprep.subr.mxu0 0.0
    %3859 = vmatpush1.msra.mxu0 %v53
    %3860 = vmatprep.subr.mxu0 0.0
    %3861 = vmatpush1.msra.mxu0 %v54
    %3862 = vmatprep.subr.mxu0 0.0
    %3863 = vmatpush1.msra.mxu0 0.0
    %3864 = vmatprep.subr.mxu0 0.0
    %3865 = vmatpush1.msra.mxu0 0.0
    %3866 = vmatprep.subr.mxu0 0.0
    %3867 = vmatpush1.msra.mxu0 0.0
    %3868 = vmatprep.subr.mxu0 0.0
    %3869 = vmatpush1.msra.mxu0 0.0
    %3870 = vmatprep.subr.mxu0 0.0
    %3871 = vmatpush1.msra.mxu0 0.0
    %3872 = vmatprep.subr.mxu0 0.0
    %3873 = vmatpush1.msra.mxu0 0.0
    %3874 = vmatprep.subr.mxu0 0.0
    %3875 = vmatpush1.msra.mxu0 0.0
    %3876 = vmatprep.subr.mxu0 0.0
    %3877 = vmatpush1.msra.mxu0 0.0
    %3878 = vmatprep.subr.mxu0 0.0
    %3879 = vmatpush1.msra.mxu0 0.0
    %3880 = vmatprep.subr.mxu0 0.0
    %3881 = vmatpush1.msra.mxu0 0.0
    %3882 = vmatprep.subr.mxu0 0.0
    %3883 = vmatpush1.msra.mxu0 0.0
    %3884 = vmatprep.subr.mxu0 0.0
    %3885 = vmatpush1.msra.mxu0 0.0
    %3886 = vmatprep.subr.mxu0 0.0
    %3887 = vmatpush1.msra.mxu0 0.0
    %3888 = vmatprep.subr.mxu0 0.0
    %3889 = vmatpush1.msra.mxu0 0.0
    %3890 = vmatprep.subr.mxu0 0.0
    %3891 = vmatpush1.msra.mxu0 0.0
    %3892 = vmatprep.subr.mxu0 0.0
    %3893 = vmatpush1.msra.mxu0 0.0
    %3894 = vmatprep.subr.mxu0 0.0
    %3895 = vmatpush1.msra.mxu0 0.0
    %3896 = vmatprep.subr.mxu0 0.0
    %3897 = vmatpush1.msra.mxu0 0.0
    %3898 = vmatprep.subr.mxu0 0.0
    %3899 = vmatpush1.msra.mxu0 0.0
    %3900 = vmatprep.subr.mxu0 0.0
    %3901 = vmatpush1.msra.mxu0 0.0
    %3902 = vmatprep.subr.mxu0 0.0
    %3903 = vmatpush1.msra.mxu0 0.0
    %3904 = vmatprep.subr.mxu0 0.0
    %3905 = vmatpush1.msra.mxu0 0.0
    %3906 = vmatprep.subr.mxu0 0.0
    %3907 = vmatpush1.msra.mxu0 0.0
    %3908 = vmatprep.subr.mxu0 0.0
    %3909 = vmatpush1.msra.mxu0 0.0
    %3910 = vmatprep.subr.mxu0 0.0
    %3911 = vmatpush1.msra.mxu0 0.0
    %3912 = vmatprep.subr.mxu0 0.0
    %3913 = vmatpush1.msra.mxu0 0.0
    %3914 = vmatprep.subr.mxu0 0.0
    %3915 = vmatpush1.msra.mxu0 0.0
    %3916 = vmatprep.subr.mxu0 0.0
    %3917 = vmatpush1.msra.mxu0 0.0
    %3918 = vmatprep.subr.mxu0 0.0
    %3919 = vmatpush1.msra.mxu0 0.0
    %3920 = vmatprep.subr.mxu0 0.0
    %3921 = vmatpush1.msra.mxu0 0.0
    %3922 = vmatprep.mubr.f32.mxu0 0.0
    %3923 = vmatmul.mubr.f32.gmra.mrb[0].mxu0 %v3811
    %v3924 = vpop.f32.mrb[0].mxu0
    %v3925 = vadd.f32 0.0, %v3924
    %v3926 = vpop.f32.mrb[0].mxu0
    %3927 = vmatprep.mubr.f32.mxu0 0.0
    %3928 = vmatmul.mubr.f32.gmra.mrb[0].mxu0 %v3814
    %v3929 = vpop.f32.mrb[0].mxu0
    %v3930 = vadd.f32 0.0, %v3929
    %v3931 = vpop.f32.mrb[0].mxu0
    %3932 = vmatprep.mubr.f32.mxu0 0.0
    %3933 = vmatmul.mubr.f32.gmra.mrb[0].mxu0 %v3817
    %v3934 = vpop.f32.mrb[0].mxu0
    %v3935 = vadd.f32 0.0, %v3934
    %v3936 = vpop.f32.mrb[0].mxu0
    %3937 = vmatprep.mubr.f32.mxu0 0.0
    %3938 = vmatmul.mubr.f32.gmra.mrb[0].mxu0 %v3820
    %v3939 = vpop.f32.mrb[0].mxu0
    %v3940 = vadd.f32 0.0, %v3939
    %v3941 = vpop.f32.mrb[0].mxu0
    %3942 = vmatprep.mubr.f32.mxu0 0.0
    %3943 = vmatmul.mubr.f32.gmra.mrb[0].mxu0 %v3823
    %v3944 = vpop.f32.mrb[0].mxu0
    %v3945 = vadd.f32 0.0, %v3944
    %v3946 = vpop.f32.mrb[0].mxu0
    %3947 = vmatprep.mubr.f32.mxu0 0.0
    %3948 = vmatmul.mubr.f32.gmra.mrb[0].mxu0 %v3826
    %v3949 = vpop.f32.mrb[0].mxu0
    %v3950 = vadd.f32 0.0, %v3949
    %v3951 = vpop.f32.mrb[0].mxu0
    %3952 = vmatprep.mubr.f32.mxu0 0.0
    %3953 = vmatmul.mubr.f32.gmra.mrb[0].mxu0 %v3829
    %v3954 = vpop.f32.mrb[0].mxu0
    %v3955 = vadd.f32 0.0, %v3954
    %v3956 = vpop.f32.mrb[0].mxu0
    %3957 = vmatprep.mubr.f32.mxu0 0.0
    %3958 = vmatmul.mubr.f32.gmra.mrb[0].mxu0 %v3832
    %v3959 = vpop.f32.mrb[0].mxu0
    %v3960 = vadd.f32 0.0, %v3959
    %v3961 = vpop.f32.mrb[0].mxu0
    %3962 = vmatprep.mubr.f32.mxu0 0.0
    %3963 = vmatmul.mubr.f32.gmra.mrb[0].mxu0 %v3835
    %v3964 = vpop.f32.mrb[0].mxu0
    %v3965 = vadd.f32 0.0, %v3964
    %v3966 = vpop.f32.mrb[0].mxu0
    %3967 = vmatprep.mubr.f32.mxu0 0.0
    %3968 = vmatmul.mubr.f32.gmra.mrb[0].mxu0 %v3838
    %v3969 = vpop.f32.mrb[0].mxu0
    %v3970 = vadd.f32 0.0, %v3969
    %v3971 = vpop.f32.mrb[0].mxu0
    %3972 = vmatprep.mubr.f32.mxu0 0.0
    %3973 = vmatmul.mubr.f32.gmra.mrb[0].mxu0 %v3841
    %v3974 = vpop.f32.mrb[0].mxu0
    %v3975 = vadd.f32 0.0, %v3974
    %v3976 = vpop.f32.mrb[0].mxu0
    %3977 = vmatprep.mubr.f32.mxu0 0.0
    %3978 = vmatmul.mubr.f32.gmra.mrb[0].mxu0 %v3844
    %v3979 = vpop.f32.mrb[0].mxu0
    %v3980 = vadd.f32 0.0, %v3979
    %v3981 = vpop.f32.mrb[0].mxu0
    %3982 = vmatprep.mubr.f32.mxu0 0.0
    %3983 = vmatmul.mubr.f32.gmra.mrb[0].mxu0 %v3847
    %v3984 = vpop.f32.mrb[0].mxu0
    %v3985 = vadd.f32 0.0, %v3984
    %v3986 = vpop.f32.mrb[0].mxu0
    %3987 = vmatprep.mubr.f32.mxu0 0.0
    %3988 = vmatmul.mubr.f32.gmra.mrb[0].mxu0 %v3850
    %v3989 = vpop.f32.mrb[0].mxu0
    %v3990 = vadd.f32 0.0, %v3989
    %v3991 = vpop.f32.mrb[0].mxu0
    %3992 = vmatprep.mubr.f32.mxu0 0.0
    %3993 = vmatmul.mubr.f32.gmra.mrb[0].mxu0 %v3853
    %v3994 = vpop.f32.mrb[0].mxu0
    %v3995 = vadd.f32 0.0, %v3994
    %v3996 = vpop.f32.mrb[0].mxu0
    %3997 = vmatprep.mubr.f32.mxu0 0.0
    %3998 = vmatmul.mubr.f32.gmra.mrb[0].mxu0 %v3856
    %v3999 = vpop.f32.mrb[0].mxu0
    %v4000 = vadd.f32 0.0, %v3999
    %v4001 = vpop.f32.mrb[0].mxu0
    %4002 = vdwg.mxu0
    %4003 = vxpose.xlu0.b32.start [1/16] %v3925, 128
    %4004 = vxpose.xlu0.b32.cont [2/16] %v3930, 128
    %4005 = vxpose.xlu0.b32.cont [3/16] 0.0, 128
    %4006 = vxpose.xlu0.b32.cont [4/16] 0.0, 128
    %4007 = vxpose.xlu0.b32.cont [5/16] 0.0, 128
    %4008 = vxpose.xlu0.b32.cont [6/16] 0.0, 128
    %4009 = vxpose.xlu0.b32.cont [7/16] 0.0, 128
    %4010 = vxpose.xlu0.b32.cont [8/16] 0.0, 128
    %4011 = vxpose.xlu0.b32.cont [9/16] 0.0, 128
    %4012 = vxpose.xlu0.b32.cont [10/16] 0.0, 128
    %4013 = vxpose.xlu0.b32.cont [11/16] 0.0, 128
    %4014 = vxpose.xlu0.b32.cont [12/16] 0.0, 128
    %4015 = vxpose.xlu0.b32.cont [13/16] 0.0, 128
    %4016 = vxpose.xlu0.b32.cont [14/16] 0.0, 128
    %4017 = vxpose.xlu0.b32.cont [15/16] 0.0, 128
    %4018 = vxpose.xlu0.b32.end [16/16] 0.0, 128
    %v4019 = vpop.trf.xlu0
    %v4020 = vpop.trf.xlu0
    %v4021 = vpop.trf.xlu0
    %v4022 = vpop.trf.xlu0
    %v4023 = vpop.trf.xlu0
    %v4024 = vpop.trf.xlu0
    %v4025 = vpop.trf.xlu0
    %v4026 = vpop.trf.xlu0
    %v4027 = vpop.trf.xlu0
    %v4028 = vpop.trf.xlu0
    %v4029 = vpop.trf.xlu0
    %v4030 = vpop.trf.xlu0
    %v4031 = vpop.trf.xlu0
    %v4032 = vpop.trf.xlu0
    %v4033 = vpop.trf.xlu0
    %v4034 = vpop.trf.xlu0
    %4035 = vxpose.xlu0.b32.start [1/16] %v3935, 128
    %4036 = vxpose.xlu0.b32.cont [2/16] %v3940, 128
    %4037 = vxpose.xlu0.b32.cont [3/16] 0.0, 128
    %4038 = vxpose.xlu0.b32.cont [4/16] 0.0, 128
    %4039 = vxpose.xlu0.b32.cont [5/16] 0.0, 128
    %4040 = vxpose.xlu0.b32.cont [6/16] 0.0, 128
    %4041 = vxpose.xlu0.b32.cont [7/16] 0.0, 128
    %4042 = vxpose.xlu0.b32.cont [8/16] 0.0, 128
    %4043 = vxpose.xlu0.b32.cont [9/16] 0.0, 128
    %4044 = vxpose.xlu0.b32.cont [10/16] 0.0, 128
    %4045 = vxpose.xlu0.b32.cont [11/16] 0.0, 128
    %4046 = vxpose.xlu0.b32.cont [12/16] 0.0, 128
    %4047 = vxpose.xlu0.b32.cont [13/16] 0.0, 128
    %4048 = vxpose.xlu0.b32.cont [14/16] 0.0, 128
    %4049 = vxpose.xlu0.b32.cont [15/16] 0.0, 128
    %4050 = vxpose.xlu0.b32.end [16/16] 0.0, 128
    %v4051 = vpop.trf.xlu0
    %v4052 = vpop.trf.xlu0
    %v4053 = vpop.trf.xlu0
    %v4054 = vpop.trf.xlu0
    %v4055 = vpop.trf.xlu0
    %v4056 = vpop.trf.xlu0
    %v4057 = vpop.trf.xlu0
    %v4058 = vpop.trf.xlu0
    %v4059 = vpop.trf.xlu0
    %v4060 = vpop.trf.xlu0
    %v4061 = vpop.trf.xlu0
    %v4062 = vpop.trf.xlu0
    %v4063 = vpop.trf.xlu0
    %v4064 = vpop.trf.xlu0
    %v4065 = vpop.trf.xlu0
    %v4066 = vpop.trf.xlu0
    %4067 = vxpose.xlu0.b32.start [1/16] %v3945, 128
    %4068 = vxpose.xlu0.b32.cont [2/16] %v3950, 128
    %4069 = vxpose.xlu0.b32.cont [3/16] 0.0, 128
    %4070 = vxpose.xlu0.b32.cont [4/16] 0.0, 128
    %4071 = vxpose.xlu0.b32.cont [5/16] 0.0, 128
    %4072 = vxpose.xlu0.b32.cont [6/16] 0.0, 128
    %4073 = vxpose.xlu0.b32.cont [7/16] 0.0, 128
    %4074 = vxpose.xlu0.b32.cont [8/16] 0.0, 128
    %4075 = vxpose.xlu0.b32.cont [9/16] 0.0, 128
    %4076 = vxpose.xlu0.b32.cont [10/16] 0.0, 128
    %4077 = vxpose.xlu0.b32.cont [11/16] 0.0, 128
    %4078 = vxpose.xlu0.b32.cont [12/16] 0.0, 128
    %4079 = vxpose.xlu0.b32.cont [13/16] 0.0, 128
    %4080 = vxpose.xlu0.b32.cont [14/16] 0.0, 128
    %4081 = vxpose.xlu0.b32.cont [15/16] 0.0, 128
    %4082 = vxpose.xlu0.b32.end [16/16] 0.0, 128
    %v4083 = vpop.trf.xlu0
    %v4084 = vpop.trf.xlu0
    %v4085 = vpop.trf.xlu0
    %v4086 = vpop.trf.xlu0
    %v4087 = vpop.trf.xlu0
    %v4088 = vpop.trf.xlu0
    %v4089 = vpop.trf.xlu0
    %v4090 = vpop.trf.xlu0
    %v4091 = vpop.trf.xlu0
    %v4092 = vpop.trf.xlu0
    %v4093 = vpop.trf.xlu0
    %v4094 = vpop.trf.xlu0
    %v4095 = vpop.trf.xlu0
    %v4096 = vpop.trf.xlu0
    %v4097 = vpop.trf.xlu0
    %v4098 = vpop.trf.xlu0
    %4099 = vxpose.xlu0.b32.start [1/16] %v3955, 128
    %4100 = vxpose.xlu0.b32.cont [2/16] %v3960, 128
    %4101 = vxpose.xlu0.b32.cont [3/16] 0.0, 128
    %4102 = vxpose.xlu0.b32.cont [4/16] 0.0, 128
    %4103 = vxpose.xlu0.b32.cont [5/16] 0.0, 128
    %4104 = vxpose.xlu0.b32.cont [6/16] 0.0, 128
    %4105 = vxpose.xlu0.b32.cont [7/16] 0.0, 128
    %4106 = vxpose.xlu0.b32.cont [8/16] 0.0, 128
    %4107 = vxpose.xlu0.b32.cont [9/16] 0.0, 128
    %4108 = vxpose.xlu0.b32.cont [10/16] 0.0, 128
    %4109 = vxpose.xlu0.b32.cont [11/16] 0.0, 128
    %4110 = vxpose.xlu0.b32.cont [12/16] 0.0, 128
    %4111 = vxpose.xlu0.b32.cont [13/16] 0.0, 128
    %4112 = vxpose.xlu0.b32.cont [14/16] 0.0, 128
    %4113 = vxpose.xlu0.b32.cont [15/16] 0.0, 128
    %4114 = vxpose.xlu0.b32.end [16/16] 0.0, 128
    %v4115 = vpop.trf.xlu0
    %v4116 = vpop.trf.xlu0
    %v4117 = vpop.trf.xlu0
    %v4118 = vpop.trf.xlu0
    %v4119 = vpop.trf.xlu0
    %v4120 = vpop.trf.xlu0
    %v4121 = vpop.trf.xlu0
    %v4122 = vpop.trf.xlu0
    %v4123 = vpop.trf.xlu0
    %v4124 = vpop.trf.xlu0
    %v4125 = vpop.trf.xlu0
    %v4126 = vpop.trf.xlu0
    %v4127 = vpop.trf.xlu0
    %v4128 = vpop.trf.xlu0
    %v4129 = vpop.trf.xlu0
    %v4130 = vpop.trf.xlu0
    %4131 = vxpose.xlu0.b32.start [1/16] %v3965, 128
    %4132 = vxpose.xlu0.b32.cont [2/16] %v3970, 128
    %4133 = vxpose.xlu0.b32.cont [3/16] 0.0, 128
    %4134 = vxpose.xlu0.b32.cont [4/16] 0.0, 128
    %4135 = vxpose.xlu0.b32.cont [5/16] 0.0, 128
    %4136 = vxpose.xlu0.b32.cont [6/16] 0.0, 128
    %4137 = vxpose.xlu0.b32.cont [7/16] 0.0, 128
    %4138 = vxpose.xlu0.b32.cont [8/16] 0.0, 128
    %4139 = vxpose.xlu0.b32.cont [9/16] 0.0, 128
    %4140 = vxpose.xlu0.b32.cont [10/16] 0.0, 128
    %4141 = vxpose.xlu0.b32.cont [11/16] 0.0, 128
    %4142 = vxpose.xlu0.b32.cont [12/16] 0.0, 128
    %4143 = vxpose.xlu0.b32.cont [13/16] 0.0, 128
    %4144 = vxpose.xlu0.b32.cont [14/16] 0.0, 128
    %4145 = vxpose.xlu0.b32.cont [15/16] 0.0, 128
    %4146 = vxpose.xlu0.b32.end [16/16] 0.0, 128
    %v4147 = vpop.trf.xlu0
    %v4148 = vpop.trf.xlu0
    %v4149 = vpop.trf.xlu0
    %v4150 = vpop.trf.xlu0
    %v4151 = vpop.trf.xlu0
    %v4152 = vpop.trf.xlu0
    %v4153 = vpop.trf.xlu0
    %v4154 = vpop.trf.xlu0
    %v4155 = vpop.trf.xlu0
    %v4156 = vpop.trf.xlu0
    %v4157 = vpop.trf.xlu0
    %v4158 = vpop.trf.xlu0
    %v4159 = vpop.trf.xlu0
    %v4160 = vpop.trf.xlu0
    %v4161 = vpop.trf.xlu0
    %v4162 = vpop.trf.xlu0
    %4163 = vxpose.xlu0.b32.start [1/16] %v3975, 128
    %4164 = vxpose.xlu0.b32.cont [2/16] %v3980, 128
    %4165 = vxpose.xlu0.b32.cont [3/16] 0.0, 128
    %4166 = vxpose.xlu0.b32.cont [4/16] 0.0, 128
    %4167 = vxpose.xlu0.b32.cont [5/16] 0.0, 128
    %4168 = vxpose.xlu0.b32.cont [6/16] 0.0, 128
    %4169 = vxpose.xlu0.b32.cont [7/16] 0.0, 128
    %4170 = vxpose.xlu0.b32.cont [8/16] 0.0, 128
    %4171 = vxpose.xlu0.b32.cont [9/16] 0.0, 128
    %4172 = vxpose.xlu0.b32.cont [10/16] 0.0, 128
    %4173 = vxpose.xlu0.b32.cont [11/16] 0.0, 128
    %4174 = vxpose.xlu0.b32.cont [12/16] 0.0, 128
    %4175 = vxpose.xlu0.b32.cont [13/16] 0.0, 128
    %4176 = vxpose.xlu0.b32.cont [14/16] 0.0, 128
    %4177 = vxpose.xlu0.b32.cont [15/16] 0.0, 128
    %4178 = vxpose.xlu0.b32.end [16/16] 0.0, 128
    %v4179 = vpop.trf.xlu0
    %v4180 = vpop.trf.xlu0
    %v4181 = vpop.trf.xlu0
    %v4182 = vpop.trf.xlu0
    %v4183 = vpop.trf.xlu0
    %v4184 = vpop.trf.xlu0
    %v4185 = vpop.trf.xlu0
    %v4186 = vpop.trf.xlu0
    %v4187 = vpop.trf.xlu0
    %v4188 = vpop.trf.xlu0
    %v4189 = vpop.trf.xlu0
    %v4190 = vpop.trf.xlu0
    %v4191 = vpop.trf.xlu0
    %v4192 = vpop.trf.xlu0
    %v4193 = vpop.trf.xlu0
    %v4194 = vpop.trf.xlu0
    %4195 = vxpose.xlu0.b32.start [1/16] %v3985, 128
    %4196 = vxpose.xlu0.b32.cont [2/16] %v3990, 128
    %4197 = vxpose.xlu0.b32.cont [3/16] 0.0, 128
    %4198 = vxpose.xlu0.b32.cont [4/16] 0.0, 128
    %4199 = vxpose.xlu0.b32.cont [5/16] 0.0, 128
    %4200 = vxpose.xlu0.b32.cont [6/16] 0.0, 128
    %4201 = vxpose.xlu0.b32.cont [7/16] 0.0, 128
    %4202 = vxpose.xlu0.b32.cont [8/16] 0.0, 128
    %4203 = vxpose.xlu0.b32.cont [9/16] 0.0, 128
    %4204 = vxpose.xlu0.b32.cont [10/16] 0.0, 128
    %4205 = vxpose.xlu0.b32.cont [11/16] 0.0, 128
    %4206 = vxpose.xlu0.b32.cont [12/16] 0.0, 128
    %4207 = vxpose.xlu0.b32.cont [13/16] 0.0, 128
    %4208 = vxpose.xlu0.b32.cont [14/16] 0.0, 128
    %4209 = vxpose.xlu0.b32.cont [15/16] 0.0, 128
    %4210 = vxpose.xlu0.b32.end [16/16] 0.0, 128
    %v4211 = vpop.trf.xlu0
    %v4212 = vpop.trf.xlu0
    %v4213 = vpop.trf.xlu0
    %v4214 = vpop.trf.xlu0
    %v4215 = vpop.trf.xlu0
    %v4216 = vpop.trf.xlu0
    %v4217 = vpop.trf.xlu0
    %v4218 = vpop.trf.xlu0
    %v4219 = vpop.trf.xlu0
    %v4220 = vpop.trf.xlu0
    %v4221 = vpop.trf.xlu0
    %v4222 = vpop.trf.xlu0
    %v4223 = vpop.trf.xlu0
    %v4224 = vpop.trf.xlu0
    %v4225 = vpop.trf.xlu0
    %v4226 = vpop.trf.xlu0
    %4227 = vxpose.xlu0.b32.start [1/16] %v3995, 128
    %4228 = vxpose.xlu0.b32.cont [2/16] %v4000, 128
    %4229 = vxpose.xlu0.b32.cont [3/16] 0.0, 128
    %4230 = vxpose.xlu0.b32.cont [4/16] 0.0, 128
    %4231 = vxpose.xlu0.b32.cont [5/16] 0.0, 128
    %4232 = vxpose.xlu0.b32.cont [6/16] 0.0, 128
    %4233 = vxpose.xlu0.b32.cont [7/16] 0.0, 128
    %4234 = vxpose.xlu0.b32.cont [8/16] 0.0, 128
    %4235 = vxpose.xlu0.b32.cont [9/16] 0.0, 128
    %4236 = vxpose.xlu0.b32.cont [10/16] 0.0, 128
    %4237 = vxpose.xlu0.b32.cont [11/16] 0.0, 128
    %4238 = vxpose.xlu0.b32.cont [12/16] 0.0, 128
    %4239 = vxpose.xlu0.b32.cont [13/16] 0.0, 128
    %4240 = vxpose.xlu0.b32.cont [14/16] 0.0, 128
    %4241 = vxpose.xlu0.b32.cont [15/16] 0.0, 128
    %4242 = vxpose.xlu0.b32.end [16/16] 0.0, 128
    %v4243 = vpop.trf.xlu0
    %v4244 = vpop.trf.xlu0
    %v4245 = vpop.trf.xlu0
    %v4246 = vpop.trf.xlu0
    %v4247 = vpop.trf.xlu0
    %v4248 = vpop.trf.xlu0
    %v4249 = vpop.trf.xlu0
    %v4250 = vpop.trf.xlu0
    %v4251 = vpop.trf.xlu0
    %v4252 = vpop.trf.xlu0
    %v4253 = vpop.trf.xlu0
    %v4254 = vpop.trf.xlu0
    %v4255 = vpop.trf.xlu0
    %v4256 = vpop.trf.xlu0
    %v4257 = vpop.trf.xlu0
    %v4258 = vpop.trf.xlu0
    %v4267 = vcombine.high %v4019, %v4019
    %v4269 = vunpack.c.l.s4 1983009808
    %v4270 = vunpack.c.0.s8 %v4269
    %v4271 = vlaneseq
    %v4272 = vshrl.u32 %v4271, 7
    %v4273 = vsub.s32 %v4270, %v4272
    %v4274 = vrot.slane %v4019, %v4273
    %v4276 = vunpack.c.l.s4 1983009808
    %v4277 = vunpack.c.0.s8 %v4276
    %v4278 = vlaneseq
    %v4279 = vshrl.u32 %v4278, 7
    %v4280 = vsub.s32 %v4277, %v4279
    %v4281 = vrot.slane %v4267, %v4280
    %v4282 = vcombine.high %v4274, %v4274
    %v4283 = vcombine.high %v4051, %v4051
    %v4285 = vunpack.c.l.s4 1983009808
    %v4286 = vunpack.c.0.s8 %v4285
    %v4287 = vlaneseq
    %v4288 = vshrl.u32 %v4287, 7
    %v4289 = vsub.s32 %v4286, %v4288
    %v4290 = vrot.slane %v4051, %v4289
    %v4292 = vunpack.c.l.s4 1983009808
    %v4293 = vunpack.c.0.s8 %v4292
    %v4294 = vlaneseq
    %v4295 = vshrl.u32 %v4294, 7
    %v4296 = vsub.s32 %v4293, %v4295
    %v4297 = vrot.slane %v4283, %v4296
    %v4298 = vcombine.high %v4290, %v4290
    %v4299 = vcombine.high %v4083, %v4083
    %v4301 = vunpack.c.l.s4 1983009808
    %v4302 = vunpack.c.0.s8 %v4301
    %v4303 = vlaneseq
    %v4304 = vshrl.u32 %v4303, 7
    %v4305 = vsub.s32 %v4302, %v4304
    %v4306 = vrot.slane %v4083, %v4305
    %v4308 = vunpack.c.l.s4 1983009808
    %v4309 = vunpack.c.0.s8 %v4308
    %v4310 = vlaneseq
    %v4311 = vshrl.u32 %v4310, 7
    %v4312 = vsub.s32 %v4309, %v4311
    %v4313 = vrot.slane %v4299, %v4312
    %v4314 = vcombine.high %v4306, %v4306
    %v4315 = vcombine.high %v4115, %v4115
    %v4317 = vunpack.c.l.s4 1983009808
    %v4318 = vunpack.c.0.s8 %v4317
    %v4319 = vlaneseq
    %v4320 = vshrl.u32 %v4319, 7
    %v4321 = vsub.s32 %v4318, %v4320
    %v4322 = vrot.slane %v4115, %v4321
    %v4324 = vunpack.c.l.s4 1983009808
    %v4325 = vunpack.c.0.s8 %v4324
    %v4326 = vlaneseq
    %v4327 = vshrl.u32 %v4326, 7
    %v4328 = vsub.s32 %v4325, %v4327
    %v4329 = vrot.slane %v4315, %v4328
    %v4330 = vcombine.high %v4322, %v4322
    %v4331 = vcombine.high %v4147, %v4147
    %v4333 = vunpack.c.l.s4 1983009808
    %v4334 = vunpack.c.0.s8 %v4333
    %v4335 = vlaneseq
    %v4336 = vshrl.u32 %v4335, 7
    %v4337 = vsub.s32 %v4334, %v4336
    %v4338 = vrot.slane %v4147, %v4337
    %v4340 = vunpack.c.l.s4 1983009808
    %v4341 = vunpack.c.0.s8 %v4340
    %v4342 = vlaneseq
    %v4343 = vshrl.u32 %v4342, 7
    %v4344 = vsub.s32 %v4341, %v4343
    %v4345 = vrot.slane %v4331, %v4344
    %v4346 = vcombine.high %v4338, %v4338
    %v4347 = vcombine.high %v4179, %v4179
    %v4349 = vunpack.c.l.s4 1983009808
    %v4350 = vunpack.c.0.s8 %v4349
    %v4351 = vlaneseq
    %v4352 = vshrl.u32 %v4351, 7
    %v4353 = vsub.s32 %v4350, %v4352
    %v4354 = vrot.slane %v4179, %v4353
    %v4356 = vunpack.c.l.s4 1983009808
    %v4357 = vunpack.c.0.s8 %v4356
    %v4358 = vlaneseq
    %v4359 = vshrl.u32 %v4358, 7
    %v4360 = vsub.s32 %v4357, %v4359
    %v4361 = vrot.slane %v4347, %v4360
    %v4362 = vcombine.high %v4354, %v4354
    %v4363 = vcombine.high %v4211, %v4211
    %v4365 = vunpack.c.l.s4 1983009808
    %v4366 = vunpack.c.0.s8 %v4365
    %v4367 = vlaneseq
    %v4368 = vshrl.u32 %v4367, 7
    %v4369 = vsub.s32 %v4366, %v4368
    %v4370 = vrot.slane %v4211, %v4369
    %v4372 = vunpack.c.l.s4 1983009808
    %v4373 = vunpack.c.0.s8 %v4372
    %v4374 = vlaneseq
    %v4375 = vshrl.u32 %v4374, 7
    %v4376 = vsub.s32 %v4373, %v4375
    %v4377 = vrot.slane %v4363, %v4376
    %v4378 = vcombine.high %v4370, %v4370
    %v4379 = vcombine.high %v4243, %v4243
    %v4381 = vunpack.c.l.s4 1983009808
    %v4382 = vunpack.c.0.s8 %v4381
    %v4383 = vlaneseq
    %v4384 = vshrl.u32 %v4383, 7
    %v4385 = vsub.s32 %v4382, %v4384
    %v4386 = vrot.slane %v4243, %v4385
    %v4388 = vunpack.c.l.s4 1983009808
    %v4389 = vunpack.c.0.s8 %v4388
    %v4390 = vlaneseq
    %v4391 = vshrl.u32 %v4390, 7
    %v4392 = vsub.s32 %v4389, %v4391
    %v4393 = vrot.slane %v4379, %v4392
    %v4394 = vcombine.high %v4386, %v4386
    %v4395 = vcombine.low %v4274, %v4282
    %v4396 = vcombine.low %v4281, %v4290
    %v4398 = vunpack.c.l.s4 1983009808
    %v4399 = vunpack.c.0.s8 %v4398
    %v4400 = vlaneseq
    %v4401 = vshrl.u32 %v4400, 7
    %v4402 = vsub.s32 %v4399, %v4401
    %v4403 = vrot.slane %v4395, %v4402
    %v4405 = vunpack.c.l.s4 1983009808
    %v4406 = vunpack.c.0.s8 %v4405
    %v4407 = vlaneseq
    %v4408 = vshrl.u32 %v4407, 7
    %v4409 = vsub.s32 %v4406, %v4408
    %v4410 = vrot.slane %v4396, %v4409
    %v4411 = vcombine.low %v4403, %v4410
    %v4412 = vcombine.low %v4298, %v4297
    %v4413 = vcombine.low %v4306, %v4314
    %v4415 = vunpack.c.l.s4 1983009808
    %v4416 = vunpack.c.0.s8 %v4415
    %v4417 = vlaneseq
    %v4418 = vshrl.u32 %v4417, 7
    %v4419 = vsub.s32 %v4416, %v4418
    %v4420 = vrot.slane %v4412, %v4419
    %v4422 = vunpack.c.l.s4 1983009808
    %v4423 = vunpack.c.0.s8 %v4422
    %v4424 = vlaneseq
    %v4425 = vshrl.u32 %v4424, 7
    %v4426 = vsub.s32 %v4423, %v4425
    %v4427 = vrot.slane %v4413, %v4426
    %v4428 = vcombine.low %v4420, %v4427
    %v4429 = vcombine.low %v4313, %v4322
    %v4430 = vcombine.low %v4330, %v4329
    %v4432 = vunpack.c.l.s4 1983009808
    %v4433 = vunpack.c.0.s8 %v4432
    %v4434 = vlaneseq
    %v4435 = vshrl.u32 %v4434, 7
    %v4436 = vsub.s32 %v4433, %v4435
    %v4437 = vrot.slane %v4429, %v4436
    %v4439 = vunpack.c.l.s4 1983009808
    %v4440 = vunpack.c.0.s8 %v4439
    %v4441 = vlaneseq
    %v4442 = vshrl.u32 %v4441, 7
    %v4443 = vsub.s32 %v4440, %v4442
    %v4444 = vrot.slane %v4430, %v4443
    %v4445 = vcombine.low %v4437, %v4444
    %v4446 = vcombine.low %v4338, %v4346
    %v4447 = vcombine.low %v4345, %v4354
    %v4449 = vunpack.c.l.s4 1983009808
    %v4450 = vunpack.c.0.s8 %v4449
    %v4451 = vlaneseq
    %v4452 = vshrl.u32 %v4451, 7
    %v4453 = vsub.s32 %v4450, %v4452
    %v4454 = vrot.slane %v4446, %v4453
    %v4456 = vunpack.c.l.s4 1983009808
    %v4457 = vunpack.c.0.s8 %v4456
    %v4458 = vlaneseq
    %v4459 = vshrl.u32 %v4458, 7
    %v4460 = vsub.s32 %v4457, %v4459
    %v4461 = vrot.slane %v4447, %v4460
    %v4462 = vcombine.low %v4454, %v4461
    %v4463 = vcombine.low %v4362, %v4361
    %v4464 = vcombine.low %v4370, %v4378
    %v4466 = vunpack.c.l.s4 1983009808
    %v4467 = vunpack.c.0.s8 %v4466
    %v4468 = vlaneseq
    %v4469 = vshrl.u32 %v4468, 7
    %v4470 = vsub.s32 %v4467, %v4469
    %v4471 = vrot.slane %v4463, %v4470
    %v4473 = vunpack.c.l.s4 1983009808
    %v4474 = vunpack.c.0.s8 %v4473
    %v4475 = vlaneseq
    %v4476 = vshrl.u32 %v4475, 7
    %v4477 = vsub.s32 %v4474, %v4476
    %v4478 = vrot.slane %v4464, %v4477
    %v4479 = vcombine.low %v4471, %v4478
    %v4480 = vcombine.low %v4377, %v4386
    %v4481 = vcombine.low %v4394, %v4393
    %v4483 = vunpack.c.l.s4 1983009808
    %v4484 = vunpack.c.0.s8 %v4483
    %v4485 = vlaneseq
    %v4486 = vshrl.u32 %v4485, 7
    %v4487 = vsub.s32 %v4484, %v4486
    %v4488 = vrot.slane %v4480, %v4487
    %v4490 = vunpack.c.l.s4 1983009808
    %v4491 = vunpack.c.0.s8 %v4490
    %v4492 = vlaneseq
    %v4493 = vshrl.u32 %v4492, 7
    %v4494 = vsub.s32 %v4491, %v4493
    %v4495 = vrot.slane %v4481, %v4494
    %v4496 = vcombine.low %v4488, %v4495
    %v4497 = vsel %vm57, %v4411, 0
    %v4499 = vsel %vm57, %v4428, 0
    %v4501 = vsel %vm57, %v4445, 0
    %v4503 = vsel %vm57, %v4462, 0
    %v4505 = vsel %vm57, %v4479, 0
    %v4507 = vsel %vm57, %v4496, 0
    %4509 = vmatprep.subr.mxu0 0.0
    %4510 = vmatpush1.msra.mxu0 %v55
    %4511 = vmatprep.subr.mxu0 0.0
    %4512 = vmatpush1.msra.mxu0 %v56
    %4513 = vmatprep.subr.mxu0 0.0
    %4514 = vmatpush1.msra.mxu0 0.0
    %4515 = vmatprep.subr.mxu0 0.0
    %4516 = vmatpush1.msra.mxu0 0.0
    %4517 = vmatprep.subr.mxu0 0.0
    %4518 = vmatpush1.msra.mxu0 0.0
    %4519 = vmatprep.subr.mxu0 0.0
    %4520 = vmatpush1.msra.mxu0 0.0
    %4521 = vmatprep.subr.mxu0 0.0
    %4522 = vmatpush1.msra.mxu0 0.0
    %4523 = vmatprep.subr.mxu0 0.0
    %4524 = vmatpush1.msra.mxu0 0.0
    %4525 = vmatprep.subr.mxu0 0.0
    %4526 = vmatpush1.msra.mxu0 0.0
    %4527 = vmatprep.subr.mxu0 0.0
    %4528 = vmatpush1.msra.mxu0 0.0
    %4529 = vmatprep.subr.mxu0 0.0
    %4530 = vmatpush1.msra.mxu0 0.0
    %4531 = vmatprep.subr.mxu0 0.0
    %4532 = vmatpush1.msra.mxu0 0.0
    %4533 = vmatprep.subr.mxu0 0.0
    %4534 = vmatpush1.msra.mxu0 0.0
    %4535 = vmatprep.subr.mxu0 0.0
    %4536 = vmatpush1.msra.mxu0 0.0
    %4537 = vmatprep.subr.mxu0 0.0
    %4538 = vmatpush1.msra.mxu0 0.0
    %4539 = vmatprep.subr.mxu0 0.0
    %4540 = vmatpush1.msra.mxu0 0.0
    %4541 = vmatprep.subr.mxu0 0.0
    %4542 = vmatpush1.msra.mxu0 0.0
    %4543 = vmatprep.subr.mxu0 0.0
    %4544 = vmatpush1.msra.mxu0 0.0
    %4545 = vmatprep.subr.mxu0 0.0
    %4546 = vmatpush1.msra.mxu0 0.0
    %4547 = vmatprep.subr.mxu0 0.0
    %4548 = vmatpush1.msra.mxu0 0.0
    %4549 = vmatprep.subr.mxu0 0.0
    %4550 = vmatpush1.msra.mxu0 0.0
    %4551 = vmatprep.subr.mxu0 0.0
    %4552 = vmatpush1.msra.mxu0 0.0
    %4553 = vmatprep.subr.mxu0 0.0
    %4554 = vmatpush1.msra.mxu0 0.0
    %4555 = vmatprep.subr.mxu0 0.0
    %4556 = vmatpush1.msra.mxu0 0.0
    %4557 = vmatprep.subr.mxu0 0.0
    %4558 = vmatpush1.msra.mxu0 0.0
    %4559 = vmatprep.subr.mxu0 0.0
    %4560 = vmatpush1.msra.mxu0 0.0
    %4561 = vmatprep.subr.mxu0 0.0
    %4562 = vmatpush1.msra.mxu0 0.0
    %4563 = vmatprep.subr.mxu0 0.0
    %4564 = vmatpush1.msra.mxu0 0.0
    %4565 = vmatprep.subr.mxu0 0.0
    %4566 = vmatpush1.msra.mxu0 0.0
    %4567 = vmatprep.subr.mxu0 0.0
    %4568 = vmatpush1.msra.mxu0 0.0
    %4569 = vmatprep.subr.mxu0 0.0
    %4570 = vmatpush1.msra.mxu0 0.0
    %4571 = vmatprep.subr.mxu0 0.0
    %4572 = vmatpush1.msra.mxu0 0.0
    %4573 = vmatprep.mubr.f32.mxu0 0.0
    %4574 = vmatmul.mubr.f32.gmra.mrb[0].mxu0 %v4497
    %v4575 = vpop.f32.mrb[0].mxu0
    %v4576 = vadd.f32 0.0, %v4575
    %v4577 = vpop.f32.mrb[0].mxu0
    %4578 = vmatprep.mubr.f32.mxu0 0.0
    %4579 = vmatmul.mubr.f32.gmra.mrb[0].mxu0 %v4499
    %v4580 = vpop.f32.mrb[0].mxu0
    %v4581 = vadd.f32 0.0, %v4580
    %v4582 = vpop.f32.mrb[0].mxu0
    %4583 = vmatprep.mubr.f32.mxu0 0.0
    %4584 = vmatmul.mubr.f32.gmra.mrb[0].mxu0 %v4501
    %v4585 = vpop.f32.mrb[0].mxu0
    %v4586 = vadd.f32 0.0, %v4585
    %v4587 = vpop.f32.mrb[0].mxu0
    %4588 = vmatprep.mubr.f32.mxu0 0.0
    %4589 = vmatmul.mubr.f32.gmra.mrb[0].mxu0 %v4503
    %v4590 = vpop.f32.mrb[0].mxu0
    %v4591 = vadd.f32 0.0, %v4590
    %v4592 = vpop.f32.mrb[0].mxu0
    %4593 = vmatprep.mubr.f32.mxu0 0.0
    %4594 = vmatmul.mubr.f32.gmra.mrb[0].mxu0 %v4505
    %v4595 = vpop.f32.mrb[0].mxu0
    %v4596 = vadd.f32 0.0, %v4595
    %v4597 = vpop.f32.mrb[0].mxu0
    %4598 = vmatprep.mubr.f32.mxu0 0.0
    %4599 = vmatmul.mubr.f32.gmra.mrb[0].mxu0 %v4507
    %v4600 = vpop.f32.mrb[0].mxu0
    %v4601 = vadd.f32 0.0, %v4600
    %v4602 = vpop.f32.mrb[0].mxu0
    %4603 = vdwg.mxu0
    %v4610 = vcombine.high %v4576, %v4576
    %v4612 = vunpack.c.l.s4 1983009808
    %v4613 = vunpack.c.0.s8 %v4612
    %v4614 = vlaneseq
    %v4615 = vshrl.u32 %v4614, 7
    %v4616 = vsub.s32 %v4613, %v4615
    %v4617 = vrot.slane %v4576, %v4616
    %v4619 = vunpack.c.l.s4 1983009808
    %v4620 = vunpack.c.0.s8 %v4619
    %v4621 = vlaneseq
    %v4622 = vshrl.u32 %v4621, 7
    %v4623 = vsub.s32 %v4620, %v4622
    %v4624 = vrot.slane %v4610, %v4623
    %v4625 = vcombine.high %v4617, %v4617
    %v4626 = vcombine.high %v4624, %v4624
    %v4627 = vcombine.high %v4581, %v4581
    %v4629 = vunpack.c.l.s4 1983009808
    %v4630 = vunpack.c.0.s8 %v4629
    %v4631 = vlaneseq
    %v4632 = vshrl.u32 %v4631, 7
    %v4633 = vsub.s32 %v4630, %v4632
    %v4634 = vrot.slane %v4581, %v4633
    %v4636 = vunpack.c.l.s4 1983009808
    %v4637 = vunpack.c.0.s8 %v4636
    %v4638 = vlaneseq
    %v4639 = vshrl.u32 %v4638, 7
    %v4640 = vsub.s32 %v4637, %v4639
    %v4641 = vrot.slane %v4627, %v4640
    %v4642 = vcombine.high %v4634, %v4634
    %v4643 = vcombine.high %v4641, %v4641
    %v4644 = vcombine.high %v4586, %v4586
    %v4646 = vunpack.c.l.s4 1983009808
    %v4647 = vunpack.c.0.s8 %v4646
    %v4648 = vlaneseq
    %v4649 = vshrl.u32 %v4648, 7
    %v4650 = vsub.s32 %v4647, %v4649
    %v4651 = vrot.slane %v4586, %v4650
    %v4653 = vunpack.c.l.s4 1983009808
    %v4654 = vunpack.c.0.s8 %v4653
    %v4655 = vlaneseq
    %v4656 = vshrl.u32 %v4655, 7
    %v4657 = vsub.s32 %v4654, %v4656
    %v4658 = vrot.slane %v4644, %v4657
    %v4659 = vcombine.high %v4651, %v4651
    %v4660 = vcombine.high %v4658, %v4658
    %v4661 = vcombine.high %v4591, %v4591
    %v4663 = vunpack.c.l.s4 1983009808
    %v4664 = vunpack.c.0.s8 %v4663
    %v4665 = vlaneseq
    %v4666 = vshrl.u32 %v4665, 7
    %v4667 = vsub.s32 %v4664, %v4666
    %v4668 = vrot.slane %v4591, %v4667
    %v4670 = vunpack.c.l.s4 1983009808
    %v4671 = vunpack.c.0.s8 %v4670
    %v4672 = vlaneseq
    %v4673 = vshrl.u32 %v4672, 7
    %v4674 = vsub.s32 %v4671, %v4673
    %v4675 = vrot.slane %v4661, %v4674
    %v4676 = vcombine.high %v4668, %v4668
    %v4677 = vcombine.high %v4675, %v4675
    %v4678 = vcombine.high %v4596, %v4596
    %v4680 = vunpack.c.l.s4 1983009808
    %v4681 = vunpack.c.0.s8 %v4680
    %v4682 = vlaneseq
    %v4683 = vshrl.u32 %v4682, 7
    %v4684 = vsub.s32 %v4681, %v4683
    %v4685 = vrot.slane %v4596, %v4684
    %v4687 = vunpack.c.l.s4 1983009808
    %v4688 = vunpack.c.0.s8 %v4687
    %v4689 = vlaneseq
    %v4690 = vshrl.u32 %v4689, 7
    %v4691 = vsub.s32 %v4688, %v4690
    %v4692 = vrot.slane %v4678, %v4691
    %v4693 = vcombine.high %v4685, %v4685
    %v4694 = vcombine.high %v4692, %v4692
    %v4695 = vcombine.high %v4601, %v4601
    %v4697 = vunpack.c.l.s4 1983009808
    %v4698 = vunpack.c.0.s8 %v4697
    %v4699 = vlaneseq
    %v4700 = vshrl.u32 %v4699, 7
    %v4701 = vsub.s32 %v4698, %v4700
    %v4702 = vrot.slane %v4601, %v4701
    %v4704 = vunpack.c.l.s4 1983009808
    %v4705 = vunpack.c.0.s8 %v4704
    %v4706 = vlaneseq
    %v4707 = vshrl.u32 %v4706, 7
    %v4708 = vsub.s32 %v4705, %v4707
    %v4709 = vrot.slane %v4695, %v4708
    %v4710 = vcombine.high %v4702, %v4702
    %v4711 = vcombine.high %v4709, %v4709
    %v4736 = vld [vmem:[%s4] sm:$0x1]
    %s4737 = vtos %v4736
    %4739 = vrot.lane.b32.xlu0 %v4736, 127
    %v4740 = vpop.permute.xlu0 %4739
    %s4742 = vtos %v4740
    %v4743 = vmul.f32 %v865, %v865
    %v4744 = vmul.f32 %v873, %v873
    %v4745 = vmul.f32 %v872, %v872
    %v4746 = vmul.f32 %v874, %v874
    %v4747 = vmul.f32 %v882, %v882
    %v4748 = vmul.f32 %v890, %v890
    %v4749 = vmul.f32 %v889, %v889
    %v4750 = vmul.f32 %v891, %v891
    %v4751 = vmul.f32 %v899, %v899
    %v4752 = vmul.f32 %v907, %v907
    %v4753 = vmul.f32 %v906, %v906
    %v4754 = vmul.f32 %v908, %v908
    %v4755 = vmul.f32 %v916, %v916
    %v4756 = vmul.f32 %v924, %v924
    %v4757 = vmul.f32 %v923, %v923
    %v4758 = vmul.f32 %v925, %v925
    %v4759 = vmul.f32 %v933, %v933
    %v4760 = vmul.f32 %v941, %v941
    %v4761 = vmul.f32 %v940, %v940
    %v4762 = vmul.f32 %v942, %v942
    %v4763 = vmul.f32 %v950, %v950
    %v4764 = vmul.f32 %v958, %v958
    %v4765 = vmul.f32 %v957, %v957
    %v4766 = vmul.f32 %v959, %v959
    %v4767 = vmul.f32 %v1791, %v1791
    %v4768 = vmul.f32 %v1799, %v1799
    %v4769 = vmul.f32 %v1798, %v1798
    %v4770 = vmul.f32 %v1800, %v1800
    %v4771 = vmul.f32 %v1808, %v1808
    %v4772 = vmul.f32 %v1816, %v1816
    %v4773 = vmul.f32 %v1815, %v1815
    %v4774 = vmul.f32 %v1817, %v1817
    %v4775 = vmul.f32 %v1825, %v1825
    %v4776 = vmul.f32 %v1833, %v1833
    %v4777 = vmul.f32 %v1832, %v1832
    %v4778 = vmul.f32 %v1834, %v1834
    %v4779 = vmul.f32 %v1842, %v1842
    %v4780 = vmul.f32 %v1850, %v1850
    %v4781 = vmul.f32 %v1849, %v1849
    %v4782 = vmul.f32 %v1851, %v1851
    %v4783 = vmul.f32 %v1859, %v1859
    %v4784 = vmul.f32 %v1867, %v1867
    %v4785 = vmul.f32 %v1866, %v1866
    %v4786 = vmul.f32 %v1868, %v1868
    %v4787 = vmul.f32 %v1876, %v1876
    %v4788 = vmul.f32 %v1884, %v1884
    %v4789 = vmul.f32 %v1883, %v1883
    %v4790 = vmul.f32 %v1885, %v1885
    %v4791 = vmul.f32 %v865, %v1791
    %v4792 = vmul.f32 %v873, %v1799
    %v4793 = vmul.f32 %v872, %v1798
    %v4794 = vmul.f32 %v874, %v1800
    %v4795 = vmul.f32 %v882, %v1808
    %v4796 = vmul.f32 %v890, %v1816
    %v4797 = vmul.f32 %v889, %v1815
    %v4798 = vmul.f32 %v891, %v1817
    %v4799 = vmul.f32 %v899, %v1825
    %v4800 = vmul.f32 %v907, %v1833
    %v4801 = vmul.f32 %v906, %v1832
    %v4802 = vmul.f32 %v908, %v1834
    %v4803 = vmul.f32 %v916, %v1842
    %v4804 = vmul.f32 %v924, %v1850
    %v4805 = vmul.f32 %v923, %v1849
    %v4806 = vmul.f32 %v925, %v1851
    %v4807 = vmul.f32 %v933, %v1859
    %v4808 = vmul.f32 %v941, %v1867
    %v4809 = vmul.f32 %v940, %v1866
    %v4810 = vmul.f32 %v942, %v1868
    %v4811 = vmul.f32 %v950, %v1876
    %v4812 = vmul.f32 %v958, %v1884
    %v4813 = vmul.f32 %v957, %v1883
    %v4814 = vmul.f32 %v959, %v1885
    %v4815 = vsub.f32 %v2733, %v4743
    %v4816 = vsub.f32 %v2741, %v4744
    %v4817 = vsub.f32 %v2740, %v4745
    %v4818 = vsub.f32 %v2742, %v4746
    %v4819 = vsub.f32 %v2750, %v4747
    %v4820 = vsub.f32 %v2758, %v4748
    %v4821 = vsub.f32 %v2757, %v4749
    %v4822 = vsub.f32 %v2759, %v4750
    %v4823 = vsub.f32 %v2767, %v4751
    %v4824 = vsub.f32 %v2775, %v4752
    %v4825 = vsub.f32 %v2774, %v4753
    %v4826 = vsub.f32 %v2776, %v4754
    %v4827 = vsub.f32 %v2784, %v4755
    %v4828 = vsub.f32 %v2792, %v4756
    %v4829 = vsub.f32 %v2791, %v4757
    %v4830 = vsub.f32 %v2793, %v4758
    %v4831 = vsub.f32 %v2801, %v4759
    %v4832 = vsub.f32 %v2809, %v4760
    %v4833 = vsub.f32 %v2808, %v4761
    %v4834 = vsub.f32 %v2810, %v4762
    %v4835 = vsub.f32 %v2818, %v4763
    %v4836 = vsub.f32 %v2826, %v4764
    %v4837 = vsub.f32 %v2825, %v4765
    %v4838 = vsub.f32 %v2827, %v4766
    %v4839 = vsub.f32 %v3675, %v4767
    %v4840 = vsub.f32 %v3683, %v4768
    %v4841 = vsub.f32 %v3682, %v4769
    %v4842 = vsub.f32 %v3684, %v4770
    %v4843 = vsub.f32 %v3692, %v4771
    %v4844 = vsub.f32 %v3700, %v4772
    %v4845 = vsub.f32 %v3699, %v4773
    %v4846 = vsub.f32 %v3701, %v4774
    %v4847 = vsub.f32 %v3709, %v4775
    %v4848 = vsub.f32 %v3717, %v4776
    %v4849 = vsub.f32 %v3716, %v4777
    %v4850 = vsub.f32 %v3718, %v4778
    %v4851 = vsub.f32 %v3726, %v4779
    %v4852 = vsub.f32 %v3734, %v4780
    %v4853 = vsub.f32 %v3733, %v4781
    %v4854 = vsub.f32 %v3735, %v4782
    %v4855 = vsub.f32 %v3743, %v4783
    %v4856 = vsub.f32 %v3751, %v4784
    %v4857 = vsub.f32 %v3750, %v4785
    %v4858 = vsub.f32 %v3752, %v4786
    %v4859 = vsub.f32 %v3760, %v4787
    %v4860 = vsub.f32 %v3768, %v4788
    %v4861 = vsub.f32 %v3767, %v4789
    %v4862 = vsub.f32 %v3769, %v4790
    %v4863 = vsub.f32 %v4617, %v4791
    %v4864 = vsub.f32 %v4625, %v4792
    %v4865 = vsub.f32 %v4624, %v4793
    %v4866 = vsub.f32 %v4626, %v4794
    %v4867 = vsub.f32 %v4634, %v4795
    %v4868 = vsub.f32 %v4642, %v4796
    %v4869 = vsub.f32 %v4641, %v4797
    %v4870 = vsub.f32 %v4643, %v4798
    %v4871 = vsub.f32 %v4651, %v4799
    %v4872 = vsub.f32 %v4659, %v4800
    %v4873 = vsub.f32 %v4658, %v4801
    %v4874 = vsub.f32 %v4660, %v4802
    %v4875 = vsub.f32 %v4668, %v4803
    %v4876 = vsub.f32 %v4676, %v4804
    %v4877 = vsub.f32 %v4675, %v4805
    %v4878 = vsub.f32 %v4677, %v4806
    %v4879 = vsub.f32 %v4685, %v4807
    %v4880 = vsub.f32 %v4693, %v4808
    %v4881 = vsub.f32 %v4692, %v4809
    %v4882 = vsub.f32 %v4694, %v4810
    %v4883 = vsub.f32 %v4702, %v4811
    %v4884 = vsub.f32 %v4710, %v4812
    %v4885 = vsub.f32 %v4709, %v4813
    %v4886 = vsub.f32 %v4711, %v4814
    %v4887 = vmul.f32 %v4863, 2.0
    %v4888 = vmul.f32 %v4864, 2.0
    %v4889 = vmul.f32 %v4865, 2.0
    %v4890 = vmul.f32 %v4866, 2.0
    %v4891 = vmul.f32 %v4867, 2.0
    %v4892 = vmul.f32 %v4868, 2.0
    %v4893 = vmul.f32 %v4869, 2.0
    %v4894 = vmul.f32 %v4870, 2.0
    %v4895 = vmul.f32 %v4871, 2.0
    %v4896 = vmul.f32 %v4872, 2.0
    %v4897 = vmul.f32 %v4873, 2.0
    %v4898 = vmul.f32 %v4874, 2.0
    %v4899 = vmul.f32 %v4875, 2.0
    %v4900 = vmul.f32 %v4876, 2.0
    %v4901 = vmul.f32 %v4877, 2.0
    %v4902 = vmul.f32 %v4878, 2.0
    %v4903 = vmul.f32 %v4879, 2.0
    %v4904 = vmul.f32 %v4880, 2.0
    %v4905 = vmul.f32 %v4881, 2.0
    %v4906 = vmul.f32 %v4882, 2.0
    %v4907 = vmul.f32 %v4883, 2.0
    %v4908 = vmul.f32 %v4884, 2.0
    %v4909 = vmul.f32 %v4885, 2.0
    %v4910 = vmul.f32 %v4886, 2.0
    %v4911 = vstv %s4742
    %v4912 = vadd.f32 %v4887, %v4911
    %v4913 = vadd.f32 %v4888, %v4911
    %v4914 = vadd.f32 %v4889, %v4911
    %v4915 = vadd.f32 %v4890, %v4911
    %v4916 = vadd.f32 %v4891, %v4911
    %v4917 = vadd.f32 %v4892, %v4911
    %v4918 = vadd.f32 %v4893, %v4911
    %v4919 = vadd.f32 %v4894, %v4911
    %v4920 = vadd.f32 %v4895, %v4911
    %v4921 = vadd.f32 %v4896, %v4911
    %v4922 = vadd.f32 %v4897, %v4911
    %v4923 = vadd.f32 %v4898, %v4911
    %v4924 = vadd.f32 %v4899, %v4911
    %v4925 = vadd.f32 %v4900, %v4911
    %v4926 = vadd.f32 %v4901, %v4911
    %v4927 = vadd.f32 %v4902, %v4911
    %v4928 = vadd.f32 %v4903, %v4911
    %v4929 = vadd.f32 %v4904, %v4911
    %v4930 = vadd.f32 %v4905, %v4911
    %v4931 = vadd.f32 %v4906, %v4911
    %v4932 = vadd.f32 %v4907, %v4911
    %v4933 = vadd.f32 %v4908, %v4911
    %v4934 = vadd.f32 %v4909, %v4911
    %v4935 = vadd.f32 %v4910, %v4911
    %v4936 = vadd.f32 %v4815, %v4839
    %v4937 = vadd.f32 %v4816, %v4840
    %v4938 = vadd.f32 %v4817, %v4841
    %v4939 = vadd.f32 %v4818, %v4842
    %v4940 = vadd.f32 %v4819, %v4843
    %v4941 = vadd.f32 %v4820, %v4844
    %v4942 = vadd.f32 %v4821, %v4845
    %v4943 = vadd.f32 %v4822, %v4846
    %v4944 = vadd.f32 %v4823, %v4847
    %v4945 = vadd.f32 %v4824, %v4848
    %v4946 = vadd.f32 %v4825, %v4849
    %v4947 = vadd.f32 %v4826, %v4850
    %v4948 = vadd.f32 %v4827, %v4851
    %v4949 = vadd.f32 %v4828, %v4852
    %v4950 = vadd.f32 %v4829, %v4853
    %v4951 = vadd.f32 %v4830, %v4854
    %v4952 = vadd.f32 %v4831, %v4855
    %v4953 = vadd.f32 %v4832, %v4856
    %v4954 = vadd.f32 %v4833, %v4857
    %v4955 = vadd.f32 %v4834, %v4858
    %v4956 = vadd.f32 %v4835, %v4859
    %v4957 = vadd.f32 %v4836, %v4860
    %v4958 = vadd.f32 %v4837, %v4861
    %v4959 = vadd.f32 %v4838, %v4862
    %v4960 = vadd.f32 %v4936, %v4911
    %v4961 = vadd.f32 %v4937, %v4911
    %v4962 = vadd.f32 %v4938, %v4911
    %v4963 = vadd.f32 %v4939, %v4911
    %v4964 = vadd.f32 %v4940, %v4911
    %v4965 = vadd.f32 %v4941, %v4911
    %v4966 = vadd.f32 %v4942, %v4911
    %v4967 = vadd.f32 %v4943, %v4911
    %v4968 = vadd.f32 %v4944, %v4911
    %v4969 = vadd.f32 %v4945, %v4911
    %v4970 = vadd.f32 %v4946, %v4911
    %v4971 = vadd.f32 %v4947, %v4911
    %v4972 = vadd.f32 %v4948, %v4911
    %v4973 = vadd.f32 %v4949, %v4911
    %v4974 = vadd.f32 %v4950, %v4911
    %v4975 = vadd.f32 %v4951, %v4911
    %v4976 = vadd.f32 %v4952, %v4911
    %v4977 = vadd.f32 %v4953, %v4911
    %v4978 = vadd.f32 %v4954, %v4911
    %v4979 = vadd.f32 %v4955, %v4911
    %v4980 = vadd.f32 %v4956, %v4911
    %v4981 = vadd.f32 %v4957, %v4911
    %v4982 = vadd.f32 %v4958, %v4911
    %v4983 = vadd.f32 %v4959, %v4911
    %v4984 = vmul.f32 %v4791, 2.0
    %v4985 = vmul.f32 %v4792, 2.0
    %v4986 = vmul.f32 %v4793, 2.0
    %v4987 = vmul.f32 %v4794, 2.0
    %v4988 = vmul.f32 %v4795, 2.0
    %v4989 = vmul.f32 %v4796, 2.0
    %v4990 = vmul.f32 %v4797, 2.0
    %v4991 = vmul.f32 %v4798, 2.0
    %v4992 = vmul.f32 %v4799, 2.0
    %v4993 = vmul.f32 %v4800, 2.0
    %v4994 = vmul.f32 %v4801, 2.0
    %v4995 = vmul.f32 %v4802, 2.0
    %v4996 = vmul.f32 %v4803, 2.0
    %v4997 = vmul.f32 %v4804, 2.0
    %v4998 = vmul.f32 %v4805, 2.0
    %v4999 = vmul.f32 %v4806, 2.0
    %v5000 = vmul.f32 %v4807, 2.0
    %v5001 = vmul.f32 %v4808, 2.0
    %v5002 = vmul.f32 %v4809, 2.0
    %v5003 = vmul.f32 %v4810, 2.0
    %v5004 = vmul.f32 %v4811, 2.0
    %v5005 = vmul.f32 %v4812, 2.0
    %v5006 = vmul.f32 %v4813, 2.0
    %v5007 = vmul.f32 %v4814, 2.0
    %v5008 = vstv %s4737
    %v5009 = vadd.f32 %v4984, %v5008
    %v5010 = vadd.f32 %v4985, %v5008
    %v5011 = vadd.f32 %v4986, %v5008
    %v5012 = vadd.f32 %v4987, %v5008
    %v5013 = vadd.f32 %v4988, %v5008
    %v5014 = vadd.f32 %v4989, %v5008
    %v5015 = vadd.f32 %v4990, %v5008
    %v5016 = vadd.f32 %v4991, %v5008
    %v5017 = vadd.f32 %v4992, %v5008
    %v5018 = vadd.f32 %v4993, %v5008
    %v5019 = vadd.f32 %v4994, %v5008
    %v5020 = vadd.f32 %v4995, %v5008
    %v5021 = vadd.f32 %v4996, %v5008
    %v5022 = vadd.f32 %v4997, %v5008
    %v5023 = vadd.f32 %v4998, %v5008
    %v5024 = vadd.f32 %v4999, %v5008
    %v5025 = vadd.f32 %v5000, %v5008
    %v5026 = vadd.f32 %v5001, %v5008
    %v5027 = vadd.f32 %v5002, %v5008
    %v5028 = vadd.f32 %v5003, %v5008
    %v5029 = vadd.f32 %v5004, %v5008
    %v5030 = vadd.f32 %v5005, %v5008
    %v5031 = vadd.f32 %v5006, %v5008
    %v5032 = vadd.f32 %v5007, %v5008
    %v5033 = vmul.f32 %v5009, %v4912
    %v5034 = vmul.f32 %v5010, %v4913
    %v5035 = vmul.f32 %v5011, %v4914
    %v5036 = vmul.f32 %v5012, %v4915
    %v5037 = vmul.f32 %v5013, %v4916
    %v5038 = vmul.f32 %v5014, %v4917
    %v5039 = vmul.f32 %v5015, %v4918
    %v5040 = vmul.f32 %v5016, %v4919
    %v5041 = vmul.f32 %v5017, %v4920
    %v5042 = vmul.f32 %v5018, %v4921
    %v5043 = vmul.f32 %v5019, %v4922
    %v5044 = vmul.f32 %v5020, %v4923
    %v5045 = vmul.f32 %v5021, %v4924
    %v5046 = vmul.f32 %v5022, %v4925
    %v5047 = vmul.f32 %v5023, %v4926
    %v5048 = vmul.f32 %v5024, %v4927
    %v5049 = vmul.f32 %v5025, %v4928
    %v5050 = vmul.f32 %v5026, %v4929
    %v5051 = vmul.f32 %v5027, %v4930
    %v5052 = vmul.f32 %v5028, %v4931
    %v5053 = vmul.f32 %v5029, %v4932
    %v5054 = vmul.f32 %v5030, %v4933
    %v5055 = vmul.f32 %v5031, %v4934
    %v5056 = vmul.f32 %v5032, %v4935
    %v5057 = vadd.f32 %v4743, %v4767
    %v5058 = vadd.f32 %v4744, %v4768
    %v5059 = vadd.f32 %v4745, %v4769
    %v5060 = vadd.f32 %v4746, %v4770
    %v5061 = vadd.f32 %v4747, %v4771
    %v5062 = vadd.f32 %v4748, %v4772
    %v5063 = vadd.f32 %v4749, %v4773
    %v5064 = vadd.f32 %v4750, %v4774
    %v5065 = vadd.f32 %v4751, %v4775
    %v5066 = vadd.f32 %v4752, %v4776
    %v5067 = vadd.f32 %v4753, %v4777
    %v5068 = vadd.f32 %v4754, %v4778
    %v5069 = vadd.f32 %v4755, %v4779
    %v5070 = vadd.f32 %v4756, %v4780
    %v5071 = vadd.f32 %v4757, %v4781
    %v5072 = vadd.f32 %v4758, %v4782
    %v5073 = vadd.f32 %v4759, %v4783
    %v5074 = vadd.f32 %v4760, %v4784
    %v5075 = vadd.f32 %v4761, %v4785
    %v5076 = vadd.f32 %v4762, %v4786
    %v5077 = vadd.f32 %v4763, %v4787
    %v5078 = vadd.f32 %v4764, %v4788
    %v5079 = vadd.f32 %v4765, %v4789
    %v5080 = vadd.f32 %v4766, %v4790
    %v5081 = vadd.f32 %v5057, %v5008
    %v5082 = vadd.f32 %v5058, %v5008
    %v5083 = vadd.f32 %v5059, %v5008
    %v5084 = vadd.f32 %v5060, %v5008
    %v5085 = vadd.f32 %v5061, %v5008
    %v5086 = vadd.f32 %v5062, %v5008
    %v5087 = vadd.f32 %v5063, %v5008
    %v5088 = vadd.f32 %v5064, %v5008
    %v5089 = vadd.f32 %v5065, %v5008
    %v5090 = vadd.f32 %v5066, %v5008
    %v5091 = vadd.f32 %v5067, %v5008
    %v5092 = vadd.f32 %v5068, %v5008
    %v5093 = vadd.f32 %v5069, %v5008
    %v5094 = vadd.f32 %v5070, %v5008
    %v5095 = vadd.f32 %v5071, %v5008
    %v5096 = vadd.f32 %v5072, %v5008
    %v5097 = vadd.f32 %v5073, %v5008
    %v5098 = vadd.f32 %v5074, %v5008
    %v5099 = vadd.f32 %v5075, %v5008
    %v5100 = vadd.f32 %v5076, %v5008
    %v5101 = vadd.f32 %v5077, %v5008
    %v5102 = vadd.f32 %v5078, %v5008
    %v5103 = vadd.f32 %v5079, %v5008
    %v5104 = vadd.f32 %v5080, %v5008
    %v5105 = vmul.f32 %v5081, %v4960
    %v5106 = vmul.f32 %v5082, %v4961
    %v5107 = vmul.f32 %v5083, %v4962
    %v5108 = vmul.f32 %v5084, %v4963
    %v5109 = vmul.f32 %v5085, %v4964
    %v5110 = vmul.f32 %v5086, %v4965
    %v5111 = vmul.f32 %v5087, %v4966
    %v5112 = vmul.f32 %v5088, %v4967
    %v5113 = vmul.f32 %v5089, %v4968
    %v5114 = vmul.f32 %v5090, %v4969
    %v5115 = vmul.f32 %v5091, %v4970
    %v5116 = vmul.f32 %v5092, %v4971
    %v5117 = vmul.f32 %v5093, %v4972
    %v5118 = vmul.f32 %v5094, %v4973
    %v5119 = vmul.f32 %v5095, %v4974
    %v5120 = vmul.f32 %v5096, %v4975
    %v5121 = vmul.f32 %v5097, %v4976
    %v5122 = vmul.f32 %v5098, %v4977
    %v5123 = vmul.f32 %v5099, %v4978
    %v5124 = vmul.f32 %v5100, %v4979
    %v5125 = vmul.f32 %v5101, %v4980
    %v5126 = vmul.f32 %v5102, %v4981
    %v5127 = vmul.f32 %v5103, %v4982
    %v5128 = vmul.f32 %v5104, %v4983
    %v5129 = vrcp.pop %v5105
    %v5130 = vrcp.pop %v5106
    %v5131 = vrcp.pop %v5107
    %v5132 = vrcp.pop %v5108
    %v5133 = vrcp.pop %v5109
    %v5134 = vrcp.pop %v5110
    %v5135 = vrcp.pop %v5111
    %v5136 = vrcp.pop %v5112
    %v5137 = vrcp.pop %v5113
    %v5138 = vrcp.pop %v5114
    %v5139 = vrcp.pop %v5115
    %v5140 = vrcp.pop %v5116
    %v5141 = vrcp.pop %v5117
    %v5142 = vrcp.pop %v5118
    %v5143 = vrcp.pop %v5119
    %v5144 = vrcp.pop %v5120
    %v5145 = vrcp.pop %v5121
    %v5146 = vrcp.pop %v5122
    %v5147 = vrcp.pop %v5123
    %v5148 = vrcp.pop %v5124
    %v5149 = vrcp.pop %v5125
    %v5150 = vrcp.pop %v5126
    %v5151 = vrcp.pop %v5127
    %v5152 = vrcp.pop %v5128
    %v5153 = vmul.f32 %v5033, %v5129
    %v5154 = vmul.f32 %v5034, %v5130
    %v5155 = vmul.f32 %v5035, %v5131
    %v5156 = vmul.f32 %v5036, %v5132
    %v5157 = vmul.f32 %v5037, %v5133
    %v5158 = vmul.f32 %v5038, %v5134
    %v5159 = vmul.f32 %v5039, %v5135
    %v5160 = vmul.f32 %v5040, %v5136
    %v5161 = vmul.f32 %v5041, %v5137
    %v5162 = vmul.f32 %v5042, %v5138
    %v5163 = vmul.f32 %v5043, %v5139
    %v5164 = vmul.f32 %v5044, %v5140
    %v5165 = vmul.f32 %v5045, %v5141
    %v5166 = vmul.f32 %v5046, %v5142
    %v5167 = vmul.f32 %v5047, %v5143
    %v5168 = vmul.f32 %v5048, %v5144
    %v5169 = vmul.f32 %v5049, %v5145
    %v5170 = vmul.f32 %v5050, %v5146
    %v5171 = vmul.f32 %v5051, %v5147
    %v5172 = vmul.f32 %v5052, %v5148
    %v5173 = vmul.f32 %v5053, %v5149
    %v5174 = vmul.f32 %v5054, %v5150
    %v5175 = vmul.f32 %v5055, %v5151
    %v5176 = vmul.f32 %v5056, %v5152
    %v5201 = vcombine.low %v5153, %v5154
    %v5203 = vunpack.c.l.s4 1983009808
    %v5204 = vunpack.c.0.s8 %v5203
    %v5205 = vlaneseq
    %v5206 = vshrl.u32 %v5205, 7
    %v5207 = vsub.s32 %v5204, %v5206
    %v5208 = vrot.slane %v5201, %v5207
    %v5210 = vunpack.c.l.s4 1983009808
    %v5211 = vunpack.c.0.s8 %v5210
    %v5212 = vlaneseq
    %v5213 = vshrl.u32 %v5212, 7
    %v5214 = vsub.s32 %v5211, %v5213
    %v5215 = vrot.slane %v5155, %v5214
    %v5216 = vcombine.low %v5208, %v5215
    %v5217 = vcombine.low %v5156, %v5157
    %v5219 = vunpack.c.l.s4 1983009808
    %v5220 = vunpack.c.0.s8 %v5219
    %v5221 = vlaneseq
    %v5222 = vshrl.u32 %v5221, 7
    %v5223 = vsub.s32 %v5220, %v5222
    %v5224 = vrot.slane %v5217, %v5223
    %v5226 = vunpack.c.l.s4 1983009808
    %v5227 = vunpack.c.0.s8 %v5226
    %v5228 = vlaneseq
    %v5229 = vshrl.u32 %v5228, 7
    %v5230 = vsub.s32 %v5227, %v5229
    %v5231 = vrot.slane %v5158, %v5230
    %v5232 = vcombine.low %v5224, %v5231
    %v5233 = vcombine.low %v5159, %v5160
    %v5235 = vunpack.c.l.s4 1983009808
    %v5236 = vunpack.c.0.s8 %v5235
    %v5237 = vlaneseq
    %v5238 = vshrl.u32 %v5237, 7
    %v5239 = vsub.s32 %v5236, %v5238
    %v5240 = vrot.slane %v5233, %v5239
    %v5242 = vunpack.c.l.s4 1983009808
    %v5243 = vunpack.c.0.s8 %v5242
    %v5244 = vlaneseq
    %v5245 = vshrl.u32 %v5244, 7
    %v5246 = vsub.s32 %v5243, %v5245
    %v5247 = vrot.slane %v5161, %v5246
    %v5248 = vcombine.low %v5240, %v5247
    %v5249 = vcombine.low %v5162, %v5163
    %v5251 = vunpack.c.l.s4 1983009808
    %v5252 = vunpack.c.0.s8 %v5251
    %v5253 = vlaneseq
    %v5254 = vshrl.u32 %v5253, 7
    %v5255 = vsub.s32 %v5252, %v5254
    %v5256 = vrot.slane %v5249, %v5255
    %v5258 = vunpack.c.l.s4 1983009808
    %v5259 = vunpack.c.0.s8 %v5258
    %v5260 = vlaneseq
    %v5261 = vshrl.u32 %v5260, 7
    %v5262 = vsub.s32 %v5259, %v5261
    %v5263 = vrot.slane %v5164, %v5262
    %v5264 = vcombine.low %v5256, %v5263
    %v5265 = vcombine.low %v5165, %v5166
    %v5267 = vunpack.c.l.s4 1983009808
    %v5268 = vunpack.c.0.s8 %v5267
    %v5269 = vlaneseq
    %v5270 = vshrl.u32 %v5269, 7
    %v5271 = vsub.s32 %v5268, %v5270
    %v5272 = vrot.slane %v5265, %v5271
    %v5274 = vunpack.c.l.s4 1983009808
    %v5275 = vunpack.c.0.s8 %v5274
    %v5276 = vlaneseq
    %v5277 = vshrl.u32 %v5276, 7
    %v5278 = vsub.s32 %v5275, %v5277
    %v5279 = vrot.slane %v5167, %v5278
    %v5280 = vcombine.low %v5272, %v5279
    %v5281 = vcombine.low %v5168, %v5169
    %v5283 = vunpack.c.l.s4 1983009808
    %v5284 = vunpack.c.0.s8 %v5283
    %v5285 = vlaneseq
    %v5286 = vshrl.u32 %v5285, 7
    %v5287 = vsub.s32 %v5284, %v5286
    %v5288 = vrot.slane %v5281, %v5287
    %v5290 = vunpack.c.l.s4 1983009808
    %v5291 = vunpack.c.0.s8 %v5290
    %v5292 = vlaneseq
    %v5293 = vshrl.u32 %v5292, 7
    %v5294 = vsub.s32 %v5291, %v5293
    %v5295 = vrot.slane %v5170, %v5294
    %v5296 = vcombine.low %v5288, %v5295
    %v5297 = vcombine.low %v5171, %v5172
    %v5299 = vunpack.c.l.s4 1983009808
    %v5300 = vunpack.c.0.s8 %v5299
    %v5301 = vlaneseq
    %v5302 = vshrl.u32 %v5301, 7
    %v5303 = vsub.s32 %v5300, %v5302
    %v5304 = vrot.slane %v5297, %v5303
    %v5306 = vunpack.c.l.s4 1983009808
    %v5307 = vunpack.c.0.s8 %v5306
    %v5308 = vlaneseq
    %v5309 = vshrl.u32 %v5308, 7
    %v5310 = vsub.s32 %v5307, %v5309
    %v5311 = vrot.slane %v5173, %v5310
    %v5312 = vcombine.low %v5304, %v5311
    %v5313 = vcombine.low %v5174, %v5175
    %v5315 = vunpack.c.l.s4 1983009808
    %v5316 = vunpack.c.0.s8 %v5315
    %v5317 = vlaneseq
    %v5318 = vshrl.u32 %v5317, 7
    %v5319 = vsub.s32 %v5316, %v5318
    %v5320 = vrot.slane %v5313, %v5319
    %v5322 = vunpack.c.l.s4 1983009808
    %v5323 = vunpack.c.0.s8 %v5322
    %v5324 = vlaneseq
    %v5325 = vshrl.u32 %v5324, 7
    %v5326 = vsub.s32 %v5323, %v5325
    %v5327 = vrot.slane %v5176, %v5326
    %v5328 = vcombine.low %v5320, %v5327
    %vm5337 = vcmask 46080
    %v5338 = vsel %vm5337, %v5216, 0.0
    %v5339 = vsel %vm5337, %v5232, 0.0
    %v5340 = vadd.f32 %v5338, %v5339
    %v5341 = vsel %vm5337, %v5248, 0.0
    %v5342 = vadd.f32 %v5340, %v5341
    %v5343 = vsel %vm5337, %v5264, 0.0
    %v5344 = vadd.f32 %v5342, %v5343
    %v5345 = vsel %vm5337, %v5280, 0.0
    %v5346 = vadd.f32 %v5344, %v5345
    %v5347 = vsel %vm5337, %v5296, 0.0
    %v5348 = vadd.f32 %v5346, %v5347
    %v5349 = vsel %vm5337, %v5312, 0.0
    %v5350 = vadd.f32 %v5348, %v5349
    %v5351 = vsel %vm5337, %v5328, 0.0
    %v5352 = vadd.f32 %v5350, %v5351
    %5353 = vadd.xlane.f32.xlu0 %v5352
    %v5354 = vpop.xlane.xlu0 %5353
    %v5355 = vrot.slane %v5354, 4
    %v5356 = vadd.f32 %v5354, %v5355
    %v5357 = vrot.slane %v5356, 2
    %v5358 = vadd.f32 %v5356, %v5357
    %v5359 = vrot.slane %v5358, 1
    %v5360 = vadd.f32 %v5358, %v5359
    %s5361 = vtos %v5360
    %v5362 = vstv %s5361
    %5363 = vst [vmem:[#allocation2] sm:$0xff] %v5362
    // Predicated region
    $region22: #{tpu_custom_call.1} parent=1 // pred_check
      _
    $region23: #{tpu_custom_call.1} parent=1 // pred_check_branch
      %5365 = sbr.rel (0) target = $region25
    $region24: #{tpu_custom_call.1} parent=1 // pred_region
      %s5367 = ssub.s32 128, 128
      %5368 = vsyncadd [#allocation3], %s5367
      %s5370 = sshll.u32 [#allocation2], 4
      %s5371 = int_to_ptr.vmem [resolvable:$true] %s5370
      %5373 = dma.vmem_to_hbm [thread:$0]  %s5371, 128, %s5, [#allocation3]
    $region25: #{tpu_custom_call.1} parent=1 // pred_fallthru
      _
    // Predicated region
    $region26: #{tpu_custom_call.1} parent=1 // pred_check
      _
    $region27: #{tpu_custom_call.1} parent=1 // pred_check_branch
      %5375 = sbr.rel (0) target = $region29
    $region28: #{tpu_custom_call.1} parent=1 // pred_region
      %5376 = dma.done [#allocation3], 128
    $region29: #{tpu_custom_call.1} parent=1 // pred_fallthru
      _
    %5377 = vsyncpa [#allocation3], 1

</llo_original>
